<compile_context>
chip_gen: v7x
topology: tpu7x:2x2x1
jax: 0.10.0
libtpu: 0.0.40
codegen_flags: <defaults>
</compile_context>

<pallas_src>
import functools

import jax
import jax.numpy as jnp
from jax.experimental import pallas as pl
from jax.experimental.pallas import tpu as pltpu

_EPS = 1e-5
_LANE = 128          # lane-width alignment for channel / N / K dims
_SUBLANE = 16        # sublane alignment (covers bf16 packing)
_MAX_TILE = 512      # max tile edge for the fused matmul
_VMEM_LIMIT = 32 * 1024 * 1024   # explicit VMEM budget (safe on v5e/v6e/v7x)


# ------------------------------- small helpers ------------------------------ #

def _round_up(x, m):
    return (x + m - 1) // m * m


def _pick_tile(dim_pad, align, max_tile=_MAX_TILE):
    """Largest multiple of `align` <= max_tile that evenly divides dim_pad."""
    best = align
    t = align
    lim = min(dim_pad, max_tile)
    while t <= lim:
        if dim_pad % t == 0:
            best = t
        t += align
    return best


def _pad2d(a, rows, cols):
    pr, pc = rows - a.shape[0], cols - a.shape[1]
    if pr == 0 and pc == 0:
        return a
    return jnp.pad(a, ((0, pr), (0, pc)))


def _cpad(c):
    return _round_up(c, _LANE)


# ------------------------------- Pallas kernels ----------------------------- #

def _apply_act(x, act):
    if act == "relu":
        return jnp.maximum(x, 0.0)
    if act == "tanh":
        return jnp.tanh(x)
    if act == "sigmoid":
        return jax.nn.sigmoid(x)
    return x  # identity


def _mm_bn_act_kernel(x_ref, w_ref, s_ref, b_ref, o_ref, acc_ref, *, act):
    # out = act((x @ w) * scale + bias); bf16 MXU operands, f32 accum/epilogue.
    @pl.when(pl.program_id(2) == 0)
    def _init():
        acc_ref[...] = jnp.zeros_like(acc_ref)

    acc_ref[...] += jnp.dot(x_ref[...], w_ref[...],
                            preferred_element_type=jnp.float32)

    @pl.when(pl.program_id(2) == pl.num_programs(2) - 1)
    def _fin():
        y = acc_ref[...] * s_ref[...] + b_ref[...]
        o_ref[...] = _apply_act(y, act).astype(o_ref.dtype)


def _mm_bn_res_act_kernel(x_ref, w_ref, s_ref, b_ref, r_ref, o_ref, acc_ref, *,
                          act):
    # out = act((x @ w) * scale + bias + residual)
    @pl.when(pl.program_id(2) == 0)
    def _init():
        acc_ref[...] = jnp.zeros_like(acc_ref)

    acc_ref[...] += jnp.dot(x_ref[...], w_ref[...],
                            preferred_element_type=jnp.float32)

    @pl.when(pl.program_id(2) == pl.num_programs(2) - 1)
    def _fin():
        y = (acc_ref[...] * s_ref[...] + b_ref[...]
             + r_ref[...].astype(jnp.float32))
        o_ref[...] = _apply_act(y, act).astype(o_ref.dtype)


def _head_kernel(x_ref, w_ref, b_ref, o_ref, *, inv_hw):
    # fused global-average-pool + fc:  mean over spatial, then matmul + bias.
    pooled = jnp.sum(x_ref[...].astype(jnp.float32), axis=1) * inv_hw  # (N, C)
    acc = jnp.dot(pooled, w_ref[...], preferred_element_type=jnp.float32)
    o_ref[...] = acc + b_ref[...]


# ----------------------------- pallas_call wrappers -------------------------- #

def matmul_bn_act(x, w, scale, bias, act, residual=None,
                  out_dtype=jnp.bfloat16):
    """Tiled fused (x @ w) * scale + bias [+ residual] -> activation."""
    m, k = x.shape
    n = w.shape[1]

    m_pad = _round_up(m, _SUBLANE)
    k_pad = _round_up(k, _LANE)
    n_pad = _round_up(n, _LANE)
    tm = _pick_tile(m_pad, _SUBLANE)
    tk = _pick_tile(k_pad, _LANE)
    tn = _pick_tile(n_pad, _LANE)

    xp = _pad2d(x, m_pad, k_pad).astype(jnp.bfloat16)
    wp = _pad2d(w, k_pad, n_pad).astype(jnp.bfloat16)
    sp = _pad2d(scale.astype(jnp.float32), 1, n_pad)
    bp = _pad2d(bias.astype(jnp.float32), 1, n_pad)

    x_spec = pl.BlockSpec((tm, tk), lambda i, j, kk: (i, kk))
    w_spec = pl.BlockSpec((tk, tn), lambda i, j, kk: (kk, j))
    v_spec = pl.BlockSpec((1, tn), lambda i, j, kk: (0, j))
    o_spec = pl.BlockSpec((tm, tn), lambda i, j, kk: (i, j))

    if residual is None:
        kernel = functools.partial(_mm_bn_act_kernel, act=act)
        args = (xp, wp, sp, bp)
        in_specs = [x_spec, w_spec, v_spec, v_spec]
    else:
        rp = _pad2d(residual, m_pad, n_pad).astype(jnp.bfloat16)
        kernel = functools.partial(_mm_bn_res_act_kernel, act=act)
        args = (xp, wp, sp, bp, rp)
        in_specs = [x_spec, w_spec, v_spec, v_spec, o_spec]

    out = pl.pallas_call(
        kernel,
        grid=(m_pad // tm, n_pad // tn, k_pad // tk),
        in_specs=in_specs,
        out_specs=o_spec,
        out_shape=jax.ShapeDtypeStruct((m_pad, n_pad), out_dtype),
        scratch_shapes=[pltpu.VMEM((tm, tn), jnp.float32)],
        compiler_params=pltpu.CompilerParams(
            dimension_semantics=("parallel", "parallel", "arbitrary"),
            vmem_limit_bytes=_VMEM_LIMIT),
    )(*args)
    return out[:m, :n]


def avgpool_fc(x, fc_w, fc_b):
    """Fused AdaptiveAvgPool2d((1,1)) + flatten + Linear in one Pallas call."""
    n, h, w, c = x.shape
    num_classes = fc_b.shape[1]
    nc_pad = _round_up(num_classes, _LANE)
    x2 = x.reshape(n, h * w, c)
    wp = _pad2d(fc_w.astype(jnp.float32), c, nc_pad)
    bp = _pad2d(fc_b.astype(jnp.float32), 1, nc_pad)
    out = pl.pallas_call(
        functools.partial(_head_kernel, inv_hw=1.0 / float(h * w)),
        out_shape=jax.ShapeDtypeStruct((n, nc_pad), jnp.float32),
        compiler_params=pltpu.CompilerParams(vmem_limit_bytes=_VMEM_LIMIT),
    )(x2, wp, bp)
    return out[:, :num_classes]


def maxpool2d(x, k, stride, pad):
    """MaxPool2d as a jnp.maximum tree over strided views (XLA fuses this);
    per perf review this avoids a 9x inflated HBM intermediate."""
    n, h, w, c = x.shape
    xp = jnp.pad(x, ((0, 0), (pad, pad), (pad, pad), (0, 0)),
                 constant_values=-jnp.inf)
    ho = (h + 2 * pad - k) // stride + 1
    wo = (w + 2 * pad - k) // stride + 1
    out = None
    for i in range(k):
        for j in range(k):
            v = xp[:, i:i + (ho - 1) * stride + 1:stride,
                   j:j + (wo - 1) * stride + 1:stride, :]
            out = v if out is None else jnp.maximum(out, v)
    return out


# ------------------------------- conv helpers -------------------------------- #

def _im2col(x, kh, kw, stride, pad):
    """NHWC -> (N*Ho*Wo, kh*kw*C) patch matrix (row-major over (kh, kw, C))."""
    n, h, w, c = x.shape
    xp = jnp.pad(x, ((0, 0), (pad, pad), (pad, pad), (0, 0)))
    ho = (h + 2 * pad - kh) // stride + 1
    wo = (w + 2 * pad - kw) // stride + 1
    cols = []
    for i in range(kh):
        for j in range(kw):
            cols.append(xp[:, i:i + (ho - 1) * stride + 1:stride,
                           j:j + (wo - 1) * stride + 1:stride, :])
    patches = jnp.concatenate(cols, axis=-1)              # (n, ho, wo, kh*kw*c)
    return patches.reshape(n * ho * wo, kh * kw * c), ho, wo


def conv_bn_act(x, w, scale, bias, stride, pad, act, residual=None):
    """conv2d(bias=False) + folded-BN + (optional residual add) + activation."""
    kh, kw, cin, cout = w.shape
    nb = x.shape[0]
    patches, ho, wo = _im2col(x, kh, kw, stride, pad)
    w2 = w.reshape(kh * kw * cin, cout)
    res2 = None if residual is None else residual.reshape(-1, cout)
    out = matmul_bn_act(patches, w2, scale, bias, act, residual=res2)
    return out.reshape(nb, ho, wo, cout)


# --------------------------- parameter construction -------------------------- #

def _fold_bn(gamma, beta, mean, var, c_store):
    scale = gamma / jnp.sqrt(var + _EPS)
    bias = beta - mean * scale
    scale = jnp.pad(scale, (0, c_store - scale.shape[0]))
    bias = jnp.pad(bias, (0, c_store - bias.shape[0]))
    return scale[None, :], bias[None, :]


def _init_bn(key, c, c_store):
    k1, k2, k3, k4 = jax.random.split(key, 4)
    gamma = 1.0 + 0.1 * jax.random.normal(k1, (c,), jnp.float32)
    beta = 0.1 * jax.random.normal(k2, (c,), jnp.float32)
    mean = 0.1 * jax.random.normal(k3, (c,), jnp.float32)
    var = 1.0 + 0.5 * jax.random.uniform(k4, (c,), jnp.float32)
    return _fold_bn(gamma, beta, mean, var, c_store)


def _init_conv(key, kh, kw, cin, cout, cin_store, cout_store):
    fan_in = kh * kw * cin
    w = jax.random.normal(key, (kh, kw, cin, cout), jnp.float32) / jnp.sqrt(fan_in)
    return jnp.pad(w, ((0, 0), (0, 0),
                       (0, cin_store - cin), (0, cout_store - cout)))


def init_basic_block(key, in_planes, planes, stride):
    cin_s, cout_s = _cpad(in_planes), _cpad(planes)
    ks = jax.random.split(key, 6)
    p = {
        "w1": _init_conv(ks[0], 3, 3, in_planes, planes, cin_s, cout_s),
        "w2": _init_conv(ks[1], 3, 3, planes, planes, cout_s, cout_s),
    }
    p["s1"], p["b1"] = _init_bn(ks[2], planes, cout_s)
    p["s2"], p["b2"] = _init_bn(ks[3], planes, cout_s)
    if stride != 1 or in_planes != planes:
        p["wd"] = _init_conv(ks[4], 1, 1, in_planes, planes, cin_s, cout_s)
        p["sd"], p["bd"] = _init_bn(ks[5], planes, cout_s)
    return p


def init_params(key, base_channels, num_blocks_list, num_classes):
    keys = jax.random.split(key, 8)
    c1_s = _cpad(base_channels)
    params = {"conv1_w": _init_conv(keys[0], 7, 7, 3, base_channels, 3, c1_s)}
    params["bn1_s"], params["bn1_b"] = _init_bn(keys[1], base_channels, c1_s)

    in_planes = base_channels
    planes_list = [base_channels, base_channels * 2,
                   base_channels * 4, base_channels * 8]
    first_strides = [1, 2, 2, 2]
    for li, (planes, nbk, s0) in enumerate(zip(planes_list, num_blocks_list,
                                               first_strides)):
        blocks = []
        strides = [s0] + [1] * (nbk - 1)
        bkeys = jax.random.split(keys[2 + li], nbk)
        for bi, s in enumerate(strides):
            blocks.append(init_basic_block(bkeys[bi], in_planes, planes, s))
            in_planes = planes                      # BasicBlock expansion = 1
        params[f"layer{li + 1}"] = blocks

    cf_s = _cpad(in_planes)
    fc_w = (jax.random.normal(keys[6], (in_planes, num_classes), jnp.float32)
            / jnp.sqrt(in_planes))
    params["fc_w"] = jnp.pad(fc_w, ((0, cf_s - in_planes), (0, 0)))
    params["fc_b"] = 0.01 * jax.random.normal(keys[7], (1, num_classes),
                                              jnp.float32)
    return params


# ---------------------------------- forward ---------------------------------- #

def basic_block_forward(x, p, act, stride):
    out = conv_bn_act(x, p["w1"], p["s1"], p["b1"], stride, 1, act)
    if "wd" in p:
        shortcut = conv_bn_act(x, p["wd"], p["sd"], p["bd"], stride, 0, act=None)
    else:
        shortcut = x
    # second conv + BN + residual add + activation fused in one Pallas kernel
    return conv_bn_act(out, p["w2"], p["s2"], p["b2"], 1, 1, act,
                       residual=shortcut)


def flexible_resnet_forward(x_nchw, params, activation="relu"):
    x = jnp.transpose(x_nchw, (0, 2, 3, 1)).astype(jnp.bfloat16)  # NCHW->NHWC
    # stem: conv7x7 s2 p3 -> bn -> act -> maxpool3x3 s2 p1
    x = conv_bn_act(x, params["conv1_w"], params["bn1_s"], params["bn1_b"],
                    stride=2, pad=3, act=activation)
    x = maxpool2d(x, 3, 2, 1)
    for li, name in enumerate(("layer1", "layer2", "layer3", "layer4")):
        for bi, blk in enumerate(params[name]):
            stride = 2 if (li > 0 and bi == 0) else 1
            x = basic_block_forward(x, blk, activation, stride)
    return avgpool_fc(x, params["fc_w"], params["fc_b"])   # (N, num_classes)


# ----------------------------------- main ------------------------------------ #

if __name__ == "__main__":
    key = jax.random.PRNGKey(0)
    pkey, xkey = jax.random.split(key)

    base_channels = 16
    num_blocks_list = (1, 1, 1, 1)
    num_classes = 2

    params = init_params(pkey, base_channels, num_blocks_list, num_classes)
    x = jax.random.normal(xkey, (2, 3, 32, 32), jnp.float32)   # NCHW (PyTorch)

    fwd = jax.jit(flexible_resnet_forward, static_argnames=("activation",))
    logits = fwd(x, params, activation="relu")
    logits = jax.block_until_ready(logits)

    assert logits.shape == (2, num_classes), logits.shape
    assert bool(jnp.all(jnp.isfinite(logits)))
    print("KERNEL_OK")
</pallas_src>

<mosaic_0001>
module attributes {stable_mosaic.version = 11 : i64} {
  func.func @_mm_bn_act_kernel(%arg0: i32, %arg1: i32, %arg2: i32, %arg3: memref<512x256xbf16, #tpu.memory_space<vmem>>, %arg4: memref<256x128xbf16, #tpu.memory_space<vmem>>, %arg5: memref<1x128xf32, #tpu.memory_space<vmem>>, %arg6: memref<1x128xf32, #tpu.memory_space<vmem>>, %arg7: memref<512x128xbf16, #tpu.memory_space<vmem>>, %arg8: memref<512x128xf32, #tpu.memory_space<vmem>>) attributes {dimension_semantics = [#tpu.dimension_semantics<parallel>, #tpu.dimension_semantics<parallel>, #tpu.dimension_semantics<arbitrary>], iteration_bounds = array<i64: 1, 1, 1>, scalar_prefetch = 0 : i64, scratch_operands = 1 : i64, tpu.core_type = #tpu.core_type<tc>, window_params = [{transform_indices = @transform_0, window_bounds = array<i64: 512, 256>}, {transform_indices = @transform_1, window_bounds = array<i64: 256, 128>}, {transform_indices = @transform_2, window_bounds = array<i64: 1, 128>}, {transform_indices = @transform_3, window_bounds = array<i64: 1, 128>}, {transform_indices = @transform_4, window_bounds = array<i64: 512, 128>}]} {
    %c0_i32 = arith.constant 0 : i32
    %0 = arith.cmpi eq, %arg2, %c0_i32 : i32
    %1 = arith.extui %0 : i1 to i32
    %c0_i32_0 = arith.constant 0 : i32
    %2 = arith.cmpi ne, %1, %c0_i32_0 : i32
    scf.if %2 {
      %cst_10 = arith.constant 0.000000e+00 : f32
      %12 = vector.broadcast %cst_10 : f32 to vector<512x128xf32>
      %c0_11 = arith.constant 0 : index
      %c0_12 = arith.constant 0 : index
      %13 = vector.load %arg8[%c0_11, %c0_12] : memref<512x128xf32, #tpu.memory_space<vmem>>, vector<512x128xf32>
      tpu.vector_store %arg8[%c0_11, %c0_12], %12 {strides = array<i32>} : memref<512x128xf32, #tpu.memory_space<vmem>>, vector<512x128xf32>,
    } else {
    }
    %c0 = arith.constant 0 : index
    %c0_1 = arith.constant 0 : index
    %3 = vector.load %arg8[%c0, %c0_1] : memref<512x128xf32, #tpu.memory_space<vmem>>, vector<512x128xf32>
    %c0_2 = arith.constant 0 : index
    %c0_3 = arith.constant 0 : index
    %4 = vector.load %arg3[%c0_2, %c0_3] : memref<512x256xbf16, #tpu.memory_space<vmem>>, vector<512x256xbf16>
    %c0_4 = arith.constant 0 : index
    %c0_5 = arith.constant 0 : index
    %5 = vector.load %arg4[%c0_4, %c0_5] : memref<256x128xbf16, #tpu.memory_space<vmem>>, vector<256x128xbf16>
    %cst = arith.constant dense<0.000000e+00> : vector<512x128xf32>
    %6 = tpu.matmul %4, %5, %cst {dimension_numbers = #tpu.dot_dimension_numbers<[1], [0], [0], [1], [0, 0, 1, 1], [], []>} : vector<512x256xbf16>, vector<256x128xbf16>, vector<512x128xf32> -> vector<512x128xf32>
    %7 = arith.addf %3, %6 : vector<512x128xf32>
    %c0_6 = arith.constant 0 : index
    %c0_7 = arith.constant 0 : index
    %8 = vector.load %arg8[%c0_6, %c0_7] : memref<512x128xf32, #tpu.memory_space<vmem>>, vector<512x128xf32>
    tpu.vector_store %arg8[%c0_6, %c0_7], %7 {strides = array<i32>} : memref<512x128xf32, #tpu.memory_space<vmem>>, vector<512x128xf32>,
    %c0_i32_8 = arith.constant 0 : i32
    %9 = arith.cmpi eq, %arg2, %c0_i32_8 : i32
    %10 = arith.extui %9 : i1 to i32
    %c0_i32_9 = arith.constant 0 : i32
    %11 = arith.cmpi ne, %10, %c0_i32_9 : i32
    scf.if %11 {
      %c0_10 = arith.constant 0 : index
      %c0_11 = arith.constant 0 : index
      %12 = vector.load %arg8[%c0_10, %c0_11] : memref<512x128xf32, #tpu.memory_space<vmem>>, vector<512x128xf32>
      %c0_12 = arith.constant 0 : index
      %c0_13 = arith.constant 0 : index
      %13 = vector.load %arg5[%c0_12, %c0_13] : memref<1x128xf32, #tpu.memory_space<vmem>>, vector<1x128xf32>
      %14 = vector.broadcast %13 : vector<1x128xf32> to vector<512x128xf32>
      %15 = arith.mulf %12, %14 : vector<512x128xf32>
      %c0_14 = arith.constant 0 : index
      %c0_15 = arith.constant 0 : index
      %16 = vector.load %arg6[%c0_14, %c0_15] : memref<1x128xf32, #tpu.memory_space<vmem>>, vector<1x128xf32>
      %17 = vector.broadcast %16 : vector<1x128xf32> to vector<512x128xf32>
      %18 = arith.addf %15, %17 : vector<512x128xf32>
      %cst_16 = arith.constant 0.000000e+00 : f32
      %19 = vector.broadcast %cst_16 : f32 to vector<512x128xf32>
      %20 = arith.maximumf %18, %19 : vector<512x128xf32>
      %21 = arith.truncf %20 : vector<512x128xf32> to vector<512x128xbf16>
      %c0_17 = arith.constant 0 : index
      %c0_18 = arith.constant 0 : index
      %22 = vector.load %arg7[%c0_17, %c0_18] : memref<512x128xbf16, #tpu.memory_space<vmem>>, vector<512x128xbf16>
      tpu.vector_store %arg7[%c0_17, %c0_18], %21 {strides = array<i32>} : memref<512x128xbf16, #tpu.memory_space<vmem>>, vector<512x128xbf16>,
    } else {
    }
    return
  }
  func.func @transform_0(%arg0: i32, %arg1: i32, %arg2: i32) -> (i32, i32) {
    %c0_i32 = arith.constant 0 : i32
    return %arg0, %arg2 : i32, i32
  }
  func.func @transform_1(%arg0: i32, %arg1: i32, %arg2: i32) -> (i32, i32) {
    %c0_i32 = arith.constant 0 : i32
    return %arg2, %arg1 : i32, i32
  }
  func.func @transform_2(%arg0: i32, %arg1: i32, %arg2: i32) -> (i32, i32) {
    %c0_i32 = arith.constant 0 : i32
    %c0_i32_0 = arith.constant 0 : i32
    return %c0_i32, %arg1 : i32, i32
  }
  func.func @transform_3(%arg0: i32, %arg1: i32, %arg2: i32) -> (i32, i32) {
    %c0_i32 = arith.constant 0 : i32
    %c0_i32_0 = arith.constant 0 : i32
    return %c0_i32, %arg1 : i32, i32
  }
  func.func @transform_4(%arg0: i32, %arg1: i32, %arg2: i32) -> (i32, i32) {
    %c0_i32 = arith.constant 0 : i32
    return %arg0, %arg1 : i32, i32
  }
}

module attributes {stable_mosaic.version = 11 : i64} {
  func.func @_mm_bn_act_kernel(%arg0: i32, %arg1: i32, %arg2: i32, %arg3: memref<128x384xbf16, #tpu.memory_space<vmem>>, %arg4: memref<384x128xbf16, #tpu.memory_space<vmem>>, %arg5: memref<1x128xf32, #tpu.memory_space<vmem>>, %arg6: memref<1x128xf32, #tpu.memory_space<vmem>>, %arg7: memref<128x128xbf16, #tpu.memory_space<vmem>>, %arg8: memref<128x128xf32, #tpu.memory_space<vmem>>) attributes {dimension_semantics = [#tpu.dimension_semantics<parallel>, #tpu.dimension_semantics<parallel>, #tpu.dimension_semantics<arbitrary>], iteration_bounds = array<i64: 1, 1, 3>, scalar_prefetch = 0 : i64, scratch_operands = 1 : i64, tpu.core_type = #tpu.core_type<tc>, window_params = [{transform_indices = @transform_0, window_bounds = array<i64: 128, 384>}, {transform_indices = @transform_1, window_bounds = array<i64: 384, 128>}, {transform_indices = @transform_2, window_bounds = array<i64: 1, 128>}, {transform_indices = @transform_3, window_bounds = array<i64: 1, 128>}, {transform_indices = @transform_4, window_bounds = array<i64: 128, 128>}]} {
    %c0_i32 = arith.constant 0 : i32
    %0 = arith.cmpi eq, %arg2, %c0_i32 : i32
    %1 = arith.extui %0 : i1 to i32
    %c0_i32_0 = arith.constant 0 : i32
    %2 = arith.cmpi ne, %1, %c0_i32_0 : i32
    scf.if %2 {
      %cst_9 = arith.constant 0.000000e+00 : f32
      %12 = vector.broadcast %cst_9 : f32 to vector<128x128xf32>
      %c0_10 = arith.constant 0 : index
      %c0_11 = arith.constant 0 : index
      %13 = vector.load %arg8[%c0_10, %c0_11] : memref<128x128xf32, #tpu.memory_space<vmem>>, vector<128x128xf32>
      tpu.vector_store %arg8[%c0_10, %c0_11], %12 {strides = array<i32>} : memref<128x128xf32, #tpu.memory_space<vmem>>, vector<128x128xf32>,
    } else {
    }
    %c0 = arith.constant 0 : index
    %c0_1 = arith.constant 0 : index
    %3 = vector.load %arg8[%c0, %c0_1] : memref<128x128xf32, #tpu.memory_space<vmem>>, vector<128x128xf32>
    %c0_2 = arith.constant 0 : index
    %c0_3 = arith.constant 0 : index
    %4 = vector.load %arg3[%c0_2, %c0_3] : memref<128x384xbf16, #tpu.memory_space<vmem>>, vector<128x384xbf16>
    %c0_4 = arith.constant 0 : index
    %c0_5 = arith.constant 0 : index
    %5 = vector.load %arg4[%c0_4, %c0_5] : memref<384x128xbf16, #tpu.memory_space<vmem>>, vector<384x128xbf16>
    %cst = arith.constant dense<0.000000e+00> : vector<128x128xf32>
    %6 = tpu.matmul %4, %5, %cst {dimension_numbers = #tpu.dot_dimension_numbers<[1], [0], [0], [1], [0, 0, 1, 1], [], []>} : vector<128x384xbf16>, vector<384x128xbf16>, vector<128x128xf32> -> vector<128x128xf32>
    %7 = arith.addf %3, %6 : vector<128x128xf32>
    %c0_6 = arith.constant 0 : index
    %c0_7 = arith.constant 0 : index
    %8 = vector.load %arg8[%c0_6, %c0_7] : memref<128x128xf32, #tpu.memory_space<vmem>>, vector<128x128xf32>
    tpu.vector_store %arg8[%c0_6, %c0_7], %7 {strides = array<i32>} : memref<128x128xf32, #tpu.memory_space<vmem>>, vector<128x128xf32>,
    %c2_i32 = arith.constant 2 : i32
    %9 = arith.cmpi eq, %arg2, %c2_i32 : i32
    %10 = arith.extui %9 : i1 to i32
    %c0_i32_8 = arith.constant 0 : i32
    %11 = arith.cmpi ne, %10, %c0_i32_8 : i32
    scf.if %11 {
      %c0_9 = arith.constant 0 : index
      %c0_10 = arith.constant 0 : index
      %12 = vector.load %arg8[%c0_9, %c0_10] : memref<128x128xf32, #tpu.memory_space<vmem>>, vector<128x128xf32>
      %c0_11 = arith.constant 0 : index
      %c0_12 = arith.constant 0 : index
      %13 = vector.load %arg5[%c0_11, %c0_12] : memref<1x128xf32, #tpu.memory_space<vmem>>, vector<1x128xf32>
      %14 = vector.broadcast %13 : vector<1x128xf32> to vector<128x128xf32>
      %15 = arith.mulf %12, %14 : vector<128x128xf32>
      %c0_13 = arith.constant 0 : index
      %c0_14 = arith.constant 0 : index
      %16 = vector.load %arg6[%c0_13, %c0_14] : memref<1x128xf32, #tpu.memory_space<vmem>>, vector<1x128xf32>
      %17 = vector.broadcast %16 : vector<1x128xf32> to vector<128x128xf32>
      %18 = arith.addf %15, %17 : vector<128x128xf32>
      %cst_15 = arith.constant 0.000000e+00 : f32
      %19 = vector.broadcast %cst_15 : f32 to vector<128x128xf32>
      %20 = arith.maximumf %18, %19 : vector<128x128xf32>
      %21 = arith.truncf %20 : vector<128x128xf32> to vector<128x128xbf16>
      %c0_16 = arith.constant 0 : index
      %c0_17 = arith.constant 0 : index
      %22 = vector.load %arg7[%c0_16, %c0_17] : memref<128x128xbf16, #tpu.memory_space<vmem>>, vector<128x128xbf16>
      tpu.vector_store %arg7[%c0_16, %c0_17], %21 {strides = array<i32>} : memref<128x128xbf16, #tpu.memory_space<vmem>>, vector<128x128xbf16>,
    } else {
    }
    return
  }
  func.func @transform_0(%arg0: i32, %arg1: i32, %arg2: i32) -> (i32, i32) {
    %c0_i32 = arith.constant 0 : i32
    return %arg0, %arg2 : i32, i32
  }
  func.func @transform_1(%arg0: i32, %arg1: i32, %arg2: i32) -> (i32, i32) {
    %c0_i32 = arith.constant 0 : i32
    return %arg2, %arg1 : i32, i32
  }
  func.func @transform_2(%arg0: i32, %arg1: i32, %arg2: i32) -> (i32, i32) {
    %c0_i32 = arith.constant 0 : i32
    %c0_i32_0 = arith.constant 0 : i32
    return %c0_i32, %arg1 : i32, i32
  }
  func.func @transform_3(%arg0: i32, %arg1: i32, %arg2: i32) -> (i32, i32) {
    %c0_i32 = arith.constant 0 : i32
    %c0_i32_0 = arith.constant 0 : i32
    return %c0_i32, %arg1 : i32, i32
  }
  func.func @transform_4(%arg0: i32, %arg1: i32, %arg2: i32) -> (i32, i32) {
    %c0_i32 = arith.constant 0 : i32
    return %arg0, %arg1 : i32, i32
  }
}

module attributes {stable_mosaic.version = 11 : i64} {
  func.func @_mm_bn_res_act_kernel(%arg0: i32, %arg1: i32, %arg2: i32, %arg3: memref<128x384xbf16, #tpu.memory_space<vmem>>, %arg4: memref<384x128xbf16, #tpu.memory_space<vmem>>, %arg5: memref<1x128xf32, #tpu.memory_space<vmem>>, %arg6: memref<1x128xf32, #tpu.memory_space<vmem>>, %arg7: memref<128x128xbf16, #tpu.memory_space<vmem>>, %arg8: memref<128x128xbf16, #tpu.memory_space<vmem>>, %arg9: memref<128x128xf32, #tpu.memory_space<vmem>>) attributes {dimension_semantics = [#tpu.dimension_semantics<parallel>, #tpu.dimension_semantics<parallel>, #tpu.dimension_semantics<arbitrary>], iteration_bounds = array<i64: 1, 1, 3>, scalar_prefetch = 0 : i64, scratch_operands = 1 : i64, tpu.core_type = #tpu.core_type<tc>, window_params = [{transform_indices = @transform_0, window_bounds = array<i64: 128, 384>}, {transform_indices = @transform_1, window_bounds = array<i64: 384, 128>}, {transform_indices = @transform_2, window_bounds = array<i64: 1, 128>}, {transform_indices = @transform_3, window_bounds = array<i64: 1, 128>}, {transform_indices = @transform_4, window_bounds = array<i64: 128, 128>}, {transform_indices = @transform_5, window_bounds = array<i64: 128, 128>}]} {
    %c0_i32 = arith.constant 0 : i32
    %0 = arith.cmpi eq, %arg2, %c0_i32 : i32
    %1 = arith.extui %0 : i1 to i32
    %c0_i32_0 = arith.constant 0 : i32
    %2 = arith.cmpi ne, %1, %c0_i32_0 : i32
    scf.if %2 {
      %cst_9 = arith.constant 0.000000e+00 : f32
      %12 = vector.broadcast %cst_9 : f32 to vector<128x128xf32>
      %c0_10 = arith.constant 0 : index
      %c0_11 = arith.constant 0 : index
      %13 = vector.load %arg9[%c0_10, %c0_11] : memref<128x128xf32, #tpu.memory_space<vmem>>, vector<128x128xf32>
      tpu.vector_store %arg9[%c0_10, %c0_11], %12 {strides = array<i32>} : memref<128x128xf32, #tpu.memory_space<vmem>>, vector<128x128xf32>,
    } else {
    }
    %c0 = arith.constant 0 : index
    %c0_1 = arith.constant 0 : index
    %3 = vector.load %arg9[%c0, %c0_1] : memref<128x128xf32, #tpu.memory_space<vmem>>, vector<128x128xf32>
    %c0_2 = arith.constant 0 : index
    %c0_3 = arith.constant 0 : index
    %4 = vector.load %arg3[%c0_2, %c0_3] : memref<128x384xbf16, #tpu.memory_space<vmem>>, vector<128x384xbf16>
    %c0_4 = arith.constant 0 : index
    %c0_5 = arith.constant 0 : index
    %5 = vector.load %arg4[%c0_4, %c0_5] : memref<384x128xbf16, #tpu.memory_space<vmem>>, vector<384x128xbf16>
    %cst = arith.constant dense<0.000000e+00> : vector<128x128xf32>
    %6 = tpu.matmul %4, %5, %cst {dimension_numbers = #tpu.dot_dimension_numbers<[1], [0], [0], [1], [0, 0, 1, 1], [], []>} : vector<128x384xbf16>, vector<384x128xbf16>, vector<128x128xf32> -> vector<128x128xf32>
    %7 = arith.addf %3, %6 : vector<128x128xf32>
    %c0_6 = arith.constant 0 : index
    %c0_7 = arith.constant 0 : index
    %8 = vector.load %arg9[%c0_6, %c0_7] : memref<128x128xf32, #tpu.memory_space<vmem>>, vector<128x128xf32>
    tpu.vector_store %arg9[%c0_6, %c0_7], %7 {strides = array<i32>} : memref<128x128xf32, #tpu.memory_space<vmem>>, vector<128x128xf32>,
    %c2_i32 = arith.constant 2 : i32
    %9 = arith.cmpi eq, %arg2, %c2_i32 : i32
    %10 = arith.extui %9 : i1 to i32
    %c0_i32_8 = arith.constant 0 : i32
    %11 = arith.cmpi ne, %10, %c0_i32_8 : i32
    scf.if %11 {
      %c0_9 = arith.constant 0 : index
      %c0_10 = arith.constant 0 : index
      %12 = vector.load %arg9[%c0_9, %c0_10] : memref<128x128xf32, #tpu.memory_space<vmem>>, vector<128x128xf32>
      %c0_11 = arith.constant 0 : index
      %c0_12 = arith.constant 0 : index
      %13 = vector.load %arg5[%c0_11, %c0_12] : memref<1x128xf32, #tpu.memory_space<vmem>>, vector<1x128xf32>
      %14 = vector.broadcast %13 : vector<1x128xf32> to vector<128x128xf32>
      %15 = arith.mulf %12, %14 : vector<128x128xf32>
      %c0_13 = arith.constant 0 : index
      %c0_14 = arith.constant 0 : index
      %16 = vector.load %arg6[%c0_13, %c0_14] : memref<1x128xf32, #tpu.memory_space<vmem>>, vector<1x128xf32>
      %17 = vector.broadcast %16 : vector<1x128xf32> to vector<128x128xf32>
      %18 = arith.addf %15, %17 : vector<128x128xf32>
      %c0_15 = arith.constant 0 : index
      %c0_16 = arith.constant 0 : index
      %19 = vector.load %arg7[%c0_15, %c0_16] : memref<128x128xbf16, #tpu.memory_space<vmem>>, vector<128x128xbf16>
      %20 = arith.extf %19 : vector<128x128xbf16> to vector<128x128xf32>
      %21 = arith.addf %18, %20 : vector<128x128xf32>
      %cst_17 = arith.constant 0.000000e+00 : f32
      %22 = vector.broadcast %cst_17 : f32 to vector<128x128xf32>
      %23 = arith.maximumf %21, %22 : vector<128x128xf32>
      %24 = arith.truncf %23 : vector<128x128xf32> to vector<128x128xbf16>
      %c0_18 = arith.constant 0 : index
      %c0_19 = arith.constant 0 : index
      %25 = vector.load %arg8[%c0_18, %c0_19] : memref<128x128xbf16, #tpu.memory_space<vmem>>, vector<128x128xbf16>
      tpu.vector_store %arg8[%c0_18, %c0_19], %24 {strides = array<i32>} : memref<128x128xbf16, #tpu.memory_space<vmem>>, vector<128x128xbf16>,
    } else {
    }
    return
  }
  func.func @transform_0(%arg0: i32, %arg1: i32, %arg2: i32) -> (i32, i32) {
    %c0_i32 = arith.constant 0 : i32
    return %arg0, %arg2 : i32, i32
  }
  func.func @transform_1(%arg0: i32, %arg1: i32, %arg2: i32) -> (i32, i32) {
    %c0_i32 = arith.constant 0 : i32
    return %arg2, %arg1 : i32, i32
  }
  func.func @transform_2(%arg0: i32, %arg1: i32, %arg2: i32) -> (i32, i32) {
    %c0_i32 = arith.constant 0 : i32
    %c0_i32_0 = arith.constant 0 : i32
    return %c0_i32, %arg1 : i32, i32
  }
  func.func @transform_3(%arg0: i32, %arg1: i32, %arg2: i32) -> (i32, i32) {
    %c0_i32 = arith.constant 0 : i32
    %c0_i32_0 = arith.constant 0 : i32
    return %c0_i32, %arg1 : i32, i32
  }
  func.func @transform_4(%arg0: i32, %arg1: i32, %arg2: i32) -> (i32, i32) {
    %c0_i32 = arith.constant 0 : i32
    return %arg0, %arg1 : i32, i32
  }
  func.func @transform_5(%arg0: i32, %arg1: i32, %arg2: i32) -> (i32, i32) {
    %c0_i32 = arith.constant 0 : i32
    return %arg0, %arg1 : i32, i32
  }
}

module attributes {stable_mosaic.version = 11 : i64} {
  func.func @_mm_bn_act_kernel(%arg0: i32, %arg1: i32, %arg2: i32, %arg3: memref<32x384xbf16, #tpu.memory_space<vmem>>, %arg4: memref<384x128xbf16, #tpu.memory_space<vmem>>, %arg5: memref<1x128xf32, #tpu.memory_space<vmem>>, %arg6: memref<1x128xf32, #tpu.memory_space<vmem>>, %arg7: memref<32x128xbf16, #tpu.memory_space<vmem>>, %arg8: memref<32x128xf32, #tpu.memory_space<vmem>>) attributes {dimension_semantics = [#tpu.dimension_semantics<parallel>, #tpu.dimension_semantics<parallel>, #tpu.dimension_semantics<arbitrary>], iteration_bounds = array<i64: 1, 1, 3>, scalar_prefetch = 0 : i64, scratch_operands = 1 : i64, tpu.core_type = #tpu.core_type<tc>, window_params = [{transform_indices = @transform_0, window_bounds = array<i64: 32, 384>}, {transform_indices = @transform_1, window_bounds = array<i64: 384, 128>}, {transform_indices = @transform_2, window_bounds = array<i64: 1, 128>}, {transform_indices = @transform_3, window_bounds = array<i64: 1, 128>}, {transform_indices = @transform_4, window_bounds = array<i64: 32, 128>}]} {
    %c0_i32 = arith.constant 0 : i32
    %0 = arith.cmpi eq, %arg2, %c0_i32 : i32
    %1 = arith.extui %0 : i1 to i32
    %c0_i32_0 = arith.constant 0 : i32
    %2 = arith.cmpi ne, %1, %c0_i32_0 : i32
    scf.if %2 {
      %cst_9 = arith.constant 0.000000e+00 : f32
      %12 = vector.broadcast %cst_9 : f32 to vector<32x128xf32>
      %c0_10 = arith.constant 0 : index
      %c0_11 = arith.constant 0 : index
      %13 = vector.load %arg8[%c0_10, %c0_11] : memref<32x128xf32, #tpu.memory_space<vmem>>, vector<32x128xf32>
      tpu.vector_store %arg8[%c0_10, %c0_11], %12 {strides = array<i32>} : memref<32x128xf32, #tpu.memory_space<vmem>>, vector<32x128xf32>,
    } else {
    }
    %c0 = arith.constant 0 : index
    %c0_1 = arith.constant 0 : index
    %3 = vector.load %arg8[%c0, %c0_1] : memref<32x128xf32, #tpu.memory_space<vmem>>, vector<32x128xf32>
    %c0_2 = arith.constant 0 : index
    %c0_3 = arith.constant 0 : index
    %4 = vector.load %arg3[%c0_2, %c0_3] : memref<32x384xbf16, #tpu.memory_space<vmem>>, vector<32x384xbf16>
    %c0_4 = arith.constant 0 : index
    %c0_5 = arith.constant 0 : index
    %5 = vector.load %arg4[%c0_4, %c0_5] : memref<384x128xbf16, #tpu.memory_space<vmem>>, vector<384x128xbf16>
    %cst = arith.constant dense<0.000000e+00> : vector<32x128xf32>
    %6 = tpu.matmul %4, %5, %cst {dimension_numbers = #tpu.dot_dimension_numbers<[1], [0], [0], [1], [0, 0, 1, 1], [], []>} : vector<32x384xbf16>, vector<384x128xbf16>, vector<32x128xf32> -> vector<32x128xf32>
    %7 = arith.addf %3, %6 : vector<32x128xf32>
    %c0_6 = arith.constant 0 : index
    %c0_7 = arith.constant 0 : index
    %8 = vector.load %arg8[%c0_6, %c0_7] : memref<32x128xf32, #tpu.memory_space<vmem>>, vector<32x128xf32>
    tpu.vector_store %arg8[%c0_6, %c0_7], %7 {strides = array<i32>} : memref<32x128xf32, #tpu.memory_space<vmem>>, vector<32x128xf32>,
    %c2_i32 = arith.constant 2 : i32
    %9 = arith.cmpi eq, %arg2, %c2_i32 : i32
    %10 = arith.extui %9 : i1 to i32
    %c0_i32_8 = arith.constant 0 : i32
    %11 = arith.cmpi ne, %10, %c0_i32_8 : i32
    scf.if %11 {
      %c0_9 = arith.constant 0 : index
      %c0_10 = arith.constant 0 : index
      %12 = vector.load %arg8[%c0_9, %c0_10] : memref<32x128xf32, #tpu.memory_space<vmem>>, vector<32x128xf32>
      %c0_11 = arith.constant 0 : index
      %c0_12 = arith.constant 0 : index
      %13 = vector.load %arg5[%c0_11, %c0_12] : memref<1x128xf32, #tpu.memory_space<vmem>>, vector<1x128xf32>
      %14 = vector.broadcast %13 : vector<1x128xf32> to vector<32x128xf32>
      %15 = arith.mulf %12, %14 : vector<32x128xf32>
      %c0_13 = arith.constant 0 : index
      %c0_14 = arith.constant 0 : index
      %16 = vector.load %arg6[%c0_13, %c0_14] : memref<1x128xf32, #tpu.memory_space<vmem>>, vector<1x128xf32>
      %17 = vector.broadcast %16 : vector<1x128xf32> to vector<32x128xf32>
      %18 = arith.addf %15, %17 : vector<32x128xf32>
      %cst_15 = arith.constant 0.000000e+00 : f32
      %19 = vector.broadcast %cst_15 : f32 to vector<32x128xf32>
      %20 = arith.maximumf %18, %19 : vector<32x128xf32>
      %21 = arith.truncf %20 : vector<32x128xf32> to vector<32x128xbf16>
      %c0_16 = arith.constant 0 : index
      %c0_17 = arith.constant 0 : index
      %22 = vector.load %arg7[%c0_16, %c0_17] : memref<32x128xbf16, #tpu.memory_space<vmem>>, vector<32x128xbf16>
      tpu.vector_store %arg7[%c0_16, %c0_17], %21 {strides = array<i32>} : memref<32x128xbf16, #tpu.memory_space<vmem>>, vector<32x128xbf16>,
    } else {
    }
    return
  }
  func.func @transform_0(%arg0: i32, %arg1: i32, %arg2: i32) -> (i32, i32) {
    %c0_i32 = arith.constant 0 : i32
    return %arg0, %arg2 : i32, i32
  }
  func.func @transform_1(%arg0: i32, %arg1: i32, %arg2: i32) -> (i32, i32) {
    %c0_i32 = arith.constant 0 : i32
    return %arg2, %arg1 : i32, i32
  }
  func.func @transform_2(%arg0: i32, %arg1: i32, %arg2: i32) -> (i32, i32) {
    %c0_i32 = arith.constant 0 : i32
    %c0_i32_0 = arith.constant 0 : i32
    return %c0_i32, %arg1 : i32, i32
  }
  func.func @transform_3(%arg0: i32, %arg1: i32, %arg2: i32) -> (i32, i32) {
    %c0_i32 = arith.constant 0 : i32
    %c0_i32_0 = arith.constant 0 : i32
    return %c0_i32, %arg1 : i32, i32
  }
  func.func @transform_4(%arg0: i32, %arg1: i32, %arg2: i32) -> (i32, i32) {
    %c0_i32 = arith.constant 0 : i32
    return %arg0, %arg1 : i32, i32
  }
}

module attributes {stable_mosaic.version = 11 : i64} {
  func.func @_mm_bn_act_kernel(%arg0: i32, %arg1: i32, %arg2: i32, %arg3: memref<32x128xbf16, #tpu.memory_space<vmem>>, %arg4: memref<128x128xbf16, #tpu.memory_space<vmem>>, %arg5: memref<1x128xf32, #tpu.memory_space<vmem>>, %arg6: memref<1x128xf32, #tpu.memory_space<vmem>>, %arg7: memref<32x128xbf16, #tpu.memory_space<vmem>>, %arg8: memref<32x128xf32, #tpu.memory_space<vmem>>) attributes {dimension_semantics = [#tpu.dimension_semantics<parallel>, #tpu.dimension_semantics<parallel>, #tpu.dimension_semantics<arbitrary>], iteration_bounds = array<i64: 1, 1, 1>, scalar_prefetch = 0 : i64, scratch_operands = 1 : i64, tpu.core_type = #tpu.core_type<tc>, window_params = [{transform_indices = @transform_0, window_bounds = array<i64: 32, 128>}, {transform_indices = @transform_1, window_bounds = array<i64: 128, 128>}, {transform_indices = @transform_2, window_bounds = array<i64: 1, 128>}, {transform_indices = @transform_3, window_bounds = array<i64: 1, 128>}, {transform_indices = @transform_4, window_bounds = array<i64: 32, 128>}]} {
    %c0_i32 = arith.constant 0 : i32
    %0 = arith.cmpi eq, %arg2, %c0_i32 : i32
    %1 = arith.extui %0 : i1 to i32
    %c0_i32_0 = arith.constant 0 : i32
    %2 = arith.cmpi ne, %1, %c0_i32_0 : i32
    scf.if %2 {
      %cst_10 = arith.constant 0.000000e+00 : f32
      %12 = vector.broadcast %cst_10 : f32 to vector<32x128xf32>
      %c0_11 = arith.constant 0 : index
      %c0_12 = arith.constant 0 : index
      %13 = vector.load %arg8[%c0_11, %c0_12] : memref<32x128xf32, #tpu.memory_space<vmem>>, vector<32x128xf32>
      tpu.vector_store %arg8[%c0_11, %c0_12], %12 {strides = array<i32>} : memref<32x128xf32, #tpu.memory_space<vmem>>, vector<32x128xf32>,
    } else {
    }
    %c0 = arith.constant 0 : index
    %c0_1 = arith.constant 0 : index
    %3 = vector.load %arg8[%c0, %c0_1] : memref<32x128xf32, #tpu.memory_space<vmem>>, vector<32x128xf32>
    %c0_2 = arith.constant 0 : index
    %c0_3 = arith.constant 0 : index
    %4 = vector.load %arg3[%c0_2, %c0_3] : memref<32x128xbf16, #tpu.memory_space<vmem>>, vector<32x128xbf16>
    %c0_4 = arith.constant 0 : index
    %c0_5 = arith.constant 0 : index
    %5 = vector.load %arg4[%c0_4, %c0_5] : memref<128x128xbf16, #tpu.memory_space<vmem>>, vector<128x128xbf16>
    %cst = arith.constant dense<0.000000e+00> : vector<32x128xf32>
    %6 = tpu.matmul %4, %5, %cst {dimension_numbers = #tpu.dot_dimension_numbers<[1], [0], [0], [1], [0, 0, 1, 1], [], []>} : vector<32x128xbf16>, vector<128x128xbf16>, vector<32x128xf32> -> vector<32x128xf32>
    %7 = arith.addf %3, %6 : vector<32x128xf32>
    %c0_6 = arith.constant 0 : index
    %c0_7 = arith.constant 0 : index
    %8 = vector.load %arg8[%c0_6, %c0_7] : memref<32x128xf32, #tpu.memory_space<vmem>>, vector<32x128xf32>
    tpu.vector_store %arg8[%c0_6, %c0_7], %7 {strides = array<i32>} : memref<32x128xf32, #tpu.memory_space<vmem>>, vector<32x128xf32>,
    %c0_i32_8 = arith.constant 0 : i32
    %9 = arith.cmpi eq, %arg2, %c0_i32_8 : i32
    %10 = arith.extui %9 : i1 to i32
    %c0_i32_9 = arith.constant 0 : i32
    %11 = arith.cmpi ne, %10, %c0_i32_9 : i32
    scf.if %11 {
      %c0_10 = arith.constant 0 : index
      %c0_11 = arith.constant 0 : index
      %12 = vector.load %arg8[%c0_10, %c0_11] : memref<32x128xf32, #tpu.memory_space<vmem>>, vector<32x128xf32>
      %c0_12 = arith.constant 0 : index
      %c0_13 = arith.constant 0 : index
      %13 = vector.load %arg5[%c0_12, %c0_13] : memref<1x128xf32, #tpu.memory_space<vmem>>, vector<1x128xf32>
      %14 = vector.broadcast %13 : vector<1x128xf32> to vector<32x128xf32>
      %15 = arith.mulf %12, %14 : vector<32x128xf32>
      %c0_14 = arith.constant 0 : index
      %c0_15 = arith.constant 0 : index
      %16 = vector.load %arg6[%c0_14, %c0_15] : memref<1x128xf32, #tpu.memory_space<vmem>>, vector<1x128xf32>
      %17 = vector.broadcast %16 : vector<1x128xf32> to vector<32x128xf32>
      %18 = arith.addf %15, %17 : vector<32x128xf32>
      %19 = arith.truncf %18 : vector<32x128xf32> to vector<32x128xbf16>
      %c0_16 = arith.constant 0 : index
      %c0_17 = arith.constant 0 : index
      %20 = vector.load %arg7[%c0_16, %c0_17] : memref<32x128xbf16, #tpu.memory_space<vmem>>, vector<32x128xbf16>
      tpu.vector_store %arg7[%c0_16, %c0_17], %19 {strides = array<i32>} : memref<32x128xbf16, #tpu.memory_space<vmem>>, vector<32x128xbf16>,
    } else {
    }
    return
  }
  func.func @transform_0(%arg0: i32, %arg1: i32, %arg2: i32) -> (i32, i32) {
    %c0_i32 = arith.constant 0 : i32
    return %arg0, %arg2 : i32, i32
  }
  func.func @transform_1(%arg0: i32, %arg1: i32, %arg2: i32) -> (i32, i32) {
    %c0_i32 = arith.constant 0 : i32
    return %arg2, %arg1 : i32, i32
  }
  func.func @transform_2(%arg0: i32, %arg1: i32, %arg2: i32) -> (i32, i32) {
    %c0_i32 = arith.constant 0 : i32
    %c0_i32_0 = arith.constant 0 : i32
    return %c0_i32, %arg1 : i32, i32
  }
  func.func @transform_3(%arg0: i32, %arg1: i32, %arg2: i32) -> (i32, i32) {
    %c0_i32 = arith.constant 0 : i32
    %c0_i32_0 = arith.constant 0 : i32
    return %c0_i32, %arg1 : i32, i32
  }
  func.func @transform_4(%arg0: i32, %arg1: i32, %arg2: i32) -> (i32, i32) {
    %c0_i32 = arith.constant 0 : i32
    return %arg0, %arg1 : i32, i32
  }
}

module attributes {stable_mosaic.version = 11 : i64} {
  func.func @_mm_bn_res_act_kernel(%arg0: i32, %arg1: i32, %arg2: i32, %arg3: memref<32x384xbf16, #tpu.memory_space<vmem>>, %arg4: memref<384x128xbf16, #tpu.memory_space<vmem>>, %arg5: memref<1x128xf32, #tpu.memory_space<vmem>>, %arg6: memref<1x128xf32, #tpu.memory_space<vmem>>, %arg7: memref<32x128xbf16, #tpu.memory_space<vmem>>, %arg8: memref<32x128xbf16, #tpu.memory_space<vmem>>, %arg9: memref<32x128xf32, #tpu.memory_space<vmem>>) attributes {dimension_semantics = [#tpu.dimension_semantics<parallel>, #tpu.dimension_semantics<parallel>, #tpu.dimension_semantics<arbitrary>], iteration_bounds = array<i64: 1, 1, 3>, scalar_prefetch = 0 : i64, scratch_operands = 1 : i64, tpu.core_type = #tpu.core_type<tc>, window_params = [{transform_indices = @transform_0, window_bounds = array<i64: 32, 384>}, {transform_indices = @transform_1, window_bounds = array<i64: 384, 128>}, {transform_indices = @transform_2, window_bounds = array<i64: 1, 128>}, {transform_indices = @transform_3, window_bounds = array<i64: 1, 128>}, {transform_indices = @transform_4, window_bounds = array<i64: 32, 128>}, {transform_indices = @transform_5, window_bounds = array<i64: 32, 128>}]} {
    %c0_i32 = arith.constant 0 : i32
    %0 = arith.cmpi eq, %arg2, %c0_i32 : i32
    %1 = arith.extui %0 : i1 to i32
    %c0_i32_0 = arith.constant 0 : i32
    %2 = arith.cmpi ne, %1, %c0_i32_0 : i32
    scf.if %2 {
      %cst_9 = arith.constant 0.000000e+00 : f32
      %12 = vector.broadcast %cst_9 : f32 to vector<32x128xf32>
      %c0_10 = arith.constant 0 : index
      %c0_11 = arith.constant 0 : index
      %13 = vector.load %arg9[%c0_10, %c0_11] : memref<32x128xf32, #tpu.memory_space<vmem>>, vector<32x128xf32>
      tpu.vector_store %arg9[%c0_10, %c0_11], %12 {strides = array<i32>} : memref<32x128xf32, #tpu.memory_space<vmem>>, vector<32x128xf32>,
    } else {
    }
    %c0 = arith.constant 0 : index
    %c0_1 = arith.constant 0 : index
    %3 = vector.load %arg9[%c0, %c0_1] : memref<32x128xf32, #tpu.memory_space<vmem>>, vector<32x128xf32>
    %c0_2 = arith.constant 0 : index
    %c0_3 = arith.constant 0 : index
    %4 = vector.load %arg3[%c0_2, %c0_3] : memref<32x384xbf16, #tpu.memory_space<vmem>>, vector<32x384xbf16>
    %c0_4 = arith.constant 0 : index
    %c0_5 = arith.constant 0 : index
    %5 = vector.load %arg4[%c0_4, %c0_5] : memref<384x128xbf16, #tpu.memory_space<vmem>>, vector<384x128xbf16>
    %cst = arith.constant dense<0.000000e+00> : vector<32x128xf32>
    %6 = tpu.matmul %4, %5, %cst {dimension_numbers = #tpu.dot_dimension_numbers<[1], [0], [0], [1], [0, 0, 1, 1], [], []>} : vector<32x384xbf16>, vector<384x128xbf16>, vector<32x128xf32> -> vector<32x128xf32>
    %7 = arith.addf %3, %6 : vector<32x128xf32>
    %c0_6 = arith.constant 0 : index
    %c0_7 = arith.constant 0 : index
    %8 = vector.load %arg9[%c0_6, %c0_7] : memref<32x128xf32, #tpu.memory_space<vmem>>, vector<32x128xf32>
    tpu.vector_store %arg9[%c0_6, %c0_7], %7 {strides = array<i32>} : memref<32x128xf32, #tpu.memory_space<vmem>>, vector<32x128xf32>,
    %c2_i32 = arith.constant 2 : i32
    %9 = arith.cmpi eq, %arg2, %c2_i32 : i32
    %10 = arith.extui %9 : i1 to i32
    %c0_i32_8 = arith.constant 0 : i32
    %11 = arith.cmpi ne, %10, %c0_i32_8 : i32
    scf.if %11 {
      %c0_9 = arith.constant 0 : index
      %c0_10 = arith.constant 0 : index
      %12 = vector.load %arg9[%c0_9, %c0_10] : memref<32x128xf32, #tpu.memory_space<vmem>>, vector<32x128xf32>
      %c0_11 = arith.constant 0 : index
      %c0_12 = arith.constant 0 : index
      %13 = vector.load %arg5[%c0_11, %c0_12] : memref<1x128xf32, #tpu.memory_space<vmem>>, vector<1x128xf32>
      %14 = vector.broadcast %13 : vector<1x128xf32> to vector<32x128xf32>
      %15 = arith.mulf %12, %14 : vector<32x128xf32>
      %c0_13 = arith.constant 0 : index
      %c0_14 = arith.constant 0 : index
      %16 = vector.load %arg6[%c0_13, %c0_14] : memref<1x128xf32, #tpu.memory_space<vmem>>, vector<1x128xf32>
      %17 = vector.broadcast %16 : vector<1x128xf32> to vector<32x128xf32>
      %18 = arith.addf %15, %17 : vector<32x128xf32>
      %c0_15 = arith.constant 0 : index
      %c0_16 = arith.constant 0 : index
      %19 = vector.load %arg7[%c0_15, %c0_16] : memref<32x128xbf16, #tpu.memory_space<vmem>>, vector<32x128xbf16>
      %20 = arith.extf %19 : vector<32x128xbf16> to vector<32x128xf32>
      %21 = arith.addf %18, %20 : vector<32x128xf32>
      %cst_17 = arith.constant 0.000000e+00 : f32
      %22 = vector.broadcast %cst_17 : f32 to vector<32x128xf32>
      %23 = arith.maximumf %21, %22 : vector<32x128xf32>
      %24 = arith.truncf %23 : vector<32x128xf32> to vector<32x128xbf16>
      %c0_18 = arith.constant 0 : index
      %c0_19 = arith.constant 0 : index
      %25 = vector.load %arg8[%c0_18, %c0_19] : memref<32x128xbf16, #tpu.memory_space<vmem>>, vector<32x128xbf16>
      tpu.vector_store %arg8[%c0_18, %c0_19], %24 {strides = array<i32>} : memref<32x128xbf16, #tpu.memory_space<vmem>>, vector<32x128xbf16>,
    } else {
    }
    return
  }
  func.func @transform_0(%arg0: i32, %arg1: i32, %arg2: i32) -> (i32, i32) {
    %c0_i32 = arith.constant 0 : i32
    return %arg0, %arg2 : i32, i32
  }
  func.func @transform_1(%arg0: i32, %arg1: i32, %arg2: i32) -> (i32, i32) {
    %c0_i32 = arith.constant 0 : i32
    return %arg2, %arg1 : i32, i32
  }
  func.func @transform_2(%arg0: i32, %arg1: i32, %arg2: i32) -> (i32, i32) {
    %c0_i32 = arith.constant 0 : i32
    %c0_i32_0 = arith.constant 0 : i32
    return %c0_i32, %arg1 : i32, i32
  }
  func.func @transform_3(%arg0: i32, %arg1: i32, %arg2: i32) -> (i32, i32) {
    %c0_i32 = arith.constant 0 : i32
    %c0_i32_0 = arith.constant 0 : i32
    return %c0_i32, %arg1 : i32, i32
  }
  func.func @transform_4(%arg0: i32, %arg1: i32, %arg2: i32) -> (i32, i32) {
    %c0_i32 = arith.constant 0 : i32
    return %arg0, %arg1 : i32, i32
  }
  func.func @transform_5(%arg0: i32, %arg1: i32, %arg2: i32) -> (i32, i32) {
    %c0_i32 = arith.constant 0 : i32
    return %arg0, %arg1 : i32, i32
  }
}

module attributes {stable_mosaic.version = 11 : i64} {
  func.func @_mm_bn_act_kernel(%arg0: i32, %arg1: i32, %arg2: i32, %arg3: memref<16x384xbf16, #tpu.memory_space<vmem>>, %arg4: memref<384x128xbf16, #tpu.memory_space<vmem>>, %arg5: memref<1x128xf32, #tpu.memory_space<vmem>>, %arg6: memref<1x128xf32, #tpu.memory_space<vmem>>, %arg7: memref<16x128xbf16, #tpu.memory_space<vmem>>, %arg8: memref<16x128xf32, #tpu.memory_space<vmem>>) attributes {dimension_semantics = [#tpu.dimension_semantics<parallel>, #tpu.dimension_semantics<parallel>, #tpu.dimension_semantics<arbitrary>], iteration_bounds = array<i64: 1, 1, 3>, scalar_prefetch = 0 : i64, scratch_operands = 1 : i64, tpu.core_type = #tpu.core_type<tc>, window_params = [{transform_indices = @transform_0, window_bounds = array<i64: 16, 384>}, {transform_indices = @transform_1, window_bounds = array<i64: 384, 128>}, {transform_indices = @transform_2, window_bounds = array<i64: 1, 128>}, {transform_indices = @transform_3, window_bounds = array<i64: 1, 128>}, {transform_indices = @transform_4, window_bounds = array<i64: 16, 128>}]} {
    %c0_i32 = arith.constant 0 : i32
    %0 = arith.cmpi eq, %arg2, %c0_i32 : i32
    %1 = arith.extui %0 : i1 to i32
    %c0_i32_0 = arith.constant 0 : i32
    %2 = arith.cmpi ne, %1, %c0_i32_0 : i32
    scf.if %2 {
      %cst_9 = arith.constant 0.000000e+00 : f32
      %12 = vector.broadcast %cst_9 : f32 to vector<16x128xf32>
      %c0_10 = arith.constant 0 : index
      %c0_11 = arith.constant 0 : index
      %13 = vector.load %arg8[%c0_10, %c0_11] : memref<16x128xf32, #tpu.memory_space<vmem>>, vector<16x128xf32>
      tpu.vector_store %arg8[%c0_10, %c0_11], %12 {strides = array<i32>} : memref<16x128xf32, #tpu.memory_space<vmem>>, vector<16x128xf32>,
    } else {
    }
    %c0 = arith.constant 0 : index
    %c0_1 = arith.constant 0 : index
    %3 = vector.load %arg8[%c0, %c0_1] : memref<16x128xf32, #tpu.memory_space<vmem>>, vector<16x128xf32>
    %c0_2 = arith.constant 0 : index
    %c0_3 = arith.constant 0 : index
    %4 = vector.load %arg3[%c0_2, %c0_3] : memref<16x384xbf16, #tpu.memory_space<vmem>>, vector<16x384xbf16>
    %c0_4 = arith.constant 0 : index
    %c0_5 = arith.constant 0 : index
    %5 = vector.load %arg4[%c0_4, %c0_5] : memref<384x128xbf16, #tpu.memory_space<vmem>>, vector<384x128xbf16>
    %cst = arith.constant dense<0.000000e+00> : vector<16x128xf32>
    %6 = tpu.matmul %4, %5, %cst {dimension_numbers = #tpu.dot_dimension_numbers<[1], [0], [0], [1], [0, 0, 1, 1], [], []>} : vector<16x384xbf16>, vector<384x128xbf16>, vector<16x128xf32> -> vector<16x128xf32>
    %7 = arith.addf %3, %6 : vector<16x128xf32>
    %c0_6 = arith.constant 0 : index
    %c0_7 = arith.constant 0 : index
    %8 = vector.load %arg8[%c0_6, %c0_7] : memref<16x128xf32, #tpu.memory_space<vmem>>, vector<16x128xf32>
    tpu.vector_store %arg8[%c0_6, %c0_7], %7 {strides = array<i32>} : memref<16x128xf32, #tpu.memory_space<vmem>>, vector<16x128xf32>,
    %c2_i32 = arith.constant 2 : i32
    %9 = arith.cmpi eq, %arg2, %c2_i32 : i32
    %10 = arith.extui %9 : i1 to i32
    %c0_i32_8 = arith.constant 0 : i32
    %11 = arith.cmpi ne, %10, %c0_i32_8 : i32
    scf.if %11 {
      %c0_9 = arith.constant 0 : index
      %c0_10 = arith.constant 0 : index
      %12 = vector.load %arg8[%c0_9, %c0_10] : memref<16x128xf32, #tpu.memory_space<vmem>>, vector<16x128xf32>
      %c0_11 = arith.constant 0 : index
      %c0_12 = arith.constant 0 : index
      %13 = vector.load %arg5[%c0_11, %c0_12] : memref<1x128xf32, #tpu.memory_space<vmem>>, vector<1x128xf32>
      %14 = vector.broadcast %13 : vector<1x128xf32> to vector<16x128xf32>
      %15 = arith.mulf %12, %14 : vector<16x128xf32>
      %c0_13 = arith.constant 0 : index
      %c0_14 = arith.constant 0 : index
      %16 = vector.load %arg6[%c0_13, %c0_14] : memref<1x128xf32, #tpu.memory_space<vmem>>, vector<1x128xf32>
      %17 = vector.broadcast %16 : vector<1x128xf32> to vector<16x128xf32>
      %18 = arith.addf %15, %17 : vector<16x128xf32>
      %cst_15 = arith.constant 0.000000e+00 : f32
      %19 = vector.broadcast %cst_15 : f32 to vector<16x128xf32>
      %20 = arith.maximumf %18, %19 : vector<16x128xf32>
      %21 = arith.truncf %20 : vector<16x128xf32> to vector<16x128xbf16>
      %c0_16 = arith.constant 0 : index
      %c0_17 = arith.constant 0 : index
      %22 = vector.load %arg7[%c0_16, %c0_17] : memref<16x128xbf16, #tpu.memory_space<vmem>>, vector<16x128xbf16>
      tpu.vector_store %arg7[%c0_16, %c0_17], %21 {strides = array<i32>} : memref<16x128xbf16, #tpu.memory_space<vmem>>, vector<16x128xbf16>,
    } else {
    }
    return
  }
  func.func @transform_0(%arg0: i32, %arg1: i32, %arg2: i32) -> (i32, i32) {
    %c0_i32 = arith.constant 0 : i32
    return %arg0, %arg2 : i32, i32
  }
  func.func @transform_1(%arg0: i32, %arg1: i32, %arg2: i32) -> (i32, i32) {
    %c0_i32 = arith.constant 0 : i32
    return %arg2, %arg1 : i32, i32
  }
  func.func @transform_2(%arg0: i32, %arg1: i32, %arg2: i32) -> (i32, i32) {
    %c0_i32 = arith.constant 0 : i32
    %c0_i32_0 = arith.constant 0 : i32
    return %c0_i32, %arg1 : i32, i32
  }
  func.func @transform_3(%arg0: i32, %arg1: i32, %arg2: i32) -> (i32, i32) {
    %c0_i32 = arith.constant 0 : i32
    %c0_i32_0 = arith.constant 0 : i32
    return %c0_i32, %arg1 : i32, i32
  }
  func.func @transform_4(%arg0: i32, %arg1: i32, %arg2: i32) -> (i32, i32) {
    %c0_i32 = arith.constant 0 : i32
    return %arg0, %arg1 : i32, i32
  }
}

module attributes {stable_mosaic.version = 11 : i64} {
  func.func @_mm_bn_res_act_kernel(%arg0: i32, %arg1: i32, %arg2: i32, %arg3: memref<16x384xbf16, #tpu.memory_space<vmem>>, %arg4: memref<384x128xbf16, #tpu.memory_space<vmem>>, %arg5: memref<1x128xf32, #tpu.memory_space<vmem>>, %arg6: memref<1x128xf32, #tpu.memory_space<vmem>>, %arg7: memref<16x128xbf16, #tpu.memory_space<vmem>>, %arg8: memref<16x128xbf16, #tpu.memory_space<vmem>>, %arg9: memref<16x128xf32, #tpu.memory_space<vmem>>) attributes {dimension_semantics = [#tpu.dimension_semantics<parallel>, #tpu.dimension_semantics<parallel>, #tpu.dimension_semantics<arbitrary>], iteration_bounds = array<i64: 1, 1, 3>, scalar_prefetch = 0 : i64, scratch_operands = 1 : i64, tpu.core_type = #tpu.core_type<tc>, window_params = [{transform_indices = @transform_0, window_bounds = array<i64: 16, 384>}, {transform_indices = @transform_1, window_bounds = array<i64: 384, 128>}, {transform_indices = @transform_2, window_bounds = array<i64: 1, 128>}, {transform_indices = @transform_3, window_bounds = array<i64: 1, 128>}, {transform_indices = @transform_4, window_bounds = array<i64: 16, 128>}, {transform_indices = @transform_5, window_bounds = array<i64: 16, 128>}]} {
    %c0_i32 = arith.constant 0 : i32
    %0 = arith.cmpi eq, %arg2, %c0_i32 : i32
    %1 = arith.extui %0 : i1 to i32
    %c0_i32_0 = arith.constant 0 : i32
    %2 = arith.cmpi ne, %1, %c0_i32_0 : i32
    scf.if %2 {
      %cst_9 = arith.constant 0.000000e+00 : f32
      %12 = vector.broadcast %cst_9 : f32 to vector<16x128xf32>
      %c0_10 = arith.constant 0 : index
      %c0_11 = arith.constant 0 : index
      %13 = vector.load %arg9[%c0_10, %c0_11] : memref<16x128xf32, #tpu.memory_space<vmem>>, vector<16x128xf32>
      tpu.vector_store %arg9[%c0_10, %c0_11], %12 {strides = array<i32>} : memref<16x128xf32, #tpu.memory_space<vmem>>, vector<16x128xf32>,
    } else {
    }
    %c0 = arith.constant 0 : index
    %c0_1 = arith.constant 0 : index
    %3 = vector.load %arg9[%c0, %c0_1] : memref<16x128xf32, #tpu.memory_space<vmem>>, vector<16x128xf32>
    %c0_2 = arith.constant 0 : index
    %c0_3 = arith.constant 0 : index
    %4 = vector.load %arg3[%c0_2, %c0_3] : memref<16x384xbf16, #tpu.memory_space<vmem>>, vector<16x384xbf16>
    %c0_4 = arith.constant 0 : index
    %c0_5 = arith.constant 0 : index
    %5 = vector.load %arg4[%c0_4, %c0_5] : memref<384x128xbf16, #tpu.memory_space<vmem>>, vector<384x128xbf16>
    %cst = arith.constant dense<0.000000e+00> : vector<16x128xf32>
    %6 = tpu.matmul %4, %5, %cst {dimension_numbers = #tpu.dot_dimension_numbers<[1], [0], [0], [1], [0, 0, 1, 1], [], []>} : vector<16x384xbf16>, vector<384x128xbf16>, vector<16x128xf32> -> vector<16x128xf32>
    %7 = arith.addf %3, %6 : vector<16x128xf32>
    %c0_6 = arith.constant 0 : index
    %c0_7 = arith.constant 0 : index
    %8 = vector.load %arg9[%c0_6, %c0_7] : memref<16x128xf32, #tpu.memory_space<vmem>>, vector<16x128xf32>
    tpu.vector_store %arg9[%c0_6, %c0_7], %7 {strides = array<i32>} : memref<16x128xf32, #tpu.memory_space<vmem>>, vector<16x128xf32>,
    %c2_i32 = arith.constant 2 : i32
    %9 = arith.cmpi eq, %arg2, %c2_i32 : i32
    %10 = arith.extui %9 : i1 to i32
    %c0_i32_8 = arith.constant 0 : i32
    %11 = arith.cmpi ne, %10, %c0_i32_8 : i32
    scf.if %11 {
      %c0_9 = arith.constant 0 : index
      %c0_10 = arith.constant 0 : index
      %12 = vector.load %arg9[%c0_9, %c0_10] : memref<16x128xf32, #tpu.memory_space<vmem>>, vector<16x128xf32>
      %c0_11 = arith.constant 0 : index
      %c0_12 = arith.constant 0 : index
      %13 = vector.load %arg5[%c0_11, %c0_12] : memref<1x128xf32, #tpu.memory_space<vmem>>, vector<1x128xf32>
      %14 = vector.broadcast %13 : vector<1x128xf32> to vector<16x128xf32>
      %15 = arith.mulf %12, %14 : vector<16x128xf32>
      %c0_13 = arith.constant 0 : index
      %c0_14 = arith.constant 0 : index
      %16 = vector.load %arg6[%c0_13, %c0_14] : memref<1x128xf32, #tpu.memory_space<vmem>>, vector<1x128xf32>
      %17 = vector.broadcast %16 : vector<1x128xf32> to vector<16x128xf32>
      %18 = arith.addf %15, %17 : vector<16x128xf32>
      %c0_15 = arith.constant 0 : index
      %c0_16 = arith.constant 0 : index
      %19 = vector.load %arg7[%c0_15, %c0_16] : memref<16x128xbf16, #tpu.memory_space<vmem>>, vector<16x128xbf16>
      %20 = arith.extf %19 : vector<16x128xbf16> to vector<16x128xf32>
      %21 = arith.addf %18, %20 : vector<16x128xf32>
      %cst_17 = arith.constant 0.000000e+00 : f32
      %22 = vector.broadcast %cst_17 : f32 to vector<16x128xf32>
      %23 = arith.maximumf %21, %22 : vector<16x128xf32>
      %24 = arith.truncf %23 : vector<16x128xf32> to vector<16x128xbf16>
      %c0_18 = arith.constant 0 : index
      %c0_19 = arith.constant 0 : index
      %25 = vector.load %arg8[%c0_18, %c0_19] : memref<16x128xbf16, #tpu.memory_space<vmem>>, vector<16x128xbf16>
      tpu.vector_store %arg8[%c0_18, %c0_19], %24 {strides = array<i32>} : memref<16x128xbf16, #tpu.memory_space<vmem>>, vector<16x128xbf16>,
    } else {
    }
    return
  }
  func.func @transform_0(%arg0: i32, %arg1: i32, %arg2: i32) -> (i32, i32) {
    %c0_i32 = arith.constant 0 : i32
    return %arg0, %arg2 : i32, i32
  }
  func.func @transform_1(%arg0: i32, %arg1: i32, %arg2: i32) -> (i32, i32) {
    %c0_i32 = arith.constant 0 : i32
    return %arg2, %arg1 : i32, i32
  }
  func.func @transform_2(%arg0: i32, %arg1: i32, %arg2: i32) -> (i32, i32) {
    %c0_i32 = arith.constant 0 : i32
    %c0_i32_0 = arith.constant 0 : i32
    return %c0_i32, %arg1 : i32, i32
  }
  func.func @transform_3(%arg0: i32, %arg1: i32, %arg2: i32) -> (i32, i32) {
    %c0_i32 = arith.constant 0 : i32
    %c0_i32_0 = arith.constant 0 : i32
    return %c0_i32, %arg1 : i32, i32
  }
  func.func @transform_4(%arg0: i32, %arg1: i32, %arg2: i32) -> (i32, i32) {
    %c0_i32 = arith.constant 0 : i32
    return %arg0, %arg1 : i32, i32
  }
  func.func @transform_5(%arg0: i32, %arg1: i32, %arg2: i32) -> (i32, i32) {
    %c0_i32 = arith.constant 0 : i32
    return %arg0, %arg1 : i32, i32
  }
}

module attributes {stable_mosaic.version = 11 : i64} {
  func.func @_mm_bn_act_kernel(%arg0: i32, %arg1: i32, %arg2: i32, %arg3: memref<16x128xbf16, #tpu.memory_space<vmem>>, %arg4: memref<128x128xbf16, #tpu.memory_space<vmem>>, %arg5: memref<1x128xf32, #tpu.memory_space<vmem>>, %arg6: memref<1x128xf32, #tpu.memory_space<vmem>>, %arg7: memref<16x128xbf16, #tpu.memory_space<vmem>>, %arg8: memref<16x128xf32, #tpu.memory_space<vmem>>) attributes {dimension_semantics = [#tpu.dimension_semantics<parallel>, #tpu.dimension_semantics<parallel>, #tpu.dimension_semantics<arbitrary>], iteration_bounds = array<i64: 1, 1, 1>, scalar_prefetch = 0 : i64, scratch_operands = 1 : i64, tpu.core_type = #tpu.core_type<tc>, window_params = [{transform_indices = @transform_0, window_bounds = array<i64: 16, 128>}, {transform_indices = @transform_1, window_bounds = array<i64: 128, 128>}, {transform_indices = @transform_2, window_bounds = array<i64: 1, 128>}, {transform_indices = @transform_3, window_bounds = array<i64: 1, 128>}, {transform_indices = @transform_4, window_bounds = array<i64: 16, 128>}]} {
    %c0_i32 = arith.constant 0 : i32
    %0 = arith.cmpi eq, %arg2, %c0_i32 : i32
    %1 = arith.extui %0 : i1 to i32
    %c0_i32_0 = arith.constant 0 : i32
    %2 = arith.cmpi ne, %1, %c0_i32_0 : i32
    scf.if %2 {
      %cst_10 = arith.constant 0.000000e+00 : f32
      %12 = vector.broadcast %cst_10 : f32 to vector<16x128xf32>
      %c0_11 = arith.constant 0 : index
      %c0_12 = arith.constant 0 : index
      %13 = vector.load %arg8[%c0_11, %c0_12] : memref<16x128xf32, #tpu.memory_space<vmem>>, vector<16x128xf32>
      tpu.vector_store %arg8[%c0_11, %c0_12], %12 {strides = array<i32>} : memref<16x128xf32, #tpu.memory_space<vmem>>, vector<16x128xf32>,
    } else {
    }
    %c0 = arith.constant 0 : index
    %c0_1 = arith.constant 0 : index
    %3 = vector.load %arg8[%c0, %c0_1] : memref<16x128xf32, #tpu.memory_space<vmem>>, vector<16x128xf32>
    %c0_2 = arith.constant 0 : index
    %c0_3 = arith.constant 0 : index
    %4 = vector.load %arg3[%c0_2, %c0_3] : memref<16x128xbf16, #tpu.memory_space<vmem>>, vector<16x128xbf16>
    %c0_4 = arith.constant 0 : index
    %c0_5 = arith.constant 0 : index
    %5 = vector.load %arg4[%c0_4, %c0_5] : memref<128x128xbf16, #tpu.memory_space<vmem>>, vector<128x128xbf16>
    %cst = arith.constant dense<0.000000e+00> : vector<16x128xf32>
    %6 = tpu.matmul %4, %5, %cst {dimension_numbers = #tpu.dot_dimension_numbers<[1], [0], [0], [1], [0, 0, 1, 1], [], []>} : vector<16x128xbf16>, vector<128x128xbf16>, vector<16x128xf32> -> vector<16x128xf32>
    %7 = arith.addf %3, %6 : vector<16x128xf32>
    %c0_6 = arith.constant 0 : index
    %c0_7 = arith.constant 0 : index
    %8 = vector.load %arg8[%c0_6, %c0_7] : memref<16x128xf32, #tpu.memory_space<vmem>>, vector<16x128xf32>
    tpu.vector_store %arg8[%c0_6, %c0_7], %7 {strides = array<i32>} : memref<16x128xf32, #tpu.memory_space<vmem>>, vector<16x128xf32>,
    %c0_i32_8 = arith.constant 0 : i32
    %9 = arith.cmpi eq, %arg2, %c0_i32_8 : i32
    %10 = arith.extui %9 : i1 to i32
    %c0_i32_9 = arith.constant 0 : i32
    %11 = arith.cmpi ne, %10, %c0_i32_9 : i32
    scf.if %11 {
      %c0_10 = arith.constant 0 : index
      %c0_11 = arith.constant 0 : index
      %12 = vector.load %arg8[%c0_10, %c0_11] : memref<16x128xf32, #tpu.memory_space<vmem>>, vector<16x128xf32>
      %c0_12 = arith.constant 0 : index
      %c0_13 = arith.constant 0 : index
      %13 = vector.load %arg5[%c0_12, %c0_13] : memref<1x128xf32, #tpu.memory_space<vmem>>, vector<1x128xf32>
      %14 = vector.broadcast %13 : vector<1x128xf32> to vector<16x128xf32>
      %15 = arith.mulf %12, %14 : vector<16x128xf32>
      %c0_14 = arith.constant 0 : index
      %c0_15 = arith.constant 0 : index
      %16 = vector.load %arg6[%c0_14, %c0_15] : memref<1x128xf32, #tpu.memory_space<vmem>>, vector<1x128xf32>
      %17 = vector.broadcast %16 : vector<1x128xf32> to vector<16x128xf32>
      %18 = arith.addf %15, %17 : vector<16x128xf32>
      %19 = arith.truncf %18 : vector<16x128xf32> to vector<16x128xbf16>
      %c0_16 = arith.constant 0 : index
      %c0_17 = arith.constant 0 : index
      %20 = vector.load %arg7[%c0_16, %c0_17] : memref<16x128xbf16, #tpu.memory_space<vmem>>, vector<16x128xbf16>
      tpu.vector_store %arg7[%c0_16, %c0_17], %19 {strides = array<i32>} : memref<16x128xbf16, #tpu.memory_space<vmem>>, vector<16x128xbf16>,
    } else {
    }
    return
  }
  func.func @transform_0(%arg0: i32, %arg1: i32, %arg2: i32) -> (i32, i32) {
    %c0_i32 = arith.constant 0 : i32
    return %arg0, %arg2 : i32, i32
  }
  func.func @transform_1(%arg0: i32, %arg1: i32, %arg2: i32) -> (i32, i32) {
    %c0_i32 = arith.constant 0 : i32
    return %arg2, %arg1 : i32, i32
  }
  func.func @transform_2(%arg0: i32, %arg1: i32, %arg2: i32) -> (i32, i32) {
    %c0_i32 = arith.constant 0 : i32
    %c0_i32_0 = arith.constant 0 : i32
    return %c0_i32, %arg1 : i32, i32
  }
  func.func @transform_3(%arg0: i32, %arg1: i32, %arg2: i32) -> (i32, i32) {
    %c0_i32 = arith.constant 0 : i32
    %c0_i32_0 = arith.constant 0 : i32
    return %c0_i32, %arg1 : i32, i32
  }
  func.func @transform_4(%arg0: i32, %arg1: i32, %arg2: i32) -> (i32, i32) {
    %c0_i32 = arith.constant 0 : i32
    return %arg0, %arg1 : i32, i32
  }
}

module attributes {stable_mosaic.version = 11 : i64} {
  func.func @_head_kernel(%arg0: memref<2x1x128xbf16, #tpu.memory_space<vmem>>, %arg1: memref<128x128xf32, #tpu.memory_space<vmem>>, %arg2: memref<1x128xf32, #tpu.memory_space<vmem>>, %arg3: memref<2x128xf32, #tpu.memory_space<vmem>>) attributes {dimension_semantics = [], scalar_prefetch = 0 : i64, scratch_operands = 0 : i64, tpu.core_type = #tpu.core_type<tc>} {
    %c0 = arith.constant 0 : index
    %c0_0 = arith.constant 0 : index
    %c0_1 = arith.constant 0 : index
    %0 = vector.load %arg0[%c0, %c0_0, %c0_1] : memref<2x1x128xbf16, #tpu.memory_space<vmem>>, vector<2x1x128xbf16>
    %1 = arith.extf %0 : vector<2x1x128xbf16> to vector<2x1x128xf32>
    %cst = arith.constant dense<0.000000e+00> : vector<2x128xf32>
    %2 = vector.multi_reduction <add>, %1, %cst [1] : vector<2x1x128xf32> to vector<2x128xf32>
    %cst_2 = arith.constant 1.000000e+00 : f32
    %3 = vector.broadcast %cst_2 : f32 to vector<2x128xf32>
    %4 = arith.mulf %2, %3 : vector<2x128xf32>
    %c0_3 = arith.constant 0 : index
    %c0_4 = arith.constant 0 : index
    %5 = vector.load %arg1[%c0_3, %c0_4] : memref<128x128xf32, #tpu.memory_space<vmem>>, vector<128x128xf32>
    %cst_5 = arith.constant dense<0.000000e+00> : vector<2x128xf32>
    %6 = tpu.matmul %4, %5, %cst_5 {dimension_numbers = #tpu.dot_dimension_numbers<[1], [0], [0], [1], [0, 0, 1, 1], [], []>} : vector<2x128xf32>, vector<128x128xf32>, vector<2x128xf32> -> vector<2x128xf32>
    %c0_6 = arith.constant 0 : index
    %c0_7 = arith.constant 0 : index
    %7 = vector.load %arg2[%c0_6, %c0_7] : memref<1x128xf32, #tpu.memory_space<vmem>>, vector<1x128xf32>
    %8 = vector.broadcast %7 : vector<1x128xf32> to vector<2x128xf32>
    %9 = arith.addf %6, %8 : vector<2x128xf32>
    %c0_8 = arith.constant 0 : index
    %c0_9 = arith.constant 0 : index
    %10 = vector.load %arg3[%c0_8, %c0_9] : memref<2x128xf32, #tpu.memory_space<vmem>>, vector<2x128xf32>
    tpu.vector_store %arg3[%c0_8, %c0_9], %9 {strides = array<i32>} : memref<2x128xf32, #tpu.memory_space<vmem>>, vector<2x128xf32>,
    return
  }
}

</mosaic_0001>

<llo_original>
// kernel: flexible_resnet_forward.13
$region0: #{flexible_resnet_forward.13}
  #allocation0 [shape = 'u32[]', space=smem, size = 0x4, offset = 0x4, fixed_abs, tag = 'smem constant byte address 0x4 - core index']
  #allocation1 [shape = 'u32[144,128]{1,0:T(1,128)}', space=vmem, size = 0x12000, scoped, tag = 'internal scratch']
  #allocation2 [shape = 'f32[512,128]{1,0:T(8,128)}', space=vmem, size = 0x40000, scoped, tag = 'scratch operand']
  %s0 = inlined_call_operand.vmem [shape: bf16[512,256], index: 0, kind: input, shape index: {}]
  %s1 = inlined_call_operand.vmem [shape: bf16[256,128], index: 1, kind: input, shape index: {}]
  %s2 = inlined_call_operand.vmem [shape: f32[1,128], index: 2, kind: input, shape index: {}]
  %s3 = inlined_call_operand.vmem [shape: f32[1,128], index: 3, kind: input, shape index: {}]
  %s4 = inlined_call_operand.vmem [shape: bf16[512,128], index: 4, kind: output, shape index: {}]
  %s5 = sld [smem:[#allocation0]]
  $region34: #{flexible_resnet_forward.13} parent=0
    _
  %s7 = ssub.s32 1, %s5
  %s8 = scalar_select 0, %s7, %s5
  // Predicated region
  $region2: #{flexible_resnet_forward.13} parent=0 // pred_check
    _
  $region3: #{flexible_resnet_forward.13} parent=0 // pred_check_branch
    %10 = sbr.rel (0) target = $region5
  $region4: #{flexible_resnet_forward.13} parent=0 // pred_region
    _
  $region5: #{flexible_resnet_forward.13} parent=0 // pred_fallthru
    _
  // Predicated region
  $region6: #{flexible_resnet_forward.13} parent=0 // pred_check
    _
  $region7: #{flexible_resnet_forward.13} parent=0 // pred_check_branch
    %12 = sbr.rel (0) target = $region9
  $region8: #{flexible_resnet_forward.13} parent=0 // pred_region
    _
  $region9: #{flexible_resnet_forward.13} parent=0 // pred_fallthru
    _
  // Predicated region
  $region10: #{flexible_resnet_forward.13} parent=0 // pred_check
    _
  $region11: #{flexible_resnet_forward.13} parent=0 // pred_check_branch
    %14 = sbr.rel (0) target = $region13
  $region12: #{flexible_resnet_forward.13} parent=0 // pred_region
    _
  $region13: #{flexible_resnet_forward.13} parent=0 // pred_fallthru
    _
  // Predicated region
  $region14: #{flexible_resnet_forward.13} parent=0 // pred_check
    _
  $region15: #{flexible_resnet_forward.13} parent=0 // pred_check_branch
    %16 = sbr.rel (0) target = $region17
  $region16: #{flexible_resnet_forward.13} parent=0 // pred_region
    _
  $region17: #{flexible_resnet_forward.13} parent=0 // pred_fallthru
    _
  %p18 = scmp.eq.s32.totalorder 0, 0
  // Predicated region
  $region18: #{flexible_resnet_forward.13} parent=0 // pred_check
    %p19 = pneg %p18
  $region19: #{flexible_resnet_forward.13} parent=0 // pred_check_branch
    %21 = sbr.rel (%p19) target = $region21
  $region20: #{flexible_resnet_forward.13} parent=0 // pred_region
    %22 = vst [vmem:[#allocation2] sm:$0xff] 0.0
    %23 = vst [vmem:[#allocation2 + $0x8] sm:$0xff] 0.0
    %24 = vst [vmem:[#allocation2 + $0x10] sm:$0xff] 0.0
    %25 = vst [vmem:[#allocation2 + $0x18] sm:$0xff] 0.0
    %26 = vst [vmem:[#allocation2 + $0x20] sm:$0xff] 0.0
    %27 = vst [vmem:[#allocation2 + $0x28] sm:$0xff] 0.0
    %28 = vst [vmem:[#allocation2 + $0x30] sm:$0xff] 0.0
    %29 = vst [vmem:[#allocation2 + $0x38] sm:$0xff] 0.0
    %30 = vst [vmem:[#allocation2 + $0x40] sm:$0xff] 0.0
    %31 = vst [vmem:[#allocation2 + $0x48] sm:$0xff] 0.0
    %32 = vst [vmem:[#allocation2 + $0x50] sm:$0xff] 0.0
    %33 = vst [vmem:[#allocation2 + $0x58] sm:$0xff] 0.0
    %34 = vst [vmem:[#allocation2 + $0x60] sm:$0xff] 0.0
    %35 = vst [vmem:[#allocation2 + $0x68] sm:$0xff] 0.0
    %36 = vst [vmem:[#allocation2 + $0x70] sm:$0xff] 0.0
    %37 = vst [vmem:[#allocation2 + $0x78] sm:$0xff] 0.0
    %38 = vst [vmem:[#allocation2 + $0x80] sm:$0xff] 0.0
    %39 = vst [vmem:[#allocation2 + $0x88] sm:$0xff] 0.0
    %40 = vst [vmem:[#allocation2 + $0x90] sm:$0xff] 0.0
    %41 = vst [vmem:[#allocation2 + $0x98] sm:$0xff] 0.0
    %42 = vst [vmem:[#allocation2 + $0xa0] sm:$0xff] 0.0
    %43 = vst [vmem:[#allocation2 + $0xa8] sm:$0xff] 0.0
    %44 = vst [vmem:[#allocation2 + $0xb0] sm:$0xff] 0.0
    %45 = vst [vmem:[#allocation2 + $0xb8] sm:$0xff] 0.0
    %46 = vst [vmem:[#allocation2 + $0xc0] sm:$0xff] 0.0
    %47 = vst [vmem:[#allocation2 + $0xc8] sm:$0xff] 0.0
    %48 = vst [vmem:[#allocation2 + $0xd0] sm:$0xff] 0.0
    %49 = vst [vmem:[#allocation2 + $0xd8] sm:$0xff] 0.0
    %50 = vst [vmem:[#allocation2 + $0xe0] sm:$0xff] 0.0
    %51 = vst [vmem:[#allocation2 + $0xe8] sm:$0xff] 0.0
    %52 = vst [vmem:[#allocation2 + $0xf0] sm:$0xff] 0.0
    %53 = vst [vmem:[#allocation2 + $0xf8] sm:$0xff] 0.0
    %54 = vst [vmem:[#allocation2 + $0x100] sm:$0xff] 0.0
    %55 = vst [vmem:[#allocation2 + $0x108] sm:$0xff] 0.0
    %56 = vst [vmem:[#allocation2 + $0x110] sm:$0xff] 0.0
    %57 = vst [vmem:[#allocation2 + $0x118] sm:$0xff] 0.0
    %58 = vst [vmem:[#allocation2 + $0x120] sm:$0xff] 0.0
    %59 = vst [vmem:[#allocation2 + $0x128] sm:$0xff] 0.0
    %60 = vst [vmem:[#allocation2 + $0x130] sm:$0xff] 0.0
    %61 = vst [vmem:[#allocation2 + $0x138] sm:$0xff] 0.0
    %62 = vst [vmem:[#allocation2 + $0x140] sm:$0xff] 0.0
    %63 = vst [vmem:[#allocation2 + $0x148] sm:$0xff] 0.0
    %64 = vst [vmem:[#allocation2 + $0x150] sm:$0xff] 0.0
    %65 = vst [vmem:[#allocation2 + $0x158] sm:$0xff] 0.0
    %66 = vst [vmem:[#allocation2 + $0x160] sm:$0xff] 0.0
    %67 = vst [vmem:[#allocation2 + $0x168] sm:$0xff] 0.0
    %68 = vst [vmem:[#allocation2 + $0x170] sm:$0xff] 0.0
    %69 = vst [vmem:[#allocation2 + $0x178] sm:$0xff] 0.0
    %70 = vst [vmem:[#allocation2 + $0x180] sm:$0xff] 0.0
    %71 = vst [vmem:[#allocation2 + $0x188] sm:$0xff] 0.0
    %72 = vst [vmem:[#allocation2 + $0x190] sm:$0xff] 0.0
    %73 = vst [vmem:[#allocation2 + $0x198] sm:$0xff] 0.0
    %74 = vst [vmem:[#allocation2 + $0x1a0] sm:$0xff] 0.0
    %75 = vst [vmem:[#allocation2 + $0x1a8] sm:$0xff] 0.0
    %76 = vst [vmem:[#allocation2 + $0x1b0] sm:$0xff] 0.0
    %77 = vst [vmem:[#allocation2 + $0x1b8] sm:$0xff] 0.0
    %78 = vst [vmem:[#allocation2 + $0x1c0] sm:$0xff] 0.0
    %79 = vst [vmem:[#allocation2 + $0x1c8] sm:$0xff] 0.0
    %80 = vst [vmem:[#allocation2 + $0x1d0] sm:$0xff] 0.0
    %81 = vst [vmem:[#allocation2 + $0x1d8] sm:$0xff] 0.0
    %82 = vst [vmem:[#allocation2 + $0x1e0] sm:$0xff] 0.0
    %83 = vst [vmem:[#allocation2 + $0x1e8] sm:$0xff] 0.0
    %84 = vst [vmem:[#allocation2 + $0x1f0] sm:$0xff] 0.0
    %85 = vst [vmem:[#allocation2 + $0x1f8] sm:$0xff] 0.0
  $region21: #{flexible_resnet_forward.13} parent=0 // pred_fallthru
    _
  %v86 = vld [vmem:[#allocation2] sm:$0xff]
  %v87 = vld [vmem:[#allocation2 + $0x8] sm:$0xff]
  %v88 = vld [vmem:[#allocation2 + $0x10] sm:$0xff]
  %v89 = vld [vmem:[#allocation2 + $0x18] sm:$0xff]
  %v90 = vld [vmem:[#allocation2 + $0x20] sm:$0xff]
  %v91 = vld [vmem:[#allocation2 + $0x28] sm:$0xff]
  %v92 = vld [vmem:[#allocation2 + $0x30] sm:$0xff]
  %v93 = vld [vmem:[#allocation2 + $0x38] sm:$0xff]
  %v94 = vld [vmem:[#allocation2 + $0x40] sm:$0xff]
  %v95 = vld [vmem:[#allocation2 + $0x48] sm:$0xff]
  %v96 = vld [vmem:[#allocation2 + $0x50] sm:$0xff]
  %v97 = vld [vmem:[#allocation2 + $0x58] sm:$0xff]
  %v98 = vld [vmem:[#allocation2 + $0x60] sm:$0xff]
  %v99 = vld [vmem:[#allocation2 + $0x68] sm:$0xff]
  %v100 = vld [vmem:[#allocation2 + $0x70] sm:$0xff]
  %v101 = vld [vmem:[#allocation2 + $0x78] sm:$0xff]
  %v102 = vld [vmem:[#allocation2 + $0x80] sm:$0xff]
  %v103 = vld [vmem:[#allocation2 + $0x88] sm:$0xff]
  %v104 = vld [vmem:[#allocation2 + $0x90] sm:$0xff]
  %v105 = vld [vmem:[#allocation2 + $0x98] sm:$0xff]
  %v106 = vld [vmem:[#allocation2 + $0xa0] sm:$0xff]
  %v107 = vld [vmem:[#allocation2 + $0xa8] sm:$0xff]
  %v108 = vld [vmem:[#allocation2 + $0xb0] sm:$0xff]
  %v109 = vld [vmem:[#allocation2 + $0xb8] sm:$0xff]
  %v110 = vld [vmem:[#allocation2 + $0xc0] sm:$0xff]
  %v111 = vld [vmem:[#allocation2 + $0xc8] sm:$0xff]
  %v112 = vld [vmem:[#allocation2 + $0xd0] sm:$0xff]
  %v113 = vld [vmem:[#allocation2 + $0xd8] sm:$0xff]
  %v114 = vld [vmem:[#allocation2 + $0xe0] sm:$0xff]
  %v115 = vld [vmem:[#allocation2 + $0xe8] sm:$0xff]
  %v116 = vld [vmem:[#allocation2 + $0xf0] sm:$0xff]
  %v117 = vld [vmem:[#allocation2 + $0xf8] sm:$0xff]
  %v118 = vld [vmem:[#allocation2 + $0x100] sm:$0xff]
  %v119 = vld [vmem:[#allocation2 + $0x108] sm:$0xff]
  %v120 = vld [vmem:[#allocation2 + $0x110] sm:$0xff]
  %v121 = vld [vmem:[#allocation2 + $0x118] sm:$0xff]
  %v122 = vld [vmem:[#allocation2 + $0x120] sm:$0xff]
  %v123 = vld [vmem:[#allocation2 + $0x128] sm:$0xff]
  %v124 = vld [vmem:[#allocation2 + $0x130] sm:$0xff]
  %v125 = vld [vmem:[#allocation2 + $0x138] sm:$0xff]
  %v126 = vld [vmem:[#allocation2 + $0x140] sm:$0xff]
  %v127 = vld [vmem:[#allocation2 + $0x148] sm:$0xff]
  %v128 = vld [vmem:[#allocation2 + $0x150] sm:$0xff]
  %v129 = vld [vmem:[#allocation2 + $0x158] sm:$0xff]
  %v130 = vld [vmem:[#allocation2 + $0x160] sm:$0xff]
  %v131 = vld [vmem:[#allocation2 + $0x168] sm:$0xff]
  %v132 = vld [vmem:[#allocation2 + $0x170] sm:$0xff]
  %v133 = vld [vmem:[#allocation2 + $0x178] sm:$0xff]
  %v134 = vld [vmem:[#allocation2 + $0x180] sm:$0xff]
  %v135 = vld [vmem:[#allocation2 + $0x188] sm:$0xff]
  %v136 = vld [vmem:[#allocation2 + $0x190] sm:$0xff]
  %v137 = vld [vmem:[#allocation2 + $0x198] sm:$0xff]
  %v138 = vld [vmem:[#allocation2 + $0x1a0] sm:$0xff]
  %v139 = vld [vmem:[#allocation2 + $0x1a8] sm:$0xff]
  %v140 = vld [vmem:[#allocation2 + $0x1b0] sm:$0xff]
  %v141 = vld [vmem:[#allocation2 + $0x1b8] sm:$0xff]
  %v142 = vld [vmem:[#allocation2 + $0x1c0] sm:$0xff]
  %v143 = vld [vmem:[#allocation2 + $0x1c8] sm:$0xff]
  %v144 = vld [vmem:[#allocation2 + $0x1d0] sm:$0xff]
  %v145 = vld [vmem:[#allocation2 + $0x1d8] sm:$0xff]
  %v146 = vld [vmem:[#allocation2 + $0x1e0] sm:$0xff]
  %v147 = vld [vmem:[#allocation2 + $0x1e8] sm:$0xff]
  %v148 = vld [vmem:[#allocation2 + $0x1f0] sm:$0xff]
  %v149 = vld [vmem:[#allocation2 + $0x1f8] sm:$0xff]
  %v150 = vld [vmem:[%s0] sm:$0xff]
  %v151 = vld [vmem:[%s0 + $0x8] sm:$0xff]
  %v152 = vld [vmem:[%s0 + $0x10] sm:$0xff]
  %v153 = vld [vmem:[%s0 + $0x18] sm:$0xff]
  %v154 = vld [vmem:[%s0 + $0x20] sm:$0xff]
  %v155 = vld [vmem:[%s0 + $0x28] sm:$0xff]
  %v156 = vld [vmem:[%s0 + $0x30] sm:$0xff]
  %v157 = vld [vmem:[%s0 + $0x38] sm:$0xff]
  %v158 = vld [vmem:[%s0 + $0x40] sm:$0xff]
  %v159 = vld [vmem:[%s0 + $0x48] sm:$0xff]
  %v160 = vld [vmem:[%s0 + $0x50] sm:$0xff]
  %v161 = vld [vmem:[%s0 + $0x58] sm:$0xff]
  %v162 = vld [vmem:[%s0 + $0x60] sm:$0xff]
  %v163 = vld [vmem:[%s0 + $0x68] sm:$0xff]
  %v164 = vld [vmem:[%s0 + $0x70] sm:$0xff]
  %v165 = vld [vmem:[%s0 + $0x78] sm:$0xff]
  %v166 = vld [vmem:[%s0 + $0x80] sm:$0xff]
  %v167 = vld [vmem:[%s0 + $0x88] sm:$0xff]
  %v168 = vld [vmem:[%s0 + $0x90] sm:$0xff]
  %v169 = vld [vmem:[%s0 + $0x98] sm:$0xff]
  %v170 = vld [vmem:[%s0 + $0xa0] sm:$0xff]
  %v171 = vld [vmem:[%s0 + $0xa8] sm:$0xff]
  %v172 = vld [vmem:[%s0 + $0xb0] sm:$0xff]
  %v173 = vld [vmem:[%s0 + $0xb8] sm:$0xff]
  %v174 = vld [vmem:[%s0 + $0xc0] sm:$0xff]
  %v175 = vld [vmem:[%s0 + $0xc8] sm:$0xff]
  %v176 = vld [vmem:[%s0 + $0xd0] sm:$0xff]
  %v177 = vld [vmem:[%s0 + $0xd8] sm:$0xff]
  %v178 = vld [vmem:[%s0 + $0xe0] sm:$0xff]
  %v179 = vld [vmem:[%s0 + $0xe8] sm:$0xff]
  %v180 = vld [vmem:[%s0 + $0xf0] sm:$0xff]
  %v181 = vld [vmem:[%s0 + $0xf8] sm:$0xff]
  %v182 = vld [vmem:[%s0 + $0x100] sm:$0xff]
  %v183 = vld [vmem:[%s0 + $0x108] sm:$0xff]
  %v184 = vld [vmem:[%s0 + $0x110] sm:$0xff]
  %v185 = vld [vmem:[%s0 + $0x118] sm:$0xff]
  %v186 = vld [vmem:[%s0 + $0x120] sm:$0xff]
  %v187 = vld [vmem:[%s0 + $0x128] sm:$0xff]
  %v188 = vld [vmem:[%s0 + $0x130] sm:$0xff]
  %v189 = vld [vmem:[%s0 + $0x138] sm:$0xff]
  %v190 = vld [vmem:[%s0 + $0x140] sm:$0xff]
  %v191 = vld [vmem:[%s0 + $0x148] sm:$0xff]
  %v192 = vld [vmem:[%s0 + $0x150] sm:$0xff]
  %v193 = vld [vmem:[%s0 + $0x158] sm:$0xff]
  %v194 = vld [vmem:[%s0 + $0x160] sm:$0xff]
  %v195 = vld [vmem:[%s0 + $0x168] sm:$0xff]
  %v196 = vld [vmem:[%s0 + $0x170] sm:$0xff]
  %v197 = vld [vmem:[%s0 + $0x178] sm:$0xff]
  %v198 = vld [vmem:[%s0 + $0x180] sm:$0xff]
  %v199 = vld [vmem:[%s0 + $0x188] sm:$0xff]
  %v200 = vld [vmem:[%s0 + $0x190] sm:$0xff]
  %v201 = vld [vmem:[%s0 + $0x198] sm:$0xff]
  %v202 = vld [vmem:[%s0 + $0x1a0] sm:$0xff]
  %v203 = vld [vmem:[%s0 + $0x1a8] sm:$0xff]
  %v204 = vld [vmem:[%s0 + $0x1b0] sm:$0xff]
  %v205 = vld [vmem:[%s0 + $0x1b8] sm:$0xff]
  %v206 = vld [vmem:[%s0 + $0x1c0] sm:$0xff]
  %v207 = vld [vmem:[%s0 + $0x1c8] sm:$0xff]
  %v208 = vld [vmem:[%s0 + $0x1d0] sm:$0xff]
  %v209 = vld [vmem:[%s0 + $0x1d8] sm:$0xff]
  %v210 = vld [vmem:[%s0 + $0x1e0] sm:$0xff]
  %v211 = vld [vmem:[%s0 + $0x1e8] sm:$0xff]
  %v212 = vld [vmem:[%s0 + $0x1f0] sm:$0xff]
  %v213 = vld [vmem:[%s0 + $0x1f8] sm:$0xff]
  %v214 = vld [vmem:[%s1] sm:$0xf]
  %v215 = vld [vmem:[%s1 + $0x4] sm:$0xf]
  %v216 = vld [vmem:[%s1 + $0x8] sm:$0xf]
  %v217 = vld [vmem:[%s1 + $0xc] sm:$0xf]
  %v218 = vld [vmem:[%s1 + $0x10] sm:$0xf]
  %v219 = vld [vmem:[%s1 + $0x14] sm:$0xf]
  %v220 = vld [vmem:[%s1 + $0x18] sm:$0xf]
  %v221 = vld [vmem:[%s1 + $0x1c] sm:$0xf]
  %v222 = vld [vmem:[%s1 + $0x20] sm:$0xf]
  %v223 = vld [vmem:[%s1 + $0x24] sm:$0xf]
  %v224 = vld [vmem:[%s1 + $0x28] sm:$0xf]
  %v225 = vld [vmem:[%s1 + $0x2c] sm:$0xf]
  %v226 = vld [vmem:[%s1 + $0x30] sm:$0xf]
  %v227 = vld [vmem:[%s1 + $0x34] sm:$0xf]
  %v228 = vld [vmem:[%s1 + $0x38] sm:$0xf]
  %v229 = vld [vmem:[%s1 + $0x3c] sm:$0xf]
  %v230 = vld [vmem:[%s1 + $0x40] sm:$0xf]
  %v231 = vld [vmem:[%s1 + $0x44] sm:$0xf]
  %v232 = vld [vmem:[%s1 + $0x48] sm:$0xf]
  %v233 = vld [vmem:[%s1 + $0x4c] sm:$0xf]
  %v234 = vld [vmem:[%s1 + $0x50] sm:$0xf]
  %v235 = vld [vmem:[%s1 + $0x54] sm:$0xf]
  %v236 = vld [vmem:[%s1 + $0x58] sm:$0xf]
  %v237 = vld [vmem:[%s1 + $0x5c] sm:$0xf]
  %v238 = vld [vmem:[%s1 + $0x60] sm:$0xf]
  %v239 = vld [vmem:[%s1 + $0x64] sm:$0xf]
  %v240 = vld [vmem:[%s1 + $0x68] sm:$0xf]
  %v241 = vld [vmem:[%s1 + $0x6c] sm:$0xf]
  %v242 = vld [vmem:[%s1 + $0x70] sm:$0xf]
  %v243 = vld [vmem:[%s1 + $0x74] sm:$0xf]
  %v244 = vld [vmem:[%s1 + $0x78] sm:$0xf]
  %v245 = vld [vmem:[%s1 + $0x7c] sm:$0xf]
  %v310 = vunpack.c.l.b16 %v150
  %v311 = vunpack.c.h.b16 %v150
  %v312 = vunpack.c.l.b16 %v151
  %v313 = vunpack.c.h.b16 %v151
  %v314 = vunpack.c.l.b16 %v152
  %v315 = vunpack.c.h.b16 %v152
  %v316 = vunpack.c.l.b16 %v153
  %v317 = vunpack.c.h.b16 %v153
  %v318 = vunpack.c.l.b16 %v154
  %v319 = vunpack.c.h.b16 %v154
  %v320 = vunpack.c.l.b16 %v155
  %v321 = vunpack.c.h.b16 %v155
  %v322 = vunpack.c.l.b16 %v156
  %v323 = vunpack.c.h.b16 %v156
  %v324 = vunpack.c.l.b16 %v157
  %v325 = vunpack.c.h.b16 %v157
  %v326 = vunpack.c.l.b16 %v158
  %v327 = vunpack.c.h.b16 %v158
  %v328 = vunpack.c.l.b16 %v159
  %v329 = vunpack.c.h.b16 %v159
  %v330 = vunpack.c.l.b16 %v160
  %v331 = vunpack.c.h.b16 %v160
  %v332 = vunpack.c.l.b16 %v161
  %v333 = vunpack.c.h.b16 %v161
  %v334 = vunpack.c.l.b16 %v162
  %v335 = vunpack.c.h.b16 %v162
  %v336 = vunpack.c.l.b16 %v163
  %v337 = vunpack.c.h.b16 %v163
  %v338 = vunpack.c.l.b16 %v164
  %v339 = vunpack.c.h.b16 %v164
  %v340 = vunpack.c.l.b16 %v165
  %v341 = vunpack.c.h.b16 %v165
  %v342 = vunpack.c.l.b16 %v166
  %v343 = vunpack.c.h.b16 %v166
  %v344 = vunpack.c.l.b16 %v167
  %v345 = vunpack.c.h.b16 %v167
  %v346 = vunpack.c.l.b16 %v168
  %v347 = vunpack.c.h.b16 %v168
  %v348 = vunpack.c.l.b16 %v169
  %v349 = vunpack.c.h.b16 %v169
  %v350 = vunpack.c.l.b16 %v170
  %v351 = vunpack.c.h.b16 %v170
  %v352 = vunpack.c.l.b16 %v171
  %v353 = vunpack.c.h.b16 %v171
  %v354 = vunpack.c.l.b16 %v172
  %v355 = vunpack.c.h.b16 %v172
  %v356 = vunpack.c.l.b16 %v173
  %v357 = vunpack.c.h.b16 %v173
  %v358 = vunpack.c.l.b16 %v174
  %v359 = vunpack.c.h.b16 %v174
  %v360 = vunpack.c.l.b16 %v175
  %v361 = vunpack.c.h.b16 %v175
  %v362 = vunpack.c.l.b16 %v176
  %v363 = vunpack.c.h.b16 %v176
  %v364 = vunpack.c.l.b16 %v177
  %v365 = vunpack.c.h.b16 %v177
  %v366 = vunpack.c.l.b16 %v178
  %v367 = vunpack.c.h.b16 %v178
  %v368 = vunpack.c.l.b16 %v179
  %v369 = vunpack.c.h.b16 %v179
  %v370 = vunpack.c.l.b16 %v180
  %v371 = vunpack.c.h.b16 %v180
  %v372 = vunpack.c.l.b16 %v181
  %v373 = vunpack.c.h.b16 %v181
  %v374 = vunpack.c.l.b16 %v182
  %v375 = vunpack.c.h.b16 %v182
  %v376 = vunpack.c.l.b16 %v183
  %v377 = vunpack.c.h.b16 %v183
  %v378 = vunpack.c.l.b16 %v184
  %v379 = vunpack.c.h.b16 %v184
  %v380 = vunpack.c.l.b16 %v185
  %v381 = vunpack.c.h.b16 %v185
  %v382 = vunpack.c.l.b16 %v186
  %v383 = vunpack.c.h.b16 %v186
  %v384 = vunpack.c.l.b16 %v187
  %v385 = vunpack.c.h.b16 %v187
  %v386 = vunpack.c.l.b16 %v188
  %v387 = vunpack.c.h.b16 %v188
  %v388 = vunpack.c.l.b16 %v189
  %v389 = vunpack.c.h.b16 %v189
  %v390 = vunpack.c.l.b16 %v190
  %v391 = vunpack.c.h.b16 %v190
  %v392 = vunpack.c.l.b16 %v191
  %v393 = vunpack.c.h.b16 %v191
  %v394 = vunpack.c.l.b16 %v192
  %v395 = vunpack.c.h.b16 %v192
  %v396 = vunpack.c.l.b16 %v193
  %v397 = vunpack.c.h.b16 %v193
  %v398 = vunpack.c.l.b16 %v194
  %v399 = vunpack.c.h.b16 %v194
  %v400 = vunpack.c.l.b16 %v195
  %v401 = vunpack.c.h.b16 %v195
  %v402 = vunpack.c.l.b16 %v196
  %v403 = vunpack.c.h.b16 %v196
  %v404 = vunpack.c.l.b16 %v197
  %v405 = vunpack.c.h.b16 %v197
  %v406 = vunpack.c.l.b16 %v198
  %v407 = vunpack.c.h.b16 %v198
  %v408 = vunpack.c.l.b16 %v199
  %v409 = vunpack.c.h.b16 %v199
  %v410 = vunpack.c.l.b16 %v200
  %v411 = vunpack.c.h.b16 %v200
  %v412 = vunpack.c.l.b16 %v201
  %v413 = vunpack.c.h.b16 %v201
  %v414 = vunpack.c.l.b16 %v202
  %v415 = vunpack.c.h.b16 %v202
  %v416 = vunpack.c.l.b16 %v203
  %v417 = vunpack.c.h.b16 %v203
  %v418 = vunpack.c.l.b16 %v204
  %v419 = vunpack.c.h.b16 %v204
  %v420 = vunpack.c.l.b16 %v205
  %v421 = vunpack.c.h.b16 %v205
  %v422 = vunpack.c.l.b16 %v206
  %v423 = vunpack.c.h.b16 %v206
  %v424 = vunpack.c.l.b16 %v207
  %v425 = vunpack.c.h.b16 %v207
  %v426 = vunpack.c.l.b16 %v208
  %v427 = vunpack.c.h.b16 %v208
  %v428 = vunpack.c.l.b16 %v209
  %v429 = vunpack.c.h.b16 %v209
  %v430 = vunpack.c.l.b16 %v210
  %v431 = vunpack.c.h.b16 %v210
  %v432 = vunpack.c.l.b16 %v211
  %v433 = vunpack.c.h.b16 %v211
  %v434 = vunpack.c.l.b16 %v212
  %v435 = vunpack.c.h.b16 %v212
  %v436 = vunpack.c.l.b16 %v213
  %v437 = vunpack.c.h.b16 %v213
  %v438 = vpack.c.b16 %v312, %v310
  %v439 = vpack.c.b16 %v313, %v311
  %v440 = vpack.c.b16 %v316, %v314
  %v441 = vpack.c.b16 %v317, %v315
  %v442 = vpack.c.b16 %v320, %v318
  %v443 = vpack.c.b16 %v321, %v319
  %v444 = vpack.c.b16 %v324, %v322
  %v445 = vpack.c.b16 %v325, %v323
  %v446 = vpack.c.b16 %v328, %v326
  %v447 = vpack.c.b16 %v329, %v327
  %v448 = vpack.c.b16 %v332, %v330
  %v449 = vpack.c.b16 %v333, %v331
  %v450 = vpack.c.b16 %v336, %v334
  %v451 = vpack.c.b16 %v337, %v335
  %v452 = vpack.c.b16 %v340, %v338
  %v453 = vpack.c.b16 %v341, %v339
  %v454 = vpack.c.b16 %v344, %v342
  %v455 = vpack.c.b16 %v345, %v343
  %v456 = vpack.c.b16 %v348, %v346
  %v457 = vpack.c.b16 %v349, %v347
  %v458 = vpack.c.b16 %v352, %v350
  %v459 = vpack.c.b16 %v353, %v351
  %v460 = vpack.c.b16 %v356, %v354
  %v461 = vpack.c.b16 %v357, %v355
  %v462 = vpack.c.b16 %v360, %v358
  %v463 = vpack.c.b16 %v361, %v359
  %v464 = vpack.c.b16 %v364, %v362
  %v465 = vpack.c.b16 %v365, %v363
  %v466 = vpack.c.b16 %v368, %v366
  %v467 = vpack.c.b16 %v369, %v367
  %v468 = vpack.c.b16 %v372, %v370
  %v469 = vpack.c.b16 %v373, %v371
  %v470 = vpack.c.b16 %v376, %v374
  %v471 = vpack.c.b16 %v377, %v375
  %v472 = vpack.c.b16 %v380, %v378
  %v473 = vpack.c.b16 %v381, %v379
  %v474 = vpack.c.b16 %v384, %v382
  %v475 = vpack.c.b16 %v385, %v383
  %v476 = vpack.c.b16 %v388, %v386
  %v477 = vpack.c.b16 %v389, %v387
  %v478 = vpack.c.b16 %v392, %v390
  %v479 = vpack.c.b16 %v393, %v391
  %v480 = vpack.c.b16 %v396, %v394
  %v481 = vpack.c.b16 %v397, %v395
  %v482 = vpack.c.b16 %v400, %v398
  %v483 = vpack.c.b16 %v401, %v399
  %v484 = vpack.c.b16 %v404, %v402
  %v485 = vpack.c.b16 %v405, %v403
  %v486 = vpack.c.b16 %v408, %v406
  %v487 = vpack.c.b16 %v409, %v407
  %v488 = vpack.c.b16 %v412, %v410
  %v489 = vpack.c.b16 %v413, %v411
  %v490 = vpack.c.b16 %v416, %v414
  %v491 = vpack.c.b16 %v417, %v415
  %v492 = vpack.c.b16 %v420, %v418
  %v493 = vpack.c.b16 %v421, %v419
  %v494 = vpack.c.b16 %v424, %v422
  %v495 = vpack.c.b16 %v425, %v423
  %v496 = vpack.c.b16 %v428, %v426
  %v497 = vpack.c.b16 %v429, %v427
  %v498 = vpack.c.b16 %v432, %v430
  %v499 = vpack.c.b16 %v433, %v431
  %v500 = vpack.c.b16 %v436, %v434
  %v501 = vpack.c.b16 %v437, %v435
  %v598 = vunpack.c.l.b16 %v214
  %v599 = vunpack.c.l.b16 %v215
  %v600 = vunpack.c.l.b16 %v216
  %v601 = vunpack.c.l.b16 %v217
  %v602 = vunpack.c.l.b16 %v218
  %v603 = vunpack.c.l.b16 %v219
  %v604 = vunpack.c.l.b16 %v220
  %v605 = vunpack.c.l.b16 %v221
  %v606 = vunpack.c.l.b16 %v222
  %v607 = vunpack.c.l.b16 %v223
  %v608 = vunpack.c.l.b16 %v224
  %v609 = vunpack.c.l.b16 %v225
  %v610 = vunpack.c.l.b16 %v226
  %v611 = vunpack.c.l.b16 %v227
  %v612 = vunpack.c.l.b16 %v228
  %v613 = vunpack.c.l.b16 %v229
  %v614 = vunpack.c.l.b16 %v230
  %v615 = vunpack.c.l.b16 %v231
  %v616 = vunpack.c.l.b16 %v232
  %v617 = vunpack.c.l.b16 %v233
  %v618 = vunpack.c.l.b16 %v234
  %v619 = vunpack.c.l.b16 %v235
  %v620 = vunpack.c.l.b16 %v236
  %v621 = vunpack.c.l.b16 %v237
  %v622 = vunpack.c.l.b16 %v238
  %v623 = vunpack.c.l.b16 %v239
  %v624 = vunpack.c.l.b16 %v240
  %v625 = vunpack.c.l.b16 %v241
  %v626 = vunpack.c.l.b16 %v242
  %v627 = vunpack.c.l.b16 %v243
  %v628 = vunpack.c.l.b16 %v244
  %v629 = vunpack.c.l.b16 %v245
  %v630 = vpack.c.b16 %v599, %v598
  %v631 = vpack.c.b16 %v601, %v600
  %v632 = vpack.c.b16 %v603, %v602
  %v633 = vpack.c.b16 %v605, %v604
  %v634 = vpack.c.b16 %v607, %v606
  %v635 = vpack.c.b16 %v609, %v608
  %v636 = vpack.c.b16 %v611, %v610
  %v637 = vpack.c.b16 %v613, %v612
  %v638 = vpack.c.b16 %v615, %v614
  %v639 = vpack.c.b16 %v617, %v616
  %v640 = vpack.c.b16 %v619, %v618
  %v641 = vpack.c.b16 %v621, %v620
  %v642 = vpack.c.b16 %v623, %v622
  %v643 = vpack.c.b16 %v625, %v624
  %v644 = vpack.c.b16 %v627, %v626
  %v645 = vpack.c.b16 %v629, %v628
  %662 = vmatprep.subr.bf16.mxu0 0
  %663 = vmatpush1.bf16.msra.mxu0 %v630
  %664 = vmatprep.subr.bf16.mxu0 0
  %665 = vmatpush1.bf16.msra.mxu0 %v631
  %666 = vmatprep.subr.bf16.mxu0 0
  %667 = vmatpush1.bf16.msra.mxu0 %v632
  %668 = vmatprep.subr.bf16.mxu0 0
  %669 = vmatpush1.bf16.msra.mxu0 %v633
  %670 = vmatprep.subr.bf16.mxu0 0
  %671 = vmatpush1.bf16.msra.mxu0 %v634
  %672 = vmatprep.subr.bf16.mxu0 0
  %673 = vmatpush1.bf16.msra.mxu0 %v635
  %674 = vmatprep.subr.bf16.mxu0 0
  %675 = vmatpush1.bf16.msra.mxu0 %v636
  %676 = vmatprep.subr.bf16.mxu0 0
  %677 = vmatpush1.bf16.msra.mxu0 %v637
  %678 = vmatprep.subr.bf16.mxu0 0
  %679 = vmatpush1.bf16.msra.mxu0 %v638
  %680 = vmatprep.subr.bf16.mxu0 0
  %681 = vmatpush1.bf16.msra.mxu0 %v639
  %682 = vmatprep.subr.bf16.mxu0 0
  %683 = vmatpush1.bf16.msra.mxu0 %v640
  %684 = vmatprep.subr.bf16.mxu0 0
  %685 = vmatpush1.bf16.msra.mxu0 %v641
  %686 = vmatprep.subr.bf16.mxu0 0
  %687 = vmatpush1.bf16.msra.mxu0 %v642
  %688 = vmatprep.subr.bf16.mxu0 0
  %689 = vmatpush1.bf16.msra.mxu0 %v643
  %690 = vmatprep.subr.bf16.mxu0 0
  %691 = vmatpush1.bf16.msra.mxu0 %v644
  %692 = vmatprep.subr.bf16.mxu0 0
  %693 = vmatpush1.bf16.msra.mxu0 %v645
  %694 = vmatprep.mubr.bf16.mxu0 %v439
  %695 = vmatmul.mubr.bf16.gmra.mrb[0].mxu0 %v438
  %v696 = vpop.f32.mrb[0].mxu0
  %v697 = vadd.f32 0.0, %v696
  %v698 = vpop.f32.mrb[0].mxu0
  %v699 = vpop.f32.mrb[0].mxu0
  %v700 = vadd.f32 0.0, %v699
  %v701 = vpop.f32.mrb[0].mxu0
  %702 = vmatprep.mubr.bf16.mxu0 %v441
  %703 = vmatmul.mubr.bf16.gmra.mrb[0].mxu0 %v440
  %v704 = vpop.f32.mrb[0].mxu0
  %v705 = vadd.f32 0.0, %v704
  %v706 = vpop.f32.mrb[0].mxu0
  %v707 = vpop.f32.mrb[0].mxu0
  %v708 = vadd.f32 0.0, %v707
  %v709 = vpop.f32.mrb[0].mxu0
  %710 = vmatprep.mubr.bf16.mxu0 %v443
  %711 = vmatmul.mubr.bf16.gmra.mrb[0].mxu0 %v442
  %v712 = vpop.f32.mrb[0].mxu0
  %v713 = vadd.f32 0.0, %v712
  %v714 = vpop.f32.mrb[0].mxu0
  %v715 = vpop.f32.mrb[0].mxu0
  %v716 = vadd.f32 0.0, %v715
  %v717 = vpop.f32.mrb[0].mxu0
  %718 = vmatprep.mubr.bf16.mxu0 %v445
  %719 = vmatmul.mubr.bf16.gmra.mrb[0].mxu0 %v444
  %v720 = vpop.f32.mrb[0].mxu0
  %v721 = vadd.f32 0.0, %v720
  %v722 = vpop.f32.mrb[0].mxu0
  %v723 = vpop.f32.mrb[0].mxu0
  %v724 = vadd.f32 0.0, %v723
  %v725 = vpop.f32.mrb[0].mxu0
  %726 = vmatprep.mubr.bf16.mxu0 %v447
  %727 = vmatmul.mubr.bf16.gmra.mrb[0].mxu0 %v446
  %v728 = vpop.f32.mrb[0].mxu0
  %v729 = vadd.f32 0.0, %v728
  %v730 = vpop.f32.mrb[0].mxu0
  %v731 = vpop.f32.mrb[0].mxu0
  %v732 = vadd.f32 0.0, %v731
  %v733 = vpop.f32.mrb[0].mxu0
  %734 = vmatprep.mubr.bf16.mxu0 %v449
  %735 = vmatmul.mubr.bf16.gmra.mrb[0].mxu0 %v448
  %v736 = vpop.f32.mrb[0].mxu0
  %v737 = vadd.f32 0.0, %v736
  %v738 = vpop.f32.mrb[0].mxu0
  %v739 = vpop.f32.mrb[0].mxu0
  %v740 = vadd.f32 0.0, %v739
  %v741 = vpop.f32.mrb[0].mxu0
  %742 = vmatprep.mubr.bf16.mxu0 %v451
  %743 = vmatmul.mubr.bf16.gmra.mrb[0].mxu0 %v450
  %v744 = vpop.f32.mrb[0].mxu0
  %v745 = vadd.f32 0.0, %v744
  %v746 = vpop.f32.mrb[0].mxu0
  %v747 = vpop.f32.mrb[0].mxu0
  %v748 = vadd.f32 0.0, %v747
  %v749 = vpop.f32.mrb[0].mxu0
  %750 = vmatprep.mubr.bf16.mxu0 %v453
  %751 = vmatmul.mubr.bf16.gmra.mrb[0].mxu0 %v452
  %v752 = vpop.f32.mrb[0].mxu0
  %v753 = vadd.f32 0.0, %v752
  %v754 = vpop.f32.mrb[0].mxu0
  %v755 = vpop.f32.mrb[0].mxu0
  %v756 = vadd.f32 0.0, %v755
  %v757 = vpop.f32.mrb[0].mxu0
  %758 = vmatprep.mubr.bf16.mxu0 %v455
  %759 = vmatmul.mubr.bf16.gmra.mrb[0].mxu0 %v454
  %v760 = vpop.f32.mrb[0].mxu0
  %v761 = vadd.f32 0.0, %v760
  %v762 = vpop.f32.mrb[0].mxu0
  %v763 = vpop.f32.mrb[0].mxu0
  %v764 = vadd.f32 0.0, %v763
  %v765 = vpop.f32.mrb[0].mxu0
  %766 = vmatprep.mubr.bf16.mxu0 %v457
  %767 = vmatmul.mubr.bf16.gmra.mrb[0].mxu0 %v456
  %v768 = vpop.f32.mrb[0].mxu0
  %v769 = vadd.f32 0.0, %v768
  %v770 = vpop.f32.mrb[0].mxu0
  %v771 = vpop.f32.mrb[0].mxu0
  %v772 = vadd.f32 0.0, %v771
  %v773 = vpop.f32.mrb[0].mxu0
  %774 = vmatprep.mubr.bf16.mxu0 %v459
  %775 = vmatmul.mubr.bf16.gmra.mrb[0].mxu0 %v458
  %v776 = vpop.f32.mrb[0].mxu0
  %v777 = vadd.f32 0.0, %v776
  %v778 = vpop.f32.mrb[0].mxu0
  %v779 = vpop.f32.mrb[0].mxu0
  %v780 = vadd.f32 0.0, %v779
  %v781 = vpop.f32.mrb[0].mxu0
  %782 = vmatprep.mubr.bf16.mxu0 %v461
  %783 = vmatmul.mubr.bf16.gmra.mrb[0].mxu0 %v460
  %v784 = vpop.f32.mrb[0].mxu0
  %v785 = vadd.f32 0.0, %v784
  %v786 = vpop.f32.mrb[0].mxu0
  %v787 = vpop.f32.mrb[0].mxu0
  %v788 = vadd.f32 0.0, %v787
  %v789 = vpop.f32.mrb[0].mxu0
  %790 = vmatprep.mubr.bf16.mxu0 %v463
  %791 = vmatmul.mubr.bf16.gmra.mrb[0].mxu0 %v462
  %v792 = vpop.f32.mrb[0].mxu0
  %v793 = vadd.f32 0.0, %v792
  %v794 = vpop.f32.mrb[0].mxu0
  %v795 = vpop.f32.mrb[0].mxu0
  %v796 = vadd.f32 0.0, %v795
  %v797 = vpop.f32.mrb[0].mxu0
  %798 = vmatprep.mubr.bf16.mxu0 %v465
  %799 = vmatmul.mubr.bf16.gmra.mrb[0].mxu0 %v464
  %v800 = vpop.f32.mrb[0].mxu0
  %v801 = vadd.f32 0.0, %v800
  %v802 = vpop.f32.mrb[0].mxu0
  %v803 = vpop.f32.mrb[0].mxu0
  %v804 = vadd.f32 0.0, %v803
  %v805 = vpop.f32.mrb[0].mxu0
  %806 = vmatprep.mubr.bf16.mxu0 %v467
  %807 = vmatmul.mubr.bf16.gmra.mrb[0].mxu0 %v466
  %v808 = vpop.f32.mrb[0].mxu0
  %v809 = vadd.f32 0.0, %v808
  %v810 = vpop.f32.mrb[0].mxu0
  %v811 = vpop.f32.mrb[0].mxu0
  %v812 = vadd.f32 0.0, %v811
  %v813 = vpop.f32.mrb[0].mxu0
  %814 = vmatprep.mubr.bf16.mxu0 %v469
  %815 = vmatmul.mubr.bf16.gmra.mrb[0].mxu0 %v468
  %v816 = vpop.f32.mrb[0].mxu0
  %v817 = vadd.f32 0.0, %v816
  %v818 = vpop.f32.mrb[0].mxu0
  %v819 = vpop.f32.mrb[0].mxu0
  %v820 = vadd.f32 0.0, %v819
  %v821 = vpop.f32.mrb[0].mxu0
  %822 = vmatprep.mubr.bf16.mxu0 %v471
  %823 = vmatmul.mubr.bf16.gmra.mrb[0].mxu0 %v470
  %v824 = vpop.f32.mrb[0].mxu0
  %v825 = vadd.f32 0.0, %v824
  %v826 = vpop.f32.mrb[0].mxu0
  %v827 = vpop.f32.mrb[0].mxu0
  %v828 = vadd.f32 0.0, %v827
  %v829 = vpop.f32.mrb[0].mxu0
  %830 = vmatprep.mubr.bf16.mxu0 %v473
  %831 = vmatmul.mubr.bf16.gmra.mrb[0].mxu0 %v472
  %v832 = vpop.f32.mrb[0].mxu0
  %v833 = vadd.f32 0.0, %v832
  %v834 = vpop.f32.mrb[0].mxu0
  %v835 = vpop.f32.mrb[0].mxu0
  %v836 = vadd.f32 0.0, %v835
  %v837 = vpop.f32.mrb[0].mxu0
  %838 = vmatprep.mubr.bf16.mxu0 %v475
  %839 = vmatmul.mubr.bf16.gmra.mrb[0].mxu0 %v474
  %v840 = vpop.f32.mrb[0].mxu0
  %v841 = vadd.f32 0.0, %v840
  %v842 = vpop.f32.mrb[0].mxu0
  %v843 = vpop.f32.mrb[0].mxu0
  %v844 = vadd.f32 0.0, %v843
  %v845 = vpop.f32.mrb[0].mxu0
  %846 = vmatprep.mubr.bf16.mxu0 %v477
  %847 = vmatmul.mubr.bf16.gmra.mrb[0].mxu0 %v476
  %v848 = vpop.f32.mrb[0].mxu0
  %v849 = vadd.f32 0.0, %v848
  %v850 = vpop.f32.mrb[0].mxu0
  %v851 = vpop.f32.mrb[0].mxu0
  %v852 = vadd.f32 0.0, %v851
  %v853 = vpop.f32.mrb[0].mxu0
  %854 = vmatprep.mubr.bf16.mxu0 %v479
  %855 = vmatmul.mubr.bf16.gmra.mrb[0].mxu0 %v478
  %v856 = vpop.f32.mrb[0].mxu0
  %v857 = vadd.f32 0.0, %v856
  %v858 = vpop.f32.mrb[0].mxu0
  %v859 = vpop.f32.mrb[0].mxu0
  %v860 = vadd.f32 0.0, %v859
  %v861 = vpop.f32.mrb[0].mxu0
  %862 = vmatprep.mubr.bf16.mxu0 %v481
  %863 = vmatmul.mubr.bf16.gmra.mrb[0].mxu0 %v480
  %v864 = vpop.f32.mrb[0].mxu0
  %v865 = vadd.f32 0.0, %v864
  %v866 = vpop.f32.mrb[0].mxu0
  %v867 = vpop.f32.mrb[0].mxu0
  %v868 = vadd.f32 0.0, %v867
  %v869 = vpop.f32.mrb[0].mxu0
  %870 = vmatprep.mubr.bf16.mxu0 %v483
  %871 = vmatmul.mubr.bf16.gmra.mrb[0].mxu0 %v482
  %v872 = vpop.f32.mrb[0].mxu0
  %v873 = vadd.f32 0.0, %v872
  %v874 = vpop.f32.mrb[0].mxu0
  %v875 = vpop.f32.mrb[0].mxu0
  %v876 = vadd.f32 0.0, %v875
  %v877 = vpop.f32.mrb[0].mxu0
  %878 = vmatprep.mubr.bf16.mxu0 %v485
  %879 = vmatmul.mubr.bf16.gmra.mrb[0].mxu0 %v484
  %v880 = vpop.f32.mrb[0].mxu0
  %v881 = vadd.f32 0.0, %v880
  %v882 = vpop.f32.mrb[0].mxu0
  %v883 = vpop.f32.mrb[0].mxu0
  %v884 = vadd.f32 0.0, %v883
  %v885 = vpop.f32.mrb[0].mxu0
  %886 = vmatprep.mubr.bf16.mxu0 %v487
  %887 = vmatmul.mubr.bf16.gmra.mrb[0].mxu0 %v486
  %v888 = vpop.f32.mrb[0].mxu0
  %v889 = vadd.f32 0.0, %v888
  %v890 = vpop.f32.mrb[0].mxu0
  %v891 = vpop.f32.mrb[0].mxu0
  %v892 = vadd.f32 0.0, %v891
  %v893 = vpop.f32.mrb[0].mxu0
  %894 = vmatprep.mubr.bf16.mxu0 %v489
  %895 = vmatmul.mubr.bf16.gmra.mrb[0].mxu0 %v488
  %v896 = vpop.f32.mrb[0].mxu0
  %v897 = vadd.f32 0.0, %v896
  %v898 = vpop.f32.mrb[0].mxu0
  %v899 = vpop.f32.mrb[0].mxu0
  %v900 = vadd.f32 0.0, %v899
  %v901 = vpop.f32.mrb[0].mxu0
  %902 = vmatprep.mubr.bf16.mxu0 %v491
  %903 = vmatmul.mubr.bf16.gmra.mrb[0].mxu0 %v490
  %v904 = vpop.f32.mrb[0].mxu0
  %v905 = vadd.f32 0.0, %v904
  %v906 = vpop.f32.mrb[0].mxu0
  %v907 = vpop.f32.mrb[0].mxu0
  %v908 = vadd.f32 0.0, %v907
  %v909 = vpop.f32.mrb[0].mxu0
  %910 = vmatprep.mubr.bf16.mxu0 %v493
  %911 = vmatmul.mubr.bf16.gmra.mrb[0].mxu0 %v492
  %v912 = vpop.f32.mrb[0].mxu0
  %v913 = vadd.f32 0.0, %v912
  %v914 = vpop.f32.mrb[0].mxu0
  %v915 = vpop.f32.mrb[0].mxu0
  %v916 = vadd.f32 0.0, %v915
  %v917 = vpop.f32.mrb[0].mxu0
  %918 = vmatprep.mubr.bf16.mxu0 %v495
  %919 = vmatmul.mubr.bf16.gmra.mrb[0].mxu0 %v494
  %v920 = vpop.f32.mrb[0].mxu0
  %v921 = vadd.f32 0.0, %v920
  %v922 = vpop.f32.mrb[0].mxu0
  %v923 = vpop.f32.mrb[0].mxu0
  %v924 = vadd.f32 0.0, %v923
  %v925 = vpop.f32.mrb[0].mxu0
  %926 = vmatprep.mubr.bf16.mxu0 %v497
  %927 = vmatmul.mubr.bf16.gmra.mrb[0].mxu0 %v496
  %v928 = vpop.f32.mrb[0].mxu0
  %v929 = vadd.f32 0.0, %v928
  %v930 = vpop.f32.mrb[0].mxu0
  %v931 = vpop.f32.mrb[0].mxu0
  %v932 = vadd.f32 0.0, %v931
  %v933 = vpop.f32.mrb[0].mxu0
  %934 = vmatprep.mubr.bf16.mxu0 %v499
  %935 = vmatmul.mubr.bf16.gmra.mrb[0].mxu0 %v498
  %v936 = vpop.f32.mrb[0].mxu0
  %v937 = vadd.f32 0.0, %v936
  %v938 = vpop.f32.mrb[0].mxu0
  %v939 = vpop.f32.mrb[0].mxu0
  %v940 = vadd.f32 0.0, %v939
  %v941 = vpop.f32.mrb[0].mxu0
  %942 = vmatprep.mubr.bf16.mxu0 %v501
  %943 = vmatmul.mubr.bf16.gmra.mrb[0].mxu0 %v500
  %v944 = vpop.f32.mrb[0].mxu0
  %v945 = vadd.f32 0.0, %v944
  %v946 = vpop.f32.mrb[0].mxu0
  %v947 = vpop.f32.mrb[0].mxu0
  %v948 = vadd.f32 0.0, %v947
  %v949 = vpop.f32.mrb[0].mxu0
  %950 = vdwg.mxu0
  %v951 = vadd.f32 %v86, %v697
  %v952 = vadd.f32 %v87, %v700
  %v953 = vadd.f32 %v88, %v705
  %v954 = vadd.f32 %v89, %v708
  %v955 = vadd.f32 %v90, %v713
  %v956 = vadd.f32 %v91, %v716
  %v957 = vadd.f32 %v92, %v721
  %v958 = vadd.f32 %v93, %v724
  %v959 = vadd.f32 %v94, %v729
  %v960 = vadd.f32 %v95, %v732
  %v961 = vadd.f32 %v96, %v737
  %v962 = vadd.f32 %v97, %v740
  %v963 = vadd.f32 %v98, %v745
  %v964 = vadd.f32 %v99, %v748
  %v965 = vadd.f32 %v100, %v753
  %v966 = vadd.f32 %v101, %v756
  %v967 = vadd.f32 %v102, %v761
  %v968 = vadd.f32 %v103, %v764
  %v969 = vadd.f32 %v104, %v769
  %v970 = vadd.f32 %v105, %v772
  %v971 = vadd.f32 %v106, %v777
  %v972 = vadd.f32 %v107, %v780
  %v973 = vadd.f32 %v108, %v785
  %v974 = vadd.f32 %v109, %v788
  %v975 = vadd.f32 %v110, %v793
  %v976 = vadd.f32 %v111, %v796
  %v977 = vadd.f32 %v112, %v801
  %v978 = vadd.f32 %v113, %v804
  %v979 = vadd.f32 %v114, %v809
  %v980 = vadd.f32 %v115, %v812
  %v981 = vadd.f32 %v116, %v817
  %v982 = vadd.f32 %v117, %v820
  %v983 = vadd.f32 %v118, %v825
  %v984 = vadd.f32 %v119, %v828
  %v985 = vadd.f32 %v120, %v833
  %v986 = vadd.f32 %v121, %v836
  %v987 = vadd.f32 %v122, %v841
  %v988 = vadd.f32 %v123, %v844
  %v989 = vadd.f32 %v124, %v849
  %v990 = vadd.f32 %v125, %v852
  %v991 = vadd.f32 %v126, %v857
  %v992 = vadd.f32 %v127, %v860
  %v993 = vadd.f32 %v128, %v865
  %v994 = vadd.f32 %v129, %v868
  %v995 = vadd.f32 %v130, %v873
  %v996 = vadd.f32 %v131, %v876
  %v997 = vadd.f32 %v132, %v881
  %v998 = vadd.f32 %v133, %v884
  %v999 = vadd.f32 %v134, %v889
  %v1000 = vadd.f32 %v135, %v892
  %v1001 = vadd.f32 %v136, %v897
  %v1002 = vadd.f32 %v137, %v900
  %v1003 = vadd.f32 %v138, %v905
  %v1004 = vadd.f32 %v139, %v908
  %v1005 = vadd.f32 %v140, %v913
  %v1006 = vadd.f32 %v141, %v916
  %v1007 = vadd.f32 %v142, %v921
  %v1008 = vadd.f32 %v143, %v924
  %v1009 = vadd.f32 %v144, %v929
  %v1010 = vadd.f32 %v145, %v932
  %v1011 = vadd.f32 %v146, %v937
  %v1012 = vadd.f32 %v147, %v940
  %v1013 = vadd.f32 %v148, %v945
  %v1014 = vadd.f32 %v149, %v948
  %1015 = vst [vmem:[#allocation2] sm:$0xff] %v951
  %1016 = vst [vmem:[#allocation2 + $0x8] sm:$0xff] %v952
  %1017 = vst [vmem:[#allocation2 + $0x10] sm:$0xff] %v953
  %1018 = vst [vmem:[#allocation2 + $0x18] sm:$0xff] %v954
  %1019 = vst [vmem:[#allocation2 + $0x20] sm:$0xff] %v955
  %1020 = vst [vmem:[#allocation2 + $0x28] sm:$0xff] %v956
  %1021 = vst [vmem:[#allocation2 + $0x30] sm:$0xff] %v957
  %1022 = vst [vmem:[#allocation2 + $0x38] sm:$0xff] %v958
  %1023 = vst [vmem:[#allocation2 + $0x40] sm:$0xff] %v959
  %1024 = vst [vmem:[#allocation2 + $0x48] sm:$0xff] %v960
  %1025 = vst [vmem:[#allocation2 + $0x50] sm:$0xff] %v961
  %1026 = vst [vmem:[#allocation2 + $0x58] sm:$0xff] %v962
  %1027 = vst [vmem:[#allocation2 + $0x60] sm:$0xff] %v963
  %1028 = vst [vmem:[#allocation2 + $0x68] sm:$0xff] %v964
  %1029 = vst [vmem:[#allocation2 + $0x70] sm:$0xff] %v965
  %1030 = vst [vmem:[#allocation2 + $0x78] sm:$0xff] %v966
  %1031 = vst [vmem:[#allocation2 + $0x80] sm:$0xff] %v967
  %1032 = vst [vmem:[#allocation2 + $0x88] sm:$0xff] %v968
  %1033 = vst [vmem:[#allocation2 + $0x90] sm:$0xff] %v969
  %1034 = vst [vmem:[#allocation2 + $0x98] sm:$0xff] %v970
  %1035 = vst [vmem:[#allocation2 + $0xa0] sm:$0xff] %v971
  %1036 = vst [vmem:[#allocation2 + $0xa8] sm:$0xff] %v972
  %1037 = vst [vmem:[#allocation2 + $0xb0] sm:$0xff] %v973
  %1038 = vst [vmem:[#allocation2 + $0xb8] sm:$0xff] %v974
  %1039 = vst [vmem:[#allocation2 + $0xc0] sm:$0xff] %v975
  %1040 = vst [vmem:[#allocation2 + $0xc8] sm:$0xff] %v976
  %1041 = vst [vmem:[#allocation2 + $0xd0] sm:$0xff] %v977
  %1042 = vst [vmem:[#allocation2 + $0xd8] sm:$0xff] %v978
  %1043 = vst [vmem:[#allocation2 + $0xe0] sm:$0xff] %v979
  %1044 = vst [vmem:[#allocation2 + $0xe8] sm:$0xff] %v980
  %1045 = vst [vmem:[#allocation2 + $0xf0] sm:$0xff] %v981
  %1046 = vst [vmem:[#allocation2 + $0xf8] sm:$0xff] %v982
  %1047 = vst [vmem:[#allocation2 + $0x100] sm:$0xff] %v983
  %1048 = vst [vmem:[#allocation2 + $0x108] sm:$0xff] %v984
  %1049 = vst [vmem:[#allocation2 + $0x110] sm:$0xff] %v985
  %1050 = vst [vmem:[#allocation2 + $0x118] sm:$0xff] %v986
  %1051 = vst [vmem:[#allocation2 + $0x120] sm:$0xff] %v987
  %1052 = vst [vmem:[#allocation2 + $0x128] sm:$0xff] %v988
  %1053 = vst [vmem:[#allocation2 + $0x130] sm:$0xff] %v989
  %1054 = vst [vmem:[#allocation2 + $0x138] sm:$0xff] %v990
  %1055 = vst [vmem:[#allocation2 + $0x140] sm:$0xff] %v991
  %1056 = vst [vmem:[#allocation2 + $0x148] sm:$0xff] %v992
  %1057 = vst [vmem:[#allocation2 + $0x150] sm:$0xff] %v993
  %1058 = vst [vmem:[#allocation2 + $0x158] sm:$0xff] %v994
  %1059 = vst [vmem:[#allocation2 + $0x160] sm:$0xff] %v995
  %1060 = vst [vmem:[#allocation2 + $0x168] sm:$0xff] %v996
  %1061 = vst [vmem:[#allocation2 + $0x170] sm:$0xff] %v997
  %1062 = vst [vmem:[#allocation2 + $0x178] sm:$0xff] %v998
  %1063 = vst [vmem:[#allocation2 + $0x180] sm:$0xff] %v999
  %1064 = vst [vmem:[#allocation2 + $0x188] sm:$0xff] %v1000
  %1065 = vst [vmem:[#allocation2 + $0x190] sm:$0xff] %v1001
  %1066 = vst [vmem:[#allocation2 + $0x198] sm:$0xff] %v1002
  %1067 = vst [vmem:[#allocation2 + $0x1a0] sm:$0xff] %v1003
  %1068 = vst [vmem:[#allocation2 + $0x1a8] sm:$0xff] %v1004
  %1069 = vst [vmem:[#allocation2 + $0x1b0] sm:$0xff] %v1005
  %1070 = vst [vmem:[#allocation2 + $0x1b8] sm:$0xff] %v1006
  %1071 = vst [vmem:[#allocation2 + $0x1c0] sm:$0xff] %v1007
  %1072 = vst [vmem:[#allocation2 + $0x1c8] sm:$0xff] %v1008
  %1073 = vst [vmem:[#allocation2 + $0x1d0] sm:$0xff] %v1009
  %1074 = vst [vmem:[#allocation2 + $0x1d8] sm:$0xff] %v1010
  %1075 = vst [vmem:[#allocation2 + $0x1e0] sm:$0xff] %v1011
  %1076 = vst [vmem:[#allocation2 + $0x1e8] sm:$0xff] %v1012
  %1077 = vst [vmem:[#allocation2 + $0x1f0] sm:$0xff] %v1013
  %1078 = vst [vmem:[#allocation2 + $0x1f8] sm:$0xff] %v1014
  // Predicated region
  $region22: #{flexible_resnet_forward.13} parent=0 // pred_check
    %p1079 = pneg %p18
  $region23: #{flexible_resnet_forward.13} parent=0 // pred_check_branch
    %1081 = sbr.rel (%p1079) target = $region25
  $region24: #{flexible_resnet_forward.13} parent=0 // pred_region
    %v1082 = vld [vmem:[#allocation2] sm:$0xff]
    %v1083 = vld [vmem:[#allocation2 + $0x8] sm:$0xff]
    %v1084 = vld [vmem:[#allocation2 + $0x10] sm:$0xff]
    %v1085 = vld [vmem:[#allocation2 + $0x18] sm:$0xff]
    %v1086 = vld [vmem:[#allocation2 + $0x20] sm:$0xff]
    %v1087 = vld [vmem:[#allocation2 + $0x28] sm:$0xff]
    %v1088 = vld [vmem:[#allocation2 + $0x30] sm:$0xff]
    %v1089 = vld [vmem:[#allocation2 + $0x38] sm:$0xff]
    %v1090 = vld [vmem:[#allocation2 + $0x40] sm:$0xff]
    %v1091 = vld [vmem:[#allocation2 + $0x48] sm:$0xff]
    %v1092 = vld [vmem:[#allocation2 + $0x50] sm:$0xff]
    %v1093 = vld [vmem:[#allocation2 + $0x58] sm:$0xff]
    %v1094 = vld [vmem:[#allocation2 + $0x60] sm:$0xff]
    %v1095 = vld [vmem:[#allocation2 + $0x68] sm:$0xff]
    %v1096 = vld [vmem:[#allocation2 + $0x70] sm:$0xff]
    %v1097 = vld [vmem:[#allocation2 + $0x78] sm:$0xff]
    %v1098 = vld [vmem:[#allocation2 + $0x80] sm:$0xff]
    %v1099 = vld [vmem:[#allocation2 + $0x88] sm:$0xff]
    %v1100 = vld [vmem:[#allocation2 + $0x90] sm:$0xff]
    %v1101 = vld [vmem:[#allocation2 + $0x98] sm:$0xff]
    %v1102 = vld [vmem:[#allocation2 + $0xa0] sm:$0xff]
    %v1103 = vld [vmem:[#allocation2 + $0xa8] sm:$0xff]
    %v1104 = vld [vmem:[#allocation2 + $0xb0] sm:$0xff]
    %v1105 = vld [vmem:[#allocation2 + $0xb8] sm:$0xff]
    %v1106 = vld [vmem:[#allocation2 + $0xc0] sm:$0xff]
    %v1107 = vld [vmem:[#allocation2 + $0xc8] sm:$0xff]
    %v1108 = vld [vmem:[#allocation2 + $0xd0] sm:$0xff]
    %v1109 = vld [vmem:[#allocation2 + $0xd8] sm:$0xff]
    %v1110 = vld [vmem:[#allocation2 + $0xe0] sm:$0xff]
    %v1111 = vld [vmem:[#allocation2 + $0xe8] sm:$0xff]
    %v1112 = vld [vmem:[#allocation2 + $0xf0] sm:$0xff]
    %v1113 = vld [vmem:[#allocation2 + $0xf8] sm:$0xff]
    %v1114 = vld [vmem:[#allocation2 + $0x100] sm:$0xff]
    %v1115 = vld [vmem:[#allocation2 + $0x108] sm:$0xff]
    %v1116 = vld [vmem:[#allocation2 + $0x110] sm:$0xff]
    %v1117 = vld [vmem:[#allocation2 + $0x118] sm:$0xff]
    %v1118 = vld [vmem:[#allocation2 + $0x120] sm:$0xff]
    %v1119 = vld [vmem:[#allocation2 + $0x128] sm:$0xff]
    %v1120 = vld [vmem:[#allocation2 + $0x130] sm:$0xff]
    %v1121 = vld [vmem:[#allocation2 + $0x138] sm:$0xff]
    %v1122 = vld [vmem:[#allocation2 + $0x140] sm:$0xff]
    %v1123 = vld [vmem:[#allocation2 + $0x148] sm:$0xff]
    %v1124 = vld [vmem:[#allocation2 + $0x150] sm:$0xff]
    %v1125 = vld [vmem:[#allocation2 + $0x158] sm:$0xff]
    %v1126 = vld [vmem:[#allocation2 + $0x160] sm:$0xff]
    %v1127 = vld [vmem:[#allocation2 + $0x168] sm:$0xff]
    %v1128 = vld [vmem:[#allocation2 + $0x170] sm:$0xff]
    %v1129 = vld [vmem:[#allocation2 + $0x178] sm:$0xff]
    %v1130 = vld [vmem:[#allocation2 + $0x180] sm:$0xff]
    %v1131 = vld [vmem:[#allocation2 + $0x188] sm:$0xff]
    %v1132 = vld [vmem:[#allocation2 + $0x190] sm:$0xff]
    %v1133 = vld [vmem:[#allocation2 + $0x198] sm:$0xff]
    %v1134 = vld [vmem:[#allocation2 + $0x1a0] sm:$0xff]
    %v1135 = vld [vmem:[#allocation2 + $0x1a8] sm:$0xff]
    %v1136 = vld [vmem:[#allocation2 + $0x1b0] sm:$0xff]
    %v1137 = vld [vmem:[#allocation2 + $0x1b8] sm:$0xff]
    %v1138 = vld [vmem:[#allocation2 + $0x1c0] sm:$0xff]
    %v1139 = vld [vmem:[#allocation2 + $0x1c8] sm:$0xff]
    %v1140 = vld [vmem:[#allocation2 + $0x1d0] sm:$0xff]
    %v1141 = vld [vmem:[#allocation2 + $0x1d8] sm:$0xff]
    %v1142 = vld [vmem:[#allocation2 + $0x1e0] sm:$0xff]
    %v1143 = vld [vmem:[#allocation2 + $0x1e8] sm:$0xff]
    %v1144 = vld [vmem:[#allocation2 + $0x1f0] sm:$0xff]
    %v1145 = vld [vmem:[#allocation2 + $0x1f8] sm:$0xff]
    %v1146 = vld [vmem:[%s2] sm:$0x1]
    %v1148 = vlaneseq
    %v1149 = vshrl.u32 %v1148, 7
    %v1150 = vsub.s32 0, %v1149
    %v1151 = vrot.slane %v1146, %v1150
    %v1153 = vmul.f32 %v1082, %v1151
    %v1154 = vmul.f32 %v1083, %v1151
    %v1155 = vmul.f32 %v1084, %v1151
    %v1156 = vmul.f32 %v1085, %v1151
    %v1157 = vmul.f32 %v1086, %v1151
    %v1158 = vmul.f32 %v1087, %v1151
    %v1159 = vmul.f32 %v1088, %v1151
    %v1160 = vmul.f32 %v1089, %v1151
    %v1161 = vmul.f32 %v1090, %v1151
    %v1162 = vmul.f32 %v1091, %v1151
    %v1163 = vmul.f32 %v1092, %v1151
    %v1164 = vmul.f32 %v1093, %v1151
    %v1165 = vmul.f32 %v1094, %v1151
    %v1166 = vmul.f32 %v1095, %v1151
    %v1167 = vmul.f32 %v1096, %v1151
    %v1168 = vmul.f32 %v1097, %v1151
    %v1169 = vmul.f32 %v1098, %v1151
    %v1170 = vmul.f32 %v1099, %v1151
    %v1171 = vmul.f32 %v1100, %v1151
    %v1172 = vmul.f32 %v1101, %v1151
    %v1173 = vmul.f32 %v1102, %v1151
    %v1174 = vmul.f32 %v1103, %v1151
    %v1175 = vmul.f32 %v1104, %v1151
    %v1176 = vmul.f32 %v1105, %v1151
    %v1177 = vmul.f32 %v1106, %v1151
    %v1178 = vmul.f32 %v1107, %v1151
    %v1179 = vmul.f32 %v1108, %v1151
    %v1180 = vmul.f32 %v1109, %v1151
    %v1181 = vmul.f32 %v1110, %v1151
    %v1182 = vmul.f32 %v1111, %v1151
    %v1183 = vmul.f32 %v1112, %v1151
    %v1184 = vmul.f32 %v1113, %v1151
    %v1185 = vmul.f32 %v1114, %v1151
    %v1186 = vmul.f32 %v1115, %v1151
    %v1187 = vmul.f32 %v1116, %v1151
    %v1188 = vmul.f32 %v1117, %v1151
    %v1189 = vmul.f32 %v1118, %v1151
    %v1190 = vmul.f32 %v1119, %v1151
    %v1191 = vmul.f32 %v1120, %v1151
    %v1192 = vmul.f32 %v1121, %v1151
    %v1193 = vmul.f32 %v1122, %v1151
    %v1194 = vmul.f32 %v1123, %v1151
    %v1195 = vmul.f32 %v1124, %v1151
    %v1196 = vmul.f32 %v1125, %v1151
    %v1197 = vmul.f32 %v1126, %v1151
    %v1198 = vmul.f32 %v1127, %v1151
    %v1199 = vmul.f32 %v1128, %v1151
    %v1200 = vmul.f32 %v1129, %v1151
    %v1201 = vmul.f32 %v1130, %v1151
    %v1202 = vmul.f32 %v1131, %v1151
    %v1203 = vmul.f32 %v1132, %v1151
    %v1204 = vmul.f32 %v1133, %v1151
    %v1205 = vmul.f32 %v1134, %v1151
    %v1206 = vmul.f32 %v1135, %v1151
    %v1207 = vmul.f32 %v1136, %v1151
    %v1208 = vmul.f32 %v1137, %v1151
    %v1209 = vmul.f32 %v1138, %v1151
    %v1210 = vmul.f32 %v1139, %v1151
    %v1211 = vmul.f32 %v1140, %v1151
    %v1212 = vmul.f32 %v1141, %v1151
    %v1213 = vmul.f32 %v1142, %v1151
    %v1214 = vmul.f32 %v1143, %v1151
    %v1215 = vmul.f32 %v1144, %v1151
    %v1216 = vmul.f32 %v1145, %v1151
    %v1217 = vld [vmem:[%s3] sm:$0x1]
    %v1219 = vlaneseq
    %v1220 = vshrl.u32 %v1219, 7
    %v1221 = vsub.s32 0, %v1220
    %v1222 = vrot.slane %v1217, %v1221
    %v1224 = vadd.f32 %v1153, %v1222
    %v1225 = vadd.f32 %v1154, %v1222
    %v1226 = vadd.f32 %v1155, %v1222
    %v1227 = vadd.f32 %v1156, %v1222
    %v1228 = vadd.f32 %v1157, %v1222
    %v1229 = vadd.f32 %v1158, %v1222
    %v1230 = vadd.f32 %v1159, %v1222
    %v1231 = vadd.f32 %v1160, %v1222
    %v1232 = vadd.f32 %v1161, %v1222
    %v1233 = vadd.f32 %v1162, %v1222
    %v1234 = vadd.f32 %v1163, %v1222
    %v1235 = vadd.f32 %v1164, %v1222
    %v1236 = vadd.f32 %v1165, %v1222
    %v1237 = vadd.f32 %v1166, %v1222
    %v1238 = vadd.f32 %v1167, %v1222
    %v1239 = vadd.f32 %v1168, %v1222
    %v1240 = vadd.f32 %v1169, %v1222
    %v1241 = vadd.f32 %v1170, %v1222
    %v1242 = vadd.f32 %v1171, %v1222
    %v1243 = vadd.f32 %v1172, %v1222
    %v1244 = vadd.f32 %v1173, %v1222
    %v1245 = vadd.f32 %v1174, %v1222
    %v1246 = vadd.f32 %v1175, %v1222
    %v1247 = vadd.f32 %v1176, %v1222
    %v1248 = vadd.f32 %v1177, %v1222
    %v1249 = vadd.f32 %v1178, %v1222
    %v1250 = vadd.f32 %v1179, %v1222
    %v1251 = vadd.f32 %v1180, %v1222
    %v1252 = vadd.f32 %v1181, %v1222
    %v1253 = vadd.f32 %v1182, %v1222
    %v1254 = vadd.f32 %v1183, %v1222
    %v1255 = vadd.f32 %v1184, %v1222
    %v1256 = vadd.f32 %v1185, %v1222
    %v1257 = vadd.f32 %v1186, %v1222
    %v1258 = vadd.f32 %v1187, %v1222
    %v1259 = vadd.f32 %v1188, %v1222
    %v1260 = vadd.f32 %v1189, %v1222
    %v1261 = vadd.f32 %v1190, %v1222
    %v1262 = vadd.f32 %v1191, %v1222
    %v1263 = vadd.f32 %v1192, %v1222
    %v1264 = vadd.f32 %v1193, %v1222
    %v1265 = vadd.f32 %v1194, %v1222
    %v1266 = vadd.f32 %v1195, %v1222
    %v1267 = vadd.f32 %v1196, %v1222
    %v1268 = vadd.f32 %v1197, %v1222
    %v1269 = vadd.f32 %v1198, %v1222
    %v1270 = vadd.f32 %v1199, %v1222
    %v1271 = vadd.f32 %v1200, %v1222
    %v1272 = vadd.f32 %v1201, %v1222
    %v1273 = vadd.f32 %v1202, %v1222
    %v1274 = vadd.f32 %v1203, %v1222
    %v1275 = vadd.f32 %v1204, %v1222
    %v1276 = vadd.f32 %v1205, %v1222
    %v1277 = vadd.f32 %v1206, %v1222
    %v1278 = vadd.f32 %v1207, %v1222
    %v1279 = vadd.f32 %v1208, %v1222
    %v1280 = vadd.f32 %v1209, %v1222
    %v1281 = vadd.f32 %v1210, %v1222
    %v1282 = vadd.f32 %v1211, %v1222
    %v1283 = vadd.f32 %v1212, %v1222
    %v1284 = vadd.f32 %v1213, %v1222
    %v1285 = vadd.f32 %v1214, %v1222
    %v1286 = vadd.f32 %v1215, %v1222
    %v1287 = vadd.f32 %v1216, %v1222
    %v1288 = vmax.f32 %v1224, 0.0
    %v1289 = vmax.f32 %v1225, 0.0
    %v1290 = vmax.f32 %v1226, 0.0
    %v1291 = vmax.f32 %v1227, 0.0
    %v1292 = vmax.f32 %v1228, 0.0
    %v1293 = vmax.f32 %v1229, 0.0
    %v1294 = vmax.f32 %v1230, 0.0
    %v1295 = vmax.f32 %v1231, 0.0
    %v1296 = vmax.f32 %v1232, 0.0
    %v1297 = vmax.f32 %v1233, 0.0
    %v1298 = vmax.f32 %v1234, 0.0
    %v1299 = vmax.f32 %v1235, 0.0
    %v1300 = vmax.f32 %v1236, 0.0
    %v1301 = vmax.f32 %v1237, 0.0
    %v1302 = vmax.f32 %v1238, 0.0
    %v1303 = vmax.f32 %v1239, 0.0
    %v1304 = vmax.f32 %v1240, 0.0
    %v1305 = vmax.f32 %v1241, 0.0
    %v1306 = vmax.f32 %v1242, 0.0
    %v1307 = vmax.f32 %v1243, 0.0
    %v1308 = vmax.f32 %v1244, 0.0
    %v1309 = vmax.f32 %v1245, 0.0
    %v1310 = vmax.f32 %v1246, 0.0
    %v1311 = vmax.f32 %v1247, 0.0
    %v1312 = vmax.f32 %v1248, 0.0
    %v1313 = vmax.f32 %v1249, 0.0
    %v1314 = vmax.f32 %v1250, 0.0
    %v1315 = vmax.f32 %v1251, 0.0
    %v1316 = vmax.f32 %v1252, 0.0
    %v1317 = vmax.f32 %v1253, 0.0
    %v1318 = vmax.f32 %v1254, 0.0
    %v1319 = vmax.f32 %v1255, 0.0
    %v1320 = vmax.f32 %v1256, 0.0
    %v1321 = vmax.f32 %v1257, 0.0
    %v1322 = vmax.f32 %v1258, 0.0
    %v1323 = vmax.f32 %v1259, 0.0
    %v1324 = vmax.f32 %v1260, 0.0
    %v1325 = vmax.f32 %v1261, 0.0
    %v1326 = vmax.f32 %v1262, 0.0
    %v1327 = vmax.f32 %v1263, 0.0
    %v1328 = vmax.f32 %v1264, 0.0
    %v1329 = vmax.f32 %v1265, 0.0
    %v1330 = vmax.f32 %v1266, 0.0
    %v1331 = vmax.f32 %v1267, 0.0
    %v1332 = vmax.f32 %v1268, 0.0
    %v1333 = vmax.f32 %v1269, 0.0
    %v1334 = vmax.f32 %v1270, 0.0
    %v1335 = vmax.f32 %v1271, 0.0
    %v1336 = vmax.f32 %v1272, 0.0
    %v1337 = vmax.f32 %v1273, 0.0
    %v1338 = vmax.f32 %v1274, 0.0
    %v1339 = vmax.f32 %v1275, 0.0
    %v1340 = vmax.f32 %v1276, 0.0
    %v1341 = vmax.f32 %v1277, 0.0
    %v1342 = vmax.f32 %v1278, 0.0
    %v1343 = vmax.f32 %v1279, 0.0
    %v1344 = vmax.f32 %v1280, 0.0
    %v1345 = vmax.f32 %v1281, 0.0
    %v1346 = vmax.f32 %v1282, 0.0
    %v1347 = vmax.f32 %v1283, 0.0
    %v1348 = vmax.f32 %v1284, 0.0
    %v1349 = vmax.f32 %v1285, 0.0
    %v1350 = vmax.f32 %v1286, 0.0
    %v1351 = vmax.f32 %v1287, 0.0
    %v1352 = vpack.c.bf16 %v1289, %v1288
    %v1353 = vpack.c.bf16 %v1291, %v1290
    %v1354 = vpack.c.bf16 %v1293, %v1292
    %v1355 = vpack.c.bf16 %v1295, %v1294
    %v1356 = vpack.c.bf16 %v1297, %v1296
    %v1357 = vpack.c.bf16 %v1299, %v1298
    %v1358 = vpack.c.bf16 %v1301, %v1300
    %v1359 = vpack.c.bf16 %v1303, %v1302
    %v1360 = vpack.c.bf16 %v1305, %v1304
    %v1361 = vpack.c.bf16 %v1307, %v1306
    %v1362 = vpack.c.bf16 %v1309, %v1308
    %v1363 = vpack.c.bf16 %v1311, %v1310
    %v1364 = vpack.c.bf16 %v1313, %v1312
    %v1365 = vpack.c.bf16 %v1315, %v1314
    %v1366 = vpack.c.bf16 %v1317, %v1316
    %v1367 = vpack.c.bf16 %v1319, %v1318
    %v1368 = vpack.c.bf16 %v1321, %v1320
    %v1369 = vpack.c.bf16 %v1323, %v1322
    %v1370 = vpack.c.bf16 %v1325, %v1324
    %v1371 = vpack.c.bf16 %v1327, %v1326
    %v1372 = vpack.c.bf16 %v1329, %v1328
    %v1373 = vpack.c.bf16 %v1331, %v1330
    %v1374 = vpack.c.bf16 %v1333, %v1332
    %v1375 = vpack.c.bf16 %v1335, %v1334
    %v1376 = vpack.c.bf16 %v1337, %v1336
    %v1377 = vpack.c.bf16 %v1339, %v1338
    %v1378 = vpack.c.bf16 %v1341, %v1340
    %v1379 = vpack.c.bf16 %v1343, %v1342
    %v1380 = vpack.c.bf16 %v1345, %v1344
    %v1381 = vpack.c.bf16 %v1347, %v1346
    %v1382 = vpack.c.bf16 %v1349, %v1348
    %v1383 = vpack.c.bf16 %v1351, %v1350
    %v1416 = vunpack.c.l.b16 %v1352
    %v1417 = vunpack.c.h.b16 %v1352
    %v1418 = vunpack.c.l.b16 %v1353
    %v1419 = vunpack.c.h.b16 %v1353
    %v1420 = vunpack.c.l.b16 %v1354
    %v1421 = vunpack.c.h.b16 %v1354
    %v1422 = vunpack.c.l.b16 %v1355
    %v1423 = vunpack.c.h.b16 %v1355
    %v1424 = vunpack.c.l.b16 %v1356
    %v1425 = vunpack.c.h.b16 %v1356
    %v1426 = vunpack.c.l.b16 %v1357
    %v1427 = vunpack.c.h.b16 %v1357
    %v1428 = vunpack.c.l.b16 %v1358
    %v1429 = vunpack.c.h.b16 %v1358
    %v1430 = vunpack.c.l.b16 %v1359
    %v1431 = vunpack.c.h.b16 %v1359
    %v1432 = vunpack.c.l.b16 %v1360
    %v1433 = vunpack.c.h.b16 %v1360
    %v1434 = vunpack.c.l.b16 %v1361
    %v1435 = vunpack.c.h.b16 %v1361
    %v1436 = vunpack.c.l.b16 %v1362
    %v1437 = vunpack.c.h.b16 %v1362
    %v1438 = vunpack.c.l.b16 %v1363
    %v1439 = vunpack.c.h.b16 %v1363
    %v1440 = vunpack.c.l.b16 %v1364
    %v1441 = vunpack.c.h.b16 %v1364
    %v1442 = vunpack.c.l.b16 %v1365
    %v1443 = vunpack.c.h.b16 %v1365
    %v1444 = vunpack.c.l.b16 %v1366
    %v1445 = vunpack.c.h.b16 %v1366
    %v1446 = vunpack.c.l.b16 %v1367
    %v1447 = vunpack.c.h.b16 %v1367
    %v1448 = vunpack.c.l.b16 %v1368
    %v1449 = vunpack.c.h.b16 %v1368
    %v1450 = vunpack.c.l.b16 %v1369
    %v1451 = vunpack.c.h.b16 %v1369
    %v1452 = vunpack.c.l.b16 %v1370
    %v1453 = vunpack.c.h.b16 %v1370
    %v1454 = vunpack.c.l.b16 %v1371
    %v1455 = vunpack.c.h.b16 %v1371
    %v1456 = vunpack.c.l.b16 %v1372
    %v1457 = vunpack.c.h.b16 %v1372
    %v1458 = vunpack.c.l.b16 %v1373
    %v1459 = vunpack.c.h.b16 %v1373
    %v1460 = vunpack.c.l.b16 %v1374
    %v1461 = vunpack.c.h.b16 %v1374
    %v1462 = vunpack.c.l.b16 %v1375
    %v1463 = vunpack.c.h.b16 %v1375
    %v1464 = vunpack.c.l.b16 %v1376
    %v1465 = vunpack.c.h.b16 %v1376
    %v1466 = vunpack.c.l.b16 %v1377
    %v1467 = vunpack.c.h.b16 %v1377
    %v1468 = vunpack.c.l.b16 %v1378
    %v1469 = vunpack.c.h.b16 %v1378
    %v1470 = vunpack.c.l.b16 %v1379
    %v1471 = vunpack.c.h.b16 %v1379
    %v1472 = vunpack.c.l.b16 %v1380
    %v1473 = vunpack.c.h.b16 %v1380
    %v1474 = vunpack.c.l.b16 %v1381
    %v1475 = vunpack.c.h.b16 %v1381
    %v1476 = vunpack.c.l.b16 %v1382
    %v1477 = vunpack.c.h.b16 %v1382
    %v1478 = vunpack.c.l.b16 %v1383
    %v1479 = vunpack.c.h.b16 %v1383
    %v1480 = vpack.c.b16 %v1416, %v1416
    %v1481 = vpack.c.b16 %v1417, %v1417
    %v1482 = vpack.c.b16 %v1418, %v1418
    %v1483 = vpack.c.b16 %v1419, %v1419
    %v1484 = vpack.c.b16 %v1420, %v1420
    %v1485 = vpack.c.b16 %v1421, %v1421
    %v1486 = vpack.c.b16 %v1422, %v1422
    %v1487 = vpack.c.b16 %v1423, %v1423
    %v1488 = vpack.c.b16 %v1424, %v1424
    %v1489 = vpack.c.b16 %v1425, %v1425
    %v1490 = vpack.c.b16 %v1426, %v1426
    %v1491 = vpack.c.b16 %v1427, %v1427
    %v1492 = vpack.c.b16 %v1428, %v1428
    %v1493 = vpack.c.b16 %v1429, %v1429
    %v1494 = vpack.c.b16 %v1430, %v1430
    %v1495 = vpack.c.b16 %v1431, %v1431
    %v1496 = vpack.c.b16 %v1432, %v1432
    %v1497 = vpack.c.b16 %v1433, %v1433
    %v1498 = vpack.c.b16 %v1434, %v1434
    %v1499 = vpack.c.b16 %v1435, %v1435
    %v1500 = vpack.c.b16 %v1436, %v1436
    %v1501 = vpack.c.b16 %v1437, %v1437
    %v1502 = vpack.c.b16 %v1438, %v1438
    %v1503 = vpack.c.b16 %v1439, %v1439
    %v1504 = vpack.c.b16 %v1440, %v1440
    %v1505 = vpack.c.b16 %v1441, %v1441
    %v1506 = vpack.c.b16 %v1442, %v1442
    %v1507 = vpack.c.b16 %v1443, %v1443
    %v1508 = vpack.c.b16 %v1444, %v1444
    %v1509 = vpack.c.b16 %v1445, %v1445
    %v1510 = vpack.c.b16 %v1446, %v1446
    %v1511 = vpack.c.b16 %v1447, %v1447
    %v1512 = vpack.c.b16 %v1448, %v1448
    %v1513 = vpack.c.b16 %v1449, %v1449
    %v1514 = vpack.c.b16 %v1450, %v1450
    %v1515 = vpack.c.b16 %v1451, %v1451
    %v1516 = vpack.c.b16 %v1452, %v1452
    %v1517 = vpack.c.b16 %v1453, %v1453
    %v1518 = vpack.c.b16 %v1454, %v1454
    %v1519 = vpack.c.b16 %v1455, %v1455
    %v1520 = vpack.c.b16 %v1456, %v1456
    %v1521 = vpack.c.b16 %v1457, %v1457
    %v1522 = vpack.c.b16 %v1458, %v1458
    %v1523 = vpack.c.b16 %v1459, %v1459
    %v1524 = vpack.c.b16 %v1460, %v1460
    %v1525 = vpack.c.b16 %v1461, %v1461
    %v1526 = vpack.c.b16 %v1462, %v1462
    %v1527 = vpack.c.b16 %v1463, %v1463
    %v1528 = vpack.c.b16 %v1464, %v1464
    %v1529 = vpack.c.b16 %v1465, %v1465
    %v1530 = vpack.c.b16 %v1466, %v1466
    %v1531 = vpack.c.b16 %v1467, %v1467
    %v1532 = vpack.c.b16 %v1468, %v1468
    %v1533 = vpack.c.b16 %v1469, %v1469
    %v1534 = vpack.c.b16 %v1470, %v1470
    %v1535 = vpack.c.b16 %v1471, %v1471
    %v1536 = vpack.c.b16 %v1472, %v1472
    %v1537 = vpack.c.b16 %v1473, %v1473
    %v1538 = vpack.c.b16 %v1474, %v1474
    %v1539 = vpack.c.b16 %v1475, %v1475
    %v1540 = vpack.c.b16 %v1476, %v1476
    %v1541 = vpack.c.b16 %v1477, %v1477
    %v1542 = vpack.c.b16 %v1478, %v1478
    %v1543 = vpack.c.b16 %v1479, %v1479
    %1608 = vst [vmem:[%s4] sm:$0xf] %v1480
    %1609 = vst [vmem:[%s4 + $0x4] sm:$0xf] %v1481
    %1610 = vst [vmem:[%s4 + $0x8] sm:$0xf] %v1482
    %1611 = vst [vmem:[%s4 + $0xc] sm:$0xf] %v1483
    %1612 = vst [vmem:[%s4 + $0x10] sm:$0xf] %v1484
    %1613 = vst [vmem:[%s4 + $0x14] sm:$0xf] %v1485
    %1614 = vst [vmem:[%s4 + $0x18] sm:$0xf] %v1486
    %1615 = vst [vmem:[%s4 + $0x1c] sm:$0xf] %v1487
    %1616 = vst [vmem:[%s4 + $0x20] sm:$0xf] %v1488
    %1617 = vst [vmem:[%s4 + $0x24] sm:$0xf] %v1489
    %1618 = vst [vmem:[%s4 + $0x28] sm:$0xf] %v1490
    %1619 = vst [vmem:[%s4 + $0x2c] sm:$0xf] %v1491
    %1620 = vst [vmem:[%s4 + $0x30] sm:$0xf] %v1492
    %1621 = vst [vmem:[%s4 + $0x34] sm:$0xf] %v1493
    %1622 = vst [vmem:[%s4 + $0x38] sm:$0xf] %v1494
    %1623 = vst [vmem:[%s4 + $0x3c] sm:$0xf] %v1495
    %1624 = vst [vmem:[%s4 + $0x40] sm:$0xf] %v1496
    %1625 = vst [vmem:[%s4 + $0x44] sm:$0xf] %v1497
    %1626 = vst [vmem:[%s4 + $0x48] sm:$0xf] %v1498
    %1627 = vst [vmem:[%s4 + $0x4c] sm:$0xf] %v1499
    %1628 = vst [vmem:[%s4 + $0x50] sm:$0xf] %v1500
    %1629 = vst [vmem:[%s4 + $0x54] sm:$0xf] %v1501
    %1630 = vst [vmem:[%s4 + $0x58] sm:$0xf] %v1502
    %1631 = vst [vmem:[%s4 + $0x5c] sm:$0xf] %v1503
    %1632 = vst [vmem:[%s4 + $0x60] sm:$0xf] %v1504
    %1633 = vst [vmem:[%s4 + $0x64] sm:$0xf] %v1505
    %1634 = vst [vmem:[%s4 + $0x68] sm:$0xf] %v1506
    %1635 = vst [vmem:[%s4 + $0x6c] sm:$0xf] %v1507
    %1636 = vst [vmem:[%s4 + $0x70] sm:$0xf] %v1508
    %1637 = vst [vmem:[%s4 + $0x74] sm:$0xf] %v1509
    %1638 = vst [vmem:[%s4 + $0x78] sm:$0xf] %v1510
    %1639 = vst [vmem:[%s4 + $0x7c] sm:$0xf] %v1511
    %1640 = vst [vmem:[%s4 + $0x80] sm:$0xf] %v1512
    %1641 = vst [vmem:[%s4 + $0x84] sm:$0xf] %v1513
    %1642 = vst [vmem:[%s4 + $0x88] sm:$0xf] %v1514
    %1643 = vst [vmem:[%s4 + $0x8c] sm:$0xf] %v1515
    %1644 = vst [vmem:[%s4 + $0x90] sm:$0xf] %v1516
    %1645 = vst [vmem:[%s4 + $0x94] sm:$0xf] %v1517
    %1646 = vst [vmem:[%s4 + $0x98] sm:$0xf] %v1518
    %1647 = vst [vmem:[%s4 + $0x9c] sm:$0xf] %v1519
    %1648 = vst [vmem:[%s4 + $0xa0] sm:$0xf] %v1520
    %1649 = vst [vmem:[%s4 + $0xa4] sm:$0xf] %v1521
    %1650 = vst [vmem:[%s4 + $0xa8] sm:$0xf] %v1522
    %1651 = vst [vmem:[%s4 + $0xac] sm:$0xf] %v1523
    %1652 = vst [vmem:[%s4 + $0xb0] sm:$0xf] %v1524
    %1653 = vst [vmem:[%s4 + $0xb4] sm:$0xf] %v1525
    %1654 = vst [vmem:[%s4 + $0xb8] sm:$0xf] %v1526
    %1655 = vst [vmem:[%s4 + $0xbc] sm:$0xf] %v1527
    %1656 = vst [vmem:[%s4 + $0xc0] sm:$0xf] %v1528
    %1657 = vst [vmem:[%s4 + $0xc4] sm:$0xf] %v1529
    %1658 = vst [vmem:[%s4 + $0xc8] sm:$0xf] %v1530
    %1659 = vst [vmem:[%s4 + $0xcc] sm:$0xf] %v1531
    %1660 = vst [vmem:[%s4 + $0xd0] sm:$0xf] %v1532
    %1661 = vst [vmem:[%s4 + $0xd4] sm:$0xf] %v1533
    %1662 = vst [vmem:[%s4 + $0xd8] sm:$0xf] %v1534
    %1663 = vst [vmem:[%s4 + $0xdc] sm:$0xf] %v1535
    %1664 = vst [vmem:[%s4 + $0xe0] sm:$0xf] %v1536
    %1665 = vst [vmem:[%s4 + $0xe4] sm:$0xf] %v1537
    %1666 = vst [vmem:[%s4 + $0xe8] sm:$0xf] %v1538
    %1667 = vst [vmem:[%s4 + $0xec] sm:$0xf] %v1539
    %1668 = vst [vmem:[%s4 + $0xf0] sm:$0xf] %v1540
    %1669 = vst [vmem:[%s4 + $0xf4] sm:$0xf] %v1541
    %1670 = vst [vmem:[%s4 + $0xf8] sm:$0xf] %v1542
    %1671 = vst [vmem:[%s4 + $0xfc] sm:$0xf] %v1543
  $region25: #{flexible_resnet_forward.13} parent=0 // pred_fallthru
    _
  // Predicated region
  $region26: #{flexible_resnet_forward.13} parent=0 // pred_check
    _
  $region27: #{flexible_resnet_forward.13} parent=0 // pred_check_branch
    %1673 = sbr.rel (0) target = $region29
  $region28: #{flexible_resnet_forward.13} parent=0 // pred_region
    _
  $region29: #{flexible_resnet_forward.13} parent=0 // pred_fallthru
    _
  // Predicated region
  $region30: #{flexible_resnet_forward.13} parent=0 // pred_check
    _
  $region31: #{flexible_resnet_forward.13} parent=0 // pred_check_branch
    %1675 = sbr.rel (0) target = $region33
  $region32: #{flexible_resnet_forward.13} parent=0 // pred_region
    _
  $region33: #{flexible_resnet_forward.13} parent=0 // pred_fallthru
    _

// kernel: flexible_resnet_forward.14
$region0: #{flexible_resnet_forward.14}
  #allocation0 [shape = 'u32[]', space=smem, size = 0x4, offset = 0x4, fixed_abs, tag = 'smem constant byte address 0x4 - core index']
  #allocation1 [shape = 'u32[144,128]{1,0:T(1,128)}', space=vmem, size = 0x12000, scoped, tag = 'internal scratch']
  #allocation2 [shape = 'f32[128,128]{1,0:T(8,128)}', space=vmem, size = 0x10000, scoped, tag = 'scratch operand']
  %s0 = inlined_call_operand.vmem [shape: bf16[128,1152], index: 0, kind: input, shape index: {}]
  %s1 = inlined_call_operand.vmem [shape: bf16[1152,128], index: 1, kind: input, shape index: {}]
  %s2 = inlined_call_operand.vmem [shape: f32[1,128], index: 2, kind: input, shape index: {}]
  %s3 = inlined_call_operand.vmem [shape: f32[1,128], index: 3, kind: input, shape index: {}]
  %s4 = inlined_call_operand.vmem [shape: bf16[128,128], index: 4, kind: output, shape index: {}]
  %s5 = sld [smem:[#allocation0]]
  $region83: #{flexible_resnet_forward.14} parent=0
    _
  %s7 = ssub.s32 1, %s5
  %s8 = scalar_select 0, %s7, %s5
  $region1: #{flexible_resnet_forward.14} parent=0
    #allocation3 [shape = 'u8[196608]{0}', space=vmem, size = 0x30000, scoped, tag = 'input window, operand 0']
    loop: start=0, step=1, limit=5
    $region2: #{flexible_resnet_forward.14} parent=1 // loop_pre_header
      _
    $region3: #{flexible_resnet_forward.14} parent=1 // loop_header
      %s10 = sphi 0, %s14
      %p11 = scmp.ge.s32.totalorder %s10, 5
      %s17 = sphi 0, %s36
      %s18 = sphi 0, %s32
      %s19 = sphi 0, %s28
      %s20 = sphi 0, %s17
      %s21 = sphi 0, %s18
      %s22 = sphi 0, %s19
      %s23 = sphi 0, %s20
      %s24 = sphi 0, %s21
      %s25 = sphi 0, %s22
      %s41 = sphi 0, %s43
      %s44 = sphi 0, %s41
      %s45 = sphi 0, %s44
      %s61 = sphi 0, %s45
      %s69 = sphi 0, %s71
      %s72 = sphi 0, %s69
      %s73 = sphi 0, %s72
      %s89 = sphi 0, %s73
      %s95 = sphi 0, %s97
      %s98 = sphi 0, %s95
      %s99 = sphi 0, %s98
      %s115 = sphi 0, %s99
      %s121 = sphi 0, %s123
      %s124 = sphi 0, %s121
      %s125 = sphi 0, %s124
      %s141 = sphi 0, %s125
      %s149 = sphi 0, %s151
      %s152 = sphi 0, %s149
      %s153 = sphi 0, %s152
      %s169 = sphi 0, %s153
    $region4: #{flexible_resnet_forward.14} parent=1 // loop_header_branch
      %13 = sbr.rel (%p11) target = $region8
    $region5: #{flexible_resnet_forward.14} parent=1 // loop_body
      %s15 = ssub.s32 %s10, 1
      %s16 = ssub.s32 %s10, 2
      %s26 = sadd.s32 1, %s19
      %p27 = scmp.ge.s32.totalorder %s26, 3
      %s28 = scalar_select %p27, 0, %s26
      %s29 = sadd.s32 1, %s18
      %s30 = scalar_select %p27, %s29, %s18
      %p31 = scmp.ge.s32.totalorder %s30, 1
      %s32 = scalar_select %p31, 0, %s30
      %s33 = sadd.s32 1, %s17
      %s34 = scalar_select %p31, %s33, %s17
      %p35 = scmp.ge.s32.totalorder %s34, 1
      %s36 = scalar_select %p35, 0, %s34
      %s37 = ssub.s32 %s17, %s36
      %s38 = ssub.s32 %s19, %s28
      %s39 = sor.u32 %s37, %s38
      %p40 = scmp.eq.s32.totalorder %s39, 0
      %s42 = sadd.s32 %s41, 1
      %s43 = scalar_select %p40, %s41, %s42
      %p46 = pneg %p40
      %p47 = scmp.eq.s32.totalorder %s10, 2
      %p48 = por %p46, %p47
      %p49 = scmp.ne.s32.totalorder %s41, %s44
      %p50 = scmp.eq.s32.totalorder %s10, 0
      %p51 = por %p49, %p50
      %p52 = scmp.ne.s32.totalorder %s41, %s44
      %p53 = scmp.eq.s32.totalorder %s15, 2
      %p54 = por %p52, %p53
      %p55 = scmp.ne.s32.totalorder %s44, %s45
      %p56 = scmp.eq.s32.totalorder %s15, 0
      %p57 = por %p55, %p56
      %p58 = scmp.ne.s32.totalorder %s44, %s45
      %p59 = scmp.eq.s32.totalorder %s16, 2
      %p60 = por %p58, %p59
      %p62 = scmp.ne.s32.totalorder %s45, %s61
      %p63 = scmp.eq.s32.totalorder %s16, 0
      %p64 = por %p62, %p63
      %s65 = ssub.s32 %s19, %s28
      %s66 = ssub.s32 %s18, %s32
      %s67 = sor.u32 %s65, %s66
      %p68 = scmp.eq.s32.totalorder %s67, 0
      %s70 = sadd.s32 %s69, 1
      %s71 = scalar_select %p68, %s69, %s70
      %p74 = pneg %p68
      %p75 = scmp.eq.s32.totalorder %s10, 2
      %p76 = por %p74, %p75
      %p77 = scmp.ne.s32.totalorder %s69, %s72
      %p78 = scmp.eq.s32.totalorder %s10, 0
      %p79 = por %p77, %p78
      %p80 = scmp.ne.s32.totalorder %s69, %s72
      %p81 = scmp.eq.s32.totalorder %s15, 2
      %p82 = por %p80, %p81
      %p83 = scmp.ne.s32.totalorder %s72, %s73
      %p84 = scmp.eq.s32.totalorder %s15, 0
      %p85 = por %p83, %p84
      %p86 = scmp.ne.s32.totalorder %s72, %s73
      %p87 = scmp.eq.s32.totalorder %s16, 2
      %p88 = por %p86, %p87
      %p90 = scmp.ne.s32.totalorder %s73, %s89
      %p91 = scmp.eq.s32.totalorder %s16, 0
      %p92 = por %p90, %p91
      %s93 = ssub.s32 %s18, %s32
      %p94 = scmp.eq.s32.totalorder %s93, 0
      %s96 = sadd.s32 %s95, 1
      %s97 = scalar_select %p94, %s95, %s96
      %p100 = pneg %p94
      %p101 = scmp.eq.s32.totalorder %s10, 2
      %p102 = por %p100, %p101
      %p103 = scmp.ne.s32.totalorder %s95, %s98
      %p104 = scmp.eq.s32.totalorder %s10, 0
      %p105 = por %p103, %p104
      %p106 = scmp.ne.s32.totalorder %s95, %s98
      %p107 = scmp.eq.s32.totalorder %s15, 2
      %p108 = por %p106, %p107
      %p109 = scmp.ne.s32.totalorder %s98, %s99
      %p110 = scmp.eq.s32.totalorder %s15, 0
      %p111 = por %p109, %p110
      %p112 = scmp.ne.s32.totalorder %s98, %s99
      %p113 = scmp.eq.s32.totalorder %s16, 2
      %p114 = por %p112, %p113
      %p116 = scmp.ne.s32.totalorder %s99, %s115
      %p117 = scmp.eq.s32.totalorder %s16, 0
      %p118 = por %p116, %p117
      %s119 = ssub.s32 %s18, %s32
      %p120 = scmp.eq.s32.totalorder %s119, 0
      %s122 = sadd.s32 %s121, 1
      %s123 = scalar_select %p120, %s121, %s122
      %p126 = pneg %p120
      %p127 = scmp.eq.s32.totalorder %s10, 2
      %p128 = por %p126, %p127
      %p129 = scmp.ne.s32.totalorder %s121, %s124
      %p130 = scmp.eq.s32.totalorder %s10, 0
      %p131 = por %p129, %p130
      %p132 = scmp.ne.s32.totalorder %s121, %s124
      %p133 = scmp.eq.s32.totalorder %s15, 2
      %p134 = por %p132, %p133
      %p135 = scmp.ne.s32.totalorder %s124, %s125
      %p136 = scmp.eq.s32.totalorder %s15, 0
      %p137 = por %p135, %p136
      %p138 = scmp.ne.s32.totalorder %s124, %s125
      %p139 = scmp.eq.s32.totalorder %s16, 2
      %p140 = por %p138, %p139
      %p142 = scmp.ne.s32.totalorder %s125, %s141
      %p143 = scmp.eq.s32.totalorder %s16, 0
      %p144 = por %p142, %p143
      %s145 = ssub.s32 %s17, %s36
      %s146 = ssub.s32 %s18, %s32
      %s147 = sor.u32 %s145, %s146
      %p148 = scmp.eq.s32.totalorder %s147, 0
      %s150 = sadd.s32 %s149, 1
      %s151 = scalar_select %p148, %s149, %s150
      %p154 = pneg %p148
      %p155 = scmp.eq.s32.totalorder %s10, 2
      %p156 = por %p154, %p155
      %p157 = scmp.ne.s32.totalorder %s149, %s152
      %p158 = scmp.eq.s32.totalorder %s10, 0
      %p159 = por %p157, %p158
      %p160 = scmp.ne.s32.totalorder %s149, %s152
      %p161 = scmp.eq.s32.totalorder %s15, 2
      %p162 = por %p160, %p161
      %p163 = scmp.ne.s32.totalorder %s152, %s153
      %p164 = scmp.eq.s32.totalorder %s15, 0
      %p165 = por %p163, %p164
      %p166 = scmp.ne.s32.totalorder %s152, %s153
      %p167 = scmp.eq.s32.totalorder %s16, 2
      %p168 = por %p166, %p167
      %p170 = scmp.ne.s32.totalorder %s153, %s169
      %p171 = scmp.eq.s32.totalorder %s16, 0
      %p172 = por %p170, %p171
      %p173 = scmp.le.s32.totalorder 1, %s10
      %p174 = scmp.lt.s32.totalorder %s10, 4
      %p175 = pnand %p173, %p174
      %p176 = pneg %p175
      // Predicated region
      $region9: #{flexible_resnet_forward.14} parent=5 // pred_check
        _
      $region10: #{flexible_resnet_forward.14} parent=5 // pred_check_branch
        %178 = sbr.rel (%p175) target = $region12
      $region11: #{flexible_resnet_forward.14} parent=5 // pred_region
        %s179 = ssub.s32 %s10, 1
        // Predicated region
        $region13: #{flexible_resnet_forward.14} parent=11 // pred_check
          %p180 = pneg %p111
        $region14: #{flexible_resnet_forward.14} parent=11 // pred_check_branch
          %182 = sbr.rel (%p180) target = $region16
        $region15: #{flexible_resnet_forward.14} parent=11 // pred_region
          %p183 = scmp.lt.s32.totalorder %s21, 0
          %s184 = scalar_select %p183, %s21, 0
          %s185 = scalar_lea.vmem %s2, %s184
        $region16: #{flexible_resnet_forward.14} parent=11 // pred_fallthru
          _
        // Predicated region
        $region17: #{flexible_resnet_forward.14} parent=11 // pred_check
          %p186 = pneg %p137
        $region18: #{flexible_resnet_forward.14} parent=11 // pred_check_branch
          %188 = sbr.rel (%p186) target = $region20
        $region19: #{flexible_resnet_forward.14} parent=11 // pred_region
          %p189 = scmp.lt.s32.totalorder %s21, 0
          %s190 = scalar_select %p189, %s21, 0
          %s191 = scalar_lea.vmem %s3, %s190
        $region20: #{flexible_resnet_forward.14} parent=11 // pred_fallthru
          _
      $region12: #{flexible_resnet_forward.14} parent=5 // pred_fallthru
        _
      %p192 = scmp.lt.s32.totalorder %s10, 3
      // Predicated region
      $region21: #{flexible_resnet_forward.14} parent=5 // pred_check
        %p193 = pneg %p192
      $region22: #{flexible_resnet_forward.14} parent=5 // pred_check_branch
        %195 = sbr.rel (%p193) target = $region24
      $region23: #{flexible_resnet_forward.14} parent=5 // pred_region
        // Predicated region
        $region25: #{flexible_resnet_forward.14} parent=23 // pred_check
          %p196 = pneg %p51
        $region26: #{flexible_resnet_forward.14} parent=23 // pred_check_branch
          %198 = sbr.rel (%p196) target = $region28
        $region27: #{flexible_resnet_forward.14} parent=23 // pred_region
          %s199 = sand.u32 %s41, 1
          %s200 = sand.u32 %s41, 1
          %s201 = smul.addr %s200, 192
          %s202 = scalar_lea.vmem [#allocation3], %s201
          %s203 = smul.u32 16, %s17
          %s204 = smul.u32 3, %s19
          %s205 = smul.addr %s203, 9
          %s206 = sadd.s32 %s204, %s205
          %s207 = smul.addr %s206, 4
          %s208 = scalar_lea.vmem %s0, %s207
          // Predicated region
          $region29: #{flexible_resnet_forward.14} parent=27 // pred_check
            _
          $region30: #{flexible_resnet_forward.14} parent=27 // pred_check_branch
            %210 = sbr.rel (0) target = $region32
          $region31: #{flexible_resnet_forward.14} parent=27 // pred_region
            // Predicated region
            $region33: #{flexible_resnet_forward.14} parent=31 // pred_check
              _
            $region34: #{flexible_resnet_forward.14} parent=31 // pred_check_branch
              %212 = sbr.rel (0) target = $region36
            $region35: #{flexible_resnet_forward.14} parent=31 // pred_region
              %s213 = scalar_lea.vmem %s208, 8
              %s214 = scalar_lea.vmem %s202, 8 [#allocation3]
              loop: start=0, step=1, limit=1
              $region37: #{flexible_resnet_forward.14} parent=35 // loop_pre_header
                _
              $region38: #{flexible_resnet_forward.14} parent=35 // loop_header
                %s216 = sphi 0, %s220
                %p217 = scmp.ge.s32.totalorder %s216, 1
                %s221 = sphi %s208, %s208
                %s222 = sphi %s202, %s202
              $region39: #{flexible_resnet_forward.14} parent=35 // loop_header_branch
                %219 = sbr.rel (%p217) target = $region43
              $region40: #{flexible_resnet_forward.14} parent=35 // loop_body
                %v223 = vld [vmem:[%s221] sm:$0xff]
                %224 = vst [vmem:[%s222] sm:$0xff] %v223
                %v225 = vld [vmem:[%s221 + $0x24] sm:$0xff]
                %226 = vst [vmem:[%s222 + $0xc] sm:$0xff] %v225
                %v227 = vld [vmem:[%s221 + $0x48] sm:$0xff]
                %228 = vst [vmem:[%s222 + $0x18] sm:$0xff] %v227
                %v229 = vld [vmem:[%s221 + $0x6c] sm:$0xff]
                %230 = vst [vmem:[%s222 + $0x24] sm:$0xff] %v229
                %v231 = vld [vmem:[%s221 + $0x90] sm:$0xff]
                %232 = vst [vmem:[%s222 + $0x30] sm:$0xff] %v231
                %v233 = vld [vmem:[%s221 + $0xb4] sm:$0xff]
                %234 = vst [vmem:[%s222 + $0x3c] sm:$0xff] %v233
                %v235 = vld [vmem:[%s221 + $0xd8] sm:$0xff]
                %236 = vst [vmem:[%s222 + $0x48] sm:$0xff] %v235
                %v237 = vld [vmem:[%s221 + $0xfc] sm:$0xff]
                %238 = vst [vmem:[%s222 + $0x54] sm:$0xff] %v237
                %v239 = vld [vmem:[%s221 + $0x120] sm:$0xff]
                %240 = vst [vmem:[%s222 + $0x60] sm:$0xff] %v239
                %v241 = vld [vmem:[%s221 + $0x144] sm:$0xff]
                %242 = vst [vmem:[%s222 + $0x6c] sm:$0xff] %v241
                %v243 = vld [vmem:[%s221 + $0x168] sm:$0xff]
                %244 = vst [vmem:[%s222 + $0x78] sm:$0xff] %v243
                %v245 = vld [vmem:[%s221 + $0x18c] sm:$0xff]
                %246 = vst [vmem:[%s222 + $0x84] sm:$0xff] %v245
                %v247 = vld [vmem:[%s221 + $0x1b0] sm:$0xff]
                %248 = vst [vmem:[%s222 + $0x90] sm:$0xff] %v247
                %v249 = vld [vmem:[%s221 + $0x1d4] sm:$0xff]
                %250 = vst [vmem:[%s222 + $0x9c] sm:$0xff] %v249
                %v251 = vld [vmem:[%s221 + $0x1f8] sm:$0xff]
                %252 = vst [vmem:[%s222 + $0xa8] sm:$0xff] %v251
                %v253 = vld [vmem:[%s221 + $0x21c] sm:$0xff]
                %254 = vst [vmem:[%s222 + $0xb4] sm:$0xff] %v253
              $region41: #{flexible_resnet_forward.14} parent=35 // loop_footer
                %s220 = sadd.s32 1, %s216
              $region42: #{flexible_resnet_forward.14} parent=35 // loop_footer_branch
                %215 = sbr.rel target = $region38
              $region43: #{flexible_resnet_forward.14} parent=35 // loop_exit
                _
              loop: start=0, step=1, limit=1
              $region44: #{flexible_resnet_forward.14} parent=35 // loop_pre_header
                _
              $region45: #{flexible_resnet_forward.14} parent=35 // loop_header
                %s257 = sphi 0, %s261
                %p258 = scmp.ge.s32.totalorder %s257, 1
                %s262 = sphi %s213, %s213
                %s263 = sphi %s214, %s214
              $region46: #{flexible_resnet_forward.14} parent=35 // loop_header_branch
                %260 = sbr.rel (%p258) target = $region50
              $region47: #{flexible_resnet_forward.14} parent=35 // loop_body
                %v264 = vld [vmem:[%s262] sm:$0xf]
                %265 = vst [vmem:[%s263] sm:$0xf] %v264
                %v266 = vld [vmem:[%s262 + $0x24] sm:$0xf]
                %267 = vst [vmem:[%s263 + $0xc] sm:$0xf] %v266
                %v268 = vld [vmem:[%s262 + $0x48] sm:$0xf]
                %269 = vst [vmem:[%s263 + $0x18] sm:$0xf] %v268
                %v270 = vld [vmem:[%s262 + $0x6c] sm:$0xf]
                %271 = vst [vmem:[%s263 + $0x24] sm:$0xf] %v270
                %v272 = vld [vmem:[%s262 + $0x90] sm:$0xf]
                %273 = vst [vmem:[%s263 + $0x30] sm:$0xf] %v272
                %v274 = vld [vmem:[%s262 + $0xb4] sm:$0xf]
                %275 = vst [vmem:[%s263 + $0x3c] sm:$0xf] %v274
                %v276 = vld [vmem:[%s262 + $0xd8] sm:$0xf]
                %277 = vst [vmem:[%s263 + $0x48] sm:$0xf] %v276
                %v278 = vld [vmem:[%s262 + $0xfc] sm:$0xf]
                %279 = vst [vmem:[%s263 + $0x54] sm:$0xf] %v278
                %v280 = vld [vmem:[%s262 + $0x120] sm:$0xf]
                %281 = vst [vmem:[%s263 + $0x60] sm:$0xf] %v280
                %v282 = vld [vmem:[%s262 + $0x144] sm:$0xf]
                %283 = vst [vmem:[%s263 + $0x6c] sm:$0xf] %v282
                %v284 = vld [vmem:[%s262 + $0x168] sm:$0xf]
                %285 = vst [vmem:[%s263 + $0x78] sm:$0xf] %v284
                %v286 = vld [vmem:[%s262 + $0x18c] sm:$0xf]
                %287 = vst [vmem:[%s263 + $0x84] sm:$0xf] %v286
                %v288 = vld [vmem:[%s262 + $0x1b0] sm:$0xf]
                %289 = vst [vmem:[%s263 + $0x90] sm:$0xf] %v288
                %v290 = vld [vmem:[%s262 + $0x1d4] sm:$0xf]
                %291 = vst [vmem:[%s263 + $0x9c] sm:$0xf] %v290
                %v292 = vld [vmem:[%s262 + $0x1f8] sm:$0xf]
                %293 = vst [vmem:[%s263 + $0xa8] sm:$0xf] %v292
                %v294 = vld [vmem:[%s262 + $0x21c] sm:$0xf]
                %295 = vst [vmem:[%s263 + $0xb4] sm:$0xf] %v294
              $region48: #{flexible_resnet_forward.14} parent=35 // loop_footer
                %s261 = sadd.s32 1, %s257
              $region49: #{flexible_resnet_forward.14} parent=35 // loop_footer_branch
                %256 = sbr.rel target = $region45
              $region50: #{flexible_resnet_forward.14} parent=35 // loop_exit
                _
            $region36: #{flexible_resnet_forward.14} parent=31 // pred_fallthru
              _
          $region32: #{flexible_resnet_forward.14} parent=27 // pred_fallthru
            _
          %296 = vnop
        $region28: #{flexible_resnet_forward.14} parent=23 // pred_fallthru
          _
        // Predicated region
        $region51: #{flexible_resnet_forward.14} parent=23 // pred_check
          %p297 = pneg %p79
        $region52: #{flexible_resnet_forward.14} parent=23 // pred_check_branch
          %299 = sbr.rel (%p297) target = $region54
        $region53: #{flexible_resnet_forward.14} parent=23 // pred_region
          %s300 = smul.u32 48, %s19
          %p301 = scmp.lt.s32.totalorder %s300, 143
          %s302 = scalar_select %p301, %s300, 143
          %p303 = scmp.lt.s32.totalorder %s18, 0
          %s304 = scalar_select %p303, %s18, 0
          %s305 = sadd.s32 %s304, %s302
          %s306 = smul.addr %s305, 4
          %s307 = scalar_lea.vmem %s1, %s306
          %s308 = smul.u32 48, %s19
        $region54: #{flexible_resnet_forward.14} parent=23 // pred_fallthru
          _
      $region24: #{flexible_resnet_forward.14} parent=5 // pred_fallthru
        _
      %p309 = scmp.le.s32.totalorder 1, %s10
      %p310 = scmp.lt.s32.totalorder %s10, 4
      %p311 = pnand %p309, %p310
      %p312 = pneg %p311
      // Predicated region
      $region55: #{flexible_resnet_forward.14} parent=5 // pred_check
        _
      $region56: #{flexible_resnet_forward.14} parent=5 // pred_check_branch
        %314 = sbr.rel (%p311) target = $region58
      $region57: #{flexible_resnet_forward.14} parent=5 // pred_region
        %s315 = ssub.s32 %s10, 1
        %s316 = sand.u32 %s44, 1
        %s317 = sand.u32 %s44, 1
        %s318 = smul.addr %s317, 192
        %s319 = scalar_lea.vmem [#allocation3], %s318
        // Predicated region
        $region59: #{flexible_resnet_forward.14} parent=57 // pred_check
          %p320 = pneg %p57
        $region60: #{flexible_resnet_forward.14} parent=57 // pred_check_branch
          %322 = sbr.rel (%p320) target = $region62
        $region61: #{flexible_resnet_forward.14} parent=57 // pred_region
          _
        $region62: #{flexible_resnet_forward.14} parent=57 // pred_fallthru
          _
        %s323 = sand.u32 %s44, 1
        %s324 = sand.u32 %s44, 1
        %s325 = smul.addr %s324, 192
        %s326 = scalar_lea.vmem [#allocation3], %s325
        %p327 = pneg %p57
        %p328 = pneg %p54
        %s329 = smul.u32 48, %s22
        %p330 = scmp.lt.s32.totalorder %s329, 143
        %s331 = scalar_select %p330, %s329, 143
        %p332 = scmp.lt.s32.totalorder %s21, 0
        %s333 = scalar_select %p332, %s21, 0
        %s334 = sadd.s32 %s333, %s331
        %s335 = smul.addr %s334, 4
        %s336 = scalar_lea.vmem %s1, %s335
        %p337 = pneg %p85
        %p338 = pneg %p82
        %p339 = scmp.lt.s32.totalorder %s21, 0
        %s340 = scalar_select %p339, %s21, 0
        %s341 = scalar_lea.vmem %s2, %s340
        %p342 = pneg %p111
        %p343 = pneg %p108
        %p344 = scmp.lt.s32.totalorder %s21, 0
        %s345 = scalar_select %p344, %s21, 0
        %s346 = scalar_lea.vmem %s3, %s345
        %p347 = pneg %p137
        %p348 = pneg %p134
        %p349 = pneg %p165
        %p350 = pneg %p162
        %s351 = smul.u32 16, %s20
        %p352 = scmp.lt.s32.totalorder %s351, 15
        %s353 = scalar_select %p352, %s351, 15
        %p354 = scmp.lt.s32.totalorder %s21, 0
        %s355 = scalar_select %p354, %s21, 0
        %s356 = sadd.s32 %s355, %s353
        %s357 = smul.addr %s356, 4
        %s358 = scalar_lea.vmem %s4, %s357
        %s359 = smul.u32 16, %s20
        %s360 = smul.u32 3, %s22
        %s361 = smul.u32 48, %s22
        %p362 = scmp.lt.s32.totalorder %s361, 143
        %s363 = scalar_select %p362, %s361, 143
        %p364 = scmp.lt.s32.totalorder %s21, 0
        %s365 = scalar_select %p364, %s21, 0
        %s366 = sadd.s32 %s365, %s363
        %s367 = smul.addr %s366, 4
        %s368 = scalar_lea.vmem %s1, %s367
        %s369 = smul.u32 48, %s22
        %p370 = scmp.lt.s32.totalorder %s21, 0
        %s371 = scalar_select %p370, %s21, 0
        %s372 = scalar_lea.vmem %s2, %s371
        %p373 = scmp.lt.s32.totalorder %s21, 0
        %s374 = scalar_select %p373, %s21, 0
        %s375 = scalar_lea.vmem %s3, %s374
        %s376 = smul.u32 16, %s20
        %p377 = scmp.lt.s32.totalorder %s376, 15
        %s378 = scalar_select %p377, %s376, 15
        %p379 = scmp.lt.s32.totalorder %s21, 0
        %s380 = scalar_select %p379, %s21, 0
        %s381 = sadd.s32 %s380, %s378
        %s382 = smul.addr %s381, 4
        %s383 = scalar_lea.vmem %s4, %s382
        %s384 = smul.u32 16, %s20
        %p386 = scmp.eq.s32.totalorder %s22, 0
        // Predicated region
        $region63: #{flexible_resnet_forward.14} parent=57 // pred_check
          %p387 = pneg %p386
        $region64: #{flexible_resnet_forward.14} parent=57 // pred_check_branch
          %389 = sbr.rel (%p387) target = $region66
        $region65: #{flexible_resnet_forward.14} parent=57 // pred_region
          %390 = vst [vmem:[#allocation2] sm:$0xff] 0.0
          %391 = vst [vmem:[#allocation2 + $0x8] sm:$0xff] 0.0
          %392 = vst [vmem:[#allocation2 + $0x10] sm:$0xff] 0.0
          %393 = vst [vmem:[#allocation2 + $0x18] sm:$0xff] 0.0
          %394 = vst [vmem:[#allocation2 + $0x20] sm:$0xff] 0.0
          %395 = vst [vmem:[#allocation2 + $0x28] sm:$0xff] 0.0
          %396 = vst [vmem:[#allocation2 + $0x30] sm:$0xff] 0.0
          %397 = vst [vmem:[#allocation2 + $0x38] sm:$0xff] 0.0
          %398 = vst [vmem:[#allocation2 + $0x40] sm:$0xff] 0.0
          %399 = vst [vmem:[#allocation2 + $0x48] sm:$0xff] 0.0
          %400 = vst [vmem:[#allocation2 + $0x50] sm:$0xff] 0.0
          %401 = vst [vmem:[#allocation2 + $0x58] sm:$0xff] 0.0
          %402 = vst [vmem:[#allocation2 + $0x60] sm:$0xff] 0.0
          %403 = vst [vmem:[#allocation2 + $0x68] sm:$0xff] 0.0
          %404 = vst [vmem:[#allocation2 + $0x70] sm:$0xff] 0.0
          %405 = vst [vmem:[#allocation2 + $0x78] sm:$0xff] 0.0
        $region66: #{flexible_resnet_forward.14} parent=57 // pred_fallthru
          _
        %v406 = vld [vmem:[#allocation2] sm:$0xff]
        %v407 = vld [vmem:[#allocation2 + $0x8] sm:$0xff]
        %v408 = vld [vmem:[#allocation2 + $0x10] sm:$0xff]
        %v409 = vld [vmem:[#allocation2 + $0x18] sm:$0xff]
        %v410 = vld [vmem:[#allocation2 + $0x20] sm:$0xff]
        %v411 = vld [vmem:[#allocation2 + $0x28] sm:$0xff]
        %v412 = vld [vmem:[#allocation2 + $0x30] sm:$0xff]
        %v413 = vld [vmem:[#allocation2 + $0x38] sm:$0xff]
        %v414 = vld [vmem:[#allocation2 + $0x40] sm:$0xff]
        %v415 = vld [vmem:[#allocation2 + $0x48] sm:$0xff]
        %v416 = vld [vmem:[#allocation2 + $0x50] sm:$0xff]
        %v417 = vld [vmem:[#allocation2 + $0x58] sm:$0xff]
        %v418 = vld [vmem:[#allocation2 + $0x60] sm:$0xff]
        %v419 = vld [vmem:[#allocation2 + $0x68] sm:$0xff]
        %v420 = vld [vmem:[#allocation2 + $0x70] sm:$0xff]
        %v421 = vld [vmem:[#allocation2 + $0x78] sm:$0xff]
        %v422 = vld [vmem:[%s319] sm:$0xff]
        %v423 = vld [vmem:[%s319 + $0x8] sm:$0xf]
        %v424 = vld [vmem:[%s319 + $0xc] sm:$0xff]
        %v425 = vld [vmem:[%s319 + $0x14] sm:$0xf]
        %v426 = vld [vmem:[%s319 + $0x18] sm:$0xff]
        %v427 = vld [vmem:[%s319 + $0x20] sm:$0xf]
        %v428 = vld [vmem:[%s319 + $0x24] sm:$0xff]
        %v429 = vld [vmem:[%s319 + $0x2c] sm:$0xf]
        %v430 = vld [vmem:[%s319 + $0x30] sm:$0xff]
        %v431 = vld [vmem:[%s319 + $0x38] sm:$0xf]
        %v432 = vld [vmem:[%s319 + $0x3c] sm:$0xff]
        %v433 = vld [vmem:[%s319 + $0x44] sm:$0xf]
        %v434 = vld [vmem:[%s319 + $0x48] sm:$0xff]
        %v435 = vld [vmem:[%s319 + $0x50] sm:$0xf]
        %v436 = vld [vmem:[%s319 + $0x54] sm:$0xff]
        %v437 = vld [vmem:[%s319 + $0x5c] sm:$0xf]
        %v438 = vld [vmem:[%s319 + $0x60] sm:$0xff]
        %v439 = vld [vmem:[%s319 + $0x68] sm:$0xf]
        %v440 = vld [vmem:[%s319 + $0x6c] sm:$0xff]
        %v441 = vld [vmem:[%s319 + $0x74] sm:$0xf]
        %v442 = vld [vmem:[%s319 + $0x78] sm:$0xff]
        %v443 = vld [vmem:[%s319 + $0x80] sm:$0xf]
        %v444 = vld [vmem:[%s319 + $0x84] sm:$0xff]
        %v445 = vld [vmem:[%s319 + $0x8c] sm:$0xf]
        %v446 = vld [vmem:[%s319 + $0x90] sm:$0xff]
        %v447 = vld [vmem:[%s319 + $0x98] sm:$0xf]
        %v448 = vld [vmem:[%s319 + $0x9c] sm:$0xff]
        %v449 = vld [vmem:[%s319 + $0xa4] sm:$0xf]
        %v450 = vld [vmem:[%s319 + $0xa8] sm:$0xff]
        %v451 = vld [vmem:[%s319 + $0xb0] sm:$0xf]
        %v452 = vld [vmem:[%s319 + $0xb4] sm:$0xff]
        %v453 = vld [vmem:[%s319 + $0xbc] sm:$0xf]
        %v454 = vld [vmem:[%s368] sm:$0xf]
        %v455 = vld [vmem:[%s368 + $0x4] sm:$0xf]
        %v456 = vld [vmem:[%s368 + $0x8] sm:$0xf]
        %v457 = vld [vmem:[%s368 + $0xc] sm:$0xf]
        %v458 = vld [vmem:[%s368 + $0x10] sm:$0xf]
        %v459 = vld [vmem:[%s368 + $0x14] sm:$0xf]
        %v460 = vld [vmem:[%s368 + $0x18] sm:$0xf]
        %v461 = vld [vmem:[%s368 + $0x1c] sm:$0xf]
        %v462 = vld [vmem:[%s368 + $0x20] sm:$0xf]
        %v463 = vld [vmem:[%s368 + $0x24] sm:$0xf]
        %v464 = vld [vmem:[%s368 + $0x28] sm:$0xf]
        %v465 = vld [vmem:[%s368 + $0x2c] sm:$0xf]
        %v466 = vld [vmem:[%s368 + $0x30] sm:$0xf]
        %v467 = vld [vmem:[%s368 + $0x34] sm:$0xf]
        %v468 = vld [vmem:[%s368 + $0x38] sm:$0xf]
        %v469 = vld [vmem:[%s368 + $0x3c] sm:$0xf]
        %v470 = vld [vmem:[%s368 + $0x40] sm:$0xf]
        %v471 = vld [vmem:[%s368 + $0x44] sm:$0xf]
        %v472 = vld [vmem:[%s368 + $0x48] sm:$0xf]
        %v473 = vld [vmem:[%s368 + $0x4c] sm:$0xf]
        %v474 = vld [vmem:[%s368 + $0x50] sm:$0xf]
        %v475 = vld [vmem:[%s368 + $0x54] sm:$0xf]
        %v476 = vld [vmem:[%s368 + $0x58] sm:$0xf]
        %v477 = vld [vmem:[%s368 + $0x5c] sm:$0xf]
        %v478 = vld [vmem:[%s368 + $0x60] sm:$0xf]
        %v479 = vld [vmem:[%s368 + $0x64] sm:$0xf]
        %v480 = vld [vmem:[%s368 + $0x68] sm:$0xf]
        %v481 = vld [vmem:[%s368 + $0x6c] sm:$0xf]
        %v482 = vld [vmem:[%s368 + $0x70] sm:$0xf]
        %v483 = vld [vmem:[%s368 + $0x74] sm:$0xf]
        %v484 = vld [vmem:[%s368 + $0x78] sm:$0xf]
        %v485 = vld [vmem:[%s368 + $0x7c] sm:$0xf]
        %v486 = vld [vmem:[%s368 + $0x80] sm:$0xf]
        %v487 = vld [vmem:[%s368 + $0x84] sm:$0xf]
        %v488 = vld [vmem:[%s368 + $0x88] sm:$0xf]
        %v489 = vld [vmem:[%s368 + $0x8c] sm:$0xf]
        %v490 = vld [vmem:[%s368 + $0x90] sm:$0xf]
        %v491 = vld [vmem:[%s368 + $0x94] sm:$0xf]
        %v492 = vld [vmem:[%s368 + $0x98] sm:$0xf]
        %v493 = vld [vmem:[%s368 + $0x9c] sm:$0xf]
        %v494 = vld [vmem:[%s368 + $0xa0] sm:$0xf]
        %v495 = vld [vmem:[%s368 + $0xa4] sm:$0xf]
        %v496 = vld [vmem:[%s368 + $0xa8] sm:$0xf]
        %v497 = vld [vmem:[%s368 + $0xac] sm:$0xf]
        %v498 = vld [vmem:[%s368 + $0xb0] sm:$0xf]
        %v499 = vld [vmem:[%s368 + $0xb4] sm:$0xf]
        %v500 = vld [vmem:[%s368 + $0xb8] sm:$0xf]
        %v501 = vld [vmem:[%s368 + $0xbc] sm:$0xf]
        %v534 = vunpack.c.l.b16 %v422
        %v535 = vunpack.c.h.b16 %v422
        %v536 = vunpack.c.l.b16 %v423
        %v537 = vunpack.c.l.b16 %v424
        %v538 = vunpack.c.h.b16 %v424
        %v539 = vunpack.c.l.b16 %v425
        %v540 = vunpack.c.l.b16 %v426
        %v541 = vunpack.c.h.b16 %v426
        %v542 = vunpack.c.l.b16 %v427
        %v543 = vunpack.c.l.b16 %v428
        %v544 = vunpack.c.h.b16 %v428
        %v545 = vunpack.c.l.b16 %v429
        %v546 = vunpack.c.l.b16 %v430
        %v547 = vunpack.c.h.b16 %v430
        %v548 = vunpack.c.l.b16 %v431
        %v549 = vunpack.c.l.b16 %v432
        %v550 = vunpack.c.h.b16 %v432
        %v551 = vunpack.c.l.b16 %v433
        %v552 = vunpack.c.l.b16 %v434
        %v553 = vunpack.c.h.b16 %v434
        %v554 = vunpack.c.l.b16 %v435
        %v555 = vunpack.c.l.b16 %v436
        %v556 = vunpack.c.h.b16 %v436
        %v557 = vunpack.c.l.b16 %v437
        %v558 = vunpack.c.l.b16 %v438
        %v559 = vunpack.c.h.b16 %v438
        %v560 = vunpack.c.l.b16 %v439
        %v561 = vunpack.c.l.b16 %v440
        %v562 = vunpack.c.h.b16 %v440
        %v563 = vunpack.c.l.b16 %v441
        %v564 = vunpack.c.l.b16 %v442
        %v565 = vunpack.c.h.b16 %v442
        %v566 = vunpack.c.l.b16 %v443
        %v567 = vunpack.c.l.b16 %v444
        %v568 = vunpack.c.h.b16 %v444
        %v569 = vunpack.c.l.b16 %v445
        %v570 = vunpack.c.l.b16 %v446
        %v571 = vunpack.c.h.b16 %v446
        %v572 = vunpack.c.l.b16 %v447
        %v573 = vunpack.c.l.b16 %v448
        %v574 = vunpack.c.h.b16 %v448
        %v575 = vunpack.c.l.b16 %v449
        %v576 = vunpack.c.l.b16 %v450
        %v577 = vunpack.c.h.b16 %v450
        %v578 = vunpack.c.l.b16 %v451
        %v579 = vunpack.c.l.b16 %v452
        %v580 = vunpack.c.h.b16 %v452
        %v581 = vunpack.c.l.b16 %v453
        %v582 = vpack.c.b16 %v537, %v534
        %v583 = vpack.c.b16 %v538, %v535
        %v584 = vpack.c.b16 %v539, %v536
        %v585 = vpack.c.b16 %v543, %v540
        %v586 = vpack.c.b16 %v544, %v541
        %v587 = vpack.c.b16 %v545, %v542
        %v588 = vpack.c.b16 %v549, %v546
        %v589 = vpack.c.b16 %v550, %v547
        %v590 = vpack.c.b16 %v551, %v548
        %v591 = vpack.c.b16 %v555, %v552
        %v592 = vpack.c.b16 %v556, %v553
        %v593 = vpack.c.b16 %v557, %v554
        %v594 = vpack.c.b16 %v561, %v558
        %v595 = vpack.c.b16 %v562, %v559
        %v596 = vpack.c.b16 %v563, %v560
        %v597 = vpack.c.b16 %v567, %v564
        %v598 = vpack.c.b16 %v568, %v565
        %v599 = vpack.c.b16 %v569, %v566
        %v600 = vpack.c.b16 %v573, %v570
        %v601 = vpack.c.b16 %v574, %v571
        %v602 = vpack.c.b16 %v575, %v572
        %v603 = vpack.c.b16 %v579, %v576
        %v604 = vpack.c.b16 %v580, %v577
        %v605 = vpack.c.b16 %v581, %v578
        %v678 = vunpack.c.l.b16 %v454
        %v679 = vunpack.c.l.b16 %v455
        %v680 = vunpack.c.l.b16 %v456
        %v681 = vunpack.c.l.b16 %v457
        %v682 = vunpack.c.l.b16 %v458
        %v683 = vunpack.c.l.b16 %v459
        %v684 = vunpack.c.l.b16 %v460
        %v685 = vunpack.c.l.b16 %v461
        %v686 = vunpack.c.l.b16 %v462
        %v687 = vunpack.c.l.b16 %v463
        %v688 = vunpack.c.l.b16 %v464
        %v689 = vunpack.c.l.b16 %v465
        %v690 = vunpack.c.l.b16 %v466
        %v691 = vunpack.c.l.b16 %v467
        %v692 = vunpack.c.l.b16 %v468
        %v693 = vunpack.c.l.b16 %v469
        %v694 = vunpack.c.l.b16 %v470
        %v695 = vunpack.c.l.b16 %v471
        %v696 = vunpack.c.l.b16 %v472
        %v697 = vunpack.c.l.b16 %v473
        %v698 = vunpack.c.l.b16 %v474
        %v699 = vunpack.c.l.b16 %v475
        %v700 = vunpack.c.l.b16 %v476
        %v701 = vunpack.c.l.b16 %v477
        %v702 = vunpack.c.l.b16 %v478
        %v703 = vunpack.c.l.b16 %v479
        %v704 = vunpack.c.l.b16 %v480
        %v705 = vunpack.c.l.b16 %v481
        %v706 = vunpack.c.l.b16 %v482
        %v707 = vunpack.c.l.b16 %v483
        %v708 = vunpack.c.l.b16 %v484
        %v709 = vunpack.c.l.b16 %v485
        %v710 = vunpack.c.l.b16 %v486
        %v711 = vunpack.c.l.b16 %v487
        %v712 = vunpack.c.l.b16 %v488
        %v713 = vunpack.c.l.b16 %v489
        %v714 = vunpack.c.l.b16 %v490
        %v715 = vunpack.c.l.b16 %v491
        %v716 = vunpack.c.l.b16 %v492
        %v717 = vunpack.c.l.b16 %v493
        %v718 = vunpack.c.l.b16 %v494
        %v719 = vunpack.c.l.b16 %v495
        %v720 = vunpack.c.l.b16 %v496
        %v721 = vunpack.c.l.b16 %v497
        %v722 = vunpack.c.l.b16 %v498
        %v723 = vunpack.c.l.b16 %v499
        %v724 = vunpack.c.l.b16 %v500
        %v725 = vunpack.c.l.b16 %v501
        %v726 = vpack.c.b16 %v679, %v678
        %v727 = vpack.c.b16 %v681, %v680
        %v728 = vpack.c.b16 %v683, %v682
        %v729 = vpack.c.b16 %v685, %v684
        %v730 = vpack.c.b16 %v687, %v686
        %v731 = vpack.c.b16 %v689, %v688
        %v732 = vpack.c.b16 %v691, %v690
        %v733 = vpack.c.b16 %v693, %v692
        %v734 = vpack.c.b16 %v695, %v694
        %v735 = vpack.c.b16 %v697, %v696
        %v736 = vpack.c.b16 %v699, %v698
        %v737 = vpack.c.b16 %v701, %v700
        %v738 = vpack.c.b16 %v703, %v702
        %v739 = vpack.c.b16 %v705, %v704
        %v740 = vpack.c.b16 %v707, %v706
        %v741 = vpack.c.b16 %v709, %v708
        %v742 = vpack.c.b16 %v711, %v710
        %v743 = vpack.c.b16 %v713, %v712
        %v744 = vpack.c.b16 %v715, %v714
        %v745 = vpack.c.b16 %v717, %v716
        %v746 = vpack.c.b16 %v719, %v718
        %v747 = vpack.c.b16 %v721, %v720
        %v748 = vpack.c.b16 %v723, %v722
        %v749 = vpack.c.b16 %v725, %v724
        %774 = vmatprep.subr.bf16.mxu0 0
        %775 = vmatpush1.bf16.msra.mxu0 %v726
        %776 = vmatprep.subr.bf16.mxu0 0
        %777 = vmatpush1.bf16.msra.mxu0 %v727
        %778 = vmatprep.subr.bf16.mxu0 0
        %779 = vmatpush1.bf16.msra.mxu0 %v728
        %780 = vmatprep.subr.bf16.mxu0 0
        %781 = vmatpush1.bf16.msra.mxu0 %v729
        %782 = vmatprep.subr.bf16.mxu0 0
        %783 = vmatpush1.bf16.msra.mxu0 %v730
        %784 = vmatprep.subr.bf16.mxu0 0
        %785 = vmatpush1.bf16.msra.mxu0 %v731
        %786 = vmatprep.subr.bf16.mxu0 0
        %787 = vmatpush1.bf16.msra.mxu0 %v732
        %788 = vmatprep.subr.bf16.mxu0 0
        %789 = vmatpush1.bf16.msra.mxu0 %v733
        %790 = vmatprep.subr.bf16.mxu0 0
        %791 = vmatpush1.bf16.msra.mxu0 %v734
        %792 = vmatprep.subr.bf16.mxu0 0
        %793 = vmatpush1.bf16.msra.mxu0 %v735
        %794 = vmatprep.subr.bf16.mxu0 0
        %795 = vmatpush1.bf16.msra.mxu0 %v736
        %796 = vmatprep.subr.bf16.mxu0 0
        %797 = vmatpush1.bf16.msra.mxu0 %v737
        %798 = vmatprep.subr.bf16.mxu0 0
        %799 = vmatpush1.bf16.msra.mxu0 %v738
        %800 = vmatprep.subr.bf16.mxu0 0
        %801 = vmatpush1.bf16.msra.mxu0 %v739
        %802 = vmatprep.subr.bf16.mxu0 0
        %803 = vmatpush1.bf16.msra.mxu0 %v740
        %804 = vmatprep.subr.bf16.mxu0 0
        %805 = vmatpush1.bf16.msra.mxu0 %v741
        %806 = vmatprep.mubr.bf16.mxu0 %v583
        %807 = vmatmul.mubr.bf16.gmra.mrb[0].mxu0 %v582
        %v808 = vpop.f32.mrb[0].mxu0
        %v809 = vadd.f32 0.0, %v808
        %v810 = vpop.f32.mrb[0].mxu0
        %v811 = vpop.f32.mrb[0].mxu0
        %v812 = vadd.f32 0.0, %v811
        %v813 = vpop.f32.mrb[0].mxu0
        %814 = vmatprep.mubr.bf16.mxu0 %v586
        %815 = vmatmul.mubr.bf16.gmra.mrb[0].mxu0 %v585
        %v816 = vpop.f32.mrb[0].mxu0
        %v817 = vadd.f32 0.0, %v816
        %v818 = vpop.f32.mrb[0].mxu0
        %v819 = vpop.f32.mrb[0].mxu0
        %v820 = vadd.f32 0.0, %v819
        %v821 = vpop.f32.mrb[0].mxu0
        %822 = vmatprep.mubr.bf16.mxu0 %v589
        %823 = vmatmul.mubr.bf16.gmra.mrb[0].mxu0 %v588
        %v824 = vpop.f32.mrb[0].mxu0
        %v825 = vadd.f32 0.0, %v824
        %v826 = vpop.f32.mrb[0].mxu0
        %v827 = vpop.f32.mrb[0].mxu0
        %v828 = vadd.f32 0.0, %v827
        %v829 = vpop.f32.mrb[0].mxu0
        %830 = vmatprep.mubr.bf16.mxu0 %v592
        %831 = vmatmul.mubr.bf16.gmra.mrb[0].mxu0 %v591
        %v832 = vpop.f32.mrb[0].mxu0
        %v833 = vadd.f32 0.0, %v832
        %v834 = vpop.f32.mrb[0].mxu0
        %v835 = vpop.f32.mrb[0].mxu0
        %v836 = vadd.f32 0.0, %v835
        %v837 = vpop.f32.mrb[0].mxu0
        %838 = vmatprep.mubr.bf16.mxu0 %v595
        %839 = vmatmul.mubr.bf16.gmra.mrb[0].mxu0 %v594
        %v840 = vpop.f32.mrb[0].mxu0
        %v841 = vadd.f32 0.0, %v840
        %v842 = vpop.f32.mrb[0].mxu0
        %v843 = vpop.f32.mrb[0].mxu0
        %v844 = vadd.f32 0.0, %v843
        %v845 = vpop.f32.mrb[0].mxu0
        %846 = vmatprep.mubr.bf16.mxu0 %v598
        %847 = vmatmul.mubr.bf16.gmra.mrb[0].mxu0 %v597
        %v848 = vpop.f32.mrb[0].mxu0
        %v849 = vadd.f32 0.0, %v848
        %v850 = vpop.f32.mrb[0].mxu0
        %v851 = vpop.f32.mrb[0].mxu0
        %v852 = vadd.f32 0.0, %v851
        %v853 = vpop.f32.mrb[0].mxu0
        %854 = vmatprep.mubr.bf16.mxu0 %v601
        %855 = vmatmul.mubr.bf16.gmra.mrb[0].mxu0 %v600
        %v856 = vpop.f32.mrb[0].mxu0
        %v857 = vadd.f32 0.0, %v856
        %v858 = vpop.f32.mrb[0].mxu0
        %v859 = vpop.f32.mrb[0].mxu0
        %v860 = vadd.f32 0.0, %v859
        %v861 = vpop.f32.mrb[0].mxu0
        %862 = vmatprep.mubr.bf16.mxu0 %v604
        %863 = vmatmul.mubr.bf16.gmra.mrb[0].mxu0 %v603
        %v864 = vpop.f32.mrb[0].mxu0
        %v865 = vadd.f32 0.0, %v864
        %v866 = vpop.f32.mrb[0].mxu0
        %v867 = vpop.f32.mrb[0].mxu0
        %v868 = vadd.f32 0.0, %v867
        %v869 = vpop.f32.mrb[0].mxu0
        %870 = vdwg.mxu0
        %871 = vmatprep.subr.bf16.mxu0 0
        %872 = vmatpush1.bf16.msra.mxu0 %v742
        %873 = vmatprep.subr.bf16.mxu0 0
        %874 = vmatpush1.bf16.msra.mxu0 %v743
        %875 = vmatprep.subr.bf16.mxu0 0
        %876 = vmatpush1.bf16.msra.mxu0 %v744
        %877 = vmatprep.subr.bf16.mxu0 0
        %878 = vmatpush1.bf16.msra.mxu0 %v745
        %879 = vmatprep.subr.bf16.mxu0 0
        %880 = vmatpush1.bf16.msra.mxu0 %v746
        %881 = vmatprep.subr.bf16.mxu0 0
        %882 = vmatpush1.bf16.msra.mxu0 %v747
        %883 = vmatprep.subr.bf16.mxu0 0
        %884 = vmatpush1.bf16.msra.mxu0 %v748
        %885 = vmatprep.subr.bf16.mxu0 0
        %886 = vmatpush1.bf16.msra.mxu0 %v749
        %887 = vmatprep.subr.bf16.mxu0 0
        %888 = vmatpush1.bf16.msra.mxu0 0
        %889 = vmatprep.subr.bf16.mxu0 0
        %890 = vmatpush1.bf16.msra.mxu0 0
        %891 = vmatprep.subr.bf16.mxu0 0
        %892 = vmatpush1.bf16.msra.mxu0 0
        %893 = vmatprep.subr.bf16.mxu0 0
        %894 = vmatpush1.bf16.msra.mxu0 0
        %895 = vmatprep.subr.bf16.mxu0 0
        %896 = vmatpush1.bf16.msra.mxu0 0
        %897 = vmatprep.subr.bf16.mxu0 0
        %898 = vmatpush1.bf16.msra.mxu0 0
        %899 = vmatprep.subr.bf16.mxu0 0
        %900 = vmatpush1.bf16.msra.mxu0 0
        %901 = vmatprep.subr.bf16.mxu0 0
        %902 = vmatpush1.bf16.msra.mxu0 0
        %903 = vmatprep.mubr.bf16.mxu0 0
        %904 = vmatmul.mubr.bf16.gmra.mrb[0].mxu0 %v584
        %v905 = vpop.f32.mrb[0].mxu0
        %v906 = vadd.f32 %v809, %v905
        %v907 = vpop.f32.mrb[0].mxu0
        %v908 = vpop.f32.mrb[0].mxu0
        %v909 = vadd.f32 %v812, %v908
        %v910 = vpop.f32.mrb[0].mxu0
        %911 = vmatprep.mubr.bf16.mxu0 0
        %912 = vmatmul.mubr.bf16.gmra.mrb[0].mxu0 %v587
        %v913 = vpop.f32.mrb[0].mxu0
        %v914 = vadd.f32 %v817, %v913
        %v915 = vpop.f32.mrb[0].mxu0
        %v916 = vpop.f32.mrb[0].mxu0
        %v917 = vadd.f32 %v820, %v916
        %v918 = vpop.f32.mrb[0].mxu0
        %919 = vmatprep.mubr.bf16.mxu0 0
        %920 = vmatmul.mubr.bf16.gmra.mrb[0].mxu0 %v590
        %v921 = vpop.f32.mrb[0].mxu0
        %v922 = vadd.f32 %v825, %v921
        %v923 = vpop.f32.mrb[0].mxu0
        %v924 = vpop.f32.mrb[0].mxu0
        %v925 = vadd.f32 %v828, %v924
        %v926 = vpop.f32.mrb[0].mxu0
        %927 = vmatprep.mubr.bf16.mxu0 0
        %928 = vmatmul.mubr.bf16.gmra.mrb[0].mxu0 %v593
        %v929 = vpop.f32.mrb[0].mxu0
        %v930 = vadd.f32 %v833, %v929
        %v931 = vpop.f32.mrb[0].mxu0
        %v932 = vpop.f32.mrb[0].mxu0
        %v933 = vadd.f32 %v836, %v932
        %v934 = vpop.f32.mrb[0].mxu0
        %935 = vmatprep.mubr.bf16.mxu0 0
        %936 = vmatmul.mubr.bf16.gmra.mrb[0].mxu0 %v596
        %v937 = vpop.f32.mrb[0].mxu0
        %v938 = vadd.f32 %v841, %v937
        %v939 = vpop.f32.mrb[0].mxu0
        %v940 = vpop.f32.mrb[0].mxu0
        %v941 = vadd.f32 %v844, %v940
        %v942 = vpop.f32.mrb[0].mxu0
        %943 = vmatprep.mubr.bf16.mxu0 0
        %944 = vmatmul.mubr.bf16.gmra.mrb[0].mxu0 %v599
        %v945 = vpop.f32.mrb[0].mxu0
        %v946 = vadd.f32 %v849, %v945
        %v947 = vpop.f32.mrb[0].mxu0
        %v948 = vpop.f32.mrb[0].mxu0
        %v949 = vadd.f32 %v852, %v948
        %v950 = vpop.f32.mrb[0].mxu0
        %951 = vmatprep.mubr.bf16.mxu0 0
        %952 = vmatmul.mubr.bf16.gmra.mrb[0].mxu0 %v602
        %v953 = vpop.f32.mrb[0].mxu0
        %v954 = vadd.f32 %v857, %v953
        %v955 = vpop.f32.mrb[0].mxu0
        %v956 = vpop.f32.mrb[0].mxu0
        %v957 = vadd.f32 %v860, %v956
        %v958 = vpop.f32.mrb[0].mxu0
        %959 = vmatprep.mubr.bf16.mxu0 0
        %960 = vmatmul.mubr.bf16.gmra.mrb[0].mxu0 %v605
        %v961 = vpop.f32.mrb[0].mxu0
        %v962 = vadd.f32 %v865, %v961
        %v963 = vpop.f32.mrb[0].mxu0
        %v964 = vpop.f32.mrb[0].mxu0
        %v965 = vadd.f32 %v868, %v964
        %v966 = vpop.f32.mrb[0].mxu0
        %967 = vdwg.mxu0
        %v968 = vadd.f32 %v406, %v906
        %v969 = vadd.f32 %v407, %v909
        %v970 = vadd.f32 %v408, %v914
        %v971 = vadd.f32 %v409, %v917
        %v972 = vadd.f32 %v410, %v922
        %v973 = vadd.f32 %v411, %v925
        %v974 = vadd.f32 %v412, %v930
        %v975 = vadd.f32 %v413, %v933
        %v976 = vadd.f32 %v414, %v938
        %v977 = vadd.f32 %v415, %v941
        %v978 = vadd.f32 %v416, %v946
        %v979 = vadd.f32 %v417, %v949
        %v980 = vadd.f32 %v418, %v954
        %v981 = vadd.f32 %v419, %v957
        %v982 = vadd.f32 %v420, %v962
        %v983 = vadd.f32 %v421, %v965
        %984 = vst [vmem:[#allocation2] sm:$0xff] %v968
        %985 = vst [vmem:[#allocation2 + $0x8] sm:$0xff] %v969
        %986 = vst [vmem:[#allocation2 + $0x10] sm:$0xff] %v970
        %987 = vst [vmem:[#allocation2 + $0x18] sm:$0xff] %v971
        %988 = vst [vmem:[#allocation2 + $0x20] sm:$0xff] %v972
        %989 = vst [vmem:[#allocation2 + $0x28] sm:$0xff] %v973
        %990 = vst [vmem:[#allocation2 + $0x30] sm:$0xff] %v974
        %991 = vst [vmem:[#allocation2 + $0x38] sm:$0xff] %v975
        %992 = vst [vmem:[#allocation2 + $0x40] sm:$0xff] %v976
        %993 = vst [vmem:[#allocation2 + $0x48] sm:$0xff] %v977
        %994 = vst [vmem:[#allocation2 + $0x50] sm:$0xff] %v978
        %995 = vst [vmem:[#allocation2 + $0x58] sm:$0xff] %v979
        %996 = vst [vmem:[#allocation2 + $0x60] sm:$0xff] %v980
        %997 = vst [vmem:[#allocation2 + $0x68] sm:$0xff] %v981
        %998 = vst [vmem:[#allocation2 + $0x70] sm:$0xff] %v982
        %999 = vst [vmem:[#allocation2 + $0x78] sm:$0xff] %v983
        %p1000 = scmp.eq.s32.totalorder %s22, 2
        // Predicated region
        $region67: #{flexible_resnet_forward.14} parent=57 // pred_check
          %p1001 = pneg %p1000
        $region68: #{flexible_resnet_forward.14} parent=57 // pred_check_branch
          %1003 = sbr.rel (%p1001) target = $region70
        $region69: #{flexible_resnet_forward.14} parent=57 // pred_region
          %v1004 = vld [vmem:[#allocation2] sm:$0xff]
          %v1005 = vld [vmem:[#allocation2 + $0x8] sm:$0xff]
          %v1006 = vld [vmem:[#allocation2 + $0x10] sm:$0xff]
          %v1007 = vld [vmem:[#allocation2 + $0x18] sm:$0xff]
          %v1008 = vld [vmem:[#allocation2 + $0x20] sm:$0xff]
          %v1009 = vld [vmem:[#allocation2 + $0x28] sm:$0xff]
          %v1010 = vld [vmem:[#allocation2 + $0x30] sm:$0xff]
          %v1011 = vld [vmem:[#allocation2 + $0x38] sm:$0xff]
          %v1012 = vld [vmem:[#allocation2 + $0x40] sm:$0xff]
          %v1013 = vld [vmem:[#allocation2 + $0x48] sm:$0xff]
          %v1014 = vld [vmem:[#allocation2 + $0x50] sm:$0xff]
          %v1015 = vld [vmem:[#allocation2 + $0x58] sm:$0xff]
          %v1016 = vld [vmem:[#allocation2 + $0x60] sm:$0xff]
          %v1017 = vld [vmem:[#allocation2 + $0x68] sm:$0xff]
          %v1018 = vld [vmem:[#allocation2 + $0x70] sm:$0xff]
          %v1019 = vld [vmem:[#allocation2 + $0x78] sm:$0xff]
          %v1020 = vld [vmem:[%s372] sm:$0x1]
          %v1022 = vlaneseq
          %v1023 = vshrl.u32 %v1022, 7
          %v1024 = vsub.s32 0, %v1023
          %v1025 = vrot.slane %v1020, %v1024
          %v1027 = vmul.f32 %v1004, %v1025
          %v1028 = vmul.f32 %v1005, %v1025
          %v1029 = vmul.f32 %v1006, %v1025
          %v1030 = vmul.f32 %v1007, %v1025
          %v1031 = vmul.f32 %v1008, %v1025
          %v1032 = vmul.f32 %v1009, %v1025
          %v1033 = vmul.f32 %v1010, %v1025
          %v1034 = vmul.f32 %v1011, %v1025
          %v1035 = vmul.f32 %v1012, %v1025
          %v1036 = vmul.f32 %v1013, %v1025
          %v1037 = vmul.f32 %v1014, %v1025
          %v1038 = vmul.f32 %v1015, %v1025
          %v1039 = vmul.f32 %v1016, %v1025
          %v1040 = vmul.f32 %v1017, %v1025
          %v1041 = vmul.f32 %v1018, %v1025
          %v1042 = vmul.f32 %v1019, %v1025
          %v1043 = vld [vmem:[%s375] sm:$0x1]
          %v1045 = vlaneseq
          %v1046 = vshrl.u32 %v1045, 7
          %v1047 = vsub.s32 0, %v1046
          %v1048 = vrot.slane %v1043, %v1047
          %v1050 = vadd.f32 %v1027, %v1048
          %v1051 = vadd.f32 %v1028, %v1048
          %v1052 = vadd.f32 %v1029, %v1048
          %v1053 = vadd.f32 %v1030, %v1048
          %v1054 = vadd.f32 %v1031, %v1048
          %v1055 = vadd.f32 %v1032, %v1048
          %v1056 = vadd.f32 %v1033, %v1048
          %v1057 = vadd.f32 %v1034, %v1048
          %v1058 = vadd.f32 %v1035, %v1048
          %v1059 = vadd.f32 %v1036, %v1048
          %v1060 = vadd.f32 %v1037, %v1048
          %v1061 = vadd.f32 %v1038, %v1048
          %v1062 = vadd.f32 %v1039, %v1048
          %v1063 = vadd.f32 %v1040, %v1048
          %v1064 = vadd.f32 %v1041, %v1048
          %v1065 = vadd.f32 %v1042, %v1048
          %v1066 = vmax.f32 %v1050, 0.0
          %v1067 = vmax.f32 %v1051, 0.0
          %v1068 = vmax.f32 %v1052, 0.0
          %v1069 = vmax.f32 %v1053, 0.0
          %v1070 = vmax.f32 %v1054, 0.0
          %v1071 = vmax.f32 %v1055, 0.0
          %v1072 = vmax.f32 %v1056, 0.0
          %v1073 = vmax.f32 %v1057, 0.0
          %v1074 = vmax.f32 %v1058, 0.0
          %v1075 = vmax.f32 %v1059, 0.0
          %v1076 = vmax.f32 %v1060, 0.0
          %v1077 = vmax.f32 %v1061, 0.0
          %v1078 = vmax.f32 %v1062, 0.0
          %v1079 = vmax.f32 %v1063, 0.0
          %v1080 = vmax.f32 %v1064, 0.0
          %v1081 = vmax.f32 %v1065, 0.0
          %v1082 = vpack.c.bf16 %v1067, %v1066
          %v1083 = vpack.c.bf16 %v1069, %v1068
          %v1084 = vpack.c.bf16 %v1071, %v1070
          %v1085 = vpack.c.bf16 %v1073, %v1072
          %v1086 = vpack.c.bf16 %v1075, %v1074
          %v1087 = vpack.c.bf16 %v1077, %v1076
          %v1088 = vpack.c.bf16 %v1079, %v1078
          %v1089 = vpack.c.bf16 %v1081, %v1080
          %v1098 = vunpack.c.l.b16 %v1082
          %v1099 = vunpack.c.h.b16 %v1082
          %v1100 = vunpack.c.l.b16 %v1083
          %v1101 = vunpack.c.h.b16 %v1083
          %v1102 = vunpack.c.l.b16 %v1084
          %v1103 = vunpack.c.h.b16 %v1084
          %v1104 = vunpack.c.l.b16 %v1085
          %v1105 = vunpack.c.h.b16 %v1085
          %v1106 = vunpack.c.l.b16 %v1086
          %v1107 = vunpack.c.h.b16 %v1086
          %v1108 = vunpack.c.l.b16 %v1087
          %v1109 = vunpack.c.h.b16 %v1087
          %v1110 = vunpack.c.l.b16 %v1088
          %v1111 = vunpack.c.h.b16 %v1088
          %v1112 = vunpack.c.l.b16 %v1089
          %v1113 = vunpack.c.h.b16 %v1089
          %v1114 = vpack.c.b16 %v1098, %v1098
          %v1115 = vpack.c.b16 %v1099, %v1099
          %v1116 = vpack.c.b16 %v1100, %v1100
          %v1117 = vpack.c.b16 %v1101, %v1101
          %v1118 = vpack.c.b16 %v1102, %v1102
          %v1119 = vpack.c.b16 %v1103, %v1103
          %v1120 = vpack.c.b16 %v1104, %v1104
          %v1121 = vpack.c.b16 %v1105, %v1105
          %v1122 = vpack.c.b16 %v1106, %v1106
          %v1123 = vpack.c.b16 %v1107, %v1107
          %v1124 = vpack.c.b16 %v1108, %v1108
          %v1125 = vpack.c.b16 %v1109, %v1109
          %v1126 = vpack.c.b16 %v1110, %v1110
          %v1127 = vpack.c.b16 %v1111, %v1111
          %v1128 = vpack.c.b16 %v1112, %v1112
          %v1129 = vpack.c.b16 %v1113, %v1113
          %1146 = vst [vmem:[%s383] sm:$0xf] %v1114
          %1147 = vst [vmem:[%s383 + $0x4] sm:$0xf] %v1115
          %1148 = vst [vmem:[%s383 + $0x8] sm:$0xf] %v1116
          %1149 = vst [vmem:[%s383 + $0xc] sm:$0xf] %v1117
          %1150 = vst [vmem:[%s383 + $0x10] sm:$0xf] %v1118
          %1151 = vst [vmem:[%s383 + $0x14] sm:$0xf] %v1119
          %1152 = vst [vmem:[%s383 + $0x18] sm:$0xf] %v1120
          %1153 = vst [vmem:[%s383 + $0x1c] sm:$0xf] %v1121
          %1154 = vst [vmem:[%s383 + $0x20] sm:$0xf] %v1122
          %1155 = vst [vmem:[%s383 + $0x24] sm:$0xf] %v1123
          %1156 = vst [vmem:[%s383 + $0x28] sm:$0xf] %v1124
          %1157 = vst [vmem:[%s383 + $0x2c] sm:$0xf] %v1125
          %1158 = vst [vmem:[%s383 + $0x30] sm:$0xf] %v1126
          %1159 = vst [vmem:[%s383 + $0x34] sm:$0xf] %v1127
          %1160 = vst [vmem:[%s383 + $0x38] sm:$0xf] %v1128
          %1161 = vst [vmem:[%s383 + $0x3c] sm:$0xf] %v1129
        $region70: #{flexible_resnet_forward.14} parent=57 // pred_fallthru
          _
        %s1162 = smul.u32 16, %s20
        %p1163 = scmp.lt.s32.totalorder %s1162, 15
        %s1164 = scalar_select %p1163, %s1162, 15
        %p1165 = scmp.lt.s32.totalorder %s21, 0
        %s1166 = scalar_select %p1165, %s21, 0
        %s1167 = sadd.s32 %s1166, %s1164
        %s1168 = smul.addr %s1167, 4
        %s1169 = scalar_lea.vmem %s4, %s1168
        // Predicated region
        $region71: #{flexible_resnet_forward.14} parent=57 // pred_check
          %p1170 = pneg %p162
        $region72: #{flexible_resnet_forward.14} parent=57 // pred_check_branch
          %1172 = sbr.rel (%p1170) target = $region74
        $region73: #{flexible_resnet_forward.14} parent=57 // pred_region
          %s1173 = smul.u32 16, %s20
        $region74: #{flexible_resnet_forward.14} parent=57 // pred_fallthru
          _
        // Predicated region
        $region75: #{flexible_resnet_forward.14} parent=57 // pred_check
          %p1174 = pneg %p162
        $region76: #{flexible_resnet_forward.14} parent=57 // pred_check_branch
          %1176 = sbr.rel (%p1174) target = $region78
        $region77: #{flexible_resnet_forward.14} parent=57 // pred_region
          %s1177 = smul.u32 16, %s20
          %p1178 = scmp.lt.s32.totalorder %s1177, 15
          %s1179 = scalar_select %p1178, %s1177, 15
          %p1180 = scmp.lt.s32.totalorder %s21, 0
          %s1181 = scalar_select %p1180, %s21, 0
          %s1182 = sadd.s32 %s1181, %s1179
          %s1183 = smul.addr %s1182, 4
          %s1184 = scalar_lea.vmem %s4, %s1183
        $region78: #{flexible_resnet_forward.14} parent=57 // pred_fallthru
          _
      $region58: #{flexible_resnet_forward.14} parent=5 // pred_fallthru
        _
      %p1185 = scmp.le.s32.totalorder 2, %s10
      // Predicated region
      $region79: #{flexible_resnet_forward.14} parent=5 // pred_check
        %p1186 = pneg %p1185
      $region80: #{flexible_resnet_forward.14} parent=5 // pred_check_branch
        %1188 = sbr.rel (%p1186) target = $region82
      $region81: #{flexible_resnet_forward.14} parent=5 // pred_region
        %s1189 = ssub.s32 %s10, 2
      $region82: #{flexible_resnet_forward.14} parent=5 // pred_fallthru
        _
    $region6: #{flexible_resnet_forward.14} parent=1 // loop_footer
      %s14 = sadd.s32 1, %s10
    $region7: #{flexible_resnet_forward.14} parent=1 // loop_footer_branch
      %9 = sbr.rel target = $region3
    $region8: #{flexible_resnet_forward.14} parent=1 // loop_exit
      _

// kernel: flexible_resnet_forward.15
$region0: #{flexible_resnet_forward.15}
  #allocation0 [shape = 'u32[]', space=smem, size = 0x4, offset = 0x4, fixed_abs, tag = 'smem constant byte address 0x4 - core index']
  #allocation1 [shape = 'u32[144,128]{1,0:T(1,128)}', space=vmem, size = 0x12000, scoped, tag = 'internal scratch']
  #allocation2 [shape = 'f32[128,128]{1,0:T(8,128)}', space=vmem, size = 0x10000, scoped, tag = 'scratch operand']
  %s0 = inlined_call_operand.vmem [shape: bf16[128,1152], index: 0, kind: input, shape index: {}]
  %s1 = inlined_call_operand.vmem [shape: bf16[1152,128], index: 1, kind: input, shape index: {}]
  %s2 = inlined_call_operand.vmem [shape: f32[1,128], index: 2, kind: input, shape index: {}]
  %s3 = inlined_call_operand.vmem [shape: f32[1,128], index: 3, kind: input, shape index: {}]
  %s4 = inlined_call_operand.vmem [shape: bf16[128,128], index: 4, kind: input, shape index: {}]
  %s5 = inlined_call_operand.vmem [shape: bf16[128,128], index: 5, kind: output, shape index: {}]
  %s6 = sld [smem:[#allocation0]]
  $region87: #{flexible_resnet_forward.15} parent=0
    _
  %s8 = ssub.s32 1, %s6
  %s9 = scalar_select 0, %s8, %s6
  $region1: #{flexible_resnet_forward.15} parent=0
    #allocation3 [shape = 'u8[196608]{0}', space=vmem, size = 0x30000, scoped, tag = 'input window, operand 0']
    loop: start=0, step=1, limit=5
    $region2: #{flexible_resnet_forward.15} parent=1 // loop_pre_header
      _
    $region3: #{flexible_resnet_forward.15} parent=1 // loop_header
      %s11 = sphi 0, %s15
      %p12 = scmp.ge.s32.totalorder %s11, 5
      %s18 = sphi 0, %s37
      %s19 = sphi 0, %s33
      %s20 = sphi 0, %s29
      %s21 = sphi 0, %s18
      %s22 = sphi 0, %s19
      %s23 = sphi 0, %s20
      %s24 = sphi 0, %s21
      %s25 = sphi 0, %s22
      %s26 = sphi 0, %s23
      %s42 = sphi 0, %s44
      %s45 = sphi 0, %s42
      %s46 = sphi 0, %s45
      %s62 = sphi 0, %s46
      %s70 = sphi 0, %s72
      %s73 = sphi 0, %s70
      %s74 = sphi 0, %s73
      %s90 = sphi 0, %s74
      %s96 = sphi 0, %s98
      %s99 = sphi 0, %s96
      %s100 = sphi 0, %s99
      %s116 = sphi 0, %s100
      %s122 = sphi 0, %s124
      %s125 = sphi 0, %s122
      %s126 = sphi 0, %s125
      %s142 = sphi 0, %s126
      %s150 = sphi 0, %s152
      %s153 = sphi 0, %s150
      %s154 = sphi 0, %s153
      %s170 = sphi 0, %s154
      %s178 = sphi 0, %s180
      %s181 = sphi 0, %s178
      %s182 = sphi 0, %s181
      %s198 = sphi 0, %s182
    $region4: #{flexible_resnet_forward.15} parent=1 // loop_header_branch
      %14 = sbr.rel (%p12) target = $region8
    $region5: #{flexible_resnet_forward.15} parent=1 // loop_body
      %s16 = ssub.s32 %s11, 1
      %s17 = ssub.s32 %s11, 2
      %s27 = sadd.s32 1, %s20
      %p28 = scmp.ge.s32.totalorder %s27, 3
      %s29 = scalar_select %p28, 0, %s27
      %s30 = sadd.s32 1, %s19
      %s31 = scalar_select %p28, %s30, %s19
      %p32 = scmp.ge.s32.totalorder %s31, 1
      %s33 = scalar_select %p32, 0, %s31
      %s34 = sadd.s32 1, %s18
      %s35 = scalar_select %p32, %s34, %s18
      %p36 = scmp.ge.s32.totalorder %s35, 1
      %s37 = scalar_select %p36, 0, %s35
      %s38 = ssub.s32 %s18, %s37
      %s39 = ssub.s32 %s20, %s29
      %s40 = sor.u32 %s38, %s39
      %p41 = scmp.eq.s32.totalorder %s40, 0
      %s43 = sadd.s32 %s42, 1
      %s44 = scalar_select %p41, %s42, %s43
      %p47 = pneg %p41
      %p48 = scmp.eq.s32.totalorder %s11, 2
      %p49 = por %p47, %p48
      %p50 = scmp.ne.s32.totalorder %s42, %s45
      %p51 = scmp.eq.s32.totalorder %s11, 0
      %p52 = por %p50, %p51
      %p53 = scmp.ne.s32.totalorder %s42, %s45
      %p54 = scmp.eq.s32.totalorder %s16, 2
      %p55 = por %p53, %p54
      %p56 = scmp.ne.s32.totalorder %s45, %s46
      %p57 = scmp.eq.s32.totalorder %s16, 0
      %p58 = por %p56, %p57
      %p59 = scmp.ne.s32.totalorder %s45, %s46
      %p60 = scmp.eq.s32.totalorder %s17, 2
      %p61 = por %p59, %p60
      %p63 = scmp.ne.s32.totalorder %s46, %s62
      %p64 = scmp.eq.s32.totalorder %s17, 0
      %p65 = por %p63, %p64
      %s66 = ssub.s32 %s20, %s29
      %s67 = ssub.s32 %s19, %s33
      %s68 = sor.u32 %s66, %s67
      %p69 = scmp.eq.s32.totalorder %s68, 0
      %s71 = sadd.s32 %s70, 1
      %s72 = scalar_select %p69, %s70, %s71
      %p75 = pneg %p69
      %p76 = scmp.eq.s32.totalorder %s11, 2
      %p77 = por %p75, %p76
      %p78 = scmp.ne.s32.totalorder %s70, %s73
      %p79 = scmp.eq.s32.totalorder %s11, 0
      %p80 = por %p78, %p79
      %p81 = scmp.ne.s32.totalorder %s70, %s73
      %p82 = scmp.eq.s32.totalorder %s16, 2
      %p83 = por %p81, %p82
      %p84 = scmp.ne.s32.totalorder %s73, %s74
      %p85 = scmp.eq.s32.totalorder %s16, 0
      %p86 = por %p84, %p85
      %p87 = scmp.ne.s32.totalorder %s73, %s74
      %p88 = scmp.eq.s32.totalorder %s17, 2
      %p89 = por %p87, %p88
      %p91 = scmp.ne.s32.totalorder %s74, %s90
      %p92 = scmp.eq.s32.totalorder %s17, 0
      %p93 = por %p91, %p92
      %s94 = ssub.s32 %s19, %s33
      %p95 = scmp.eq.s32.totalorder %s94, 0
      %s97 = sadd.s32 %s96, 1
      %s98 = scalar_select %p95, %s96, %s97
      %p101 = pneg %p95
      %p102 = scmp.eq.s32.totalorder %s11, 2
      %p103 = por %p101, %p102
      %p104 = scmp.ne.s32.totalorder %s96, %s99
      %p105 = scmp.eq.s32.totalorder %s11, 0
      %p106 = por %p104, %p105
      %p107 = scmp.ne.s32.totalorder %s96, %s99
      %p108 = scmp.eq.s32.totalorder %s16, 2
      %p109 = por %p107, %p108
      %p110 = scmp.ne.s32.totalorder %s99, %s100
      %p111 = scmp.eq.s32.totalorder %s16, 0
      %p112 = por %p110, %p111
      %p113 = scmp.ne.s32.totalorder %s99, %s100
      %p114 = scmp.eq.s32.totalorder %s17, 2
      %p115 = por %p113, %p114
      %p117 = scmp.ne.s32.totalorder %s100, %s116
      %p118 = scmp.eq.s32.totalorder %s17, 0
      %p119 = por %p117, %p118
      %s120 = ssub.s32 %s19, %s33
      %p121 = scmp.eq.s32.totalorder %s120, 0
      %s123 = sadd.s32 %s122, 1
      %s124 = scalar_select %p121, %s122, %s123
      %p127 = pneg %p121
      %p128 = scmp.eq.s32.totalorder %s11, 2
      %p129 = por %p127, %p128
      %p130 = scmp.ne.s32.totalorder %s122, %s125
      %p131 = scmp.eq.s32.totalorder %s11, 0
      %p132 = por %p130, %p131
      %p133 = scmp.ne.s32.totalorder %s122, %s125
      %p134 = scmp.eq.s32.totalorder %s16, 2
      %p135 = por %p133, %p134
      %p136 = scmp.ne.s32.totalorder %s125, %s126
      %p137 = scmp.eq.s32.totalorder %s16, 0
      %p138 = por %p136, %p137
      %p139 = scmp.ne.s32.totalorder %s125, %s126
      %p140 = scmp.eq.s32.totalorder %s17, 2
      %p141 = por %p139, %p140
      %p143 = scmp.ne.s32.totalorder %s126, %s142
      %p144 = scmp.eq.s32.totalorder %s17, 0
      %p145 = por %p143, %p144
      %s146 = ssub.s32 %s18, %s37
      %s147 = ssub.s32 %s19, %s33
      %s148 = sor.u32 %s146, %s147
      %p149 = scmp.eq.s32.totalorder %s148, 0
      %s151 = sadd.s32 %s150, 1
      %s152 = scalar_select %p149, %s150, %s151
      %p155 = pneg %p149
      %p156 = scmp.eq.s32.totalorder %s11, 2
      %p157 = por %p155, %p156
      %p158 = scmp.ne.s32.totalorder %s150, %s153
      %p159 = scmp.eq.s32.totalorder %s11, 0
      %p160 = por %p158, %p159
      %p161 = scmp.ne.s32.totalorder %s150, %s153
      %p162 = scmp.eq.s32.totalorder %s16, 2
      %p163 = por %p161, %p162
      %p164 = scmp.ne.s32.totalorder %s153, %s154
      %p165 = scmp.eq.s32.totalorder %s16, 0
      %p166 = por %p164, %p165
      %p167 = scmp.ne.s32.totalorder %s153, %s154
      %p168 = scmp.eq.s32.totalorder %s17, 2
      %p169 = por %p167, %p168
      %p171 = scmp.ne.s32.totalorder %s154, %s170
      %p172 = scmp.eq.s32.totalorder %s17, 0
      %p173 = por %p171, %p172
      %s174 = ssub.s32 %s18, %s37
      %s175 = ssub.s32 %s19, %s33
      %s176 = sor.u32 %s174, %s175
      %p177 = scmp.eq.s32.totalorder %s176, 0
      %s179 = sadd.s32 %s178, 1
      %s180 = scalar_select %p177, %s178, %s179
      %p183 = pneg %p177
      %p184 = scmp.eq.s32.totalorder %s11, 2
      %p185 = por %p183, %p184
      %p186 = scmp.ne.s32.totalorder %s178, %s181
      %p187 = scmp.eq.s32.totalorder %s11, 0
      %p188 = por %p186, %p187
      %p189 = scmp.ne.s32.totalorder %s178, %s181
      %p190 = scmp.eq.s32.totalorder %s16, 2
      %p191 = por %p189, %p190
      %p192 = scmp.ne.s32.totalorder %s181, %s182
      %p193 = scmp.eq.s32.totalorder %s16, 0
      %p194 = por %p192, %p193
      %p195 = scmp.ne.s32.totalorder %s181, %s182
      %p196 = scmp.eq.s32.totalorder %s17, 2
      %p197 = por %p195, %p196
      %p199 = scmp.ne.s32.totalorder %s182, %s198
      %p200 = scmp.eq.s32.totalorder %s17, 0
      %p201 = por %p199, %p200
      %p202 = scmp.le.s32.totalorder 1, %s11
      %p203 = scmp.lt.s32.totalorder %s11, 4
      %p204 = pnand %p202, %p203
      %p205 = pneg %p204
      // Predicated region
      $region9: #{flexible_resnet_forward.15} parent=5 // pred_check
        _
      $region10: #{flexible_resnet_forward.15} parent=5 // pred_check_branch
        %207 = sbr.rel (%p204) target = $region12
      $region11: #{flexible_resnet_forward.15} parent=5 // pred_region
        %s208 = ssub.s32 %s11, 1
        // Predicated region
        $region13: #{flexible_resnet_forward.15} parent=11 // pred_check
          %p209 = pneg %p112
        $region14: #{flexible_resnet_forward.15} parent=11 // pred_check_branch
          %211 = sbr.rel (%p209) target = $region16
        $region15: #{flexible_resnet_forward.15} parent=11 // pred_region
          %p212 = scmp.lt.s32.totalorder %s22, 0
          %s213 = scalar_select %p212, %s22, 0
          %s214 = scalar_lea.vmem %s2, %s213
        $region16: #{flexible_resnet_forward.15} parent=11 // pred_fallthru
          _
        // Predicated region
        $region17: #{flexible_resnet_forward.15} parent=11 // pred_check
          %p215 = pneg %p138
        $region18: #{flexible_resnet_forward.15} parent=11 // pred_check_branch
          %217 = sbr.rel (%p215) target = $region20
        $region19: #{flexible_resnet_forward.15} parent=11 // pred_region
          %p218 = scmp.lt.s32.totalorder %s22, 0
          %s219 = scalar_select %p218, %s22, 0
          %s220 = scalar_lea.vmem %s3, %s219
        $region20: #{flexible_resnet_forward.15} parent=11 // pred_fallthru
          _
        // Predicated region
        $region21: #{flexible_resnet_forward.15} parent=11 // pred_check
          %p221 = pneg %p166
        $region22: #{flexible_resnet_forward.15} parent=11 // pred_check_branch
          %223 = sbr.rel (%p221) target = $region24
        $region23: #{flexible_resnet_forward.15} parent=11 // pred_region
          %s224 = smul.u32 16, %s21
          %p225 = scmp.lt.s32.totalorder %s224, 15
          %s226 = scalar_select %p225, %s224, 15
          %p227 = scmp.lt.s32.totalorder %s22, 0
          %s228 = scalar_select %p227, %s22, 0
          %s229 = sadd.s32 %s228, %s226
          %s230 = smul.addr %s229, 4
          %s231 = scalar_lea.vmem %s4, %s230
          %s232 = smul.u32 16, %s21
        $region24: #{flexible_resnet_forward.15} parent=11 // pred_fallthru
          _
      $region12: #{flexible_resnet_forward.15} parent=5 // pred_fallthru
        _
      %p233 = scmp.lt.s32.totalorder %s11, 3
      // Predicated region
      $region25: #{flexible_resnet_forward.15} parent=5 // pred_check
        %p234 = pneg %p233
      $region26: #{flexible_resnet_forward.15} parent=5 // pred_check_branch
        %236 = sbr.rel (%p234) target = $region28
      $region27: #{flexible_resnet_forward.15} parent=5 // pred_region
        // Predicated region
        $region29: #{flexible_resnet_forward.15} parent=27 // pred_check
          %p237 = pneg %p52
        $region30: #{flexible_resnet_forward.15} parent=27 // pred_check_branch
          %239 = sbr.rel (%p237) target = $region32
        $region31: #{flexible_resnet_forward.15} parent=27 // pred_region
          %s240 = sand.u32 %s42, 1
          %s241 = sand.u32 %s42, 1
          %s242 = smul.addr %s241, 192
          %s243 = scalar_lea.vmem [#allocation3], %s242
          %s244 = smul.u32 16, %s18
          %s245 = smul.u32 3, %s20
          %s246 = smul.addr %s244, 9
          %s247 = sadd.s32 %s245, %s246
          %s248 = smul.addr %s247, 4
          %s249 = scalar_lea.vmem %s0, %s248
          // Predicated region
          $region33: #{flexible_resnet_forward.15} parent=31 // pred_check
            _
          $region34: #{flexible_resnet_forward.15} parent=31 // pred_check_branch
            %251 = sbr.rel (0) target = $region36
          $region35: #{flexible_resnet_forward.15} parent=31 // pred_region
            // Predicated region
            $region37: #{flexible_resnet_forward.15} parent=35 // pred_check
              _
            $region38: #{flexible_resnet_forward.15} parent=35 // pred_check_branch
              %253 = sbr.rel (0) target = $region40
            $region39: #{flexible_resnet_forward.15} parent=35 // pred_region
              %s254 = scalar_lea.vmem %s249, 8
              %s255 = scalar_lea.vmem %s243, 8 [#allocation3]
              loop: start=0, step=1, limit=1
              $region41: #{flexible_resnet_forward.15} parent=39 // loop_pre_header
                _
              $region42: #{flexible_resnet_forward.15} parent=39 // loop_header
                %s257 = sphi 0, %s261
                %p258 = scmp.ge.s32.totalorder %s257, 1
                %s262 = sphi %s249, %s249
                %s263 = sphi %s243, %s243
              $region43: #{flexible_resnet_forward.15} parent=39 // loop_header_branch
                %260 = sbr.rel (%p258) target = $region47
              $region44: #{flexible_resnet_forward.15} parent=39 // loop_body
                %v264 = vld [vmem:[%s262] sm:$0xff]
                %265 = vst [vmem:[%s263] sm:$0xff] %v264
                %v266 = vld [vmem:[%s262 + $0x24] sm:$0xff]
                %267 = vst [vmem:[%s263 + $0xc] sm:$0xff] %v266
                %v268 = vld [vmem:[%s262 + $0x48] sm:$0xff]
                %269 = vst [vmem:[%s263 + $0x18] sm:$0xff] %v268
                %v270 = vld [vmem:[%s262 + $0x6c] sm:$0xff]
                %271 = vst [vmem:[%s263 + $0x24] sm:$0xff] %v270
                %v272 = vld [vmem:[%s262 + $0x90] sm:$0xff]
                %273 = vst [vmem:[%s263 + $0x30] sm:$0xff] %v272
                %v274 = vld [vmem:[%s262 + $0xb4] sm:$0xff]
                %275 = vst [vmem:[%s263 + $0x3c] sm:$0xff] %v274
                %v276 = vld [vmem:[%s262 + $0xd8] sm:$0xff]
                %277 = vst [vmem:[%s263 + $0x48] sm:$0xff] %v276
                %v278 = vld [vmem:[%s262 + $0xfc] sm:$0xff]
                %279 = vst [vmem:[%s263 + $0x54] sm:$0xff] %v278
                %v280 = vld [vmem:[%s262 + $0x120] sm:$0xff]
                %281 = vst [vmem:[%s263 + $0x60] sm:$0xff] %v280
                %v282 = vld [vmem:[%s262 + $0x144] sm:$0xff]
                %283 = vst [vmem:[%s263 + $0x6c] sm:$0xff] %v282
                %v284 = vld [vmem:[%s262 + $0x168] sm:$0xff]
                %285 = vst [vmem:[%s263 + $0x78] sm:$0xff] %v284
                %v286 = vld [vmem:[%s262 + $0x18c] sm:$0xff]
                %287 = vst [vmem:[%s263 + $0x84] sm:$0xff] %v286
                %v288 = vld [vmem:[%s262 + $0x1b0] sm:$0xff]
                %289 = vst [vmem:[%s263 + $0x90] sm:$0xff] %v288
                %v290 = vld [vmem:[%s262 + $0x1d4] sm:$0xff]
                %291 = vst [vmem:[%s263 + $0x9c] sm:$0xff] %v290
                %v292 = vld [vmem:[%s262 + $0x1f8] sm:$0xff]
                %293 = vst [vmem:[%s263 + $0xa8] sm:$0xff] %v292
                %v294 = vld [vmem:[%s262 + $0x21c] sm:$0xff]
                %295 = vst [vmem:[%s263 + $0xb4] sm:$0xff] %v294
              $region45: #{flexible_resnet_forward.15} parent=39 // loop_footer
                %s261 = sadd.s32 1, %s257
              $region46: #{flexible_resnet_forward.15} parent=39 // loop_footer_branch
                %256 = sbr.rel target = $region42
              $region47: #{flexible_resnet_forward.15} parent=39 // loop_exit
                _
              loop: start=0, step=1, limit=1
              $region48: #{flexible_resnet_forward.15} parent=39 // loop_pre_header
                _
              $region49: #{flexible_resnet_forward.15} parent=39 // loop_header
                %s298 = sphi 0, %s302
                %p299 = scmp.ge.s32.totalorder %s298, 1
                %s303 = sphi %s254, %s254
                %s304 = sphi %s255, %s255
              $region50: #{flexible_resnet_forward.15} parent=39 // loop_header_branch
                %301 = sbr.rel (%p299) target = $region54
              $region51: #{flexible_resnet_forward.15} parent=39 // loop_body
                %v305 = vld [vmem:[%s303] sm:$0xf]
                %306 = vst [vmem:[%s304] sm:$0xf] %v305
                %v307 = vld [vmem:[%s303 + $0x24] sm:$0xf]
                %308 = vst [vmem:[%s304 + $0xc] sm:$0xf] %v307
                %v309 = vld [vmem:[%s303 + $0x48] sm:$0xf]
                %310 = vst [vmem:[%s304 + $0x18] sm:$0xf] %v309
                %v311 = vld [vmem:[%s303 + $0x6c] sm:$0xf]
                %312 = vst [vmem:[%s304 + $0x24] sm:$0xf] %v311
                %v313 = vld [vmem:[%s303 + $0x90] sm:$0xf]
                %314 = vst [vmem:[%s304 + $0x30] sm:$0xf] %v313
                %v315 = vld [vmem:[%s303 + $0xb4] sm:$0xf]
                %316 = vst [vmem:[%s304 + $0x3c] sm:$0xf] %v315
                %v317 = vld [vmem:[%s303 + $0xd8] sm:$0xf]
                %318 = vst [vmem:[%s304 + $0x48] sm:$0xf] %v317
                %v319 = vld [vmem:[%s303 + $0xfc] sm:$0xf]
                %320 = vst [vmem:[%s304 + $0x54] sm:$0xf] %v319
                %v321 = vld [vmem:[%s303 + $0x120] sm:$0xf]
                %322 = vst [vmem:[%s304 + $0x60] sm:$0xf] %v321
                %v323 = vld [vmem:[%s303 + $0x144] sm:$0xf]
                %324 = vst [vmem:[%s304 + $0x6c] sm:$0xf] %v323
                %v325 = vld [vmem:[%s303 + $0x168] sm:$0xf]
                %326 = vst [vmem:[%s304 + $0x78] sm:$0xf] %v325
                %v327 = vld [vmem:[%s303 + $0x18c] sm:$0xf]
                %328 = vst [vmem:[%s304 + $0x84] sm:$0xf] %v327
                %v329 = vld [vmem:[%s303 + $0x1b0] sm:$0xf]
                %330 = vst [vmem:[%s304 + $0x90] sm:$0xf] %v329
                %v331 = vld [vmem:[%s303 + $0x1d4] sm:$0xf]
                %332 = vst [vmem:[%s304 + $0x9c] sm:$0xf] %v331
                %v333 = vld [vmem:[%s303 + $0x1f8] sm:$0xf]
                %334 = vst [vmem:[%s304 + $0xa8] sm:$0xf] %v333
                %v335 = vld [vmem:[%s303 + $0x21c] sm:$0xf]
                %336 = vst [vmem:[%s304 + $0xb4] sm:$0xf] %v335
              $region52: #{flexible_resnet_forward.15} parent=39 // loop_footer
                %s302 = sadd.s32 1, %s298
              $region53: #{flexible_resnet_forward.15} parent=39 // loop_footer_branch
                %297 = sbr.rel target = $region49
              $region54: #{flexible_resnet_forward.15} parent=39 // loop_exit
                _
            $region40: #{flexible_resnet_forward.15} parent=35 // pred_fallthru
              _
          $region36: #{flexible_resnet_forward.15} parent=31 // pred_fallthru
            _
          %337 = vnop
        $region32: #{flexible_resnet_forward.15} parent=27 // pred_fallthru
          _
        // Predicated region
        $region55: #{flexible_resnet_forward.15} parent=27 // pred_check
          %p338 = pneg %p80
        $region56: #{flexible_resnet_forward.15} parent=27 // pred_check_branch
          %340 = sbr.rel (%p338) target = $region58
        $region57: #{flexible_resnet_forward.15} parent=27 // pred_region
          %s341 = smul.u32 48, %s20
          %p342 = scmp.lt.s32.totalorder %s341, 143
          %s343 = scalar_select %p342, %s341, 143
          %p344 = scmp.lt.s32.totalorder %s19, 0
          %s345 = scalar_select %p344, %s19, 0
          %s346 = sadd.s32 %s345, %s343
          %s347 = smul.addr %s346, 4
          %s348 = scalar_lea.vmem %s1, %s347
          %s349 = smul.u32 48, %s20
        $region58: #{flexible_resnet_forward.15} parent=27 // pred_fallthru
          _
      $region28: #{flexible_resnet_forward.15} parent=5 // pred_fallthru
        _
      %p350 = scmp.le.s32.totalorder 1, %s11
      %p351 = scmp.lt.s32.totalorder %s11, 4
      %p352 = pnand %p350, %p351
      %p353 = pneg %p352
      // Predicated region
      $region59: #{flexible_resnet_forward.15} parent=5 // pred_check
        _
      $region60: #{flexible_resnet_forward.15} parent=5 // pred_check_branch
        %355 = sbr.rel (%p352) target = $region62
      $region61: #{flexible_resnet_forward.15} parent=5 // pred_region
        %s356 = ssub.s32 %s11, 1
        %s357 = sand.u32 %s45, 1
        %s358 = sand.u32 %s45, 1
        %s359 = smul.addr %s358, 192
        %s360 = scalar_lea.vmem [#allocation3], %s359
        // Predicated region
        $region63: #{flexible_resnet_forward.15} parent=61 // pred_check
          %p361 = pneg %p58
        $region64: #{flexible_resnet_forward.15} parent=61 // pred_check_branch
          %363 = sbr.rel (%p361) target = $region66
        $region65: #{flexible_resnet_forward.15} parent=61 // pred_region
          _
        $region66: #{flexible_resnet_forward.15} parent=61 // pred_fallthru
          _
        %s364 = sand.u32 %s45, 1
        %s365 = sand.u32 %s45, 1
        %s366 = smul.addr %s365, 192
        %s367 = scalar_lea.vmem [#allocation3], %s366
        %p368 = pneg %p58
        %p369 = pneg %p55
        %s370 = smul.u32 48, %s23
        %p371 = scmp.lt.s32.totalorder %s370, 143
        %s372 = scalar_select %p371, %s370, 143
        %p373 = scmp.lt.s32.totalorder %s22, 0
        %s374 = scalar_select %p373, %s22, 0
        %s375 = sadd.s32 %s374, %s372
        %s376 = smul.addr %s375, 4
        %s377 = scalar_lea.vmem %s1, %s376
        %p378 = pneg %p86
        %p379 = pneg %p83
        %p380 = scmp.lt.s32.totalorder %s22, 0
        %s381 = scalar_select %p380, %s22, 0
        %s382 = scalar_lea.vmem %s2, %s381
        %p383 = pneg %p112
        %p384 = pneg %p109
        %p385 = scmp.lt.s32.totalorder %s22, 0
        %s386 = scalar_select %p385, %s22, 0
        %s387 = scalar_lea.vmem %s3, %s386
        %p388 = pneg %p138
        %p389 = pneg %p135
        %s390 = smul.u32 16, %s21
        %p391 = scmp.lt.s32.totalorder %s390, 15
        %s392 = scalar_select %p391, %s390, 15
        %p393 = scmp.lt.s32.totalorder %s22, 0
        %s394 = scalar_select %p393, %s22, 0
        %s395 = sadd.s32 %s394, %s392
        %s396 = smul.addr %s395, 4
        %s397 = scalar_lea.vmem %s4, %s396
        %p398 = pneg %p166
        %p399 = pneg %p163
        %p400 = pneg %p194
        %p401 = pneg %p191
        %s402 = smul.u32 16, %s21
        %p403 = scmp.lt.s32.totalorder %s402, 15
        %s404 = scalar_select %p403, %s402, 15
        %p405 = scmp.lt.s32.totalorder %s22, 0
        %s406 = scalar_select %p405, %s22, 0
        %s407 = sadd.s32 %s406, %s404
        %s408 = smul.addr %s407, 4
        %s409 = scalar_lea.vmem %s5, %s408
        %s410 = smul.u32 16, %s21
        %s411 = smul.u32 3, %s23
        %s412 = smul.u32 48, %s23
        %p413 = scmp.lt.s32.totalorder %s412, 143
        %s414 = scalar_select %p413, %s412, 143
        %p415 = scmp.lt.s32.totalorder %s22, 0
        %s416 = scalar_select %p415, %s22, 0
        %s417 = sadd.s32 %s416, %s414
        %s418 = smul.addr %s417, 4
        %s419 = scalar_lea.vmem %s1, %s418
        %s420 = smul.u32 48, %s23
        %p421 = scmp.lt.s32.totalorder %s22, 0
        %s422 = scalar_select %p421, %s22, 0
        %s423 = scalar_lea.vmem %s2, %s422
        %p424 = scmp.lt.s32.totalorder %s22, 0
        %s425 = scalar_select %p424, %s22, 0
        %s426 = scalar_lea.vmem %s3, %s425
        %s427 = smul.u32 16, %s21
        %p428 = scmp.lt.s32.totalorder %s427, 15
        %s429 = scalar_select %p428, %s427, 15
        %p430 = scmp.lt.s32.totalorder %s22, 0
        %s431 = scalar_select %p430, %s22, 0
        %s432 = sadd.s32 %s431, %s429
        %s433 = smul.addr %s432, 4
        %s434 = scalar_lea.vmem %s4, %s433
        %s435 = smul.u32 16, %s21
        %s436 = smul.u32 16, %s21
        %p437 = scmp.lt.s32.totalorder %s436, 15
        %s438 = scalar_select %p437, %s436, 15
        %p439 = scmp.lt.s32.totalorder %s22, 0
        %s440 = scalar_select %p439, %s22, 0
        %s441 = sadd.s32 %s440, %s438
        %s442 = smul.addr %s441, 4
        %s443 = scalar_lea.vmem %s5, %s442
        %s444 = smul.u32 16, %s21
        %p446 = scmp.eq.s32.totalorder %s23, 0
        // Predicated region
        $region67: #{flexible_resnet_forward.15} parent=61 // pred_check
          %p447 = pneg %p446
        $region68: #{flexible_resnet_forward.15} parent=61 // pred_check_branch
          %449 = sbr.rel (%p447) target = $region70
        $region69: #{flexible_resnet_forward.15} parent=61 // pred_region
          %450 = vst [vmem:[#allocation2] sm:$0xff] 0.0
          %451 = vst [vmem:[#allocation2 + $0x8] sm:$0xff] 0.0
          %452 = vst [vmem:[#allocation2 + $0x10] sm:$0xff] 0.0
          %453 = vst [vmem:[#allocation2 + $0x18] sm:$0xff] 0.0
          %454 = vst [vmem:[#allocation2 + $0x20] sm:$0xff] 0.0
          %455 = vst [vmem:[#allocation2 + $0x28] sm:$0xff] 0.0
          %456 = vst [vmem:[#allocation2 + $0x30] sm:$0xff] 0.0
          %457 = vst [vmem:[#allocation2 + $0x38] sm:$0xff] 0.0
          %458 = vst [vmem:[#allocation2 + $0x40] sm:$0xff] 0.0
          %459 = vst [vmem:[#allocation2 + $0x48] sm:$0xff] 0.0
          %460 = vst [vmem:[#allocation2 + $0x50] sm:$0xff] 0.0
          %461 = vst [vmem:[#allocation2 + $0x58] sm:$0xff] 0.0
          %462 = vst [vmem:[#allocation2 + $0x60] sm:$0xff] 0.0
          %463 = vst [vmem:[#allocation2 + $0x68] sm:$0xff] 0.0
          %464 = vst [vmem:[#allocation2 + $0x70] sm:$0xff] 0.0
          %465 = vst [vmem:[#allocation2 + $0x78] sm:$0xff] 0.0
        $region70: #{flexible_resnet_forward.15} parent=61 // pred_fallthru
          _
        %v466 = vld [vmem:[#allocation2] sm:$0xff]
        %v467 = vld [vmem:[#allocation2 + $0x8] sm:$0xff]
        %v468 = vld [vmem:[#allocation2 + $0x10] sm:$0xff]
        %v469 = vld [vmem:[#allocation2 + $0x18] sm:$0xff]
        %v470 = vld [vmem:[#allocation2 + $0x20] sm:$0xff]
        %v471 = vld [vmem:[#allocation2 + $0x28] sm:$0xff]
        %v472 = vld [vmem:[#allocation2 + $0x30] sm:$0xff]
        %v473 = vld [vmem:[#allocation2 + $0x38] sm:$0xff]
        %v474 = vld [vmem:[#allocation2 + $0x40] sm:$0xff]
        %v475 = vld [vmem:[#allocation2 + $0x48] sm:$0xff]
        %v476 = vld [vmem:[#allocation2 + $0x50] sm:$0xff]
        %v477 = vld [vmem:[#allocation2 + $0x58] sm:$0xff]
        %v478 = vld [vmem:[#allocation2 + $0x60] sm:$0xff]
        %v479 = vld [vmem:[#allocation2 + $0x68] sm:$0xff]
        %v480 = vld [vmem:[#allocation2 + $0x70] sm:$0xff]
        %v481 = vld [vmem:[#allocation2 + $0x78] sm:$0xff]
        %v482 = vld [vmem:[%s360] sm:$0xff]
        %v483 = vld [vmem:[%s360 + $0x8] sm:$0xf]
        %v484 = vld [vmem:[%s360 + $0xc] sm:$0xff]
        %v485 = vld [vmem:[%s360 + $0x14] sm:$0xf]
        %v486 = vld [vmem:[%s360 + $0x18] sm:$0xff]
        %v487 = vld [vmem:[%s360 + $0x20] sm:$0xf]
        %v488 = vld [vmem:[%s360 + $0x24] sm:$0xff]
        %v489 = vld [vmem:[%s360 + $0x2c] sm:$0xf]
        %v490 = vld [vmem:[%s360 + $0x30] sm:$0xff]
        %v491 = vld [vmem:[%s360 + $0x38] sm:$0xf]
        %v492 = vld [vmem:[%s360 + $0x3c] sm:$0xff]
        %v493 = vld [vmem:[%s360 + $0x44] sm:$0xf]
        %v494 = vld [vmem:[%s360 + $0x48] sm:$0xff]
        %v495 = vld [vmem:[%s360 + $0x50] sm:$0xf]
        %v496 = vld [vmem:[%s360 + $0x54] sm:$0xff]
        %v497 = vld [vmem:[%s360 + $0x5c] sm:$0xf]
        %v498 = vld [vmem:[%s360 + $0x60] sm:$0xff]
        %v499 = vld [vmem:[%s360 + $0x68] sm:$0xf]
        %v500 = vld [vmem:[%s360 + $0x6c] sm:$0xff]
        %v501 = vld [vmem:[%s360 + $0x74] sm:$0xf]
        %v502 = vld [vmem:[%s360 + $0x78] sm:$0xff]
        %v503 = vld [vmem:[%s360 + $0x80] sm:$0xf]
        %v504 = vld [vmem:[%s360 + $0x84] sm:$0xff]
        %v505 = vld [vmem:[%s360 + $0x8c] sm:$0xf]
        %v506 = vld [vmem:[%s360 + $0x90] sm:$0xff]
        %v507 = vld [vmem:[%s360 + $0x98] sm:$0xf]
        %v508 = vld [vmem:[%s360 + $0x9c] sm:$0xff]
        %v509 = vld [vmem:[%s360 + $0xa4] sm:$0xf]
        %v510 = vld [vmem:[%s360 + $0xa8] sm:$0xff]
        %v511 = vld [vmem:[%s360 + $0xb0] sm:$0xf]
        %v512 = vld [vmem:[%s360 + $0xb4] sm:$0xff]
        %v513 = vld [vmem:[%s360 + $0xbc] sm:$0xf]
        %v514 = vld [vmem:[%s419] sm:$0xf]
        %v515 = vld [vmem:[%s419 + $0x4] sm:$0xf]
        %v516 = vld [vmem:[%s419 + $0x8] sm:$0xf]
        %v517 = vld [vmem:[%s419 + $0xc] sm:$0xf]
        %v518 = vld [vmem:[%s419 + $0x10] sm:$0xf]
        %v519 = vld [vmem:[%s419 + $0x14] sm:$0xf]
        %v520 = vld [vmem:[%s419 + $0x18] sm:$0xf]
        %v521 = vld [vmem:[%s419 + $0x1c] sm:$0xf]
        %v522 = vld [vmem:[%s419 + $0x20] sm:$0xf]
        %v523 = vld [vmem:[%s419 + $0x24] sm:$0xf]
        %v524 = vld [vmem:[%s419 + $0x28] sm:$0xf]
        %v525 = vld [vmem:[%s419 + $0x2c] sm:$0xf]
        %v526 = vld [vmem:[%s419 + $0x30] sm:$0xf]
        %v527 = vld [vmem:[%s419 + $0x34] sm:$0xf]
        %v528 = vld [vmem:[%s419 + $0x38] sm:$0xf]
        %v529 = vld [vmem:[%s419 + $0x3c] sm:$0xf]
        %v530 = vld [vmem:[%s419 + $0x40] sm:$0xf]
        %v531 = vld [vmem:[%s419 + $0x44] sm:$0xf]
        %v532 = vld [vmem:[%s419 + $0x48] sm:$0xf]
        %v533 = vld [vmem:[%s419 + $0x4c] sm:$0xf]
        %v534 = vld [vmem:[%s419 + $0x50] sm:$0xf]
        %v535 = vld [vmem:[%s419 + $0x54] sm:$0xf]
        %v536 = vld [vmem:[%s419 + $0x58] sm:$0xf]
        %v537 = vld [vmem:[%s419 + $0x5c] sm:$0xf]
        %v538 = vld [vmem:[%s419 + $0x60] sm:$0xf]
        %v539 = vld [vmem:[%s419 + $0x64] sm:$0xf]
        %v540 = vld [vmem:[%s419 + $0x68] sm:$0xf]
        %v541 = vld [vmem:[%s419 + $0x6c] sm:$0xf]
        %v542 = vld [vmem:[%s419 + $0x70] sm:$0xf]
        %v543 = vld [vmem:[%s419 + $0x74] sm:$0xf]
        %v544 = vld [vmem:[%s419 + $0x78] sm:$0xf]
        %v545 = vld [vmem:[%s419 + $0x7c] sm:$0xf]
        %v546 = vld [vmem:[%s419 + $0x80] sm:$0xf]
        %v547 = vld [vmem:[%s419 + $0x84] sm:$0xf]
        %v548 = vld [vmem:[%s419 + $0x88] sm:$0xf]
        %v549 = vld [vmem:[%s419 + $0x8c] sm:$0xf]
        %v550 = vld [vmem:[%s419 + $0x90] sm:$0xf]
        %v551 = vld [vmem:[%s419 + $0x94] sm:$0xf]
        %v552 = vld [vmem:[%s419 + $0x98] sm:$0xf]
        %v553 = vld [vmem:[%s419 + $0x9c] sm:$0xf]
        %v554 = vld [vmem:[%s419 + $0xa0] sm:$0xf]
        %v555 = vld [vmem:[%s419 + $0xa4] sm:$0xf]
        %v556 = vld [vmem:[%s419 + $0xa8] sm:$0xf]
        %v557 = vld [vmem:[%s419 + $0xac] sm:$0xf]
        %v558 = vld [vmem:[%s419 + $0xb0] sm:$0xf]
        %v559 = vld [vmem:[%s419 + $0xb4] sm:$0xf]
        %v560 = vld [vmem:[%s419 + $0xb8] sm:$0xf]
        %v561 = vld [vmem:[%s419 + $0xbc] sm:$0xf]
        %v594 = vunpack.c.l.b16 %v482
        %v595 = vunpack.c.h.b16 %v482
        %v596 = vunpack.c.l.b16 %v483
        %v597 = vunpack.c.l.b16 %v484
        %v598 = vunpack.c.h.b16 %v484
        %v599 = vunpack.c.l.b16 %v485
        %v600 = vunpack.c.l.b16 %v486
        %v601 = vunpack.c.h.b16 %v486
        %v602 = vunpack.c.l.b16 %v487
        %v603 = vunpack.c.l.b16 %v488
        %v604 = vunpack.c.h.b16 %v488
        %v605 = vunpack.c.l.b16 %v489
        %v606 = vunpack.c.l.b16 %v490
        %v607 = vunpack.c.h.b16 %v490
        %v608 = vunpack.c.l.b16 %v491
        %v609 = vunpack.c.l.b16 %v492
        %v610 = vunpack.c.h.b16 %v492
        %v611 = vunpack.c.l.b16 %v493
        %v612 = vunpack.c.l.b16 %v494
        %v613 = vunpack.c.h.b16 %v494
        %v614 = vunpack.c.l.b16 %v495
        %v615 = vunpack.c.l.b16 %v496
        %v616 = vunpack.c.h.b16 %v496
        %v617 = vunpack.c.l.b16 %v497
        %v618 = vunpack.c.l.b16 %v498
        %v619 = vunpack.c.h.b16 %v498
        %v620 = vunpack.c.l.b16 %v499
        %v621 = vunpack.c.l.b16 %v500
        %v622 = vunpack.c.h.b16 %v500
        %v623 = vunpack.c.l.b16 %v501
        %v624 = vunpack.c.l.b16 %v502
        %v625 = vunpack.c.h.b16 %v502
        %v626 = vunpack.c.l.b16 %v503
        %v627 = vunpack.c.l.b16 %v504
        %v628 = vunpack.c.h.b16 %v504
        %v629 = vunpack.c.l.b16 %v505
        %v630 = vunpack.c.l.b16 %v506
        %v631 = vunpack.c.h.b16 %v506
        %v632 = vunpack.c.l.b16 %v507
        %v633 = vunpack.c.l.b16 %v508
        %v634 = vunpack.c.h.b16 %v508
        %v635 = vunpack.c.l.b16 %v509
        %v636 = vunpack.c.l.b16 %v510
        %v637 = vunpack.c.h.b16 %v510
        %v638 = vunpack.c.l.b16 %v511
        %v639 = vunpack.c.l.b16 %v512
        %v640 = vunpack.c.h.b16 %v512
        %v641 = vunpack.c.l.b16 %v513
        %v642 = vpack.c.b16 %v597, %v594
        %v643 = vpack.c.b16 %v598, %v595
        %v644 = vpack.c.b16 %v599, %v596
        %v645 = vpack.c.b16 %v603, %v600
        %v646 = vpack.c.b16 %v604, %v601
        %v647 = vpack.c.b16 %v605, %v602
        %v648 = vpack.c.b16 %v609, %v606
        %v649 = vpack.c.b16 %v610, %v607
        %v650 = vpack.c.b16 %v611, %v608
        %v651 = vpack.c.b16 %v615, %v612
        %v652 = vpack.c.b16 %v616, %v613
        %v653 = vpack.c.b16 %v617, %v614
        %v654 = vpack.c.b16 %v621, %v618
        %v655 = vpack.c.b16 %v622, %v619
        %v656 = vpack.c.b16 %v623, %v620
        %v657 = vpack.c.b16 %v627, %v624
        %v658 = vpack.c.b16 %v628, %v625
        %v659 = vpack.c.b16 %v629, %v626
        %v660 = vpack.c.b16 %v633, %v630
        %v661 = vpack.c.b16 %v634, %v631
        %v662 = vpack.c.b16 %v635, %v632
        %v663 = vpack.c.b16 %v639, %v636
        %v664 = vpack.c.b16 %v640, %v637
        %v665 = vpack.c.b16 %v641, %v638
        %v738 = vunpack.c.l.b16 %v514
        %v739 = vunpack.c.l.b16 %v515
        %v740 = vunpack.c.l.b16 %v516
        %v741 = vunpack.c.l.b16 %v517
        %v742 = vunpack.c.l.b16 %v518
        %v743 = vunpack.c.l.b16 %v519
        %v744 = vunpack.c.l.b16 %v520
        %v745 = vunpack.c.l.b16 %v521
        %v746 = vunpack.c.l.b16 %v522
        %v747 = vunpack.c.l.b16 %v523
        %v748 = vunpack.c.l.b16 %v524
        %v749 = vunpack.c.l.b16 %v525
        %v750 = vunpack.c.l.b16 %v526
        %v751 = vunpack.c.l.b16 %v527
        %v752 = vunpack.c.l.b16 %v528
        %v753 = vunpack.c.l.b16 %v529
        %v754 = vunpack.c.l.b16 %v530
        %v755 = vunpack.c.l.b16 %v531
        %v756 = vunpack.c.l.b16 %v532
        %v757 = vunpack.c.l.b16 %v533
        %v758 = vunpack.c.l.b16 %v534
        %v759 = vunpack.c.l.b16 %v535
        %v760 = vunpack.c.l.b16 %v536
        %v761 = vunpack.c.l.b16 %v537
        %v762 = vunpack.c.l.b16 %v538
        %v763 = vunpack.c.l.b16 %v539
        %v764 = vunpack.c.l.b16 %v540
        %v765 = vunpack.c.l.b16 %v541
        %v766 = vunpack.c.l.b16 %v542
        %v767 = vunpack.c.l.b16 %v543
        %v768 = vunpack.c.l.b16 %v544
        %v769 = vunpack.c.l.b16 %v545
        %v770 = vunpack.c.l.b16 %v546
        %v771 = vunpack.c.l.b16 %v547
        %v772 = vunpack.c.l.b16 %v548
        %v773 = vunpack.c.l.b16 %v549
        %v774 = vunpack.c.l.b16 %v550
        %v775 = vunpack.c.l.b16 %v551
        %v776 = vunpack.c.l.b16 %v552
        %v777 = vunpack.c.l.b16 %v553
        %v778 = vunpack.c.l.b16 %v554
        %v779 = vunpack.c.l.b16 %v555
        %v780 = vunpack.c.l.b16 %v556
        %v781 = vunpack.c.l.b16 %v557
        %v782 = vunpack.c.l.b16 %v558
        %v783 = vunpack.c.l.b16 %v559
        %v784 = vunpack.c.l.b16 %v560
        %v785 = vunpack.c.l.b16 %v561
        %v786 = vpack.c.b16 %v739, %v738
        %v787 = vpack.c.b16 %v741, %v740
        %v788 = vpack.c.b16 %v743, %v742
        %v789 = vpack.c.b16 %v745, %v744
        %v790 = vpack.c.b16 %v747, %v746
        %v791 = vpack.c.b16 %v749, %v748
        %v792 = vpack.c.b16 %v751, %v750
        %v793 = vpack.c.b16 %v753, %v752
        %v794 = vpack.c.b16 %v755, %v754
        %v795 = vpack.c.b16 %v757, %v756
        %v796 = vpack.c.b16 %v759, %v758
        %v797 = vpack.c.b16 %v761, %v760
        %v798 = vpack.c.b16 %v763, %v762
        %v799 = vpack.c.b16 %v765, %v764
        %v800 = vpack.c.b16 %v767, %v766
        %v801 = vpack.c.b16 %v769, %v768
        %v802 = vpack.c.b16 %v771, %v770
        %v803 = vpack.c.b16 %v773, %v772
        %v804 = vpack.c.b16 %v775, %v774
        %v805 = vpack.c.b16 %v777, %v776
        %v806 = vpack.c.b16 %v779, %v778
        %v807 = vpack.c.b16 %v781, %v780
        %v808 = vpack.c.b16 %v783, %v782
        %v809 = vpack.c.b16 %v785, %v784
        %834 = vmatprep.subr.bf16.mxu0 0
        %835 = vmatpush1.bf16.msra.mxu0 %v786
        %836 = vmatprep.subr.bf16.mxu0 0
        %837 = vmatpush1.bf16.msra.mxu0 %v787
        %838 = vmatprep.subr.bf16.mxu0 0
        %839 = vmatpush1.bf16.msra.mxu0 %v788
        %840 = vmatprep.subr.bf16.mxu0 0
        %841 = vmatpush1.bf16.msra.mxu0 %v789
        %842 = vmatprep.subr.bf16.mxu0 0
        %843 = vmatpush1.bf16.msra.mxu0 %v790
        %844 = vmatprep.subr.bf16.mxu0 0
        %845 = vmatpush1.bf16.msra.mxu0 %v791
        %846 = vmatprep.subr.bf16.mxu0 0
        %847 = vmatpush1.bf16.msra.mxu0 %v792
        %848 = vmatprep.subr.bf16.mxu0 0
        %849 = vmatpush1.bf16.msra.mxu0 %v793
        %850 = vmatprep.subr.bf16.mxu0 0
        %851 = vmatpush1.bf16.msra.mxu0 %v794
        %852 = vmatprep.subr.bf16.mxu0 0
        %853 = vmatpush1.bf16.msra.mxu0 %v795
        %854 = vmatprep.subr.bf16.mxu0 0
        %855 = vmatpush1.bf16.msra.mxu0 %v796
        %856 = vmatprep.subr.bf16.mxu0 0
        %857 = vmatpush1.bf16.msra.mxu0 %v797
        %858 = vmatprep.subr.bf16.mxu0 0
        %859 = vmatpush1.bf16.msra.mxu0 %v798
        %860 = vmatprep.subr.bf16.mxu0 0
        %861 = vmatpush1.bf16.msra.mxu0 %v799
        %862 = vmatprep.subr.bf16.mxu0 0
        %863 = vmatpush1.bf16.msra.mxu0 %v800
        %864 = vmatprep.subr.bf16.mxu0 0
        %865 = vmatpush1.bf16.msra.mxu0 %v801
        %866 = vmatprep.mubr.bf16.mxu0 %v643
        %867 = vmatmul.mubr.bf16.gmra.mrb[0].mxu0 %v642
        %v868 = vpop.f32.mrb[0].mxu0
        %v869 = vadd.f32 0.0, %v868
        %v870 = vpop.f32.mrb[0].mxu0
        %v871 = vpop.f32.mrb[0].mxu0
        %v872 = vadd.f32 0.0, %v871
        %v873 = vpop.f32.mrb[0].mxu0
        %874 = vmatprep.mubr.bf16.mxu0 %v646
        %875 = vmatmul.mubr.bf16.gmra.mrb[0].mxu0 %v645
        %v876 = vpop.f32.mrb[0].mxu0
        %v877 = vadd.f32 0.0, %v876
        %v878 = vpop.f32.mrb[0].mxu0
        %v879 = vpop.f32.mrb[0].mxu0
        %v880 = vadd.f32 0.0, %v879
        %v881 = vpop.f32.mrb[0].mxu0
        %882 = vmatprep.mubr.bf16.mxu0 %v649
        %883 = vmatmul.mubr.bf16.gmra.mrb[0].mxu0 %v648
        %v884 = vpop.f32.mrb[0].mxu0
        %v885 = vadd.f32 0.0, %v884
        %v886 = vpop.f32.mrb[0].mxu0
        %v887 = vpop.f32.mrb[0].mxu0
        %v888 = vadd.f32 0.0, %v887
        %v889 = vpop.f32.mrb[0].mxu0
        %890 = vmatprep.mubr.bf16.mxu0 %v652
        %891 = vmatmul.mubr.bf16.gmra.mrb[0].mxu0 %v651
        %v892 = vpop.f32.mrb[0].mxu0
        %v893 = vadd.f32 0.0, %v892
        %v894 = vpop.f32.mrb[0].mxu0
        %v895 = vpop.f32.mrb[0].mxu0
        %v896 = vadd.f32 0.0, %v895
        %v897 = vpop.f32.mrb[0].mxu0
        %898 = vmatprep.mubr.bf16.mxu0 %v655
        %899 = vmatmul.mubr.bf16.gmra.mrb[0].mxu0 %v654
        %v900 = vpop.f32.mrb[0].mxu0
        %v901 = vadd.f32 0.0, %v900
        %v902 = vpop.f32.mrb[0].mxu0
        %v903 = vpop.f32.mrb[0].mxu0
        %v904 = vadd.f32 0.0, %v903
        %v905 = vpop.f32.mrb[0].mxu0
        %906 = vmatprep.mubr.bf16.mxu0 %v658
        %907 = vmatmul.mubr.bf16.gmra.mrb[0].mxu0 %v657
        %v908 = vpop.f32.mrb[0].mxu0
        %v909 = vadd.f32 0.0, %v908
        %v910 = vpop.f32.mrb[0].mxu0
        %v911 = vpop.f32.mrb[0].mxu0
        %v912 = vadd.f32 0.0, %v911
        %v913 = vpop.f32.mrb[0].mxu0
        %914 = vmatprep.mubr.bf16.mxu0 %v661
        %915 = vmatmul.mubr.bf16.gmra.mrb[0].mxu0 %v660
        %v916 = vpop.f32.mrb[0].mxu0
        %v917 = vadd.f32 0.0, %v916
        %v918 = vpop.f32.mrb[0].mxu0
        %v919 = vpop.f32.mrb[0].mxu0
        %v920 = vadd.f32 0.0, %v919
        %v921 = vpop.f32.mrb[0].mxu0
        %922 = vmatprep.mubr.bf16.mxu0 %v664
        %923 = vmatmul.mubr.bf16.gmra.mrb[0].mxu0 %v663
        %v924 = vpop.f32.mrb[0].mxu0
        %v925 = vadd.f32 0.0, %v924
        %v926 = vpop.f32.mrb[0].mxu0
        %v927 = vpop.f32.mrb[0].mxu0
        %v928 = vadd.f32 0.0, %v927
        %v929 = vpop.f32.mrb[0].mxu0
        %930 = vdwg.mxu0
        %931 = vmatprep.subr.bf16.mxu0 0
        %932 = vmatpush1.bf16.msra.mxu0 %v802
        %933 = vmatprep.subr.bf16.mxu0 0
        %934 = vmatpush1.bf16.msra.mxu0 %v803
        %935 = vmatprep.subr.bf16.mxu0 0
        %936 = vmatpush1.bf16.msra.mxu0 %v804
        %937 = vmatprep.subr.bf16.mxu0 0
        %938 = vmatpush1.bf16.msra.mxu0 %v805
        %939 = vmatprep.subr.bf16.mxu0 0
        %940 = vmatpush1.bf16.msra.mxu0 %v806
        %941 = vmatprep.subr.bf16.mxu0 0
        %942 = vmatpush1.bf16.msra.mxu0 %v807
        %943 = vmatprep.subr.bf16.mxu0 0
        %944 = vmatpush1.bf16.msra.mxu0 %v808
        %945 = vmatprep.subr.bf16.mxu0 0
        %946 = vmatpush1.bf16.msra.mxu0 %v809
        %947 = vmatprep.subr.bf16.mxu0 0
        %948 = vmatpush1.bf16.msra.mxu0 0
        %949 = vmatprep.subr.bf16.mxu0 0
        %950 = vmatpush1.bf16.msra.mxu0 0
        %951 = vmatprep.subr.bf16.mxu0 0
        %952 = vmatpush1.bf16.msra.mxu0 0
        %953 = vmatprep.subr.bf16.mxu0 0
        %954 = vmatpush1.bf16.msra.mxu0 0
        %955 = vmatprep.subr.bf16.mxu0 0
        %956 = vmatpush1.bf16.msra.mxu0 0
        %957 = vmatprep.subr.bf16.mxu0 0
        %958 = vmatpush1.bf16.msra.mxu0 0
        %959 = vmatprep.subr.bf16.mxu0 0
        %960 = vmatpush1.bf16.msra.mxu0 0
        %961 = vmatprep.subr.bf16.mxu0 0
        %962 = vmatpush1.bf16.msra.mxu0 0
        %963 = vmatprep.mubr.bf16.mxu0 0
        %964 = vmatmul.mubr.bf16.gmra.mrb[0].mxu0 %v644
        %v965 = vpop.f32.mrb[0].mxu0
        %v966 = vadd.f32 %v869, %v965
        %v967 = vpop.f32.mrb[0].mxu0
        %v968 = vpop.f32.mrb[0].mxu0
        %v969 = vadd.f32 %v872, %v968
        %v970 = vpop.f32.mrb[0].mxu0
        %971 = vmatprep.mubr.bf16.mxu0 0
        %972 = vmatmul.mubr.bf16.gmra.mrb[0].mxu0 %v647
        %v973 = vpop.f32.mrb[0].mxu0
        %v974 = vadd.f32 %v877, %v973
        %v975 = vpop.f32.mrb[0].mxu0
        %v976 = vpop.f32.mrb[0].mxu0
        %v977 = vadd.f32 %v880, %v976
        %v978 = vpop.f32.mrb[0].mxu0
        %979 = vmatprep.mubr.bf16.mxu0 0
        %980 = vmatmul.mubr.bf16.gmra.mrb[0].mxu0 %v650
        %v981 = vpop.f32.mrb[0].mxu0
        %v982 = vadd.f32 %v885, %v981
        %v983 = vpop.f32.mrb[0].mxu0
        %v984 = vpop.f32.mrb[0].mxu0
        %v985 = vadd.f32 %v888, %v984
        %v986 = vpop.f32.mrb[0].mxu0
        %987 = vmatprep.mubr.bf16.mxu0 0
        %988 = vmatmul.mubr.bf16.gmra.mrb[0].mxu0 %v653
        %v989 = vpop.f32.mrb[0].mxu0
        %v990 = vadd.f32 %v893, %v989
        %v991 = vpop.f32.mrb[0].mxu0
        %v992 = vpop.f32.mrb[0].mxu0
        %v993 = vadd.f32 %v896, %v992
        %v994 = vpop.f32.mrb[0].mxu0
        %995 = vmatprep.mubr.bf16.mxu0 0
        %996 = vmatmul.mubr.bf16.gmra.mrb[0].mxu0 %v656
        %v997 = vpop.f32.mrb[0].mxu0
        %v998 = vadd.f32 %v901, %v997
        %v999 = vpop.f32.mrb[0].mxu0
        %v1000 = vpop.f32.mrb[0].mxu0
        %v1001 = vadd.f32 %v904, %v1000
        %v1002 = vpop.f32.mrb[0].mxu0
        %1003 = vmatprep.mubr.bf16.mxu0 0
        %1004 = vmatmul.mubr.bf16.gmra.mrb[0].mxu0 %v659
        %v1005 = vpop.f32.mrb[0].mxu0
        %v1006 = vadd.f32 %v909, %v1005
        %v1007 = vpop.f32.mrb[0].mxu0
        %v1008 = vpop.f32.mrb[0].mxu0
        %v1009 = vadd.f32 %v912, %v1008
        %v1010 = vpop.f32.mrb[0].mxu0
        %1011 = vmatprep.mubr.bf16.mxu0 0
        %1012 = vmatmul.mubr.bf16.gmra.mrb[0].mxu0 %v662
        %v1013 = vpop.f32.mrb[0].mxu0
        %v1014 = vadd.f32 %v917, %v1013
        %v1015 = vpop.f32.mrb[0].mxu0
        %v1016 = vpop.f32.mrb[0].mxu0
        %v1017 = vadd.f32 %v920, %v1016
        %v1018 = vpop.f32.mrb[0].mxu0
        %1019 = vmatprep.mubr.bf16.mxu0 0
        %1020 = vmatmul.mubr.bf16.gmra.mrb[0].mxu0 %v665
        %v1021 = vpop.f32.mrb[0].mxu0
        %v1022 = vadd.f32 %v925, %v1021
        %v1023 = vpop.f32.mrb[0].mxu0
        %v1024 = vpop.f32.mrb[0].mxu0
        %v1025 = vadd.f32 %v928, %v1024
        %v1026 = vpop.f32.mrb[0].mxu0
        %1027 = vdwg.mxu0
        %v1028 = vadd.f32 %v466, %v966
        %v1029 = vadd.f32 %v467, %v969
        %v1030 = vadd.f32 %v468, %v974
        %v1031 = vadd.f32 %v469, %v977
        %v1032 = vadd.f32 %v470, %v982
        %v1033 = vadd.f32 %v471, %v985
        %v1034 = vadd.f32 %v472, %v990
        %v1035 = vadd.f32 %v473, %v993
        %v1036 = vadd.f32 %v474, %v998
        %v1037 = vadd.f32 %v475, %v1001
        %v1038 = vadd.f32 %v476, %v1006
        %v1039 = vadd.f32 %v477, %v1009
        %v1040 = vadd.f32 %v478, %v1014
        %v1041 = vadd.f32 %v479, %v1017
        %v1042 = vadd.f32 %v480, %v1022
        %v1043 = vadd.f32 %v481, %v1025
        %1044 = vst [vmem:[#allocation2] sm:$0xff] %v1028
        %1045 = vst [vmem:[#allocation2 + $0x8] sm:$0xff] %v1029
        %1046 = vst [vmem:[#allocation2 + $0x10] sm:$0xff] %v1030
        %1047 = vst [vmem:[#allocation2 + $0x18] sm:$0xff] %v1031
        %1048 = vst [vmem:[#allocation2 + $0x20] sm:$0xff] %v1032
        %1049 = vst [vmem:[#allocation2 + $0x28] sm:$0xff] %v1033
        %1050 = vst [vmem:[#allocation2 + $0x30] sm:$0xff] %v1034
        %1051 = vst [vmem:[#allocation2 + $0x38] sm:$0xff] %v1035
        %1052 = vst [vmem:[#allocation2 + $0x40] sm:$0xff] %v1036
        %1053 = vst [vmem:[#allocation2 + $0x48] sm:$0xff] %v1037
        %1054 = vst [vmem:[#allocation2 + $0x50] sm:$0xff] %v1038
        %1055 = vst [vmem:[#allocation2 + $0x58] sm:$0xff] %v1039
        %1056 = vst [vmem:[#allocation2 + $0x60] sm:$0xff] %v1040
        %1057 = vst [vmem:[#allocation2 + $0x68] sm:$0xff] %v1041
        %1058 = vst [vmem:[#allocation2 + $0x70] sm:$0xff] %v1042
        %1059 = vst [vmem:[#allocation2 + $0x78] sm:$0xff] %v1043
        %p1060 = scmp.eq.s32.totalorder %s23, 2
        // Predicated region
        $region71: #{flexible_resnet_forward.15} parent=61 // pred_check
          %p1061 = pneg %p1060
        $region72: #{flexible_resnet_forward.15} parent=61 // pred_check_branch
          %1063 = sbr.rel (%p1061) target = $region74
        $region73: #{flexible_resnet_forward.15} parent=61 // pred_region
          %v1064 = vld [vmem:[#allocation2] sm:$0xff]
          %v1065 = vld [vmem:[#allocation2 + $0x8] sm:$0xff]
          %v1066 = vld [vmem:[#allocation2 + $0x10] sm:$0xff]
          %v1067 = vld [vmem:[#allocation2 + $0x18] sm:$0xff]
          %v1068 = vld [vmem:[#allocation2 + $0x20] sm:$0xff]
          %v1069 = vld [vmem:[#allocation2 + $0x28] sm:$0xff]
          %v1070 = vld [vmem:[#allocation2 + $0x30] sm:$0xff]
          %v1071 = vld [vmem:[#allocation2 + $0x38] sm:$0xff]
          %v1072 = vld [vmem:[#allocation2 + $0x40] sm:$0xff]
          %v1073 = vld [vmem:[#allocation2 + $0x48] sm:$0xff]
          %v1074 = vld [vmem:[#allocation2 + $0x50] sm:$0xff]
          %v1075 = vld [vmem:[#allocation2 + $0x58] sm:$0xff]
          %v1076 = vld [vmem:[#allocation2 + $0x60] sm:$0xff]
          %v1077 = vld [vmem:[#allocation2 + $0x68] sm:$0xff]
          %v1078 = vld [vmem:[#allocation2 + $0x70] sm:$0xff]
          %v1079 = vld [vmem:[#allocation2 + $0x78] sm:$0xff]
          %v1080 = vld [vmem:[%s423] sm:$0x1]
          %v1082 = vlaneseq
          %v1083 = vshrl.u32 %v1082, 7
          %v1084 = vsub.s32 0, %v1083
          %v1085 = vrot.slane %v1080, %v1084
          %v1087 = vmul.f32 %v1064, %v1085
          %v1088 = vmul.f32 %v1065, %v1085
          %v1089 = vmul.f32 %v1066, %v1085
          %v1090 = vmul.f32 %v1067, %v1085
          %v1091 = vmul.f32 %v1068, %v1085
          %v1092 = vmul.f32 %v1069, %v1085
          %v1093 = vmul.f32 %v1070, %v1085
          %v1094 = vmul.f32 %v1071, %v1085
          %v1095 = vmul.f32 %v1072, %v1085
          %v1096 = vmul.f32 %v1073, %v1085
          %v1097 = vmul.f32 %v1074, %v1085
          %v1098 = vmul.f32 %v1075, %v1085
          %v1099 = vmul.f32 %v1076, %v1085
          %v1100 = vmul.f32 %v1077, %v1085
          %v1101 = vmul.f32 %v1078, %v1085
          %v1102 = vmul.f32 %v1079, %v1085
          %v1103 = vld [vmem:[%s426] sm:$0x1]
          %v1105 = vlaneseq
          %v1106 = vshrl.u32 %v1105, 7
          %v1107 = vsub.s32 0, %v1106
          %v1108 = vrot.slane %v1103, %v1107
          %v1110 = vadd.f32 %v1087, %v1108
          %v1111 = vadd.f32 %v1088, %v1108
          %v1112 = vadd.f32 %v1089, %v1108
          %v1113 = vadd.f32 %v1090, %v1108
          %v1114 = vadd.f32 %v1091, %v1108
          %v1115 = vadd.f32 %v1092, %v1108
          %v1116 = vadd.f32 %v1093, %v1108
          %v1117 = vadd.f32 %v1094, %v1108
          %v1118 = vadd.f32 %v1095, %v1108
          %v1119 = vadd.f32 %v1096, %v1108
          %v1120 = vadd.f32 %v1097, %v1108
          %v1121 = vadd.f32 %v1098, %v1108
          %v1122 = vadd.f32 %v1099, %v1108
          %v1123 = vadd.f32 %v1100, %v1108
          %v1124 = vadd.f32 %v1101, %v1108
          %v1125 = vadd.f32 %v1102, %v1108
          %v1126 = vld [vmem:[%s434] sm:$0xf]
          %v1127 = vld [vmem:[%s434 + $0x4] sm:$0xf]
          %v1128 = vld [vmem:[%s434 + $0x8] sm:$0xf]
          %v1129 = vld [vmem:[%s434 + $0xc] sm:$0xf]
          %v1130 = vld [vmem:[%s434 + $0x10] sm:$0xf]
          %v1131 = vld [vmem:[%s434 + $0x14] sm:$0xf]
          %v1132 = vld [vmem:[%s434 + $0x18] sm:$0xf]
          %v1133 = vld [vmem:[%s434 + $0x1c] sm:$0xf]
          %v1134 = vld [vmem:[%s434 + $0x20] sm:$0xf]
          %v1135 = vld [vmem:[%s434 + $0x24] sm:$0xf]
          %v1136 = vld [vmem:[%s434 + $0x28] sm:$0xf]
          %v1137 = vld [vmem:[%s434 + $0x2c] sm:$0xf]
          %v1138 = vld [vmem:[%s434 + $0x30] sm:$0xf]
          %v1139 = vld [vmem:[%s434 + $0x34] sm:$0xf]
          %v1140 = vld [vmem:[%s434 + $0x38] sm:$0xf]
          %v1141 = vld [vmem:[%s434 + $0x3c] sm:$0xf]
          %v1142 = vunpack.c.l.bf16 %v1126
          %v1143 = vunpack.c.l.bf16 %v1127
          %v1144 = vunpack.c.l.bf16 %v1128
          %v1145 = vunpack.c.l.bf16 %v1129
          %v1146 = vunpack.c.l.bf16 %v1130
          %v1147 = vunpack.c.l.bf16 %v1131
          %v1148 = vunpack.c.l.bf16 %v1132
          %v1149 = vunpack.c.l.bf16 %v1133
          %v1150 = vunpack.c.l.bf16 %v1134
          %v1151 = vunpack.c.l.bf16 %v1135
          %v1152 = vunpack.c.l.bf16 %v1136
          %v1153 = vunpack.c.l.bf16 %v1137
          %v1154 = vunpack.c.l.bf16 %v1138
          %v1155 = vunpack.c.l.bf16 %v1139
          %v1156 = vunpack.c.l.bf16 %v1140
          %v1157 = vunpack.c.l.bf16 %v1141
          %v1158 = vadd.f32 %v1110, %v1142
          %v1159 = vadd.f32 %v1111, %v1143
          %v1160 = vadd.f32 %v1112, %v1144
          %v1161 = vadd.f32 %v1113, %v1145
          %v1162 = vadd.f32 %v1114, %v1146
          %v1163 = vadd.f32 %v1115, %v1147
          %v1164 = vadd.f32 %v1116, %v1148
          %v1165 = vadd.f32 %v1117, %v1149
          %v1166 = vadd.f32 %v1118, %v1150
          %v1167 = vadd.f32 %v1119, %v1151
          %v1168 = vadd.f32 %v1120, %v1152
          %v1169 = vadd.f32 %v1121, %v1153
          %v1170 = vadd.f32 %v1122, %v1154
          %v1171 = vadd.f32 %v1123, %v1155
          %v1172 = vadd.f32 %v1124, %v1156
          %v1173 = vadd.f32 %v1125, %v1157
          %v1174 = vmax.f32 %v1158, 0.0
          %v1175 = vmax.f32 %v1159, 0.0
          %v1176 = vmax.f32 %v1160, 0.0
          %v1177 = vmax.f32 %v1161, 0.0
          %v1178 = vmax.f32 %v1162, 0.0
          %v1179 = vmax.f32 %v1163, 0.0
          %v1180 = vmax.f32 %v1164, 0.0
          %v1181 = vmax.f32 %v1165, 0.0
          %v1182 = vmax.f32 %v1166, 0.0
          %v1183 = vmax.f32 %v1167, 0.0
          %v1184 = vmax.f32 %v1168, 0.0
          %v1185 = vmax.f32 %v1169, 0.0
          %v1186 = vmax.f32 %v1170, 0.0
          %v1187 = vmax.f32 %v1171, 0.0
          %v1188 = vmax.f32 %v1172, 0.0
          %v1189 = vmax.f32 %v1173, 0.0
          %v1190 = vpack.c.bf16 %v1175, %v1174
          %v1191 = vpack.c.bf16 %v1177, %v1176
          %v1192 = vpack.c.bf16 %v1179, %v1178
          %v1193 = vpack.c.bf16 %v1181, %v1180
          %v1194 = vpack.c.bf16 %v1183, %v1182
          %v1195 = vpack.c.bf16 %v1185, %v1184
          %v1196 = vpack.c.bf16 %v1187, %v1186
          %v1197 = vpack.c.bf16 %v1189, %v1188
          %v1206 = vunpack.c.l.b16 %v1190
          %v1207 = vunpack.c.h.b16 %v1190
          %v1208 = vunpack.c.l.b16 %v1191
          %v1209 = vunpack.c.h.b16 %v1191
          %v1210 = vunpack.c.l.b16 %v1192
          %v1211 = vunpack.c.h.b16 %v1192
          %v1212 = vunpack.c.l.b16 %v1193
          %v1213 = vunpack.c.h.b16 %v1193
          %v1214 = vunpack.c.l.b16 %v1194
          %v1215 = vunpack.c.h.b16 %v1194
          %v1216 = vunpack.c.l.b16 %v1195
          %v1217 = vunpack.c.h.b16 %v1195
          %v1218 = vunpack.c.l.b16 %v1196
          %v1219 = vunpack.c.h.b16 %v1196
          %v1220 = vunpack.c.l.b16 %v1197
          %v1221 = vunpack.c.h.b16 %v1197
          %v1222 = vpack.c.b16 %v1206, %v1206
          %v1223 = vpack.c.b16 %v1207, %v1207
          %v1224 = vpack.c.b16 %v1208, %v1208
          %v1225 = vpack.c.b16 %v1209, %v1209
          %v1226 = vpack.c.b16 %v1210, %v1210
          %v1227 = vpack.c.b16 %v1211, %v1211
          %v1228 = vpack.c.b16 %v1212, %v1212
          %v1229 = vpack.c.b16 %v1213, %v1213
          %v1230 = vpack.c.b16 %v1214, %v1214
          %v1231 = vpack.c.b16 %v1215, %v1215
          %v1232 = vpack.c.b16 %v1216, %v1216
          %v1233 = vpack.c.b16 %v1217, %v1217
          %v1234 = vpack.c.b16 %v1218, %v1218
          %v1235 = vpack.c.b16 %v1219, %v1219
          %v1236 = vpack.c.b16 %v1220, %v1220
          %v1237 = vpack.c.b16 %v1221, %v1221
          %1254 = vst [vmem:[%s443] sm:$0xf] %v1222
          %1255 = vst [vmem:[%s443 + $0x4] sm:$0xf] %v1223
          %1256 = vst [vmem:[%s443 + $0x8] sm:$0xf] %v1224
          %1257 = vst [vmem:[%s443 + $0xc] sm:$0xf] %v1225
          %1258 = vst [vmem:[%s443 + $0x10] sm:$0xf] %v1226
          %1259 = vst [vmem:[%s443 + $0x14] sm:$0xf] %v1227
          %1260 = vst [vmem:[%s443 + $0x18] sm:$0xf] %v1228
          %1261 = vst [vmem:[%s443 + $0x1c] sm:$0xf] %v1229
          %1262 = vst [vmem:[%s443 + $0x20] sm:$0xf] %v1230
          %1263 = vst [vmem:[%s443 + $0x24] sm:$0xf] %v1231
          %1264 = vst [vmem:[%s443 + $0x28] sm:$0xf] %v1232
          %1265 = vst [vmem:[%s443 + $0x2c] sm:$0xf] %v1233
          %1266 = vst [vmem:[%s443 + $0x30] sm:$0xf] %v1234
          %1267 = vst [vmem:[%s443 + $0x34] sm:$0xf] %v1235
          %1268 = vst [vmem:[%s443 + $0x38] sm:$0xf] %v1236
          %1269 = vst [vmem:[%s443 + $0x3c] sm:$0xf] %v1237
        $region74: #{flexible_resnet_forward.15} parent=61 // pred_fallthru
          _
        %s1270 = smul.u32 16, %s21
        %p1271 = scmp.lt.s32.totalorder %s1270, 15
        %s1272 = scalar_select %p1271, %s1270, 15
        %p1273 = scmp.lt.s32.totalorder %s22, 0
        %s1274 = scalar_select %p1273, %s22, 0
        %s1275 = sadd.s32 %s1274, %s1272
        %s1276 = smul.addr %s1275, 4
        %s1277 = scalar_lea.vmem %s5, %s1276
        // Predicated region
        $region75: #{flexible_resnet_forward.15} parent=61 // pred_check
          %p1278 = pneg %p191
        $region76: #{flexible_resnet_forward.15} parent=61 // pred_check_branch
          %1280 = sbr.rel (%p1278) target = $region78
        $region77: #{flexible_resnet_forward.15} parent=61 // pred_region
          %s1281 = smul.u32 16, %s21
        $region78: #{flexible_resnet_forward.15} parent=61 // pred_fallthru
          _
        // Predicated region
        $region79: #{flexible_resnet_forward.15} parent=61 // pred_check
          %p1282 = pneg %p191
        $region80: #{flexible_resnet_forward.15} parent=61 // pred_check_branch
          %1284 = sbr.rel (%p1282) target = $region82
        $region81: #{flexible_resnet_forward.15} parent=61 // pred_region
          %s1285 = smul.u32 16, %s21
          %p1286 = scmp.lt.s32.totalorder %s1285, 15
          %s1287 = scalar_select %p1286, %s1285, 15
          %p1288 = scmp.lt.s32.totalorder %s22, 0
          %s1289 = scalar_select %p1288, %s22, 0
          %s1290 = sadd.s32 %s1289, %s1287
          %s1291 = smul.addr %s1290, 4
          %s1292 = scalar_lea.vmem %s5, %s1291
        $region82: #{flexible_resnet_forward.15} parent=61 // pred_fallthru
          _
      $region62: #{flexible_resnet_forward.15} parent=5 // pred_fallthru
        _
      %p1293 = scmp.le.s32.totalorder 2, %s11
      // Predicated region
      $region83: #{flexible_resnet_forward.15} parent=5 // pred_check
        %p1294 = pneg %p1293
      $region84: #{flexible_resnet_forward.15} parent=5 // pred_check_branch
        %1296 = sbr.rel (%p1294) target = $region86
      $region85: #{flexible_resnet_forward.15} parent=5 // pred_region
        %s1297 = ssub.s32 %s11, 2
      $region86: #{flexible_resnet_forward.15} parent=5 // pred_fallthru
        _
    $region6: #{flexible_resnet_forward.15} parent=1 // loop_footer
      %s15 = sadd.s32 1, %s11
    $region7: #{flexible_resnet_forward.15} parent=1 // loop_footer_branch
      %10 = sbr.rel target = $region3
    $region8: #{flexible_resnet_forward.15} parent=1 // loop_exit
      _

// kernel: flexible_resnet_forward.17
$region0: #{flexible_resnet_forward.17}
  #allocation0 [shape = 'u32[]', space=smem, size = 0x4, offset = 0x4, fixed_abs, tag = 'smem constant byte address 0x4 - core index']
  #allocation1 [shape = 'u32[144,128]{1,0:T(1,128)}', space=vmem, size = 0x12000, scoped, tag = 'internal scratch']
  #allocation2 [shape = 'f32[32,128]{1,0:T(8,128)}', space=vmem, size = 0x4000, scoped, tag = 'scratch operand']
  %s0 = inlined_call_operand.vmem [shape: bf16[32,128], index: 0, kind: input, shape index: {}]
  %s1 = inlined_call_operand.vmem [shape: bf16[128,128], index: 1, kind: input, shape index: {}]
  %s2 = inlined_call_operand.vmem [shape: f32[1,128], index: 2, kind: input, shape index: {}]
  %s3 = inlined_call_operand.vmem [shape: f32[1,128], index: 3, kind: input, shape index: {}]
  %s4 = inlined_call_operand.vmem [shape: bf16[32,128], index: 4, kind: output, shape index: {}]
  %s5 = sld [smem:[#allocation0]]
  $region34: #{flexible_resnet_forward.17} parent=0
    _
  %s7 = ssub.s32 1, %s5
  %s8 = scalar_select 0, %s7, %s5
  // Predicated region
  $region2: #{flexible_resnet_forward.17} parent=0 // pred_check
    _
  $region3: #{flexible_resnet_forward.17} parent=0 // pred_check_branch
    %10 = sbr.rel (0) target = $region5
  $region4: #{flexible_resnet_forward.17} parent=0 // pred_region
    _
  $region5: #{flexible_resnet_forward.17} parent=0 // pred_fallthru
    _
  // Predicated region
  $region6: #{flexible_resnet_forward.17} parent=0 // pred_check
    _
  $region7: #{flexible_resnet_forward.17} parent=0 // pred_check_branch
    %12 = sbr.rel (0) target = $region9
  $region8: #{flexible_resnet_forward.17} parent=0 // pred_region
    _
  $region9: #{flexible_resnet_forward.17} parent=0 // pred_fallthru
    _
  // Predicated region
  $region10: #{flexible_resnet_forward.17} parent=0 // pred_check
    _
  $region11: #{flexible_resnet_forward.17} parent=0 // pred_check_branch
    %14 = sbr.rel (0) target = $region13
  $region12: #{flexible_resnet_forward.17} parent=0 // pred_region
    _
  $region13: #{flexible_resnet_forward.17} parent=0 // pred_fallthru
    _
  // Predicated region
  $region14: #{flexible_resnet_forward.17} parent=0 // pred_check
    _
  $region15: #{flexible_resnet_forward.17} parent=0 // pred_check_branch
    %16 = sbr.rel (0) target = $region17
  $region16: #{flexible_resnet_forward.17} parent=0 // pred_region
    _
  $region17: #{flexible_resnet_forward.17} parent=0 // pred_fallthru
    _
  %p18 = scmp.eq.s32.totalorder 0, 0
  // Predicated region
  $region18: #{flexible_resnet_forward.17} parent=0 // pred_check
    %p19 = pneg %p18
  $region19: #{flexible_resnet_forward.17} parent=0 // pred_check_branch
    %21 = sbr.rel (%p19) target = $region21
  $region20: #{flexible_resnet_forward.17} parent=0 // pred_region
    %22 = vst [vmem:[#allocation2] sm:$0xff] 0.0
    %23 = vst [vmem:[#allocation2 + $0x8] sm:$0xff] 0.0
    %24 = vst [vmem:[#allocation2 + $0x10] sm:$0xff] 0.0
    %25 = vst [vmem:[#allocation2 + $0x18] sm:$0xff] 0.0
  $region21: #{flexible_resnet_forward.17} parent=0 // pred_fallthru
    _
  %v26 = vld [vmem:[#allocation2] sm:$0xff]
  %v27 = vld [vmem:[#allocation2 + $0x8] sm:$0xff]
  %v28 = vld [vmem:[#allocation2 + $0x10] sm:$0xff]
  %v29 = vld [vmem:[#allocation2 + $0x18] sm:$0xff]
  %v30 = vld [vmem:[%s0] sm:$0xf]
  %v31 = vld [vmem:[%s0 + $0x4] sm:$0xf]
  %v32 = vld [vmem:[%s0 + $0x8] sm:$0xf]
  %v33 = vld [vmem:[%s0 + $0xc] sm:$0xf]
  %v34 = vld [vmem:[%s1] sm:$0xf]
  %v35 = vld [vmem:[%s1 + $0x4] sm:$0xf]
  %v36 = vld [vmem:[%s1 + $0x8] sm:$0xf]
  %v37 = vld [vmem:[%s1 + $0xc] sm:$0xf]
  %v38 = vld [vmem:[%s1 + $0x10] sm:$0xf]
  %v39 = vld [vmem:[%s1 + $0x14] sm:$0xf]
  %v40 = vld [vmem:[%s1 + $0x18] sm:$0xf]
  %v41 = vld [vmem:[%s1 + $0x1c] sm:$0xf]
  %v42 = vld [vmem:[%s1 + $0x20] sm:$0xf]
  %v43 = vld [vmem:[%s1 + $0x24] sm:$0xf]
  %v44 = vld [vmem:[%s1 + $0x28] sm:$0xf]
  %v45 = vld [vmem:[%s1 + $0x2c] sm:$0xf]
  %v46 = vld [vmem:[%s1 + $0x30] sm:$0xf]
  %v47 = vld [vmem:[%s1 + $0x34] sm:$0xf]
  %v48 = vld [vmem:[%s1 + $0x38] sm:$0xf]
  %v49 = vld [vmem:[%s1 + $0x3c] sm:$0xf]
  %v54 = vunpack.c.l.b16 %v30
  %v55 = vunpack.c.l.b16 %v31
  %v56 = vunpack.c.l.b16 %v32
  %v57 = vunpack.c.l.b16 %v33
  %v58 = vpack.c.b16 %v55, %v54
  %v59 = vpack.c.b16 %v57, %v56
  %v78 = vunpack.c.l.b16 %v34
  %v79 = vunpack.c.l.b16 %v35
  %v80 = vunpack.c.l.b16 %v36
  %v81 = vunpack.c.l.b16 %v37
  %v82 = vunpack.c.l.b16 %v38
  %v83 = vunpack.c.l.b16 %v39
  %v84 = vunpack.c.l.b16 %v40
  %v85 = vunpack.c.l.b16 %v41
  %v86 = vunpack.c.l.b16 %v42
  %v87 = vunpack.c.l.b16 %v43
  %v88 = vunpack.c.l.b16 %v44
  %v89 = vunpack.c.l.b16 %v45
  %v90 = vunpack.c.l.b16 %v46
  %v91 = vunpack.c.l.b16 %v47
  %v92 = vunpack.c.l.b16 %v48
  %v93 = vunpack.c.l.b16 %v49
  %v94 = vpack.c.b16 %v79, %v78
  %v95 = vpack.c.b16 %v81, %v80
  %v96 = vpack.c.b16 %v83, %v82
  %v97 = vpack.c.b16 %v85, %v84
  %v98 = vpack.c.b16 %v87, %v86
  %v99 = vpack.c.b16 %v89, %v88
  %v100 = vpack.c.b16 %v91, %v90
  %v101 = vpack.c.b16 %v93, %v92
  %110 = vmatprep.subr.bf16.mxu0 0
  %111 = vmatpush1.bf16.msra.mxu0 %v94
  %112 = vmatprep.subr.bf16.mxu0 0
  %113 = vmatpush1.bf16.msra.mxu0 %v95
  %114 = vmatprep.subr.bf16.mxu0 0
  %115 = vmatpush1.bf16.msra.mxu0 %v96
  %116 = vmatprep.subr.bf16.mxu0 0
  %117 = vmatpush1.bf16.msra.mxu0 %v97
  %118 = vmatprep.subr.bf16.mxu0 0
  %119 = vmatpush1.bf16.msra.mxu0 %v98
  %120 = vmatprep.subr.bf16.mxu0 0
  %121 = vmatpush1.bf16.msra.mxu0 %v99
  %122 = vmatprep.subr.bf16.mxu0 0
  %123 = vmatpush1.bf16.msra.mxu0 %v100
  %124 = vmatprep.subr.bf16.mxu0 0
  %125 = vmatpush1.bf16.msra.mxu0 %v101
  %126 = vmatprep.subr.bf16.mxu0 0
  %127 = vmatpush1.bf16.msra.mxu0 0
  %128 = vmatprep.subr.bf16.mxu0 0
  %129 = vmatpush1.bf16.msra.mxu0 0
  %130 = vmatprep.subr.bf16.mxu0 0
  %131 = vmatpush1.bf16.msra.mxu0 0
  %132 = vmatprep.subr.bf16.mxu0 0
  %133 = vmatpush1.bf16.msra.mxu0 0
  %134 = vmatprep.subr.bf16.mxu0 0
  %135 = vmatpush1.bf16.msra.mxu0 0
  %136 = vmatprep.subr.bf16.mxu0 0
  %137 = vmatpush1.bf16.msra.mxu0 0
  %138 = vmatprep.subr.bf16.mxu0 0
  %139 = vmatpush1.bf16.msra.mxu0 0
  %140 = vmatprep.subr.bf16.mxu0 0
  %141 = vmatpush1.bf16.msra.mxu0 0
  %142 = vmatprep.mubr.bf16.mxu0 0
  %143 = vmatmul.mubr.bf16.gmra.mrb[0].mxu0 %v58
  %v144 = vpop.f32.mrb[0].mxu0
  %v145 = vadd.f32 0.0, %v144
  %v146 = vpop.f32.mrb[0].mxu0
  %v147 = vpop.f32.mrb[0].mxu0
  %v148 = vadd.f32 0.0, %v147
  %v149 = vpop.f32.mrb[0].mxu0
  %150 = vmatprep.mubr.bf16.mxu0 0
  %151 = vmatmul.mubr.bf16.gmra.mrb[0].mxu0 %v59
  %v152 = vpop.f32.mrb[0].mxu0
  %v153 = vadd.f32 0.0, %v152
  %v154 = vpop.f32.mrb[0].mxu0
  %v155 = vpop.f32.mrb[0].mxu0
  %v156 = vadd.f32 0.0, %v155
  %v157 = vpop.f32.mrb[0].mxu0
  %158 = vdwg.mxu0
  %v159 = vadd.f32 %v26, %v145
  %v160 = vadd.f32 %v27, %v148
  %v161 = vadd.f32 %v28, %v153
  %v162 = vadd.f32 %v29, %v156
  %163 = vst [vmem:[#allocation2] sm:$0xff] %v159
  %164 = vst [vmem:[#allocation2 + $0x8] sm:$0xff] %v160
  %165 = vst [vmem:[#allocation2 + $0x10] sm:$0xff] %v161
  %166 = vst [vmem:[#allocation2 + $0x18] sm:$0xff] %v162
  // Predicated region
  $region22: #{flexible_resnet_forward.17} parent=0 // pred_check
    %p167 = pneg %p18
  $region23: #{flexible_resnet_forward.17} parent=0 // pred_check_branch
    %169 = sbr.rel (%p167) target = $region25
  $region24: #{flexible_resnet_forward.17} parent=0 // pred_region
    %v170 = vld [vmem:[#allocation2] sm:$0xff]
    %v171 = vld [vmem:[#allocation2 + $0x8] sm:$0xff]
    %v172 = vld [vmem:[#allocation2 + $0x10] sm:$0xff]
    %v173 = vld [vmem:[#allocation2 + $0x18] sm:$0xff]
    %v174 = vld [vmem:[%s2] sm:$0x1]
    %v176 = vlaneseq
    %v177 = vshrl.u32 %v176, 7
    %v178 = vsub.s32 0, %v177
    %v179 = vrot.slane %v174, %v178
    %v181 = vmul.f32 %v170, %v179
    %v182 = vmul.f32 %v171, %v179
    %v183 = vmul.f32 %v172, %v179
    %v184 = vmul.f32 %v173, %v179
    %v185 = vld [vmem:[%s3] sm:$0x1]
    %v187 = vlaneseq
    %v188 = vshrl.u32 %v187, 7
    %v189 = vsub.s32 0, %v188
    %v190 = vrot.slane %v185, %v189
    %v192 = vadd.f32 %v181, %v190
    %v193 = vadd.f32 %v182, %v190
    %v194 = vadd.f32 %v183, %v190
    %v195 = vadd.f32 %v184, %v190
    %v196 = vpack.c.bf16 %v193, %v192
    %v197 = vpack.c.bf16 %v195, %v194
    %v200 = vunpack.c.l.b16 %v196
    %v201 = vunpack.c.h.b16 %v196
    %v202 = vunpack.c.l.b16 %v197
    %v203 = vunpack.c.h.b16 %v197
    %v204 = vpack.c.b16 %v200, %v200
    %v205 = vpack.c.b16 %v201, %v201
    %v206 = vpack.c.b16 %v202, %v202
    %v207 = vpack.c.b16 %v203, %v203
    %212 = vst [vmem:[%s4] sm:$0xf] %v204
    %213 = vst [vmem:[%s4 + $0x4] sm:$0xf] %v205
    %214 = vst [vmem:[%s4 + $0x8] sm:$0xf] %v206
    %215 = vst [vmem:[%s4 + $0xc] sm:$0xf] %v207
  $region25: #{flexible_resnet_forward.17} parent=0 // pred_fallthru
    _
  // Predicated region
  $region26: #{flexible_resnet_forward.17} parent=0 // pred_check
    _
  $region27: #{flexible_resnet_forward.17} parent=0 // pred_check_branch
    %217 = sbr.rel (0) target = $region29
  $region28: #{flexible_resnet_forward.17} parent=0 // pred_region
    _
  $region29: #{flexible_resnet_forward.17} parent=0 // pred_fallthru
    _
  // Predicated region
  $region30: #{flexible_resnet_forward.17} parent=0 // pred_check
    _
  $region31: #{flexible_resnet_forward.17} parent=0 // pred_check_branch
    %219 = sbr.rel (0) target = $region33
  $region32: #{flexible_resnet_forward.17} parent=0 // pred_region
    _
  $region33: #{flexible_resnet_forward.17} parent=0 // pred_fallthru
    _

// kernel: flexible_resnet_forward.16
$region0: #{flexible_resnet_forward.16}
  #allocation0 [shape = 'u32[]', space=smem, size = 0x4, offset = 0x4, fixed_abs, tag = 'smem constant byte address 0x4 - core index']
  #allocation1 [shape = 'u32[144,128]{1,0:T(1,128)}', space=vmem, size = 0x12000, scoped, tag = 'internal scratch']
  #allocation2 [shape = 'f32[32,128]{1,0:T(8,128)}', space=vmem, size = 0x4000, scoped, tag = 'scratch operand']
  %s0 = inlined_call_operand.vmem [shape: bf16[32,1152], index: 0, kind: input, shape index: {}]
  %s1 = inlined_call_operand.vmem [shape: bf16[1152,128], index: 1, kind: input, shape index: {}]
  %s2 = inlined_call_operand.vmem [shape: f32[1,128], index: 2, kind: input, shape index: {}]
  %s3 = inlined_call_operand.vmem [shape: f32[1,128], index: 3, kind: input, shape index: {}]
  %s4 = inlined_call_operand.vmem [shape: bf16[32,128], index: 4, kind: output, shape index: {}]
  %s5 = sld [smem:[#allocation0]]
  $region83: #{flexible_resnet_forward.16} parent=0
    _
  %s7 = ssub.s32 1, %s5
  %s8 = scalar_select 0, %s7, %s5
  $region1: #{flexible_resnet_forward.16} parent=0
    #allocation3 [shape = 'u8[49152]{0}', space=vmem, size = 0xc000, scoped, tag = 'input window, operand 0']
    loop: start=0, step=1, limit=5
    $region2: #{flexible_resnet_forward.16} parent=1 // loop_pre_header
      _
    $region3: #{flexible_resnet_forward.16} parent=1 // loop_header
      %s10 = sphi 0, %s14
      %p11 = scmp.ge.s32.totalorder %s10, 5
      %s17 = sphi 0, %s36
      %s18 = sphi 0, %s32
      %s19 = sphi 0, %s28
      %s20 = sphi 0, %s17
      %s21 = sphi 0, %s18
      %s22 = sphi 0, %s19
      %s23 = sphi 0, %s20
      %s24 = sphi 0, %s21
      %s25 = sphi 0, %s22
      %s41 = sphi 0, %s43
      %s44 = sphi 0, %s41
      %s45 = sphi 0, %s44
      %s61 = sphi 0, %s45
      %s69 = sphi 0, %s71
      %s72 = sphi 0, %s69
      %s73 = sphi 0, %s72
      %s89 = sphi 0, %s73
      %s95 = sphi 0, %s97
      %s98 = sphi 0, %s95
      %s99 = sphi 0, %s98
      %s115 = sphi 0, %s99
      %s121 = sphi 0, %s123
      %s124 = sphi 0, %s121
      %s125 = sphi 0, %s124
      %s141 = sphi 0, %s125
      %s149 = sphi 0, %s151
      %s152 = sphi 0, %s149
      %s153 = sphi 0, %s152
      %s169 = sphi 0, %s153
    $region4: #{flexible_resnet_forward.16} parent=1 // loop_header_branch
      %13 = sbr.rel (%p11) target = $region8
    $region5: #{flexible_resnet_forward.16} parent=1 // loop_body
      %s15 = ssub.s32 %s10, 1
      %s16 = ssub.s32 %s10, 2
      %s26 = sadd.s32 1, %s19
      %p27 = scmp.ge.s32.totalorder %s26, 3
      %s28 = scalar_select %p27, 0, %s26
      %s29 = sadd.s32 1, %s18
      %s30 = scalar_select %p27, %s29, %s18
      %p31 = scmp.ge.s32.totalorder %s30, 1
      %s32 = scalar_select %p31, 0, %s30
      %s33 = sadd.s32 1, %s17
      %s34 = scalar_select %p31, %s33, %s17
      %p35 = scmp.ge.s32.totalorder %s34, 1
      %s36 = scalar_select %p35, 0, %s34
      %s37 = ssub.s32 %s17, %s36
      %s38 = ssub.s32 %s19, %s28
      %s39 = sor.u32 %s37, %s38
      %p40 = scmp.eq.s32.totalorder %s39, 0
      %s42 = sadd.s32 %s41, 1
      %s43 = scalar_select %p40, %s41, %s42
      %p46 = pneg %p40
      %p47 = scmp.eq.s32.totalorder %s10, 2
      %p48 = por %p46, %p47
      %p49 = scmp.ne.s32.totalorder %s41, %s44
      %p50 = scmp.eq.s32.totalorder %s10, 0
      %p51 = por %p49, %p50
      %p52 = scmp.ne.s32.totalorder %s41, %s44
      %p53 = scmp.eq.s32.totalorder %s15, 2
      %p54 = por %p52, %p53
      %p55 = scmp.ne.s32.totalorder %s44, %s45
      %p56 = scmp.eq.s32.totalorder %s15, 0
      %p57 = por %p55, %p56
      %p58 = scmp.ne.s32.totalorder %s44, %s45
      %p59 = scmp.eq.s32.totalorder %s16, 2
      %p60 = por %p58, %p59
      %p62 = scmp.ne.s32.totalorder %s45, %s61
      %p63 = scmp.eq.s32.totalorder %s16, 0
      %p64 = por %p62, %p63
      %s65 = ssub.s32 %s19, %s28
      %s66 = ssub.s32 %s18, %s32
      %s67 = sor.u32 %s65, %s66
      %p68 = scmp.eq.s32.totalorder %s67, 0
      %s70 = sadd.s32 %s69, 1
      %s71 = scalar_select %p68, %s69, %s70
      %p74 = pneg %p68
      %p75 = scmp.eq.s32.totalorder %s10, 2
      %p76 = por %p74, %p75
      %p77 = scmp.ne.s32.totalorder %s69, %s72
      %p78 = scmp.eq.s32.totalorder %s10, 0
      %p79 = por %p77, %p78
      %p80 = scmp.ne.s32.totalorder %s69, %s72
      %p81 = scmp.eq.s32.totalorder %s15, 2
      %p82 = por %p80, %p81
      %p83 = scmp.ne.s32.totalorder %s72, %s73
      %p84 = scmp.eq.s32.totalorder %s15, 0
      %p85 = por %p83, %p84
      %p86 = scmp.ne.s32.totalorder %s72, %s73
      %p87 = scmp.eq.s32.totalorder %s16, 2
      %p88 = por %p86, %p87
      %p90 = scmp.ne.s32.totalorder %s73, %s89
      %p91 = scmp.eq.s32.totalorder %s16, 0
      %p92 = por %p90, %p91
      %s93 = ssub.s32 %s18, %s32
      %p94 = scmp.eq.s32.totalorder %s93, 0
      %s96 = sadd.s32 %s95, 1
      %s97 = scalar_select %p94, %s95, %s96
      %p100 = pneg %p94
      %p101 = scmp.eq.s32.totalorder %s10, 2
      %p102 = por %p100, %p101
      %p103 = scmp.ne.s32.totalorder %s95, %s98
      %p104 = scmp.eq.s32.totalorder %s10, 0
      %p105 = por %p103, %p104
      %p106 = scmp.ne.s32.totalorder %s95, %s98
      %p107 = scmp.eq.s32.totalorder %s15, 2
      %p108 = por %p106, %p107
      %p109 = scmp.ne.s32.totalorder %s98, %s99
      %p110 = scmp.eq.s32.totalorder %s15, 0
      %p111 = por %p109, %p110
      %p112 = scmp.ne.s32.totalorder %s98, %s99
      %p113 = scmp.eq.s32.totalorder %s16, 2
      %p114 = por %p112, %p113
      %p116 = scmp.ne.s32.totalorder %s99, %s115
      %p117 = scmp.eq.s32.totalorder %s16, 0
      %p118 = por %p116, %p117
      %s119 = ssub.s32 %s18, %s32
      %p120 = scmp.eq.s32.totalorder %s119, 0
      %s122 = sadd.s32 %s121, 1
      %s123 = scalar_select %p120, %s121, %s122
      %p126 = pneg %p120
      %p127 = scmp.eq.s32.totalorder %s10, 2
      %p128 = por %p126, %p127
      %p129 = scmp.ne.s32.totalorder %s121, %s124
      %p130 = scmp.eq.s32.totalorder %s10, 0
      %p131 = por %p129, %p130
      %p132 = scmp.ne.s32.totalorder %s121, %s124
      %p133 = scmp.eq.s32.totalorder %s15, 2
      %p134 = por %p132, %p133
      %p135 = scmp.ne.s32.totalorder %s124, %s125
      %p136 = scmp.eq.s32.totalorder %s15, 0
      %p137 = por %p135, %p136
      %p138 = scmp.ne.s32.totalorder %s124, %s125
      %p139 = scmp.eq.s32.totalorder %s16, 2
      %p140 = por %p138, %p139
      %p142 = scmp.ne.s32.totalorder %s125, %s141
      %p143 = scmp.eq.s32.totalorder %s16, 0
      %p144 = por %p142, %p143
      %s145 = ssub.s32 %s17, %s36
      %s146 = ssub.s32 %s18, %s32
      %s147 = sor.u32 %s145, %s146
      %p148 = scmp.eq.s32.totalorder %s147, 0
      %s150 = sadd.s32 %s149, 1
      %s151 = scalar_select %p148, %s149, %s150
      %p154 = pneg %p148
      %p155 = scmp.eq.s32.totalorder %s10, 2
      %p156 = por %p154, %p155
      %p157 = scmp.ne.s32.totalorder %s149, %s152
      %p158 = scmp.eq.s32.totalorder %s10, 0
      %p159 = por %p157, %p158
      %p160 = scmp.ne.s32.totalorder %s149, %s152
      %p161 = scmp.eq.s32.totalorder %s15, 2
      %p162 = por %p160, %p161
      %p163 = scmp.ne.s32.totalorder %s152, %s153
      %p164 = scmp.eq.s32.totalorder %s15, 0
      %p165 = por %p163, %p164
      %p166 = scmp.ne.s32.totalorder %s152, %s153
      %p167 = scmp.eq.s32.totalorder %s16, 2
      %p168 = por %p166, %p167
      %p170 = scmp.ne.s32.totalorder %s153, %s169
      %p171 = scmp.eq.s32.totalorder %s16, 0
      %p172 = por %p170, %p171
      %p173 = scmp.le.s32.totalorder 1, %s10
      %p174 = scmp.lt.s32.totalorder %s10, 4
      %p175 = pnand %p173, %p174
      %p176 = pneg %p175
      // Predicated region
      $region9: #{flexible_resnet_forward.16} parent=5 // pred_check
        _
      $region10: #{flexible_resnet_forward.16} parent=5 // pred_check_branch
        %178 = sbr.rel (%p175) target = $region12
      $region11: #{flexible_resnet_forward.16} parent=5 // pred_region
        %s179 = ssub.s32 %s10, 1
        // Predicated region
        $region13: #{flexible_resnet_forward.16} parent=11 // pred_check
          %p180 = pneg %p111
        $region14: #{flexible_resnet_forward.16} parent=11 // pred_check_branch
          %182 = sbr.rel (%p180) target = $region16
        $region15: #{flexible_resnet_forward.16} parent=11 // pred_region
          %p183 = scmp.lt.s32.totalorder %s21, 0
          %s184 = scalar_select %p183, %s21, 0
          %s185 = scalar_lea.vmem %s2, %s184
        $region16: #{flexible_resnet_forward.16} parent=11 // pred_fallthru
          _
        // Predicated region
        $region17: #{flexible_resnet_forward.16} parent=11 // pred_check
          %p186 = pneg %p137
        $region18: #{flexible_resnet_forward.16} parent=11 // pred_check_branch
          %188 = sbr.rel (%p186) target = $region20
        $region19: #{flexible_resnet_forward.16} parent=11 // pred_region
          %p189 = scmp.lt.s32.totalorder %s21, 0
          %s190 = scalar_select %p189, %s21, 0
          %s191 = scalar_lea.vmem %s3, %s190
        $region20: #{flexible_resnet_forward.16} parent=11 // pred_fallthru
          _
      $region12: #{flexible_resnet_forward.16} parent=5 // pred_fallthru
        _
      %p192 = scmp.lt.s32.totalorder %s10, 3
      // Predicated region
      $region21: #{flexible_resnet_forward.16} parent=5 // pred_check
        %p193 = pneg %p192
      $region22: #{flexible_resnet_forward.16} parent=5 // pred_check_branch
        %195 = sbr.rel (%p193) target = $region24
      $region23: #{flexible_resnet_forward.16} parent=5 // pred_region
        // Predicated region
        $region25: #{flexible_resnet_forward.16} parent=23 // pred_check
          %p196 = pneg %p51
        $region26: #{flexible_resnet_forward.16} parent=23 // pred_check_branch
          %198 = sbr.rel (%p196) target = $region28
        $region27: #{flexible_resnet_forward.16} parent=23 // pred_region
          %s199 = sand.u32 %s41, 1
          %s200 = sand.u32 %s41, 1
          %s201 = smul.addr %s200, 48
          %s202 = scalar_lea.vmem [#allocation3], %s201
          %s203 = smul.u32 4, %s17
          %s204 = smul.u32 3, %s19
          %s205 = smul.addr %s203, 9
          %s206 = sadd.s32 %s204, %s205
          %s207 = smul.addr %s206, 4
          %s208 = scalar_lea.vmem %s0, %s207
          // Predicated region
          $region29: #{flexible_resnet_forward.16} parent=27 // pred_check
            _
          $region30: #{flexible_resnet_forward.16} parent=27 // pred_check_branch
            %210 = sbr.rel (0) target = $region32
          $region31: #{flexible_resnet_forward.16} parent=27 // pred_region
            // Predicated region
            $region33: #{flexible_resnet_forward.16} parent=31 // pred_check
              _
            $region34: #{flexible_resnet_forward.16} parent=31 // pred_check_branch
              %212 = sbr.rel (0) target = $region36
            $region35: #{flexible_resnet_forward.16} parent=31 // pred_region
              %s213 = scalar_lea.vmem %s208, 8
              %s214 = scalar_lea.vmem %s202, 8 [#allocation3]
              loop: start=0, step=1, limit=1
              $region37: #{flexible_resnet_forward.16} parent=35 // loop_pre_header
                _
              $region38: #{flexible_resnet_forward.16} parent=35 // loop_header
                %s216 = sphi 0, %s220
                %p217 = scmp.ge.s32.totalorder %s216, 1
                %s221 = sphi %s208, %s208
                %s222 = sphi %s202, %s202
              $region39: #{flexible_resnet_forward.16} parent=35 // loop_header_branch
                %219 = sbr.rel (%p217) target = $region43
              $region40: #{flexible_resnet_forward.16} parent=35 // loop_body
                %v223 = vld [vmem:[%s221] sm:$0xff]
                %224 = vst [vmem:[%s222] sm:$0xff] %v223
                %v225 = vld [vmem:[%s221 + $0x24] sm:$0xff]
                %226 = vst [vmem:[%s222 + $0xc] sm:$0xff] %v225
                %v227 = vld [vmem:[%s221 + $0x48] sm:$0xff]
                %228 = vst [vmem:[%s222 + $0x18] sm:$0xff] %v227
                %v229 = vld [vmem:[%s221 + $0x6c] sm:$0xff]
                %230 = vst [vmem:[%s222 + $0x24] sm:$0xff] %v229
              $region41: #{flexible_resnet_forward.16} parent=35 // loop_footer
                %s220 = sadd.s32 1, %s216
              $region42: #{flexible_resnet_forward.16} parent=35 // loop_footer_branch
                %215 = sbr.rel target = $region38
              $region43: #{flexible_resnet_forward.16} parent=35 // loop_exit
                _
              loop: start=0, step=1, limit=1
              $region44: #{flexible_resnet_forward.16} parent=35 // loop_pre_header
                _
              $region45: #{flexible_resnet_forward.16} parent=35 // loop_header
                %s233 = sphi 0, %s237
                %p234 = scmp.ge.s32.totalorder %s233, 1
                %s238 = sphi %s213, %s213
                %s239 = sphi %s214, %s214
              $region46: #{flexible_resnet_forward.16} parent=35 // loop_header_branch
                %236 = sbr.rel (%p234) target = $region50
              $region47: #{flexible_resnet_forward.16} parent=35 // loop_body
                %v240 = vld [vmem:[%s238] sm:$0xf]
                %241 = vst [vmem:[%s239] sm:$0xf] %v240
                %v242 = vld [vmem:[%s238 + $0x24] sm:$0xf]
                %243 = vst [vmem:[%s239 + $0xc] sm:$0xf] %v242
                %v244 = vld [vmem:[%s238 + $0x48] sm:$0xf]
                %245 = vst [vmem:[%s239 + $0x18] sm:$0xf] %v244
                %v246 = vld [vmem:[%s238 + $0x6c] sm:$0xf]
                %247 = vst [vmem:[%s239 + $0x24] sm:$0xf] %v246
              $region48: #{flexible_resnet_forward.16} parent=35 // loop_footer
                %s237 = sadd.s32 1, %s233
              $region49: #{flexible_resnet_forward.16} parent=35 // loop_footer_branch
                %232 = sbr.rel target = $region45
              $region50: #{flexible_resnet_forward.16} parent=35 // loop_exit
                _
            $region36: #{flexible_resnet_forward.16} parent=31 // pred_fallthru
              _
          $region32: #{flexible_resnet_forward.16} parent=27 // pred_fallthru
            _
          %248 = vnop
        $region28: #{flexible_resnet_forward.16} parent=23 // pred_fallthru
          _
        // Predicated region
        $region51: #{flexible_resnet_forward.16} parent=23 // pred_check
          %p249 = pneg %p79
        $region52: #{flexible_resnet_forward.16} parent=23 // pred_check_branch
          %251 = sbr.rel (%p249) target = $region54
        $region53: #{flexible_resnet_forward.16} parent=23 // pred_region
          %s252 = smul.u32 48, %s19
          %p253 = scmp.lt.s32.totalorder %s252, 143
          %s254 = scalar_select %p253, %s252, 143
          %p255 = scmp.lt.s32.totalorder %s18, 0
          %s256 = scalar_select %p255, %s18, 0
          %s257 = sadd.s32 %s256, %s254
          %s258 = smul.addr %s257, 4
          %s259 = scalar_lea.vmem %s1, %s258
          %s260 = smul.u32 48, %s19
        $region54: #{flexible_resnet_forward.16} parent=23 // pred_fallthru
          _
      $region24: #{flexible_resnet_forward.16} parent=5 // pred_fallthru
        _
      %p261 = scmp.le.s32.totalorder 1, %s10
      %p262 = scmp.lt.s32.totalorder %s10, 4
      %p263 = pnand %p261, %p262
      %p264 = pneg %p263
      // Predicated region
      $region55: #{flexible_resnet_forward.16} parent=5 // pred_check
        _
      $region56: #{flexible_resnet_forward.16} parent=5 // pred_check_branch
        %266 = sbr.rel (%p263) target = $region58
      $region57: #{flexible_resnet_forward.16} parent=5 // pred_region
        %s267 = ssub.s32 %s10, 1
        %s268 = sand.u32 %s44, 1
        %s269 = sand.u32 %s44, 1
        %s270 = smul.addr %s269, 48
        %s271 = scalar_lea.vmem [#allocation3], %s270
        // Predicated region
        $region59: #{flexible_resnet_forward.16} parent=57 // pred_check
          %p272 = pneg %p57
        $region60: #{flexible_resnet_forward.16} parent=57 // pred_check_branch
          %274 = sbr.rel (%p272) target = $region62
        $region61: #{flexible_resnet_forward.16} parent=57 // pred_region
          _
        $region62: #{flexible_resnet_forward.16} parent=57 // pred_fallthru
          _
        %s275 = sand.u32 %s44, 1
        %s276 = sand.u32 %s44, 1
        %s277 = smul.addr %s276, 48
        %s278 = scalar_lea.vmem [#allocation3], %s277
        %p279 = pneg %p57
        %p280 = pneg %p54
        %s281 = smul.u32 48, %s22
        %p282 = scmp.lt.s32.totalorder %s281, 143
        %s283 = scalar_select %p282, %s281, 143
        %p284 = scmp.lt.s32.totalorder %s21, 0
        %s285 = scalar_select %p284, %s21, 0
        %s286 = sadd.s32 %s285, %s283
        %s287 = smul.addr %s286, 4
        %s288 = scalar_lea.vmem %s1, %s287
        %p289 = pneg %p85
        %p290 = pneg %p82
        %p291 = scmp.lt.s32.totalorder %s21, 0
        %s292 = scalar_select %p291, %s21, 0
        %s293 = scalar_lea.vmem %s2, %s292
        %p294 = pneg %p111
        %p295 = pneg %p108
        %p296 = scmp.lt.s32.totalorder %s21, 0
        %s297 = scalar_select %p296, %s21, 0
        %s298 = scalar_lea.vmem %s3, %s297
        %p299 = pneg %p137
        %p300 = pneg %p134
        %p301 = pneg %p165
        %p302 = pneg %p162
        %s303 = smul.u32 4, %s20
        %p304 = scmp.lt.s32.totalorder %s303, 3
        %s305 = scalar_select %p304, %s303, 3
        %p306 = scmp.lt.s32.totalorder %s21, 0
        %s307 = scalar_select %p306, %s21, 0
        %s308 = sadd.s32 %s307, %s305
        %s309 = smul.addr %s308, 4
        %s310 = scalar_lea.vmem %s4, %s309
        %s311 = smul.u32 4, %s20
        %s312 = smul.u32 3, %s22
        %s313 = smul.u32 48, %s22
        %p314 = scmp.lt.s32.totalorder %s313, 143
        %s315 = scalar_select %p314, %s313, 143
        %p316 = scmp.lt.s32.totalorder %s21, 0
        %s317 = scalar_select %p316, %s21, 0
        %s318 = sadd.s32 %s317, %s315
        %s319 = smul.addr %s318, 4
        %s320 = scalar_lea.vmem %s1, %s319
        %s321 = smul.u32 48, %s22
        %p322 = scmp.lt.s32.totalorder %s21, 0
        %s323 = scalar_select %p322, %s21, 0
        %s324 = scalar_lea.vmem %s2, %s323
        %p325 = scmp.lt.s32.totalorder %s21, 0
        %s326 = scalar_select %p325, %s21, 0
        %s327 = scalar_lea.vmem %s3, %s326
        %s328 = smul.u32 4, %s20
        %p329 = scmp.lt.s32.totalorder %s328, 3
        %s330 = scalar_select %p329, %s328, 3
        %p331 = scmp.lt.s32.totalorder %s21, 0
        %s332 = scalar_select %p331, %s21, 0
        %s333 = sadd.s32 %s332, %s330
        %s334 = smul.addr %s333, 4
        %s335 = scalar_lea.vmem %s4, %s334
        %s336 = smul.u32 4, %s20
        %p338 = scmp.eq.s32.totalorder %s22, 0
        // Predicated region
        $region63: #{flexible_resnet_forward.16} parent=57 // pred_check
          %p339 = pneg %p338
        $region64: #{flexible_resnet_forward.16} parent=57 // pred_check_branch
          %341 = sbr.rel (%p339) target = $region66
        $region65: #{flexible_resnet_forward.16} parent=57 // pred_region
          %342 = vst [vmem:[#allocation2] sm:$0xff] 0.0
          %343 = vst [vmem:[#allocation2 + $0x8] sm:$0xff] 0.0
          %344 = vst [vmem:[#allocation2 + $0x10] sm:$0xff] 0.0
          %345 = vst [vmem:[#allocation2 + $0x18] sm:$0xff] 0.0
        $region66: #{flexible_resnet_forward.16} parent=57 // pred_fallthru
          _
        %v346 = vld [vmem:[#allocation2] sm:$0xff]
        %v347 = vld [vmem:[#allocation2 + $0x8] sm:$0xff]
        %v348 = vld [vmem:[#allocation2 + $0x10] sm:$0xff]
        %v349 = vld [vmem:[#allocation2 + $0x18] sm:$0xff]
        %v350 = vld [vmem:[%s271] sm:$0xff]
        %v351 = vld [vmem:[%s271 + $0x8] sm:$0xf]
        %v352 = vld [vmem:[%s271 + $0xc] sm:$0xff]
        %v353 = vld [vmem:[%s271 + $0x14] sm:$0xf]
        %v354 = vld [vmem:[%s271 + $0x18] sm:$0xff]
        %v355 = vld [vmem:[%s271 + $0x20] sm:$0xf]
        %v356 = vld [vmem:[%s271 + $0x24] sm:$0xff]
        %v357 = vld [vmem:[%s271 + $0x2c] sm:$0xf]
        %v358 = vld [vmem:[%s320] sm:$0xf]
        %v359 = vld [vmem:[%s320 + $0x4] sm:$0xf]
        %v360 = vld [vmem:[%s320 + $0x8] sm:$0xf]
        %v361 = vld [vmem:[%s320 + $0xc] sm:$0xf]
        %v362 = vld [vmem:[%s320 + $0x10] sm:$0xf]
        %v363 = vld [vmem:[%s320 + $0x14] sm:$0xf]
        %v364 = vld [vmem:[%s320 + $0x18] sm:$0xf]
        %v365 = vld [vmem:[%s320 + $0x1c] sm:$0xf]
        %v366 = vld [vmem:[%s320 + $0x20] sm:$0xf]
        %v367 = vld [vmem:[%s320 + $0x24] sm:$0xf]
        %v368 = vld [vmem:[%s320 + $0x28] sm:$0xf]
        %v369 = vld [vmem:[%s320 + $0x2c] sm:$0xf]
        %v370 = vld [vmem:[%s320 + $0x30] sm:$0xf]
        %v371 = vld [vmem:[%s320 + $0x34] sm:$0xf]
        %v372 = vld [vmem:[%s320 + $0x38] sm:$0xf]
        %v373 = vld [vmem:[%s320 + $0x3c] sm:$0xf]
        %v374 = vld [vmem:[%s320 + $0x40] sm:$0xf]
        %v375 = vld [vmem:[%s320 + $0x44] sm:$0xf]
        %v376 = vld [vmem:[%s320 + $0x48] sm:$0xf]
        %v377 = vld [vmem:[%s320 + $0x4c] sm:$0xf]
        %v378 = vld [vmem:[%s320 + $0x50] sm:$0xf]
        %v379 = vld [vmem:[%s320 + $0x54] sm:$0xf]
        %v380 = vld [vmem:[%s320 + $0x58] sm:$0xf]
        %v381 = vld [vmem:[%s320 + $0x5c] sm:$0xf]
        %v382 = vld [vmem:[%s320 + $0x60] sm:$0xf]
        %v383 = vld [vmem:[%s320 + $0x64] sm:$0xf]
        %v384 = vld [vmem:[%s320 + $0x68] sm:$0xf]
        %v385 = vld [vmem:[%s320 + $0x6c] sm:$0xf]
        %v386 = vld [vmem:[%s320 + $0x70] sm:$0xf]
        %v387 = vld [vmem:[%s320 + $0x74] sm:$0xf]
        %v388 = vld [vmem:[%s320 + $0x78] sm:$0xf]
        %v389 = vld [vmem:[%s320 + $0x7c] sm:$0xf]
        %v390 = vld [vmem:[%s320 + $0x80] sm:$0xf]
        %v391 = vld [vmem:[%s320 + $0x84] sm:$0xf]
        %v392 = vld [vmem:[%s320 + $0x88] sm:$0xf]
        %v393 = vld [vmem:[%s320 + $0x8c] sm:$0xf]
        %v394 = vld [vmem:[%s320 + $0x90] sm:$0xf]
        %v395 = vld [vmem:[%s320 + $0x94] sm:$0xf]
        %v396 = vld [vmem:[%s320 + $0x98] sm:$0xf]
        %v397 = vld [vmem:[%s320 + $0x9c] sm:$0xf]
        %v398 = vld [vmem:[%s320 + $0xa0] sm:$0xf]
        %v399 = vld [vmem:[%s320 + $0xa4] sm:$0xf]
        %v400 = vld [vmem:[%s320 + $0xa8] sm:$0xf]
        %v401 = vld [vmem:[%s320 + $0xac] sm:$0xf]
        %v402 = vld [vmem:[%s320 + $0xb0] sm:$0xf]
        %v403 = vld [vmem:[%s320 + $0xb4] sm:$0xf]
        %v404 = vld [vmem:[%s320 + $0xb8] sm:$0xf]
        %v405 = vld [vmem:[%s320 + $0xbc] sm:$0xf]
        %v414 = vunpack.c.l.b16 %v350
        %v415 = vunpack.c.h.b16 %v350
        %v416 = vunpack.c.l.b16 %v351
        %v417 = vunpack.c.l.b16 %v352
        %v418 = vunpack.c.h.b16 %v352
        %v419 = vunpack.c.l.b16 %v353
        %v420 = vunpack.c.l.b16 %v354
        %v421 = vunpack.c.h.b16 %v354
        %v422 = vunpack.c.l.b16 %v355
        %v423 = vunpack.c.l.b16 %v356
        %v424 = vunpack.c.h.b16 %v356
        %v425 = vunpack.c.l.b16 %v357
        %v426 = vpack.c.b16 %v417, %v414
        %v427 = vpack.c.b16 %v418, %v415
        %v428 = vpack.c.b16 %v419, %v416
        %v429 = vpack.c.b16 %v423, %v420
        %v430 = vpack.c.b16 %v424, %v421
        %v431 = vpack.c.b16 %v425, %v422
        %v486 = vunpack.c.l.b16 %v358
        %v487 = vunpack.c.l.b16 %v359
        %v488 = vunpack.c.l.b16 %v360
        %v489 = vunpack.c.l.b16 %v361
        %v490 = vunpack.c.l.b16 %v362
        %v491 = vunpack.c.l.b16 %v363
        %v492 = vunpack.c.l.b16 %v364
        %v493 = vunpack.c.l.b16 %v365
        %v494 = vunpack.c.l.b16 %v366
        %v495 = vunpack.c.l.b16 %v367
        %v496 = vunpack.c.l.b16 %v368
        %v497 = vunpack.c.l.b16 %v369
        %v498 = vunpack.c.l.b16 %v370
        %v499 = vunpack.c.l.b16 %v371
        %v500 = vunpack.c.l.b16 %v372
        %v501 = vunpack.c.l.b16 %v373
        %v502 = vunpack.c.l.b16 %v374
        %v503 = vunpack.c.l.b16 %v375
        %v504 = vunpack.c.l.b16 %v376
        %v505 = vunpack.c.l.b16 %v377
        %v506 = vunpack.c.l.b16 %v378
        %v507 = vunpack.c.l.b16 %v379
        %v508 = vunpack.c.l.b16 %v380
        %v509 = vunpack.c.l.b16 %v381
        %v510 = vunpack.c.l.b16 %v382
        %v511 = vunpack.c.l.b16 %v383
        %v512 = vunpack.c.l.b16 %v384
        %v513 = vunpack.c.l.b16 %v385
        %v514 = vunpack.c.l.b16 %v386
        %v515 = vunpack.c.l.b16 %v387
        %v516 = vunpack.c.l.b16 %v388
        %v517 = vunpack.c.l.b16 %v389
        %v518 = vunpack.c.l.b16 %v390
        %v519 = vunpack.c.l.b16 %v391
        %v520 = vunpack.c.l.b16 %v392
        %v521 = vunpack.c.l.b16 %v393
        %v522 = vunpack.c.l.b16 %v394
        %v523 = vunpack.c.l.b16 %v395
        %v524 = vunpack.c.l.b16 %v396
        %v525 = vunpack.c.l.b16 %v397
        %v526 = vunpack.c.l.b16 %v398
        %v527 = vunpack.c.l.b16 %v399
        %v528 = vunpack.c.l.b16 %v400
        %v529 = vunpack.c.l.b16 %v401
        %v530 = vunpack.c.l.b16 %v402
        %v531 = vunpack.c.l.b16 %v403
        %v532 = vunpack.c.l.b16 %v404
        %v533 = vunpack.c.l.b16 %v405
        %v534 = vpack.c.b16 %v487, %v486
        %v535 = vpack.c.b16 %v489, %v488
        %v536 = vpack.c.b16 %v491, %v490
        %v537 = vpack.c.b16 %v493, %v492
        %v538 = vpack.c.b16 %v495, %v494
        %v539 = vpack.c.b16 %v497, %v496
        %v540 = vpack.c.b16 %v499, %v498
        %v541 = vpack.c.b16 %v501, %v500
        %v542 = vpack.c.b16 %v503, %v502
        %v543 = vpack.c.b16 %v505, %v504
        %v544 = vpack.c.b16 %v507, %v506
        %v545 = vpack.c.b16 %v509, %v508
        %v546 = vpack.c.b16 %v511, %v510
        %v547 = vpack.c.b16 %v513, %v512
        %v548 = vpack.c.b16 %v515, %v514
        %v549 = vpack.c.b16 %v517, %v516
        %v550 = vpack.c.b16 %v519, %v518
        %v551 = vpack.c.b16 %v521, %v520
        %v552 = vpack.c.b16 %v523, %v522
        %v553 = vpack.c.b16 %v525, %v524
        %v554 = vpack.c.b16 %v527, %v526
        %v555 = vpack.c.b16 %v529, %v528
        %v556 = vpack.c.b16 %v531, %v530
        %v557 = vpack.c.b16 %v533, %v532
        %582 = vmatprep.subr.bf16.mxu0 0
        %583 = vmatpush1.bf16.msra.mxu0 %v534
        %584 = vmatprep.subr.bf16.mxu0 0
        %585 = vmatpush1.bf16.msra.mxu0 %v535
        %586 = vmatprep.subr.bf16.mxu0 0
        %587 = vmatpush1.bf16.msra.mxu0 %v536
        %588 = vmatprep.subr.bf16.mxu0 0
        %589 = vmatpush1.bf16.msra.mxu0 %v537
        %590 = vmatprep.subr.bf16.mxu0 0
        %591 = vmatpush1.bf16.msra.mxu0 %v538
        %592 = vmatprep.subr.bf16.mxu0 0
        %593 = vmatpush1.bf16.msra.mxu0 %v539
        %594 = vmatprep.subr.bf16.mxu0 0
        %595 = vmatpush1.bf16.msra.mxu0 %v540
        %596 = vmatprep.subr.bf16.mxu0 0
        %597 = vmatpush1.bf16.msra.mxu0 %v541
        %598 = vmatprep.subr.bf16.mxu0 0
        %599 = vmatpush1.bf16.msra.mxu0 %v542
        %600 = vmatprep.subr.bf16.mxu0 0
        %601 = vmatpush1.bf16.msra.mxu0 %v543
        %602 = vmatprep.subr.bf16.mxu0 0
        %603 = vmatpush1.bf16.msra.mxu0 %v544
        %604 = vmatprep.subr.bf16.mxu0 0
        %605 = vmatpush1.bf16.msra.mxu0 %v545
        %606 = vmatprep.subr.bf16.mxu0 0
        %607 = vmatpush1.bf16.msra.mxu0 %v546
        %608 = vmatprep.subr.bf16.mxu0 0
        %609 = vmatpush1.bf16.msra.mxu0 %v547
        %610 = vmatprep.subr.bf16.mxu0 0
        %611 = vmatpush1.bf16.msra.mxu0 %v548
        %612 = vmatprep.subr.bf16.mxu0 0
        %613 = vmatpush1.bf16.msra.mxu0 %v549
        %614 = vmatprep.mubr.bf16.mxu0 %v427
        %615 = vmatmul.mubr.bf16.gmra.mrb[0].mxu0 %v426
        %v616 = vpop.f32.mrb[0].mxu0
        %v617 = vadd.f32 0.0, %v616
        %v618 = vpop.f32.mrb[0].mxu0
        %v619 = vpop.f32.mrb[0].mxu0
        %v620 = vadd.f32 0.0, %v619
        %v621 = vpop.f32.mrb[0].mxu0
        %622 = vmatprep.mubr.bf16.mxu0 %v430
        %623 = vmatmul.mubr.bf16.gmra.mrb[0].mxu0 %v429
        %v624 = vpop.f32.mrb[0].mxu0
        %v625 = vadd.f32 0.0, %v624
        %v626 = vpop.f32.mrb[0].mxu0
        %v627 = vpop.f32.mrb[0].mxu0
        %v628 = vadd.f32 0.0, %v627
        %v629 = vpop.f32.mrb[0].mxu0
        %630 = vdwg.mxu0
        %631 = vmatprep.subr.bf16.mxu0 0
        %632 = vmatpush1.bf16.msra.mxu0 %v550
        %633 = vmatprep.subr.bf16.mxu0 0
        %634 = vmatpush1.bf16.msra.mxu0 %v551
        %635 = vmatprep.subr.bf16.mxu0 0
        %636 = vmatpush1.bf16.msra.mxu0 %v552
        %637 = vmatprep.subr.bf16.mxu0 0
        %638 = vmatpush1.bf16.msra.mxu0 %v553
        %639 = vmatprep.subr.bf16.mxu0 0
        %640 = vmatpush1.bf16.msra.mxu0 %v554
        %641 = vmatprep.subr.bf16.mxu0 0
        %642 = vmatpush1.bf16.msra.mxu0 %v555
        %643 = vmatprep.subr.bf16.mxu0 0
        %644 = vmatpush1.bf16.msra.mxu0 %v556
        %645 = vmatprep.subr.bf16.mxu0 0
        %646 = vmatpush1.bf16.msra.mxu0 %v557
        %647 = vmatprep.subr.bf16.mxu0 0
        %648 = vmatpush1.bf16.msra.mxu0 0
        %649 = vmatprep.subr.bf16.mxu0 0
        %650 = vmatpush1.bf16.msra.mxu0 0
        %651 = vmatprep.subr.bf16.mxu0 0
        %652 = vmatpush1.bf16.msra.mxu0 0
        %653 = vmatprep.subr.bf16.mxu0 0
        %654 = vmatpush1.bf16.msra.mxu0 0
        %655 = vmatprep.subr.bf16.mxu0 0
        %656 = vmatpush1.bf16.msra.mxu0 0
        %657 = vmatprep.subr.bf16.mxu0 0
        %658 = vmatpush1.bf16.msra.mxu0 0
        %659 = vmatprep.subr.bf16.mxu0 0
        %660 = vmatpush1.bf16.msra.mxu0 0
        %661 = vmatprep.subr.bf16.mxu0 0
        %662 = vmatpush1.bf16.msra.mxu0 0
        %663 = vmatprep.mubr.bf16.mxu0 0
        %664 = vmatmul.mubr.bf16.gmra.mrb[0].mxu0 %v428
        %v665 = vpop.f32.mrb[0].mxu0
        %v666 = vadd.f32 %v617, %v665
        %v667 = vpop.f32.mrb[0].mxu0
        %v668 = vpop.f32.mrb[0].mxu0
        %v669 = vadd.f32 %v620, %v668
        %v670 = vpop.f32.mrb[0].mxu0
        %671 = vmatprep.mubr.bf16.mxu0 0
        %672 = vmatmul.mubr.bf16.gmra.mrb[0].mxu0 %v431
        %v673 = vpop.f32.mrb[0].mxu0
        %v674 = vadd.f32 %v625, %v673
        %v675 = vpop.f32.mrb[0].mxu0
        %v676 = vpop.f32.mrb[0].mxu0
        %v677 = vadd.f32 %v628, %v676
        %v678 = vpop.f32.mrb[0].mxu0
        %679 = vdwg.mxu0
        %v680 = vadd.f32 %v346, %v666
        %v681 = vadd.f32 %v347, %v669
        %v682 = vadd.f32 %v348, %v674
        %v683 = vadd.f32 %v349, %v677
        %684 = vst [vmem:[#allocation2] sm:$0xff] %v680
        %685 = vst [vmem:[#allocation2 + $0x8] sm:$0xff] %v681
        %686 = vst [vmem:[#allocation2 + $0x10] sm:$0xff] %v682
        %687 = vst [vmem:[#allocation2 + $0x18] sm:$0xff] %v683
        %p688 = scmp.eq.s32.totalorder %s22, 2
        // Predicated region
        $region67: #{flexible_resnet_forward.16} parent=57 // pred_check
          %p689 = pneg %p688
        $region68: #{flexible_resnet_forward.16} parent=57 // pred_check_branch
          %691 = sbr.rel (%p689) target = $region70
        $region69: #{flexible_resnet_forward.16} parent=57 // pred_region
          %v692 = vld [vmem:[#allocation2] sm:$0xff]
          %v693 = vld [vmem:[#allocation2 + $0x8] sm:$0xff]
          %v694 = vld [vmem:[#allocation2 + $0x10] sm:$0xff]
          %v695 = vld [vmem:[#allocation2 + $0x18] sm:$0xff]
          %v696 = vld [vmem:[%s324] sm:$0x1]
          %v698 = vlaneseq
          %v699 = vshrl.u32 %v698, 7
          %v700 = vsub.s32 0, %v699
          %v701 = vrot.slane %v696, %v700
          %v703 = vmul.f32 %v692, %v701
          %v704 = vmul.f32 %v693, %v701
          %v705 = vmul.f32 %v694, %v701
          %v706 = vmul.f32 %v695, %v701
          %v707 = vld [vmem:[%s327] sm:$0x1]
          %v709 = vlaneseq
          %v710 = vshrl.u32 %v709, 7
          %v711 = vsub.s32 0, %v710
          %v712 = vrot.slane %v707, %v711
          %v714 = vadd.f32 %v703, %v712
          %v715 = vadd.f32 %v704, %v712
          %v716 = vadd.f32 %v705, %v712
          %v717 = vadd.f32 %v706, %v712
          %v718 = vmax.f32 %v714, 0.0
          %v719 = vmax.f32 %v715, 0.0
          %v720 = vmax.f32 %v716, 0.0
          %v721 = vmax.f32 %v717, 0.0
          %v722 = vpack.c.bf16 %v719, %v718
          %v723 = vpack.c.bf16 %v721, %v720
          %v726 = vunpack.c.l.b16 %v722
          %v727 = vunpack.c.h.b16 %v722
          %v728 = vunpack.c.l.b16 %v723
          %v729 = vunpack.c.h.b16 %v723
          %v730 = vpack.c.b16 %v726, %v726
          %v731 = vpack.c.b16 %v727, %v727
          %v732 = vpack.c.b16 %v728, %v728
          %v733 = vpack.c.b16 %v729, %v729
          %738 = vst [vmem:[%s335] sm:$0xf] %v730
          %739 = vst [vmem:[%s335 + $0x4] sm:$0xf] %v731
          %740 = vst [vmem:[%s335 + $0x8] sm:$0xf] %v732
          %741 = vst [vmem:[%s335 + $0xc] sm:$0xf] %v733
        $region70: #{flexible_resnet_forward.16} parent=57 // pred_fallthru
          _
        %s742 = smul.u32 4, %s20
        %p743 = scmp.lt.s32.totalorder %s742, 3
        %s744 = scalar_select %p743, %s742, 3
        %p745 = scmp.lt.s32.totalorder %s21, 0
        %s746 = scalar_select %p745, %s21, 0
        %s747 = sadd.s32 %s746, %s744
        %s748 = smul.addr %s747, 4
        %s749 = scalar_lea.vmem %s4, %s748
        // Predicated region
        $region71: #{flexible_resnet_forward.16} parent=57 // pred_check
          %p750 = pneg %p162
        $region72: #{flexible_resnet_forward.16} parent=57 // pred_check_branch
          %752 = sbr.rel (%p750) target = $region74
        $region73: #{flexible_resnet_forward.16} parent=57 // pred_region
          %s753 = smul.u32 4, %s20
        $region74: #{flexible_resnet_forward.16} parent=57 // pred_fallthru
          _
        // Predicated region
        $region75: #{flexible_resnet_forward.16} parent=57 // pred_check
          %p754 = pneg %p162
        $region76: #{flexible_resnet_forward.16} parent=57 // pred_check_branch
          %756 = sbr.rel (%p754) target = $region78
        $region77: #{flexible_resnet_forward.16} parent=57 // pred_region
          %s757 = smul.u32 4, %s20
          %p758 = scmp.lt.s32.totalorder %s757, 3
          %s759 = scalar_select %p758, %s757, 3
          %p760 = scmp.lt.s32.totalorder %s21, 0
          %s761 = scalar_select %p760, %s21, 0
          %s762 = sadd.s32 %s761, %s759
          %s763 = smul.addr %s762, 4
          %s764 = scalar_lea.vmem %s4, %s763
        $region78: #{flexible_resnet_forward.16} parent=57 // pred_fallthru
          _
      $region58: #{flexible_resnet_forward.16} parent=5 // pred_fallthru
        _
      %p765 = scmp.le.s32.totalorder 2, %s10
      // Predicated region
      $region79: #{flexible_resnet_forward.16} parent=5 // pred_check
        %p766 = pneg %p765
      $region80: #{flexible_resnet_forward.16} parent=5 // pred_check_branch
        %768 = sbr.rel (%p766) target = $region82
      $region81: #{flexible_resnet_forward.16} parent=5 // pred_region
        %s769 = ssub.s32 %s10, 2
      $region82: #{flexible_resnet_forward.16} parent=5 // pred_fallthru
        _
    $region6: #{flexible_resnet_forward.16} parent=1 // loop_footer
      %s14 = sadd.s32 1, %s10
    $region7: #{flexible_resnet_forward.16} parent=1 // loop_footer_branch
      %9 = sbr.rel target = $region3
    $region8: #{flexible_resnet_forward.16} parent=1 // loop_exit
      _

// kernel: flexible_resnet_forward.18
$region0: #{flexible_resnet_forward.18}
  #allocation0 [shape = 'u32[]', space=smem, size = 0x4, offset = 0x4, fixed_abs, tag = 'smem constant byte address 0x4 - core index']
  #allocation1 [shape = 'u32[144,128]{1,0:T(1,128)}', space=vmem, size = 0x12000, scoped, tag = 'internal scratch']
  #allocation2 [shape = 'f32[32,128]{1,0:T(8,128)}', space=vmem, size = 0x4000, scoped, tag = 'scratch operand']
  %s0 = inlined_call_operand.vmem [shape: bf16[32,1152], index: 0, kind: input, shape index: {}]
  %s1 = inlined_call_operand.vmem [shape: bf16[1152,128], index: 1, kind: input, shape index: {}]
  %s2 = inlined_call_operand.vmem [shape: f32[1,128], index: 2, kind: input, shape index: {}]
  %s3 = inlined_call_operand.vmem [shape: f32[1,128], index: 3, kind: input, shape index: {}]
  %s4 = inlined_call_operand.vmem [shape: bf16[32,128], index: 4, kind: input, shape index: {}]
  %s5 = inlined_call_operand.vmem [shape: bf16[32,128], index: 5, kind: output, shape index: {}]
  %s6 = sld [smem:[#allocation0]]
  $region87: #{flexible_resnet_forward.18} parent=0
    _
  %s8 = ssub.s32 1, %s6
  %s9 = scalar_select 0, %s8, %s6
  $region1: #{flexible_resnet_forward.18} parent=0
    #allocation3 [shape = 'u8[49152]{0}', space=vmem, size = 0xc000, scoped, tag = 'input window, operand 0']
    loop: start=0, step=1, limit=5
    $region2: #{flexible_resnet_forward.18} parent=1 // loop_pre_header
      _
    $region3: #{flexible_resnet_forward.18} parent=1 // loop_header
      %s11 = sphi 0, %s15
      %p12 = scmp.ge.s32.totalorder %s11, 5
      %s18 = sphi 0, %s37
      %s19 = sphi 0, %s33
      %s20 = sphi 0, %s29
      %s21 = sphi 0, %s18
      %s22 = sphi 0, %s19
      %s23 = sphi 0, %s20
      %s24 = sphi 0, %s21
      %s25 = sphi 0, %s22
      %s26 = sphi 0, %s23
      %s42 = sphi 0, %s44
      %s45 = sphi 0, %s42
      %s46 = sphi 0, %s45
      %s62 = sphi 0, %s46
      %s70 = sphi 0, %s72
      %s73 = sphi 0, %s70
      %s74 = sphi 0, %s73
      %s90 = sphi 0, %s74
      %s96 = sphi 0, %s98
      %s99 = sphi 0, %s96
      %s100 = sphi 0, %s99
      %s116 = sphi 0, %s100
      %s122 = sphi 0, %s124
      %s125 = sphi 0, %s122
      %s126 = sphi 0, %s125
      %s142 = sphi 0, %s126
      %s150 = sphi 0, %s152
      %s153 = sphi 0, %s150
      %s154 = sphi 0, %s153
      %s170 = sphi 0, %s154
      %s178 = sphi 0, %s180
      %s181 = sphi 0, %s178
      %s182 = sphi 0, %s181
      %s198 = sphi 0, %s182
    $region4: #{flexible_resnet_forward.18} parent=1 // loop_header_branch
      %14 = sbr.rel (%p12) target = $region8
    $region5: #{flexible_resnet_forward.18} parent=1 // loop_body
      %s16 = ssub.s32 %s11, 1
      %s17 = ssub.s32 %s11, 2
      %s27 = sadd.s32 1, %s20
      %p28 = scmp.ge.s32.totalorder %s27, 3
      %s29 = scalar_select %p28, 0, %s27
      %s30 = sadd.s32 1, %s19
      %s31 = scalar_select %p28, %s30, %s19
      %p32 = scmp.ge.s32.totalorder %s31, 1
      %s33 = scalar_select %p32, 0, %s31
      %s34 = sadd.s32 1, %s18
      %s35 = scalar_select %p32, %s34, %s18
      %p36 = scmp.ge.s32.totalorder %s35, 1
      %s37 = scalar_select %p36, 0, %s35
      %s38 = ssub.s32 %s18, %s37
      %s39 = ssub.s32 %s20, %s29
      %s40 = sor.u32 %s38, %s39
      %p41 = scmp.eq.s32.totalorder %s40, 0
      %s43 = sadd.s32 %s42, 1
      %s44 = scalar_select %p41, %s42, %s43
      %p47 = pneg %p41
      %p48 = scmp.eq.s32.totalorder %s11, 2
      %p49 = por %p47, %p48
      %p50 = scmp.ne.s32.totalorder %s42, %s45
      %p51 = scmp.eq.s32.totalorder %s11, 0
      %p52 = por %p50, %p51
      %p53 = scmp.ne.s32.totalorder %s42, %s45
      %p54 = scmp.eq.s32.totalorder %s16, 2
      %p55 = por %p53, %p54
      %p56 = scmp.ne.s32.totalorder %s45, %s46
      %p57 = scmp.eq.s32.totalorder %s16, 0
      %p58 = por %p56, %p57
      %p59 = scmp.ne.s32.totalorder %s45, %s46
      %p60 = scmp.eq.s32.totalorder %s17, 2
      %p61 = por %p59, %p60
      %p63 = scmp.ne.s32.totalorder %s46, %s62
      %p64 = scmp.eq.s32.totalorder %s17, 0
      %p65 = por %p63, %p64
      %s66 = ssub.s32 %s20, %s29
      %s67 = ssub.s32 %s19, %s33
      %s68 = sor.u32 %s66, %s67
      %p69 = scmp.eq.s32.totalorder %s68, 0
      %s71 = sadd.s32 %s70, 1
      %s72 = scalar_select %p69, %s70, %s71
      %p75 = pneg %p69
      %p76 = scmp.eq.s32.totalorder %s11, 2
      %p77 = por %p75, %p76
      %p78 = scmp.ne.s32.totalorder %s70, %s73
      %p79 = scmp.eq.s32.totalorder %s11, 0
      %p80 = por %p78, %p79
      %p81 = scmp.ne.s32.totalorder %s70, %s73
      %p82 = scmp.eq.s32.totalorder %s16, 2
      %p83 = por %p81, %p82
      %p84 = scmp.ne.s32.totalorder %s73, %s74
      %p85 = scmp.eq.s32.totalorder %s16, 0
      %p86 = por %p84, %p85
      %p87 = scmp.ne.s32.totalorder %s73, %s74
      %p88 = scmp.eq.s32.totalorder %s17, 2
      %p89 = por %p87, %p88
      %p91 = scmp.ne.s32.totalorder %s74, %s90
      %p92 = scmp.eq.s32.totalorder %s17, 0
      %p93 = por %p91, %p92
      %s94 = ssub.s32 %s19, %s33
      %p95 = scmp.eq.s32.totalorder %s94, 0
      %s97 = sadd.s32 %s96, 1
      %s98 = scalar_select %p95, %s96, %s97
      %p101 = pneg %p95
      %p102 = scmp.eq.s32.totalorder %s11, 2
      %p103 = por %p101, %p102
      %p104 = scmp.ne.s32.totalorder %s96, %s99
      %p105 = scmp.eq.s32.totalorder %s11, 0
      %p106 = por %p104, %p105
      %p107 = scmp.ne.s32.totalorder %s96, %s99
      %p108 = scmp.eq.s32.totalorder %s16, 2
      %p109 = por %p107, %p108
      %p110 = scmp.ne.s32.totalorder %s99, %s100
      %p111 = scmp.eq.s32.totalorder %s16, 0
      %p112 = por %p110, %p111
      %p113 = scmp.ne.s32.totalorder %s99, %s100
      %p114 = scmp.eq.s32.totalorder %s17, 2
      %p115 = por %p113, %p114
      %p117 = scmp.ne.s32.totalorder %s100, %s116
      %p118 = scmp.eq.s32.totalorder %s17, 0
      %p119 = por %p117, %p118
      %s120 = ssub.s32 %s19, %s33
      %p121 = scmp.eq.s32.totalorder %s120, 0
      %s123 = sadd.s32 %s122, 1
      %s124 = scalar_select %p121, %s122, %s123
      %p127 = pneg %p121
      %p128 = scmp.eq.s32.totalorder %s11, 2
      %p129 = por %p127, %p128
      %p130 = scmp.ne.s32.totalorder %s122, %s125
      %p131 = scmp.eq.s32.totalorder %s11, 0
      %p132 = por %p130, %p131
      %p133 = scmp.ne.s32.totalorder %s122, %s125
      %p134 = scmp.eq.s32.totalorder %s16, 2
      %p135 = por %p133, %p134
      %p136 = scmp.ne.s32.totalorder %s125, %s126
      %p137 = scmp.eq.s32.totalorder %s16, 0
      %p138 = por %p136, %p137
      %p139 = scmp.ne.s32.totalorder %s125, %s126
      %p140 = scmp.eq.s32.totalorder %s17, 2
      %p141 = por %p139, %p140
      %p143 = scmp.ne.s32.totalorder %s126, %s142
      %p144 = scmp.eq.s32.totalorder %s17, 0
      %p145 = por %p143, %p144
      %s146 = ssub.s32 %s18, %s37
      %s147 = ssub.s32 %s19, %s33
      %s148 = sor.u32 %s146, %s147
      %p149 = scmp.eq.s32.totalorder %s148, 0
      %s151 = sadd.s32 %s150, 1
      %s152 = scalar_select %p149, %s150, %s151
      %p155 = pneg %p149
      %p156 = scmp.eq.s32.totalorder %s11, 2
      %p157 = por %p155, %p156
      %p158 = scmp.ne.s32.totalorder %s150, %s153
      %p159 = scmp.eq.s32.totalorder %s11, 0
      %p160 = por %p158, %p159
      %p161 = scmp.ne.s32.totalorder %s150, %s153
      %p162 = scmp.eq.s32.totalorder %s16, 2
      %p163 = por %p161, %p162
      %p164 = scmp.ne.s32.totalorder %s153, %s154
      %p165 = scmp.eq.s32.totalorder %s16, 0
      %p166 = por %p164, %p165
      %p167 = scmp.ne.s32.totalorder %s153, %s154
      %p168 = scmp.eq.s32.totalorder %s17, 2
      %p169 = por %p167, %p168
      %p171 = scmp.ne.s32.totalorder %s154, %s170
      %p172 = scmp.eq.s32.totalorder %s17, 0
      %p173 = por %p171, %p172
      %s174 = ssub.s32 %s18, %s37
      %s175 = ssub.s32 %s19, %s33
      %s176 = sor.u32 %s174, %s175
      %p177 = scmp.eq.s32.totalorder %s176, 0
      %s179 = sadd.s32 %s178, 1
      %s180 = scalar_select %p177, %s178, %s179
      %p183 = pneg %p177
      %p184 = scmp.eq.s32.totalorder %s11, 2
      %p185 = por %p183, %p184
      %p186 = scmp.ne.s32.totalorder %s178, %s181
      %p187 = scmp.eq.s32.totalorder %s11, 0
      %p188 = por %p186, %p187
      %p189 = scmp.ne.s32.totalorder %s178, %s181
      %p190 = scmp.eq.s32.totalorder %s16, 2
      %p191 = por %p189, %p190
      %p192 = scmp.ne.s32.totalorder %s181, %s182
      %p193 = scmp.eq.s32.totalorder %s16, 0
      %p194 = por %p192, %p193
      %p195 = scmp.ne.s32.totalorder %s181, %s182
      %p196 = scmp.eq.s32.totalorder %s17, 2
      %p197 = por %p195, %p196
      %p199 = scmp.ne.s32.totalorder %s182, %s198
      %p200 = scmp.eq.s32.totalorder %s17, 0
      %p201 = por %p199, %p200
      %p202 = scmp.le.s32.totalorder 1, %s11
      %p203 = scmp.lt.s32.totalorder %s11, 4
      %p204 = pnand %p202, %p203
      %p205 = pneg %p204
      // Predicated region
      $region9: #{flexible_resnet_forward.18} parent=5 // pred_check
        _
      $region10: #{flexible_resnet_forward.18} parent=5 // pred_check_branch
        %207 = sbr.rel (%p204) target = $region12
      $region11: #{flexible_resnet_forward.18} parent=5 // pred_region
        %s208 = ssub.s32 %s11, 1
        // Predicated region
        $region13: #{flexible_resnet_forward.18} parent=11 // pred_check
          %p209 = pneg %p112
        $region14: #{flexible_resnet_forward.18} parent=11 // pred_check_branch
          %211 = sbr.rel (%p209) target = $region16
        $region15: #{flexible_resnet_forward.18} parent=11 // pred_region
          %p212 = scmp.lt.s32.totalorder %s22, 0
          %s213 = scalar_select %p212, %s22, 0
          %s214 = scalar_lea.vmem %s2, %s213
        $region16: #{flexible_resnet_forward.18} parent=11 // pred_fallthru
          _
        // Predicated region
        $region17: #{flexible_resnet_forward.18} parent=11 // pred_check
          %p215 = pneg %p138
        $region18: #{flexible_resnet_forward.18} parent=11 // pred_check_branch
          %217 = sbr.rel (%p215) target = $region20
        $region19: #{flexible_resnet_forward.18} parent=11 // pred_region
          %p218 = scmp.lt.s32.totalorder %s22, 0
          %s219 = scalar_select %p218, %s22, 0
          %s220 = scalar_lea.vmem %s3, %s219
        $region20: #{flexible_resnet_forward.18} parent=11 // pred_fallthru
          _
        // Predicated region
        $region21: #{flexible_resnet_forward.18} parent=11 // pred_check
          %p221 = pneg %p166
        $region22: #{flexible_resnet_forward.18} parent=11 // pred_check_branch
          %223 = sbr.rel (%p221) target = $region24
        $region23: #{flexible_resnet_forward.18} parent=11 // pred_region
          %s224 = smul.u32 4, %s21
          %p225 = scmp.lt.s32.totalorder %s224, 3
          %s226 = scalar_select %p225, %s224, 3
          %p227 = scmp.lt.s32.totalorder %s22, 0
          %s228 = scalar_select %p227, %s22, 0
          %s229 = sadd.s32 %s228, %s226
          %s230 = smul.addr %s229, 4
          %s231 = scalar_lea.vmem %s4, %s230
          %s232 = smul.u32 4, %s21
        $region24: #{flexible_resnet_forward.18} parent=11 // pred_fallthru
          _
      $region12: #{flexible_resnet_forward.18} parent=5 // pred_fallthru
        _
      %p233 = scmp.lt.s32.totalorder %s11, 3
      // Predicated region
      $region25: #{flexible_resnet_forward.18} parent=5 // pred_check
        %p234 = pneg %p233
      $region26: #{flexible_resnet_forward.18} parent=5 // pred_check_branch
        %236 = sbr.rel (%p234) target = $region28
      $region27: #{flexible_resnet_forward.18} parent=5 // pred_region
        // Predicated region
        $region29: #{flexible_resnet_forward.18} parent=27 // pred_check
          %p237 = pneg %p52
        $region30: #{flexible_resnet_forward.18} parent=27 // pred_check_branch
          %239 = sbr.rel (%p237) target = $region32
        $region31: #{flexible_resnet_forward.18} parent=27 // pred_region
          %s240 = sand.u32 %s42, 1
          %s241 = sand.u32 %s42, 1
          %s242 = smul.addr %s241, 48
          %s243 = scalar_lea.vmem [#allocation3], %s242
          %s244 = smul.u32 4, %s18
          %s245 = smul.u32 3, %s20
          %s246 = smul.addr %s244, 9
          %s247 = sadd.s32 %s245, %s246
          %s248 = smul.addr %s247, 4
          %s249 = scalar_lea.vmem %s0, %s248
          // Predicated region
          $region33: #{flexible_resnet_forward.18} parent=31 // pred_check
            _
          $region34: #{flexible_resnet_forward.18} parent=31 // pred_check_branch
            %251 = sbr.rel (0) target = $region36
          $region35: #{flexible_resnet_forward.18} parent=31 // pred_region
            // Predicated region
            $region37: #{flexible_resnet_forward.18} parent=35 // pred_check
              _
            $region38: #{flexible_resnet_forward.18} parent=35 // pred_check_branch
              %253 = sbr.rel (0) target = $region40
            $region39: #{flexible_resnet_forward.18} parent=35 // pred_region
              %s254 = scalar_lea.vmem %s249, 8
              %s255 = scalar_lea.vmem %s243, 8 [#allocation3]
              loop: start=0, step=1, limit=1
              $region41: #{flexible_resnet_forward.18} parent=39 // loop_pre_header
                _
              $region42: #{flexible_resnet_forward.18} parent=39 // loop_header
                %s257 = sphi 0, %s261
                %p258 = scmp.ge.s32.totalorder %s257, 1
                %s262 = sphi %s249, %s249
                %s263 = sphi %s243, %s243
              $region43: #{flexible_resnet_forward.18} parent=39 // loop_header_branch
                %260 = sbr.rel (%p258) target = $region47
              $region44: #{flexible_resnet_forward.18} parent=39 // loop_body
                %v264 = vld [vmem:[%s262] sm:$0xff]
                %265 = vst [vmem:[%s263] sm:$0xff] %v264
                %v266 = vld [vmem:[%s262 + $0x24] sm:$0xff]
                %267 = vst [vmem:[%s263 + $0xc] sm:$0xff] %v266
                %v268 = vld [vmem:[%s262 + $0x48] sm:$0xff]
                %269 = vst [vmem:[%s263 + $0x18] sm:$0xff] %v268
                %v270 = vld [vmem:[%s262 + $0x6c] sm:$0xff]
                %271 = vst [vmem:[%s263 + $0x24] sm:$0xff] %v270
              $region45: #{flexible_resnet_forward.18} parent=39 // loop_footer
                %s261 = sadd.s32 1, %s257
              $region46: #{flexible_resnet_forward.18} parent=39 // loop_footer_branch
                %256 = sbr.rel target = $region42
              $region47: #{flexible_resnet_forward.18} parent=39 // loop_exit
                _
              loop: start=0, step=1, limit=1
              $region48: #{flexible_resnet_forward.18} parent=39 // loop_pre_header
                _
              $region49: #{flexible_resnet_forward.18} parent=39 // loop_header
                %s274 = sphi 0, %s278
                %p275 = scmp.ge.s32.totalorder %s274, 1
                %s279 = sphi %s254, %s254
                %s280 = sphi %s255, %s255
              $region50: #{flexible_resnet_forward.18} parent=39 // loop_header_branch
                %277 = sbr.rel (%p275) target = $region54
              $region51: #{flexible_resnet_forward.18} parent=39 // loop_body
                %v281 = vld [vmem:[%s279] sm:$0xf]
                %282 = vst [vmem:[%s280] sm:$0xf] %v281
                %v283 = vld [vmem:[%s279 + $0x24] sm:$0xf]
                %284 = vst [vmem:[%s280 + $0xc] sm:$0xf] %v283
                %v285 = vld [vmem:[%s279 + $0x48] sm:$0xf]
                %286 = vst [vmem:[%s280 + $0x18] sm:$0xf] %v285
                %v287 = vld [vmem:[%s279 + $0x6c] sm:$0xf]
                %288 = vst [vmem:[%s280 + $0x24] sm:$0xf] %v287
              $region52: #{flexible_resnet_forward.18} parent=39 // loop_footer
                %s278 = sadd.s32 1, %s274
              $region53: #{flexible_resnet_forward.18} parent=39 // loop_footer_branch
                %273 = sbr.rel target = $region49
              $region54: #{flexible_resnet_forward.18} parent=39 // loop_exit
                _
            $region40: #{flexible_resnet_forward.18} parent=35 // pred_fallthru
              _
          $region36: #{flexible_resnet_forward.18} parent=31 // pred_fallthru
            _
          %289 = vnop
        $region32: #{flexible_resnet_forward.18} parent=27 // pred_fallthru
          _
        // Predicated region
        $region55: #{flexible_resnet_forward.18} parent=27 // pred_check
          %p290 = pneg %p80
        $region56: #{flexible_resnet_forward.18} parent=27 // pred_check_branch
          %292 = sbr.rel (%p290) target = $region58
        $region57: #{flexible_resnet_forward.18} parent=27 // pred_region
          %s293 = smul.u32 48, %s20
          %p294 = scmp.lt.s32.totalorder %s293, 143
          %s295 = scalar_select %p294, %s293, 143
          %p296 = scmp.lt.s32.totalorder %s19, 0
          %s297 = scalar_select %p296, %s19, 0
          %s298 = sadd.s32 %s297, %s295
          %s299 = smul.addr %s298, 4
          %s300 = scalar_lea.vmem %s1, %s299
          %s301 = smul.u32 48, %s20
        $region58: #{flexible_resnet_forward.18} parent=27 // pred_fallthru
          _
      $region28: #{flexible_resnet_forward.18} parent=5 // pred_fallthru
        _
      %p302 = scmp.le.s32.totalorder 1, %s11
      %p303 = scmp.lt.s32.totalorder %s11, 4
      %p304 = pnand %p302, %p303
      %p305 = pneg %p304
      // Predicated region
      $region59: #{flexible_resnet_forward.18} parent=5 // pred_check
        _
      $region60: #{flexible_resnet_forward.18} parent=5 // pred_check_branch
        %307 = sbr.rel (%p304) target = $region62
      $region61: #{flexible_resnet_forward.18} parent=5 // pred_region
        %s308 = ssub.s32 %s11, 1
        %s309 = sand.u32 %s45, 1
        %s310 = sand.u32 %s45, 1
        %s311 = smul.addr %s310, 48
        %s312 = scalar_lea.vmem [#allocation3], %s311
        // Predicated region
        $region63: #{flexible_resnet_forward.18} parent=61 // pred_check
          %p313 = pneg %p58
        $region64: #{flexible_resnet_forward.18} parent=61 // pred_check_branch
          %315 = sbr.rel (%p313) target = $region66
        $region65: #{flexible_resnet_forward.18} parent=61 // pred_region
          _
        $region66: #{flexible_resnet_forward.18} parent=61 // pred_fallthru
          _
        %s316 = sand.u32 %s45, 1
        %s317 = sand.u32 %s45, 1
        %s318 = smul.addr %s317, 48
        %s319 = scalar_lea.vmem [#allocation3], %s318
        %p320 = pneg %p58
        %p321 = pneg %p55
        %s322 = smul.u32 48, %s23
        %p323 = scmp.lt.s32.totalorder %s322, 143
        %s324 = scalar_select %p323, %s322, 143
        %p325 = scmp.lt.s32.totalorder %s22, 0
        %s326 = scalar_select %p325, %s22, 0
        %s327 = sadd.s32 %s326, %s324
        %s328 = smul.addr %s327, 4
        %s329 = scalar_lea.vmem %s1, %s328
        %p330 = pneg %p86
        %p331 = pneg %p83
        %p332 = scmp.lt.s32.totalorder %s22, 0
        %s333 = scalar_select %p332, %s22, 0
        %s334 = scalar_lea.vmem %s2, %s333
        %p335 = pneg %p112
        %p336 = pneg %p109
        %p337 = scmp.lt.s32.totalorder %s22, 0
        %s338 = scalar_select %p337, %s22, 0
        %s339 = scalar_lea.vmem %s3, %s338
        %p340 = pneg %p138
        %p341 = pneg %p135
        %s342 = smul.u32 4, %s21
        %p343 = scmp.lt.s32.totalorder %s342, 3
        %s344 = scalar_select %p343, %s342, 3
        %p345 = scmp.lt.s32.totalorder %s22, 0
        %s346 = scalar_select %p345, %s22, 0
        %s347 = sadd.s32 %s346, %s344
        %s348 = smul.addr %s347, 4
        %s349 = scalar_lea.vmem %s4, %s348
        %p350 = pneg %p166
        %p351 = pneg %p163
        %p352 = pneg %p194
        %p353 = pneg %p191
        %s354 = smul.u32 4, %s21
        %p355 = scmp.lt.s32.totalorder %s354, 3
        %s356 = scalar_select %p355, %s354, 3
        %p357 = scmp.lt.s32.totalorder %s22, 0
        %s358 = scalar_select %p357, %s22, 0
        %s359 = sadd.s32 %s358, %s356
        %s360 = smul.addr %s359, 4
        %s361 = scalar_lea.vmem %s5, %s360
        %s362 = smul.u32 4, %s21
        %s363 = smul.u32 3, %s23
        %s364 = smul.u32 48, %s23
        %p365 = scmp.lt.s32.totalorder %s364, 143
        %s366 = scalar_select %p365, %s364, 143
        %p367 = scmp.lt.s32.totalorder %s22, 0
        %s368 = scalar_select %p367, %s22, 0
        %s369 = sadd.s32 %s368, %s366
        %s370 = smul.addr %s369, 4
        %s371 = scalar_lea.vmem %s1, %s370
        %s372 = smul.u32 48, %s23
        %p373 = scmp.lt.s32.totalorder %s22, 0
        %s374 = scalar_select %p373, %s22, 0
        %s375 = scalar_lea.vmem %s2, %s374
        %p376 = scmp.lt.s32.totalorder %s22, 0
        %s377 = scalar_select %p376, %s22, 0
        %s378 = scalar_lea.vmem %s3, %s377
        %s379 = smul.u32 4, %s21
        %p380 = scmp.lt.s32.totalorder %s379, 3
        %s381 = scalar_select %p380, %s379, 3
        %p382 = scmp.lt.s32.totalorder %s22, 0
        %s383 = scalar_select %p382, %s22, 0
        %s384 = sadd.s32 %s383, %s381
        %s385 = smul.addr %s384, 4
        %s386 = scalar_lea.vmem %s4, %s385
        %s387 = smul.u32 4, %s21
        %s388 = smul.u32 4, %s21
        %p389 = scmp.lt.s32.totalorder %s388, 3
        %s390 = scalar_select %p389, %s388, 3
        %p391 = scmp.lt.s32.totalorder %s22, 0
        %s392 = scalar_select %p391, %s22, 0
        %s393 = sadd.s32 %s392, %s390
        %s394 = smul.addr %s393, 4
        %s395 = scalar_lea.vmem %s5, %s394
        %s396 = smul.u32 4, %s21
        %p398 = scmp.eq.s32.totalorder %s23, 0
        // Predicated region
        $region67: #{flexible_resnet_forward.18} parent=61 // pred_check
          %p399 = pneg %p398
        $region68: #{flexible_resnet_forward.18} parent=61 // pred_check_branch
          %401 = sbr.rel (%p399) target = $region70
        $region69: #{flexible_resnet_forward.18} parent=61 // pred_region
          %402 = vst [vmem:[#allocation2] sm:$0xff] 0.0
          %403 = vst [vmem:[#allocation2 + $0x8] sm:$0xff] 0.0
          %404 = vst [vmem:[#allocation2 + $0x10] sm:$0xff] 0.0
          %405 = vst [vmem:[#allocation2 + $0x18] sm:$0xff] 0.0
        $region70: #{flexible_resnet_forward.18} parent=61 // pred_fallthru
          _
        %v406 = vld [vmem:[#allocation2] sm:$0xff]
        %v407 = vld [vmem:[#allocation2 + $0x8] sm:$0xff]
        %v408 = vld [vmem:[#allocation2 + $0x10] sm:$0xff]
        %v409 = vld [vmem:[#allocation2 + $0x18] sm:$0xff]
        %v410 = vld [vmem:[%s312] sm:$0xff]
        %v411 = vld [vmem:[%s312 + $0x8] sm:$0xf]
        %v412 = vld [vmem:[%s312 + $0xc] sm:$0xff]
        %v413 = vld [vmem:[%s312 + $0x14] sm:$0xf]
        %v414 = vld [vmem:[%s312 + $0x18] sm:$0xff]
        %v415 = vld [vmem:[%s312 + $0x20] sm:$0xf]
        %v416 = vld [vmem:[%s312 + $0x24] sm:$0xff]
        %v417 = vld [vmem:[%s312 + $0x2c] sm:$0xf]
        %v418 = vld [vmem:[%s371] sm:$0xf]
        %v419 = vld [vmem:[%s371 + $0x4] sm:$0xf]
        %v420 = vld [vmem:[%s371 + $0x8] sm:$0xf]
        %v421 = vld [vmem:[%s371 + $0xc] sm:$0xf]
        %v422 = vld [vmem:[%s371 + $0x10] sm:$0xf]
        %v423 = vld [vmem:[%s371 + $0x14] sm:$0xf]
        %v424 = vld [vmem:[%s371 + $0x18] sm:$0xf]
        %v425 = vld [vmem:[%s371 + $0x1c] sm:$0xf]
        %v426 = vld [vmem:[%s371 + $0x20] sm:$0xf]
        %v427 = vld [vmem:[%s371 + $0x24] sm:$0xf]
        %v428 = vld [vmem:[%s371 + $0x28] sm:$0xf]
        %v429 = vld [vmem:[%s371 + $0x2c] sm:$0xf]
        %v430 = vld [vmem:[%s371 + $0x30] sm:$0xf]
        %v431 = vld [vmem:[%s371 + $0x34] sm:$0xf]
        %v432 = vld [vmem:[%s371 + $0x38] sm:$0xf]
        %v433 = vld [vmem:[%s371 + $0x3c] sm:$0xf]
        %v434 = vld [vmem:[%s371 + $0x40] sm:$0xf]
        %v435 = vld [vmem:[%s371 + $0x44] sm:$0xf]
        %v436 = vld [vmem:[%s371 + $0x48] sm:$0xf]
        %v437 = vld [vmem:[%s371 + $0x4c] sm:$0xf]
        %v438 = vld [vmem:[%s371 + $0x50] sm:$0xf]
        %v439 = vld [vmem:[%s371 + $0x54] sm:$0xf]
        %v440 = vld [vmem:[%s371 + $0x58] sm:$0xf]
        %v441 = vld [vmem:[%s371 + $0x5c] sm:$0xf]
        %v442 = vld [vmem:[%s371 + $0x60] sm:$0xf]
        %v443 = vld [vmem:[%s371 + $0x64] sm:$0xf]
        %v444 = vld [vmem:[%s371 + $0x68] sm:$0xf]
        %v445 = vld [vmem:[%s371 + $0x6c] sm:$0xf]
        %v446 = vld [vmem:[%s371 + $0x70] sm:$0xf]
        %v447 = vld [vmem:[%s371 + $0x74] sm:$0xf]
        %v448 = vld [vmem:[%s371 + $0x78] sm:$0xf]
        %v449 = vld [vmem:[%s371 + $0x7c] sm:$0xf]
        %v450 = vld [vmem:[%s371 + $0x80] sm:$0xf]
        %v451 = vld [vmem:[%s371 + $0x84] sm:$0xf]
        %v452 = vld [vmem:[%s371 + $0x88] sm:$0xf]
        %v453 = vld [vmem:[%s371 + $0x8c] sm:$0xf]
        %v454 = vld [vmem:[%s371 + $0x90] sm:$0xf]
        %v455 = vld [vmem:[%s371 + $0x94] sm:$0xf]
        %v456 = vld [vmem:[%s371 + $0x98] sm:$0xf]
        %v457 = vld [vmem:[%s371 + $0x9c] sm:$0xf]
        %v458 = vld [vmem:[%s371 + $0xa0] sm:$0xf]
        %v459 = vld [vmem:[%s371 + $0xa4] sm:$0xf]
        %v460 = vld [vmem:[%s371 + $0xa8] sm:$0xf]
        %v461 = vld [vmem:[%s371 + $0xac] sm:$0xf]
        %v462 = vld [vmem:[%s371 + $0xb0] sm:$0xf]
        %v463 = vld [vmem:[%s371 + $0xb4] sm:$0xf]
        %v464 = vld [vmem:[%s371 + $0xb8] sm:$0xf]
        %v465 = vld [vmem:[%s371 + $0xbc] sm:$0xf]
        %v474 = vunpack.c.l.b16 %v410
        %v475 = vunpack.c.h.b16 %v410
        %v476 = vunpack.c.l.b16 %v411
        %v477 = vunpack.c.l.b16 %v412
        %v478 = vunpack.c.h.b16 %v412
        %v479 = vunpack.c.l.b16 %v413
        %v480 = vunpack.c.l.b16 %v414
        %v481 = vunpack.c.h.b16 %v414
        %v482 = vunpack.c.l.b16 %v415
        %v483 = vunpack.c.l.b16 %v416
        %v484 = vunpack.c.h.b16 %v416
        %v485 = vunpack.c.l.b16 %v417
        %v486 = vpack.c.b16 %v477, %v474
        %v487 = vpack.c.b16 %v478, %v475
        %v488 = vpack.c.b16 %v479, %v476
        %v489 = vpack.c.b16 %v483, %v480
        %v490 = vpack.c.b16 %v484, %v481
        %v491 = vpack.c.b16 %v485, %v482
        %v546 = vunpack.c.l.b16 %v418
        %v547 = vunpack.c.l.b16 %v419
        %v548 = vunpack.c.l.b16 %v420
        %v549 = vunpack.c.l.b16 %v421
        %v550 = vunpack.c.l.b16 %v422
        %v551 = vunpack.c.l.b16 %v423
        %v552 = vunpack.c.l.b16 %v424
        %v553 = vunpack.c.l.b16 %v425
        %v554 = vunpack.c.l.b16 %v426
        %v555 = vunpack.c.l.b16 %v427
        %v556 = vunpack.c.l.b16 %v428
        %v557 = vunpack.c.l.b16 %v429
        %v558 = vunpack.c.l.b16 %v430
        %v559 = vunpack.c.l.b16 %v431
        %v560 = vunpack.c.l.b16 %v432
        %v561 = vunpack.c.l.b16 %v433
        %v562 = vunpack.c.l.b16 %v434
        %v563 = vunpack.c.l.b16 %v435
        %v564 = vunpack.c.l.b16 %v436
        %v565 = vunpack.c.l.b16 %v437
        %v566 = vunpack.c.l.b16 %v438
        %v567 = vunpack.c.l.b16 %v439
        %v568 = vunpack.c.l.b16 %v440
        %v569 = vunpack.c.l.b16 %v441
        %v570 = vunpack.c.l.b16 %v442
        %v571 = vunpack.c.l.b16 %v443
        %v572 = vunpack.c.l.b16 %v444
        %v573 = vunpack.c.l.b16 %v445
        %v574 = vunpack.c.l.b16 %v446
        %v575 = vunpack.c.l.b16 %v447
        %v576 = vunpack.c.l.b16 %v448
        %v577 = vunpack.c.l.b16 %v449
        %v578 = vunpack.c.l.b16 %v450
        %v579 = vunpack.c.l.b16 %v451
        %v580 = vunpack.c.l.b16 %v452
        %v581 = vunpack.c.l.b16 %v453
        %v582 = vunpack.c.l.b16 %v454
        %v583 = vunpack.c.l.b16 %v455
        %v584 = vunpack.c.l.b16 %v456
        %v585 = vunpack.c.l.b16 %v457
        %v586 = vunpack.c.l.b16 %v458
        %v587 = vunpack.c.l.b16 %v459
        %v588 = vunpack.c.l.b16 %v460
        %v589 = vunpack.c.l.b16 %v461
        %v590 = vunpack.c.l.b16 %v462
        %v591 = vunpack.c.l.b16 %v463
        %v592 = vunpack.c.l.b16 %v464
        %v593 = vunpack.c.l.b16 %v465
        %v594 = vpack.c.b16 %v547, %v546
        %v595 = vpack.c.b16 %v549, %v548
        %v596 = vpack.c.b16 %v551, %v550
        %v597 = vpack.c.b16 %v553, %v552
        %v598 = vpack.c.b16 %v555, %v554
        %v599 = vpack.c.b16 %v557, %v556
        %v600 = vpack.c.b16 %v559, %v558
        %v601 = vpack.c.b16 %v561, %v560
        %v602 = vpack.c.b16 %v563, %v562
        %v603 = vpack.c.b16 %v565, %v564
        %v604 = vpack.c.b16 %v567, %v566
        %v605 = vpack.c.b16 %v569, %v568
        %v606 = vpack.c.b16 %v571, %v570
        %v607 = vpack.c.b16 %v573, %v572
        %v608 = vpack.c.b16 %v575, %v574
        %v609 = vpack.c.b16 %v577, %v576
        %v610 = vpack.c.b16 %v579, %v578
        %v611 = vpack.c.b16 %v581, %v580
        %v612 = vpack.c.b16 %v583, %v582
        %v613 = vpack.c.b16 %v585, %v584
        %v614 = vpack.c.b16 %v587, %v586
        %v615 = vpack.c.b16 %v589, %v588
        %v616 = vpack.c.b16 %v591, %v590
        %v617 = vpack.c.b16 %v593, %v592
        %642 = vmatprep.subr.bf16.mxu0 0
        %643 = vmatpush1.bf16.msra.mxu0 %v594
        %644 = vmatprep.subr.bf16.mxu0 0
        %645 = vmatpush1.bf16.msra.mxu0 %v595
        %646 = vmatprep.subr.bf16.mxu0 0
        %647 = vmatpush1.bf16.msra.mxu0 %v596
        %648 = vmatprep.subr.bf16.mxu0 0
        %649 = vmatpush1.bf16.msra.mxu0 %v597
        %650 = vmatprep.subr.bf16.mxu0 0
        %651 = vmatpush1.bf16.msra.mxu0 %v598
        %652 = vmatprep.subr.bf16.mxu0 0
        %653 = vmatpush1.bf16.msra.mxu0 %v599
        %654 = vmatprep.subr.bf16.mxu0 0
        %655 = vmatpush1.bf16.msra.mxu0 %v600
        %656 = vmatprep.subr.bf16.mxu0 0
        %657 = vmatpush1.bf16.msra.mxu0 %v601
        %658 = vmatprep.subr.bf16.mxu0 0
        %659 = vmatpush1.bf16.msra.mxu0 %v602
        %660 = vmatprep.subr.bf16.mxu0 0
        %661 = vmatpush1.bf16.msra.mxu0 %v603
        %662 = vmatprep.subr.bf16.mxu0 0
        %663 = vmatpush1.bf16.msra.mxu0 %v604
        %664 = vmatprep.subr.bf16.mxu0 0
        %665 = vmatpush1.bf16.msra.mxu0 %v605
        %666 = vmatprep.subr.bf16.mxu0 0
        %667 = vmatpush1.bf16.msra.mxu0 %v606
        %668 = vmatprep.subr.bf16.mxu0 0
        %669 = vmatpush1.bf16.msra.mxu0 %v607
        %670 = vmatprep.subr.bf16.mxu0 0
        %671 = vmatpush1.bf16.msra.mxu0 %v608
        %672 = vmatprep.subr.bf16.mxu0 0
        %673 = vmatpush1.bf16.msra.mxu0 %v609
        %674 = vmatprep.mubr.bf16.mxu0 %v487
        %675 = vmatmul.mubr.bf16.gmra.mrb[0].mxu0 %v486
        %v676 = vpop.f32.mrb[0].mxu0
        %v677 = vadd.f32 0.0, %v676
        %v678 = vpop.f32.mrb[0].mxu0
        %v679 = vpop.f32.mrb[0].mxu0
        %v680 = vadd.f32 0.0, %v679
        %v681 = vpop.f32.mrb[0].mxu0
        %682 = vmatprep.mubr.bf16.mxu0 %v490
        %683 = vmatmul.mubr.bf16.gmra.mrb[0].mxu0 %v489
        %v684 = vpop.f32.mrb[0].mxu0
        %v685 = vadd.f32 0.0, %v684
        %v686 = vpop.f32.mrb[0].mxu0
        %v687 = vpop.f32.mrb[0].mxu0
        %v688 = vadd.f32 0.0, %v687
        %v689 = vpop.f32.mrb[0].mxu0
        %690 = vdwg.mxu0
        %691 = vmatprep.subr.bf16.mxu0 0
        %692 = vmatpush1.bf16.msra.mxu0 %v610
        %693 = vmatprep.subr.bf16.mxu0 0
        %694 = vmatpush1.bf16.msra.mxu0 %v611
        %695 = vmatprep.subr.bf16.mxu0 0
        %696 = vmatpush1.bf16.msra.mxu0 %v612
        %697 = vmatprep.subr.bf16.mxu0 0
        %698 = vmatpush1.bf16.msra.mxu0 %v613
        %699 = vmatprep.subr.bf16.mxu0 0
        %700 = vmatpush1.bf16.msra.mxu0 %v614
        %701 = vmatprep.subr.bf16.mxu0 0
        %702 = vmatpush1.bf16.msra.mxu0 %v615
        %703 = vmatprep.subr.bf16.mxu0 0
        %704 = vmatpush1.bf16.msra.mxu0 %v616
        %705 = vmatprep.subr.bf16.mxu0 0
        %706 = vmatpush1.bf16.msra.mxu0 %v617
        %707 = vmatprep.subr.bf16.mxu0 0
        %708 = vmatpush1.bf16.msra.mxu0 0
        %709 = vmatprep.subr.bf16.mxu0 0
        %710 = vmatpush1.bf16.msra.mxu0 0
        %711 = vmatprep.subr.bf16.mxu0 0
        %712 = vmatpush1.bf16.msra.mxu0 0
        %713 = vmatprep.subr.bf16.mxu0 0
        %714 = vmatpush1.bf16.msra.mxu0 0
        %715 = vmatprep.subr.bf16.mxu0 0
        %716 = vmatpush1.bf16.msra.mxu0 0
        %717 = vmatprep.subr.bf16.mxu0 0
        %718 = vmatpush1.bf16.msra.mxu0 0
        %719 = vmatprep.subr.bf16.mxu0 0
        %720 = vmatpush1.bf16.msra.mxu0 0
        %721 = vmatprep.subr.bf16.mxu0 0
        %722 = vmatpush1.bf16.msra.mxu0 0
        %723 = vmatprep.mubr.bf16.mxu0 0
        %724 = vmatmul.mubr.bf16.gmra.mrb[0].mxu0 %v488
        %v725 = vpop.f32.mrb[0].mxu0
        %v726 = vadd.f32 %v677, %v725
        %v727 = vpop.f32.mrb[0].mxu0
        %v728 = vpop.f32.mrb[0].mxu0
        %v729 = vadd.f32 %v680, %v728
        %v730 = vpop.f32.mrb[0].mxu0
        %731 = vmatprep.mubr.bf16.mxu0 0
        %732 = vmatmul.mubr.bf16.gmra.mrb[0].mxu0 %v491
        %v733 = vpop.f32.mrb[0].mxu0
        %v734 = vadd.f32 %v685, %v733
        %v735 = vpop.f32.mrb[0].mxu0
        %v736 = vpop.f32.mrb[0].mxu0
        %v737 = vadd.f32 %v688, %v736
        %v738 = vpop.f32.mrb[0].mxu0
        %739 = vdwg.mxu0
        %v740 = vadd.f32 %v406, %v726
        %v741 = vadd.f32 %v407, %v729
        %v742 = vadd.f32 %v408, %v734
        %v743 = vadd.f32 %v409, %v737
        %744 = vst [vmem:[#allocation2] sm:$0xff] %v740
        %745 = vst [vmem:[#allocation2 + $0x8] sm:$0xff] %v741
        %746 = vst [vmem:[#allocation2 + $0x10] sm:$0xff] %v742
        %747 = vst [vmem:[#allocation2 + $0x18] sm:$0xff] %v743
        %p748 = scmp.eq.s32.totalorder %s23, 2
        // Predicated region
        $region71: #{flexible_resnet_forward.18} parent=61 // pred_check
          %p749 = pneg %p748
        $region72: #{flexible_resnet_forward.18} parent=61 // pred_check_branch
          %751 = sbr.rel (%p749) target = $region74
        $region73: #{flexible_resnet_forward.18} parent=61 // pred_region
          %v752 = vld [vmem:[#allocation2] sm:$0xff]
          %v753 = vld [vmem:[#allocation2 + $0x8] sm:$0xff]
          %v754 = vld [vmem:[#allocation2 + $0x10] sm:$0xff]
          %v755 = vld [vmem:[#allocation2 + $0x18] sm:$0xff]
          %v756 = vld [vmem:[%s375] sm:$0x1]
          %v758 = vlaneseq
          %v759 = vshrl.u32 %v758, 7
          %v760 = vsub.s32 0, %v759
          %v761 = vrot.slane %v756, %v760
          %v763 = vmul.f32 %v752, %v761
          %v764 = vmul.f32 %v753, %v761
          %v765 = vmul.f32 %v754, %v761
          %v766 = vmul.f32 %v755, %v761
          %v767 = vld [vmem:[%s378] sm:$0x1]
          %v769 = vlaneseq
          %v770 = vshrl.u32 %v769, 7
          %v771 = vsub.s32 0, %v770
          %v772 = vrot.slane %v767, %v771
          %v774 = vadd.f32 %v763, %v772
          %v775 = vadd.f32 %v764, %v772
          %v776 = vadd.f32 %v765, %v772
          %v777 = vadd.f32 %v766, %v772
          %v778 = vld [vmem:[%s386] sm:$0xf]
          %v779 = vld [vmem:[%s386 + $0x4] sm:$0xf]
          %v780 = vld [vmem:[%s386 + $0x8] sm:$0xf]
          %v781 = vld [vmem:[%s386 + $0xc] sm:$0xf]
          %v782 = vunpack.c.l.bf16 %v778
          %v783 = vunpack.c.l.bf16 %v779
          %v784 = vunpack.c.l.bf16 %v780
          %v785 = vunpack.c.l.bf16 %v781
          %v786 = vadd.f32 %v774, %v782
          %v787 = vadd.f32 %v775, %v783
          %v788 = vadd.f32 %v776, %v784
          %v789 = vadd.f32 %v777, %v785
          %v790 = vmax.f32 %v786, 0.0
          %v791 = vmax.f32 %v787, 0.0
          %v792 = vmax.f32 %v788, 0.0
          %v793 = vmax.f32 %v789, 0.0
          %v794 = vpack.c.bf16 %v791, %v790
          %v795 = vpack.c.bf16 %v793, %v792
          %v798 = vunpack.c.l.b16 %v794
          %v799 = vunpack.c.h.b16 %v794
          %v800 = vunpack.c.l.b16 %v795
          %v801 = vunpack.c.h.b16 %v795
          %v802 = vpack.c.b16 %v798, %v798
          %v803 = vpack.c.b16 %v799, %v799
          %v804 = vpack.c.b16 %v800, %v800
          %v805 = vpack.c.b16 %v801, %v801
          %810 = vst [vmem:[%s395] sm:$0xf] %v802
          %811 = vst [vmem:[%s395 + $0x4] sm:$0xf] %v803
          %812 = vst [vmem:[%s395 + $0x8] sm:$0xf] %v804
          %813 = vst [vmem:[%s395 + $0xc] sm:$0xf] %v805
        $region74: #{flexible_resnet_forward.18} parent=61 // pred_fallthru
          _
        %s814 = smul.u32 4, %s21
        %p815 = scmp.lt.s32.totalorder %s814, 3
        %s816 = scalar_select %p815, %s814, 3
        %p817 = scmp.lt.s32.totalorder %s22, 0
        %s818 = scalar_select %p817, %s22, 0
        %s819 = sadd.s32 %s818, %s816
        %s820 = smul.addr %s819, 4
        %s821 = scalar_lea.vmem %s5, %s820
        // Predicated region
        $region75: #{flexible_resnet_forward.18} parent=61 // pred_check
          %p822 = pneg %p191
        $region76: #{flexible_resnet_forward.18} parent=61 // pred_check_branch
          %824 = sbr.rel (%p822) target = $region78
        $region77: #{flexible_resnet_forward.18} parent=61 // pred_region
          %s825 = smul.u32 4, %s21
        $region78: #{flexible_resnet_forward.18} parent=61 // pred_fallthru
          _
        // Predicated region
        $region79: #{flexible_resnet_forward.18} parent=61 // pred_check
          %p826 = pneg %p191
        $region80: #{flexible_resnet_forward.18} parent=61 // pred_check_branch
          %828 = sbr.rel (%p826) target = $region82
        $region81: #{flexible_resnet_forward.18} parent=61 // pred_region
          %s829 = smul.u32 4, %s21
          %p830 = scmp.lt.s32.totalorder %s829, 3
          %s831 = scalar_select %p830, %s829, 3
          %p832 = scmp.lt.s32.totalorder %s22, 0
          %s833 = scalar_select %p832, %s22, 0
          %s834 = sadd.s32 %s833, %s831
          %s835 = smul.addr %s834, 4
          %s836 = scalar_lea.vmem %s5, %s835
        $region82: #{flexible_resnet_forward.18} parent=61 // pred_fallthru
          _
      $region62: #{flexible_resnet_forward.18} parent=5 // pred_fallthru
        _
      %p837 = scmp.le.s32.totalorder 2, %s11
      // Predicated region
      $region83: #{flexible_resnet_forward.18} parent=5 // pred_check
        %p838 = pneg %p837
      $region84: #{flexible_resnet_forward.18} parent=5 // pred_check_branch
        %840 = sbr.rel (%p838) target = $region86
      $region85: #{flexible_resnet_forward.18} parent=5 // pred_region
        %s841 = ssub.s32 %s11, 2
      $region86: #{flexible_resnet_forward.18} parent=5 // pred_fallthru
        _
    $region6: #{flexible_resnet_forward.18} parent=1 // loop_footer
      %s15 = sadd.s32 1, %s11
    $region7: #{flexible_resnet_forward.18} parent=1 // loop_footer_branch
      %10 = sbr.rel target = $region3
    $region8: #{flexible_resnet_forward.18} parent=1 // loop_exit
      _

// kernel: flexible_resnet_forward.19
$region0: #{flexible_resnet_forward.19}
  #allocation0 [shape = 'u32[]', space=smem, size = 0x4, offset = 0x4, fixed_abs, tag = 'smem constant byte address 0x4 - core index']
  #allocation1 [shape = 'u32[144,128]{1,0:T(1,128)}', space=vmem, size = 0x12000, scoped, tag = 'internal scratch']
  #allocation2 [shape = 'f32[16,128]{1,0:T(8,128)}', space=vmem, size = 0x2000, scoped, tag = 'scratch operand']
  %s0 = inlined_call_operand.vmem [shape: bf16[16,1152], index: 0, kind: input, shape index: {}]
  %s1 = inlined_call_operand.vmem [shape: bf16[1152,128], index: 1, kind: input, shape index: {}]
  %s2 = inlined_call_operand.vmem [shape: f32[1,128], index: 2, kind: input, shape index: {}]
  %s3 = inlined_call_operand.vmem [shape: f32[1,128], index: 3, kind: input, shape index: {}]
  %s4 = inlined_call_operand.vmem [shape: bf16[16,128], index: 4, kind: output, shape index: {}]
  %s5 = sld [smem:[#allocation0]]
  $region83: #{flexible_resnet_forward.19} parent=0
    _
  %s7 = ssub.s32 1, %s5
  %s8 = scalar_select 0, %s7, %s5
  $region1: #{flexible_resnet_forward.19} parent=0
    #allocation3 [shape = 'u8[24576]{0}', space=vmem, size = 0x6000, scoped, tag = 'input window, operand 0']
    loop: start=0, step=1, limit=5
    $region2: #{flexible_resnet_forward.19} parent=1 // loop_pre_header
      _
    $region3: #{flexible_resnet_forward.19} parent=1 // loop_header
      %s10 = sphi 0, %s14
      %p11 = scmp.ge.s32.totalorder %s10, 5
      %s17 = sphi 0, %s36
      %s18 = sphi 0, %s32
      %s19 = sphi 0, %s28
      %s20 = sphi 0, %s17
      %s21 = sphi 0, %s18
      %s22 = sphi 0, %s19
      %s23 = sphi 0, %s20
      %s24 = sphi 0, %s21
      %s25 = sphi 0, %s22
      %s41 = sphi 0, %s43
      %s44 = sphi 0, %s41
      %s45 = sphi 0, %s44
      %s61 = sphi 0, %s45
      %s69 = sphi 0, %s71
      %s72 = sphi 0, %s69
      %s73 = sphi 0, %s72
      %s89 = sphi 0, %s73
      %s95 = sphi 0, %s97
      %s98 = sphi 0, %s95
      %s99 = sphi 0, %s98
      %s115 = sphi 0, %s99
      %s121 = sphi 0, %s123
      %s124 = sphi 0, %s121
      %s125 = sphi 0, %s124
      %s141 = sphi 0, %s125
      %s149 = sphi 0, %s151
      %s152 = sphi 0, %s149
      %s153 = sphi 0, %s152
      %s169 = sphi 0, %s153
    $region4: #{flexible_resnet_forward.19} parent=1 // loop_header_branch
      %13 = sbr.rel (%p11) target = $region8
    $region5: #{flexible_resnet_forward.19} parent=1 // loop_body
      %s15 = ssub.s32 %s10, 1
      %s16 = ssub.s32 %s10, 2
      %s26 = sadd.s32 1, %s19
      %p27 = scmp.ge.s32.totalorder %s26, 3
      %s28 = scalar_select %p27, 0, %s26
      %s29 = sadd.s32 1, %s18
      %s30 = scalar_select %p27, %s29, %s18
      %p31 = scmp.ge.s32.totalorder %s30, 1
      %s32 = scalar_select %p31, 0, %s30
      %s33 = sadd.s32 1, %s17
      %s34 = scalar_select %p31, %s33, %s17
      %p35 = scmp.ge.s32.totalorder %s34, 1
      %s36 = scalar_select %p35, 0, %s34
      %s37 = ssub.s32 %s17, %s36
      %s38 = ssub.s32 %s19, %s28
      %s39 = sor.u32 %s37, %s38
      %p40 = scmp.eq.s32.totalorder %s39, 0
      %s42 = sadd.s32 %s41, 1
      %s43 = scalar_select %p40, %s41, %s42
      %p46 = pneg %p40
      %p47 = scmp.eq.s32.totalorder %s10, 2
      %p48 = por %p46, %p47
      %p49 = scmp.ne.s32.totalorder %s41, %s44
      %p50 = scmp.eq.s32.totalorder %s10, 0
      %p51 = por %p49, %p50
      %p52 = scmp.ne.s32.totalorder %s41, %s44
      %p53 = scmp.eq.s32.totalorder %s15, 2
      %p54 = por %p52, %p53
      %p55 = scmp.ne.s32.totalorder %s44, %s45
      %p56 = scmp.eq.s32.totalorder %s15, 0
      %p57 = por %p55, %p56
      %p58 = scmp.ne.s32.totalorder %s44, %s45
      %p59 = scmp.eq.s32.totalorder %s16, 2
      %p60 = por %p58, %p59
      %p62 = scmp.ne.s32.totalorder %s45, %s61
      %p63 = scmp.eq.s32.totalorder %s16, 0
      %p64 = por %p62, %p63
      %s65 = ssub.s32 %s19, %s28
      %s66 = ssub.s32 %s18, %s32
      %s67 = sor.u32 %s65, %s66
      %p68 = scmp.eq.s32.totalorder %s67, 0
      %s70 = sadd.s32 %s69, 1
      %s71 = scalar_select %p68, %s69, %s70
      %p74 = pneg %p68
      %p75 = scmp.eq.s32.totalorder %s10, 2
      %p76 = por %p74, %p75
      %p77 = scmp.ne.s32.totalorder %s69, %s72
      %p78 = scmp.eq.s32.totalorder %s10, 0
      %p79 = por %p77, %p78
      %p80 = scmp.ne.s32.totalorder %s69, %s72
      %p81 = scmp.eq.s32.totalorder %s15, 2
      %p82 = por %p80, %p81
      %p83 = scmp.ne.s32.totalorder %s72, %s73
      %p84 = scmp.eq.s32.totalorder %s15, 0
      %p85 = por %p83, %p84
      %p86 = scmp.ne.s32.totalorder %s72, %s73
      %p87 = scmp.eq.s32.totalorder %s16, 2
      %p88 = por %p86, %p87
      %p90 = scmp.ne.s32.totalorder %s73, %s89
      %p91 = scmp.eq.s32.totalorder %s16, 0
      %p92 = por %p90, %p91
      %s93 = ssub.s32 %s18, %s32
      %p94 = scmp.eq.s32.totalorder %s93, 0
      %s96 = sadd.s32 %s95, 1
      %s97 = scalar_select %p94, %s95, %s96
      %p100 = pneg %p94
      %p101 = scmp.eq.s32.totalorder %s10, 2
      %p102 = por %p100, %p101
      %p103 = scmp.ne.s32.totalorder %s95, %s98
      %p104 = scmp.eq.s32.totalorder %s10, 0
      %p105 = por %p103, %p104
      %p106 = scmp.ne.s32.totalorder %s95, %s98
      %p107 = scmp.eq.s32.totalorder %s15, 2
      %p108 = por %p106, %p107
      %p109 = scmp.ne.s32.totalorder %s98, %s99
      %p110 = scmp.eq.s32.totalorder %s15, 0
      %p111 = por %p109, %p110
      %p112 = scmp.ne.s32.totalorder %s98, %s99
      %p113 = scmp.eq.s32.totalorder %s16, 2
      %p114 = por %p112, %p113
      %p116 = scmp.ne.s32.totalorder %s99, %s115
      %p117 = scmp.eq.s32.totalorder %s16, 0
      %p118 = por %p116, %p117
      %s119 = ssub.s32 %s18, %s32
      %p120 = scmp.eq.s32.totalorder %s119, 0
      %s122 = sadd.s32 %s121, 1
      %s123 = scalar_select %p120, %s121, %s122
      %p126 = pneg %p120
      %p127 = scmp.eq.s32.totalorder %s10, 2
      %p128 = por %p126, %p127
      %p129 = scmp.ne.s32.totalorder %s121, %s124
      %p130 = scmp.eq.s32.totalorder %s10, 0
      %p131 = por %p129, %p130
      %p132 = scmp.ne.s32.totalorder %s121, %s124
      %p133 = scmp.eq.s32.totalorder %s15, 2
      %p134 = por %p132, %p133
      %p135 = scmp.ne.s32.totalorder %s124, %s125
      %p136 = scmp.eq.s32.totalorder %s15, 0
      %p137 = por %p135, %p136
      %p138 = scmp.ne.s32.totalorder %s124, %s125
      %p139 = scmp.eq.s32.totalorder %s16, 2
      %p140 = por %p138, %p139
      %p142 = scmp.ne.s32.totalorder %s125, %s141
      %p143 = scmp.eq.s32.totalorder %s16, 0
      %p144 = por %p142, %p143
      %s145 = ssub.s32 %s17, %s36
      %s146 = ssub.s32 %s18, %s32
      %s147 = sor.u32 %s145, %s146
      %p148 = scmp.eq.s32.totalorder %s147, 0
      %s150 = sadd.s32 %s149, 1
      %s151 = scalar_select %p148, %s149, %s150
      %p154 = pneg %p148
      %p155 = scmp.eq.s32.totalorder %s10, 2
      %p156 = por %p154, %p155
      %p157 = scmp.ne.s32.totalorder %s149, %s152
      %p158 = scmp.eq.s32.totalorder %s10, 0
      %p159 = por %p157, %p158
      %p160 = scmp.ne.s32.totalorder %s149, %s152
      %p161 = scmp.eq.s32.totalorder %s15, 2
      %p162 = por %p160, %p161
      %p163 = scmp.ne.s32.totalorder %s152, %s153
      %p164 = scmp.eq.s32.totalorder %s15, 0
      %p165 = por %p163, %p164
      %p166 = scmp.ne.s32.totalorder %s152, %s153
      %p167 = scmp.eq.s32.totalorder %s16, 2
      %p168 = por %p166, %p167
      %p170 = scmp.ne.s32.totalorder %s153, %s169
      %p171 = scmp.eq.s32.totalorder %s16, 0
      %p172 = por %p170, %p171
      %p173 = scmp.le.s32.totalorder 1, %s10
      %p174 = scmp.lt.s32.totalorder %s10, 4
      %p175 = pnand %p173, %p174
      %p176 = pneg %p175
      // Predicated region
      $region9: #{flexible_resnet_forward.19} parent=5 // pred_check
        _
      $region10: #{flexible_resnet_forward.19} parent=5 // pred_check_branch
        %178 = sbr.rel (%p175) target = $region12
      $region11: #{flexible_resnet_forward.19} parent=5 // pred_region
        %s179 = ssub.s32 %s10, 1
        // Predicated region
        $region13: #{flexible_resnet_forward.19} parent=11 // pred_check
          %p180 = pneg %p111
        $region14: #{flexible_resnet_forward.19} parent=11 // pred_check_branch
          %182 = sbr.rel (%p180) target = $region16
        $region15: #{flexible_resnet_forward.19} parent=11 // pred_region
          %p183 = scmp.lt.s32.totalorder %s21, 0
          %s184 = scalar_select %p183, %s21, 0
          %s185 = scalar_lea.vmem %s2, %s184
        $region16: #{flexible_resnet_forward.19} parent=11 // pred_fallthru
          _
        // Predicated region
        $region17: #{flexible_resnet_forward.19} parent=11 // pred_check
          %p186 = pneg %p137
        $region18: #{flexible_resnet_forward.19} parent=11 // pred_check_branch
          %188 = sbr.rel (%p186) target = $region20
        $region19: #{flexible_resnet_forward.19} parent=11 // pred_region
          %p189 = scmp.lt.s32.totalorder %s21, 0
          %s190 = scalar_select %p189, %s21, 0
          %s191 = scalar_lea.vmem %s3, %s190
        $region20: #{flexible_resnet_forward.19} parent=11 // pred_fallthru
          _
      $region12: #{flexible_resnet_forward.19} parent=5 // pred_fallthru
        _
      %p192 = scmp.lt.s32.totalorder %s10, 3
      // Predicated region
      $region21: #{flexible_resnet_forward.19} parent=5 // pred_check
        %p193 = pneg %p192
      $region22: #{flexible_resnet_forward.19} parent=5 // pred_check_branch
        %195 = sbr.rel (%p193) target = $region24
      $region23: #{flexible_resnet_forward.19} parent=5 // pred_region
        // Predicated region
        $region25: #{flexible_resnet_forward.19} parent=23 // pred_check
          %p196 = pneg %p51
        $region26: #{flexible_resnet_forward.19} parent=23 // pred_check_branch
          %198 = sbr.rel (%p196) target = $region28
        $region27: #{flexible_resnet_forward.19} parent=23 // pred_region
          %s199 = sand.u32 %s41, 1
          %s200 = sand.u32 %s41, 1
          %s201 = smul.addr %s200, 24
          %s202 = scalar_lea.vmem [#allocation3], %s201
          %s203 = smul.u32 2, %s17
          %s204 = smul.u32 3, %s19
          %s205 = smul.addr %s203, 9
          %s206 = sadd.s32 %s204, %s205
          %s207 = smul.addr %s206, 4
          %s208 = scalar_lea.vmem %s0, %s207
          // Predicated region
          $region29: #{flexible_resnet_forward.19} parent=27 // pred_check
            _
          $region30: #{flexible_resnet_forward.19} parent=27 // pred_check_branch
            %210 = sbr.rel (0) target = $region32
          $region31: #{flexible_resnet_forward.19} parent=27 // pred_region
            // Predicated region
            $region33: #{flexible_resnet_forward.19} parent=31 // pred_check
              _
            $region34: #{flexible_resnet_forward.19} parent=31 // pred_check_branch
              %212 = sbr.rel (0) target = $region36
            $region35: #{flexible_resnet_forward.19} parent=31 // pred_region
              %s213 = scalar_lea.vmem %s208, 8
              %s214 = scalar_lea.vmem %s202, 8 [#allocation3]
              loop: start=0, step=1, limit=1
              $region37: #{flexible_resnet_forward.19} parent=35 // loop_pre_header
                _
              $region38: #{flexible_resnet_forward.19} parent=35 // loop_header
                %s216 = sphi 0, %s220
                %p217 = scmp.ge.s32.totalorder %s216, 1
                %s221 = sphi %s208, %s208
                %s222 = sphi %s202, %s202
              $region39: #{flexible_resnet_forward.19} parent=35 // loop_header_branch
                %219 = sbr.rel (%p217) target = $region43
              $region40: #{flexible_resnet_forward.19} parent=35 // loop_body
                %v223 = vld [vmem:[%s221] sm:$0xff]
                %224 = vst [vmem:[%s222] sm:$0xff] %v223
                %v225 = vld [vmem:[%s221 + $0x24] sm:$0xff]
                %226 = vst [vmem:[%s222 + $0xc] sm:$0xff] %v225
              $region41: #{flexible_resnet_forward.19} parent=35 // loop_footer
                %s220 = sadd.s32 1, %s216
              $region42: #{flexible_resnet_forward.19} parent=35 // loop_footer_branch
                %215 = sbr.rel target = $region38
              $region43: #{flexible_resnet_forward.19} parent=35 // loop_exit
                _
              loop: start=0, step=1, limit=1
              $region44: #{flexible_resnet_forward.19} parent=35 // loop_pre_header
                _
              $region45: #{flexible_resnet_forward.19} parent=35 // loop_header
                %s229 = sphi 0, %s233
                %p230 = scmp.ge.s32.totalorder %s229, 1
                %s234 = sphi %s213, %s213
                %s235 = sphi %s214, %s214
              $region46: #{flexible_resnet_forward.19} parent=35 // loop_header_branch
                %232 = sbr.rel (%p230) target = $region50
              $region47: #{flexible_resnet_forward.19} parent=35 // loop_body
                %v236 = vld [vmem:[%s234] sm:$0xf]
                %237 = vst [vmem:[%s235] sm:$0xf] %v236
                %v238 = vld [vmem:[%s234 + $0x24] sm:$0xf]
                %239 = vst [vmem:[%s235 + $0xc] sm:$0xf] %v238
              $region48: #{flexible_resnet_forward.19} parent=35 // loop_footer
                %s233 = sadd.s32 1, %s229
              $region49: #{flexible_resnet_forward.19} parent=35 // loop_footer_branch
                %228 = sbr.rel target = $region45
              $region50: #{flexible_resnet_forward.19} parent=35 // loop_exit
                _
            $region36: #{flexible_resnet_forward.19} parent=31 // pred_fallthru
              _
          $region32: #{flexible_resnet_forward.19} parent=27 // pred_fallthru
            _
          %240 = vnop
        $region28: #{flexible_resnet_forward.19} parent=23 // pred_fallthru
          _
        // Predicated region
        $region51: #{flexible_resnet_forward.19} parent=23 // pred_check
          %p241 = pneg %p79
        $region52: #{flexible_resnet_forward.19} parent=23 // pred_check_branch
          %243 = sbr.rel (%p241) target = $region54
        $region53: #{flexible_resnet_forward.19} parent=23 // pred_region
          %s244 = smul.u32 48, %s19
          %p245 = scmp.lt.s32.totalorder %s244, 143
          %s246 = scalar_select %p245, %s244, 143
          %p247 = scmp.lt.s32.totalorder %s18, 0
          %s248 = scalar_select %p247, %s18, 0
          %s249 = sadd.s32 %s248, %s246
          %s250 = smul.addr %s249, 4
          %s251 = scalar_lea.vmem %s1, %s250
          %s252 = smul.u32 48, %s19
        $region54: #{flexible_resnet_forward.19} parent=23 // pred_fallthru
          _
      $region24: #{flexible_resnet_forward.19} parent=5 // pred_fallthru
        _
      %p253 = scmp.le.s32.totalorder 1, %s10
      %p254 = scmp.lt.s32.totalorder %s10, 4
      %p255 = pnand %p253, %p254
      %p256 = pneg %p255
      // Predicated region
      $region55: #{flexible_resnet_forward.19} parent=5 // pred_check
        _
      $region56: #{flexible_resnet_forward.19} parent=5 // pred_check_branch
        %258 = sbr.rel (%p255) target = $region58
      $region57: #{flexible_resnet_forward.19} parent=5 // pred_region
        %s259 = ssub.s32 %s10, 1
        %s260 = sand.u32 %s44, 1
        %s261 = sand.u32 %s44, 1
        %s262 = smul.addr %s261, 24
        %s263 = scalar_lea.vmem [#allocation3], %s262
        // Predicated region
        $region59: #{flexible_resnet_forward.19} parent=57 // pred_check
          %p264 = pneg %p57
        $region60: #{flexible_resnet_forward.19} parent=57 // pred_check_branch
          %266 = sbr.rel (%p264) target = $region62
        $region61: #{flexible_resnet_forward.19} parent=57 // pred_region
          _
        $region62: #{flexible_resnet_forward.19} parent=57 // pred_fallthru
          _
        %s267 = sand.u32 %s44, 1
        %s268 = sand.u32 %s44, 1
        %s269 = smul.addr %s268, 24
        %s270 = scalar_lea.vmem [#allocation3], %s269
        %p271 = pneg %p57
        %p272 = pneg %p54
        %s273 = smul.u32 48, %s22
        %p274 = scmp.lt.s32.totalorder %s273, 143
        %s275 = scalar_select %p274, %s273, 143
        %p276 = scmp.lt.s32.totalorder %s21, 0
        %s277 = scalar_select %p276, %s21, 0
        %s278 = sadd.s32 %s277, %s275
        %s279 = smul.addr %s278, 4
        %s280 = scalar_lea.vmem %s1, %s279
        %p281 = pneg %p85
        %p282 = pneg %p82
        %p283 = scmp.lt.s32.totalorder %s21, 0
        %s284 = scalar_select %p283, %s21, 0
        %s285 = scalar_lea.vmem %s2, %s284
        %p286 = pneg %p111
        %p287 = pneg %p108
        %p288 = scmp.lt.s32.totalorder %s21, 0
        %s289 = scalar_select %p288, %s21, 0
        %s290 = scalar_lea.vmem %s3, %s289
        %p291 = pneg %p137
        %p292 = pneg %p134
        %p293 = pneg %p165
        %p294 = pneg %p162
        %s295 = smul.u32 2, %s20
        %p296 = scmp.lt.s32.totalorder %s295, 1
        %s297 = scalar_select %p296, %s295, 1
        %p298 = scmp.lt.s32.totalorder %s21, 0
        %s299 = scalar_select %p298, %s21, 0
        %s300 = sadd.s32 %s299, %s297
        %s301 = smul.addr %s300, 4
        %s302 = scalar_lea.vmem %s4, %s301
        %s303 = smul.u32 2, %s20
        %s304 = smul.u32 3, %s22
        %s305 = smul.u32 48, %s22
        %p306 = scmp.lt.s32.totalorder %s305, 143
        %s307 = scalar_select %p306, %s305, 143
        %p308 = scmp.lt.s32.totalorder %s21, 0
        %s309 = scalar_select %p308, %s21, 0
        %s310 = sadd.s32 %s309, %s307
        %s311 = smul.addr %s310, 4
        %s312 = scalar_lea.vmem %s1, %s311
        %s313 = smul.u32 48, %s22
        %p314 = scmp.lt.s32.totalorder %s21, 0
        %s315 = scalar_select %p314, %s21, 0
        %s316 = scalar_lea.vmem %s2, %s315
        %p317 = scmp.lt.s32.totalorder %s21, 0
        %s318 = scalar_select %p317, %s21, 0
        %s319 = scalar_lea.vmem %s3, %s318
        %s320 = smul.u32 2, %s20
        %p321 = scmp.lt.s32.totalorder %s320, 1
        %s322 = scalar_select %p321, %s320, 1
        %p323 = scmp.lt.s32.totalorder %s21, 0
        %s324 = scalar_select %p323, %s21, 0
        %s325 = sadd.s32 %s324, %s322
        %s326 = smul.addr %s325, 4
        %s327 = scalar_lea.vmem %s4, %s326
        %s328 = smul.u32 2, %s20
        %p330 = scmp.eq.s32.totalorder %s22, 0
        // Predicated region
        $region63: #{flexible_resnet_forward.19} parent=57 // pred_check
          %p331 = pneg %p330
        $region64: #{flexible_resnet_forward.19} parent=57 // pred_check_branch
          %333 = sbr.rel (%p331) target = $region66
        $region65: #{flexible_resnet_forward.19} parent=57 // pred_region
          %334 = vst [vmem:[#allocation2] sm:$0xff] 0.0
          %335 = vst [vmem:[#allocation2 + $0x8] sm:$0xff] 0.0
        $region66: #{flexible_resnet_forward.19} parent=57 // pred_fallthru
          _
        %v336 = vld [vmem:[#allocation2] sm:$0xff]
        %v337 = vld [vmem:[#allocation2 + $0x8] sm:$0xff]
        %v338 = vld [vmem:[%s263] sm:$0xff]
        %v339 = vld [vmem:[%s263 + $0x8] sm:$0xf]
        %v340 = vld [vmem:[%s263 + $0xc] sm:$0xff]
        %v341 = vld [vmem:[%s263 + $0x14] sm:$0xf]
        %v342 = vld [vmem:[%s312] sm:$0xf]
        %v343 = vld [vmem:[%s312 + $0x4] sm:$0xf]
        %v344 = vld [vmem:[%s312 + $0x8] sm:$0xf]
        %v345 = vld [vmem:[%s312 + $0xc] sm:$0xf]
        %v346 = vld [vmem:[%s312 + $0x10] sm:$0xf]
        %v347 = vld [vmem:[%s312 + $0x14] sm:$0xf]
        %v348 = vld [vmem:[%s312 + $0x18] sm:$0xf]
        %v349 = vld [vmem:[%s312 + $0x1c] sm:$0xf]
        %v350 = vld [vmem:[%s312 + $0x20] sm:$0xf]
        %v351 = vld [vmem:[%s312 + $0x24] sm:$0xf]
        %v352 = vld [vmem:[%s312 + $0x28] sm:$0xf]
        %v353 = vld [vmem:[%s312 + $0x2c] sm:$0xf]
        %v354 = vld [vmem:[%s312 + $0x30] sm:$0xf]
        %v355 = vld [vmem:[%s312 + $0x34] sm:$0xf]
        %v356 = vld [vmem:[%s312 + $0x38] sm:$0xf]
        %v357 = vld [vmem:[%s312 + $0x3c] sm:$0xf]
        %v358 = vld [vmem:[%s312 + $0x40] sm:$0xf]
        %v359 = vld [vmem:[%s312 + $0x44] sm:$0xf]
        %v360 = vld [vmem:[%s312 + $0x48] sm:$0xf]
        %v361 = vld [vmem:[%s312 + $0x4c] sm:$0xf]
        %v362 = vld [vmem:[%s312 + $0x50] sm:$0xf]
        %v363 = vld [vmem:[%s312 + $0x54] sm:$0xf]
        %v364 = vld [vmem:[%s312 + $0x58] sm:$0xf]
        %v365 = vld [vmem:[%s312 + $0x5c] sm:$0xf]
        %v366 = vld [vmem:[%s312 + $0x60] sm:$0xf]
        %v367 = vld [vmem:[%s312 + $0x64] sm:$0xf]
        %v368 = vld [vmem:[%s312 + $0x68] sm:$0xf]
        %v369 = vld [vmem:[%s312 + $0x6c] sm:$0xf]
        %v370 = vld [vmem:[%s312 + $0x70] sm:$0xf]
        %v371 = vld [vmem:[%s312 + $0x74] sm:$0xf]
        %v372 = vld [vmem:[%s312 + $0x78] sm:$0xf]
        %v373 = vld [vmem:[%s312 + $0x7c] sm:$0xf]
        %v374 = vld [vmem:[%s312 + $0x80] sm:$0xf]
        %v375 = vld [vmem:[%s312 + $0x84] sm:$0xf]
        %v376 = vld [vmem:[%s312 + $0x88] sm:$0xf]
        %v377 = vld [vmem:[%s312 + $0x8c] sm:$0xf]
        %v378 = vld [vmem:[%s312 + $0x90] sm:$0xf]
        %v379 = vld [vmem:[%s312 + $0x94] sm:$0xf]
        %v380 = vld [vmem:[%s312 + $0x98] sm:$0xf]
        %v381 = vld [vmem:[%s312 + $0x9c] sm:$0xf]
        %v382 = vld [vmem:[%s312 + $0xa0] sm:$0xf]
        %v383 = vld [vmem:[%s312 + $0xa4] sm:$0xf]
        %v384 = vld [vmem:[%s312 + $0xa8] sm:$0xf]
        %v385 = vld [vmem:[%s312 + $0xac] sm:$0xf]
        %v386 = vld [vmem:[%s312 + $0xb0] sm:$0xf]
        %v387 = vld [vmem:[%s312 + $0xb4] sm:$0xf]
        %v388 = vld [vmem:[%s312 + $0xb8] sm:$0xf]
        %v389 = vld [vmem:[%s312 + $0xbc] sm:$0xf]
        %v394 = vunpack.c.l.b16 %v338
        %v395 = vunpack.c.h.b16 %v338
        %v396 = vunpack.c.l.b16 %v339
        %v397 = vunpack.c.l.b16 %v340
        %v398 = vunpack.c.h.b16 %v340
        %v399 = vunpack.c.l.b16 %v341
        %v400 = vpack.c.b16 %v397, %v394
        %v401 = vpack.c.b16 %v398, %v395
        %v402 = vpack.c.b16 %v399, %v396
        %v454 = vunpack.c.l.b16 %v342
        %v455 = vunpack.c.l.b16 %v343
        %v456 = vunpack.c.l.b16 %v344
        %v457 = vunpack.c.l.b16 %v345
        %v458 = vunpack.c.l.b16 %v346
        %v459 = vunpack.c.l.b16 %v347
        %v460 = vunpack.c.l.b16 %v348
        %v461 = vunpack.c.l.b16 %v349
        %v462 = vunpack.c.l.b16 %v350
        %v463 = vunpack.c.l.b16 %v351
        %v464 = vunpack.c.l.b16 %v352
        %v465 = vunpack.c.l.b16 %v353
        %v466 = vunpack.c.l.b16 %v354
        %v467 = vunpack.c.l.b16 %v355
        %v468 = vunpack.c.l.b16 %v356
        %v469 = vunpack.c.l.b16 %v357
        %v470 = vunpack.c.l.b16 %v358
        %v471 = vunpack.c.l.b16 %v359
        %v472 = vunpack.c.l.b16 %v360
        %v473 = vunpack.c.l.b16 %v361
        %v474 = vunpack.c.l.b16 %v362
        %v475 = vunpack.c.l.b16 %v363
        %v476 = vunpack.c.l.b16 %v364
        %v477 = vunpack.c.l.b16 %v365
        %v478 = vunpack.c.l.b16 %v366
        %v479 = vunpack.c.l.b16 %v367
        %v480 = vunpack.c.l.b16 %v368
        %v481 = vunpack.c.l.b16 %v369
        %v482 = vunpack.c.l.b16 %v370
        %v483 = vunpack.c.l.b16 %v371
        %v484 = vunpack.c.l.b16 %v372
        %v485 = vunpack.c.l.b16 %v373
        %v486 = vunpack.c.l.b16 %v374
        %v487 = vunpack.c.l.b16 %v375
        %v488 = vunpack.c.l.b16 %v376
        %v489 = vunpack.c.l.b16 %v377
        %v490 = vunpack.c.l.b16 %v378
        %v491 = vunpack.c.l.b16 %v379
        %v492 = vunpack.c.l.b16 %v380
        %v493 = vunpack.c.l.b16 %v381
        %v494 = vunpack.c.l.b16 %v382
        %v495 = vunpack.c.l.b16 %v383
        %v496 = vunpack.c.l.b16 %v384
        %v497 = vunpack.c.l.b16 %v385
        %v498 = vunpack.c.l.b16 %v386
        %v499 = vunpack.c.l.b16 %v387
        %v500 = vunpack.c.l.b16 %v388
        %v501 = vunpack.c.l.b16 %v389
        %v502 = vpack.c.b16 %v455, %v454
        %v503 = vpack.c.b16 %v457, %v456
        %v504 = vpack.c.b16 %v459, %v458
        %v505 = vpack.c.b16 %v461, %v460
        %v506 = vpack.c.b16 %v463, %v462
        %v507 = vpack.c.b16 %v465, %v464
        %v508 = vpack.c.b16 %v467, %v466
        %v509 = vpack.c.b16 %v469, %v468
        %v510 = vpack.c.b16 %v471, %v470
        %v511 = vpack.c.b16 %v473, %v472
        %v512 = vpack.c.b16 %v475, %v474
        %v513 = vpack.c.b16 %v477, %v476
        %v514 = vpack.c.b16 %v479, %v478
        %v515 = vpack.c.b16 %v481, %v480
        %v516 = vpack.c.b16 %v483, %v482
        %v517 = vpack.c.b16 %v485, %v484
        %v518 = vpack.c.b16 %v487, %v486
        %v519 = vpack.c.b16 %v489, %v488
        %v520 = vpack.c.b16 %v491, %v490
        %v521 = vpack.c.b16 %v493, %v492
        %v522 = vpack.c.b16 %v495, %v494
        %v523 = vpack.c.b16 %v497, %v496
        %v524 = vpack.c.b16 %v499, %v498
        %v525 = vpack.c.b16 %v501, %v500
        %550 = vmatprep.subr.bf16.mxu0 0
        %551 = vmatpush1.bf16.msra.mxu0 %v502
        %552 = vmatprep.subr.bf16.mxu0 0
        %553 = vmatpush1.bf16.msra.mxu0 %v503
        %554 = vmatprep.subr.bf16.mxu0 0
        %555 = vmatpush1.bf16.msra.mxu0 %v504
        %556 = vmatprep.subr.bf16.mxu0 0
        %557 = vmatpush1.bf16.msra.mxu0 %v505
        %558 = vmatprep.subr.bf16.mxu0 0
        %559 = vmatpush1.bf16.msra.mxu0 %v506
        %560 = vmatprep.subr.bf16.mxu0 0
        %561 = vmatpush1.bf16.msra.mxu0 %v507
        %562 = vmatprep.subr.bf16.mxu0 0
        %563 = vmatpush1.bf16.msra.mxu0 %v508
        %564 = vmatprep.subr.bf16.mxu0 0
        %565 = vmatpush1.bf16.msra.mxu0 %v509
        %566 = vmatprep.subr.bf16.mxu0 0
        %567 = vmatpush1.bf16.msra.mxu0 %v510
        %568 = vmatprep.subr.bf16.mxu0 0
        %569 = vmatpush1.bf16.msra.mxu0 %v511
        %570 = vmatprep.subr.bf16.mxu0 0
        %571 = vmatpush1.bf16.msra.mxu0 %v512
        %572 = vmatprep.subr.bf16.mxu0 0
        %573 = vmatpush1.bf16.msra.mxu0 %v513
        %574 = vmatprep.subr.bf16.mxu0 0
        %575 = vmatpush1.bf16.msra.mxu0 %v514
        %576 = vmatprep.subr.bf16.mxu0 0
        %577 = vmatpush1.bf16.msra.mxu0 %v515
        %578 = vmatprep.subr.bf16.mxu0 0
        %579 = vmatpush1.bf16.msra.mxu0 %v516
        %580 = vmatprep.subr.bf16.mxu0 0
        %581 = vmatpush1.bf16.msra.mxu0 %v517
        %582 = vmatprep.mubr.bf16.mxu0 %v401
        %583 = vmatmul.mubr.bf16.gmra.mrb[0].mxu0 %v400
        %v584 = vpop.f32.mrb[0].mxu0
        %v585 = vadd.f32 0.0, %v584
        %v586 = vpop.f32.mrb[0].mxu0
        %v587 = vpop.f32.mrb[0].mxu0
        %v588 = vadd.f32 0.0, %v587
        %v589 = vpop.f32.mrb[0].mxu0
        %590 = vdwg.mxu0
        %591 = vmatprep.subr.bf16.mxu0 0
        %592 = vmatpush1.bf16.msra.mxu0 %v518
        %593 = vmatprep.subr.bf16.mxu0 0
        %594 = vmatpush1.bf16.msra.mxu0 %v519
        %595 = vmatprep.subr.bf16.mxu0 0
        %596 = vmatpush1.bf16.msra.mxu0 %v520
        %597 = vmatprep.subr.bf16.mxu0 0
        %598 = vmatpush1.bf16.msra.mxu0 %v521
        %599 = vmatprep.subr.bf16.mxu0 0
        %600 = vmatpush1.bf16.msra.mxu0 %v522
        %601 = vmatprep.subr.bf16.mxu0 0
        %602 = vmatpush1.bf16.msra.mxu0 %v523
        %603 = vmatprep.subr.bf16.mxu0 0
        %604 = vmatpush1.bf16.msra.mxu0 %v524
        %605 = vmatprep.subr.bf16.mxu0 0
        %606 = vmatpush1.bf16.msra.mxu0 %v525
        %607 = vmatprep.subr.bf16.mxu0 0
        %608 = vmatpush1.bf16.msra.mxu0 0
        %609 = vmatprep.subr.bf16.mxu0 0
        %610 = vmatpush1.bf16.msra.mxu0 0
        %611 = vmatprep.subr.bf16.mxu0 0
        %612 = vmatpush1.bf16.msra.mxu0 0
        %613 = vmatprep.subr.bf16.mxu0 0
        %614 = vmatpush1.bf16.msra.mxu0 0
        %615 = vmatprep.subr.bf16.mxu0 0
        %616 = vmatpush1.bf16.msra.mxu0 0
        %617 = vmatprep.subr.bf16.mxu0 0
        %618 = vmatpush1.bf16.msra.mxu0 0
        %619 = vmatprep.subr.bf16.mxu0 0
        %620 = vmatpush1.bf16.msra.mxu0 0
        %621 = vmatprep.subr.bf16.mxu0 0
        %622 = vmatpush1.bf16.msra.mxu0 0
        %623 = vmatprep.mubr.bf16.mxu0 0
        %624 = vmatmul.mubr.bf16.gmra.mrb[0].mxu0 %v402
        %v625 = vpop.f32.mrb[0].mxu0
        %v626 = vadd.f32 %v585, %v625
        %v627 = vpop.f32.mrb[0].mxu0
        %v628 = vpop.f32.mrb[0].mxu0
        %v629 = vadd.f32 %v588, %v628
        %v630 = vpop.f32.mrb[0].mxu0
        %631 = vdwg.mxu0
        %v632 = vadd.f32 %v336, %v626
        %v633 = vadd.f32 %v337, %v629
        %634 = vst [vmem:[#allocation2] sm:$0xff] %v632
        %635 = vst [vmem:[#allocation2 + $0x8] sm:$0xff] %v633
        %p636 = scmp.eq.s32.totalorder %s22, 2
        // Predicated region
        $region67: #{flexible_resnet_forward.19} parent=57 // pred_check
          %p637 = pneg %p636
        $region68: #{flexible_resnet_forward.19} parent=57 // pred_check_branch
          %639 = sbr.rel (%p637) target = $region70
        $region69: #{flexible_resnet_forward.19} parent=57 // pred_region
          %v640 = vld [vmem:[#allocation2] sm:$0xff]
          %v641 = vld [vmem:[#allocation2 + $0x8] sm:$0xff]
          %v642 = vld [vmem:[%s316] sm:$0x1]
          %v644 = vlaneseq
          %v645 = vshrl.u32 %v644, 7
          %v646 = vsub.s32 0, %v645
          %v647 = vrot.slane %v642, %v646
          %v649 = vmul.f32 %v640, %v647
          %v650 = vmul.f32 %v641, %v647
          %v651 = vld [vmem:[%s319] sm:$0x1]
          %v653 = vlaneseq
          %v654 = vshrl.u32 %v653, 7
          %v655 = vsub.s32 0, %v654
          %v656 = vrot.slane %v651, %v655
          %v658 = vadd.f32 %v649, %v656
          %v659 = vadd.f32 %v650, %v656
          %v660 = vmax.f32 %v658, 0.0
          %v661 = vmax.f32 %v659, 0.0
          %v662 = vpack.c.bf16 %v661, %v660
          %v664 = vunpack.c.l.b16 %v662
          %v665 = vunpack.c.h.b16 %v662
          %v666 = vpack.c.b16 %v664, %v664
          %v667 = vpack.c.b16 %v665, %v665
          %670 = vst [vmem:[%s327] sm:$0xf] %v666
          %671 = vst [vmem:[%s327 + $0x4] sm:$0xf] %v667
        $region70: #{flexible_resnet_forward.19} parent=57 // pred_fallthru
          _
        %s672 = smul.u32 2, %s20
        %p673 = scmp.lt.s32.totalorder %s672, 1
        %s674 = scalar_select %p673, %s672, 1
        %p675 = scmp.lt.s32.totalorder %s21, 0
        %s676 = scalar_select %p675, %s21, 0
        %s677 = sadd.s32 %s676, %s674
        %s678 = smul.addr %s677, 4
        %s679 = scalar_lea.vmem %s4, %s678
        // Predicated region
        $region71: #{flexible_resnet_forward.19} parent=57 // pred_check
          %p680 = pneg %p162
        $region72: #{flexible_resnet_forward.19} parent=57 // pred_check_branch
          %682 = sbr.rel (%p680) target = $region74
        $region73: #{flexible_resnet_forward.19} parent=57 // pred_region
          %s683 = smul.u32 2, %s20
        $region74: #{flexible_resnet_forward.19} parent=57 // pred_fallthru
          _
        // Predicated region
        $region75: #{flexible_resnet_forward.19} parent=57 // pred_check
          %p684 = pneg %p162
        $region76: #{flexible_resnet_forward.19} parent=57 // pred_check_branch
          %686 = sbr.rel (%p684) target = $region78
        $region77: #{flexible_resnet_forward.19} parent=57 // pred_region
          %s687 = smul.u32 2, %s20
          %p688 = scmp.lt.s32.totalorder %s687, 1
          %s689 = scalar_select %p688, %s687, 1
          %p690 = scmp.lt.s32.totalorder %s21, 0
          %s691 = scalar_select %p690, %s21, 0
          %s692 = sadd.s32 %s691, %s689
          %s693 = smul.addr %s692, 4
          %s694 = scalar_lea.vmem %s4, %s693
        $region78: #{flexible_resnet_forward.19} parent=57 // pred_fallthru
          _
      $region58: #{flexible_resnet_forward.19} parent=5 // pred_fallthru
        _
      %p695 = scmp.le.s32.totalorder 2, %s10
      // Predicated region
      $region79: #{flexible_resnet_forward.19} parent=5 // pred_check
        %p696 = pneg %p695
      $region80: #{flexible_resnet_forward.19} parent=5 // pred_check_branch
        %698 = sbr.rel (%p696) target = $region82
      $region81: #{flexible_resnet_forward.19} parent=5 // pred_region
        %s699 = ssub.s32 %s10, 2
      $region82: #{flexible_resnet_forward.19} parent=5 // pred_fallthru
        _
    $region6: #{flexible_resnet_forward.19} parent=1 // loop_footer
      %s14 = sadd.s32 1, %s10
    $region7: #{flexible_resnet_forward.19} parent=1 // loop_footer_branch
      %9 = sbr.rel target = $region3
    $region8: #{flexible_resnet_forward.19} parent=1 // loop_exit
      _

// kernel: flexible_resnet_forward.21
$region0: #{flexible_resnet_forward.21}
  #allocation0 [shape = 'u32[]', space=smem, size = 0x4, offset = 0x4, fixed_abs, tag = 'smem constant byte address 0x4 - core index']
  #allocation1 [shape = 'u32[144,128]{1,0:T(1,128)}', space=vmem, size = 0x12000, scoped, tag = 'internal scratch']
  #allocation2 [shape = 'f32[16,128]{1,0:T(8,128)}', space=vmem, size = 0x2000, scoped, tag = 'scratch operand']
  %s0 = inlined_call_operand.vmem [shape: bf16[16,1152], index: 0, kind: input, shape index: {}]
  %s1 = inlined_call_operand.vmem [shape: bf16[1152,128], index: 1, kind: input, shape index: {}]
  %s2 = inlined_call_operand.vmem [shape: f32[1,128], index: 2, kind: input, shape index: {}]
  %s3 = inlined_call_operand.vmem [shape: f32[1,128], index: 3, kind: input, shape index: {}]
  %s4 = inlined_call_operand.vmem [shape: bf16[16,128], index: 4, kind: input, shape index: {}]
  %s5 = inlined_call_operand.vmem [shape: bf16[16,128], index: 5, kind: output, shape index: {}]
  %s6 = sld [smem:[#allocation0]]
  $region87: #{flexible_resnet_forward.21} parent=0
    _
  %s8 = ssub.s32 1, %s6
  %s9 = scalar_select 0, %s8, %s6
  $region1: #{flexible_resnet_forward.21} parent=0
    #allocation3 [shape = 'u8[24576]{0}', space=vmem, size = 0x6000, scoped, tag = 'input window, operand 0']
    loop: start=0, step=1, limit=5
    $region2: #{flexible_resnet_forward.21} parent=1 // loop_pre_header
      _
    $region3: #{flexible_resnet_forward.21} parent=1 // loop_header
      %s11 = sphi 0, %s15
      %p12 = scmp.ge.s32.totalorder %s11, 5
      %s18 = sphi 0, %s37
      %s19 = sphi 0, %s33
      %s20 = sphi 0, %s29
      %s21 = sphi 0, %s18
      %s22 = sphi 0, %s19
      %s23 = sphi 0, %s20
      %s24 = sphi 0, %s21
      %s25 = sphi 0, %s22
      %s26 = sphi 0, %s23
      %s42 = sphi 0, %s44
      %s45 = sphi 0, %s42
      %s46 = sphi 0, %s45
      %s62 = sphi 0, %s46
      %s70 = sphi 0, %s72
      %s73 = sphi 0, %s70
      %s74 = sphi 0, %s73
      %s90 = sphi 0, %s74
      %s96 = sphi 0, %s98
      %s99 = sphi 0, %s96
      %s100 = sphi 0, %s99
      %s116 = sphi 0, %s100
      %s122 = sphi 0, %s124
      %s125 = sphi 0, %s122
      %s126 = sphi 0, %s125
      %s142 = sphi 0, %s126
      %s150 = sphi 0, %s152
      %s153 = sphi 0, %s150
      %s154 = sphi 0, %s153
      %s170 = sphi 0, %s154
      %s178 = sphi 0, %s180
      %s181 = sphi 0, %s178
      %s182 = sphi 0, %s181
      %s198 = sphi 0, %s182
    $region4: #{flexible_resnet_forward.21} parent=1 // loop_header_branch
      %14 = sbr.rel (%p12) target = $region8
    $region5: #{flexible_resnet_forward.21} parent=1 // loop_body
      %s16 = ssub.s32 %s11, 1
      %s17 = ssub.s32 %s11, 2
      %s27 = sadd.s32 1, %s20
      %p28 = scmp.ge.s32.totalorder %s27, 3
      %s29 = scalar_select %p28, 0, %s27
      %s30 = sadd.s32 1, %s19
      %s31 = scalar_select %p28, %s30, %s19
      %p32 = scmp.ge.s32.totalorder %s31, 1
      %s33 = scalar_select %p32, 0, %s31
      %s34 = sadd.s32 1, %s18
      %s35 = scalar_select %p32, %s34, %s18
      %p36 = scmp.ge.s32.totalorder %s35, 1
      %s37 = scalar_select %p36, 0, %s35
      %s38 = ssub.s32 %s18, %s37
      %s39 = ssub.s32 %s20, %s29
      %s40 = sor.u32 %s38, %s39
      %p41 = scmp.eq.s32.totalorder %s40, 0
      %s43 = sadd.s32 %s42, 1
      %s44 = scalar_select %p41, %s42, %s43
      %p47 = pneg %p41
      %p48 = scmp.eq.s32.totalorder %s11, 2
      %p49 = por %p47, %p48
      %p50 = scmp.ne.s32.totalorder %s42, %s45
      %p51 = scmp.eq.s32.totalorder %s11, 0
      %p52 = por %p50, %p51
      %p53 = scmp.ne.s32.totalorder %s42, %s45
      %p54 = scmp.eq.s32.totalorder %s16, 2
      %p55 = por %p53, %p54
      %p56 = scmp.ne.s32.totalorder %s45, %s46
      %p57 = scmp.eq.s32.totalorder %s16, 0
      %p58 = por %p56, %p57
      %p59 = scmp.ne.s32.totalorder %s45, %s46
      %p60 = scmp.eq.s32.totalorder %s17, 2
      %p61 = por %p59, %p60
      %p63 = scmp.ne.s32.totalorder %s46, %s62
      %p64 = scmp.eq.s32.totalorder %s17, 0
      %p65 = por %p63, %p64
      %s66 = ssub.s32 %s20, %s29
      %s67 = ssub.s32 %s19, %s33
      %s68 = sor.u32 %s66, %s67
      %p69 = scmp.eq.s32.totalorder %s68, 0
      %s71 = sadd.s32 %s70, 1
      %s72 = scalar_select %p69, %s70, %s71
      %p75 = pneg %p69
      %p76 = scmp.eq.s32.totalorder %s11, 2
      %p77 = por %p75, %p76
      %p78 = scmp.ne.s32.totalorder %s70, %s73
      %p79 = scmp.eq.s32.totalorder %s11, 0
      %p80 = por %p78, %p79
      %p81 = scmp.ne.s32.totalorder %s70, %s73
      %p82 = scmp.eq.s32.totalorder %s16, 2
      %p83 = por %p81, %p82
      %p84 = scmp.ne.s32.totalorder %s73, %s74
      %p85 = scmp.eq.s32.totalorder %s16, 0
      %p86 = por %p84, %p85
      %p87 = scmp.ne.s32.totalorder %s73, %s74
      %p88 = scmp.eq.s32.totalorder %s17, 2
      %p89 = por %p87, %p88
      %p91 = scmp.ne.s32.totalorder %s74, %s90
      %p92 = scmp.eq.s32.totalorder %s17, 0
      %p93 = por %p91, %p92
      %s94 = ssub.s32 %s19, %s33
      %p95 = scmp.eq.s32.totalorder %s94, 0
      %s97 = sadd.s32 %s96, 1
      %s98 = scalar_select %p95, %s96, %s97
      %p101 = pneg %p95
      %p102 = scmp.eq.s32.totalorder %s11, 2
      %p103 = por %p101, %p102
      %p104 = scmp.ne.s32.totalorder %s96, %s99
      %p105 = scmp.eq.s32.totalorder %s11, 0
      %p106 = por %p104, %p105
      %p107 = scmp.ne.s32.totalorder %s96, %s99
      %p108 = scmp.eq.s32.totalorder %s16, 2
      %p109 = por %p107, %p108
      %p110 = scmp.ne.s32.totalorder %s99, %s100
      %p111 = scmp.eq.s32.totalorder %s16, 0
      %p112 = por %p110, %p111
      %p113 = scmp.ne.s32.totalorder %s99, %s100
      %p114 = scmp.eq.s32.totalorder %s17, 2
      %p115 = por %p113, %p114
      %p117 = scmp.ne.s32.totalorder %s100, %s116
      %p118 = scmp.eq.s32.totalorder %s17, 0
      %p119 = por %p117, %p118
      %s120 = ssub.s32 %s19, %s33
      %p121 = scmp.eq.s32.totalorder %s120, 0
      %s123 = sadd.s32 %s122, 1
      %s124 = scalar_select %p121, %s122, %s123
      %p127 = pneg %p121
      %p128 = scmp.eq.s32.totalorder %s11, 2
      %p129 = por %p127, %p128
      %p130 = scmp.ne.s32.totalorder %s122, %s125
      %p131 = scmp.eq.s32.totalorder %s11, 0
      %p132 = por %p130, %p131
      %p133 = scmp.ne.s32.totalorder %s122, %s125
      %p134 = scmp.eq.s32.totalorder %s16, 2
      %p135 = por %p133, %p134
      %p136 = scmp.ne.s32.totalorder %s125, %s126
      %p137 = scmp.eq.s32.totalorder %s16, 0
      %p138 = por %p136, %p137
      %p139 = scmp.ne.s32.totalorder %s125, %s126
      %p140 = scmp.eq.s32.totalorder %s17, 2
      %p141 = por %p139, %p140
      %p143 = scmp.ne.s32.totalorder %s126, %s142
      %p144 = scmp.eq.s32.totalorder %s17, 0
      %p145 = por %p143, %p144
      %s146 = ssub.s32 %s18, %s37
      %s147 = ssub.s32 %s19, %s33
      %s148 = sor.u32 %s146, %s147
      %p149 = scmp.eq.s32.totalorder %s148, 0
      %s151 = sadd.s32 %s150, 1
      %s152 = scalar_select %p149, %s150, %s151
      %p155 = pneg %p149
      %p156 = scmp.eq.s32.totalorder %s11, 2
      %p157 = por %p155, %p156
      %p158 = scmp.ne.s32.totalorder %s150, %s153
      %p159 = scmp.eq.s32.totalorder %s11, 0
      %p160 = por %p158, %p159
      %p161 = scmp.ne.s32.totalorder %s150, %s153
      %p162 = scmp.eq.s32.totalorder %s16, 2
      %p163 = por %p161, %p162
      %p164 = scmp.ne.s32.totalorder %s153, %s154
      %p165 = scmp.eq.s32.totalorder %s16, 0
      %p166 = por %p164, %p165
      %p167 = scmp.ne.s32.totalorder %s153, %s154
      %p168 = scmp.eq.s32.totalorder %s17, 2
      %p169 = por %p167, %p168
      %p171 = scmp.ne.s32.totalorder %s154, %s170
      %p172 = scmp.eq.s32.totalorder %s17, 0
      %p173 = por %p171, %p172
      %s174 = ssub.s32 %s18, %s37
      %s175 = ssub.s32 %s19, %s33
      %s176 = sor.u32 %s174, %s175
      %p177 = scmp.eq.s32.totalorder %s176, 0
      %s179 = sadd.s32 %s178, 1
      %s180 = scalar_select %p177, %s178, %s179
      %p183 = pneg %p177
      %p184 = scmp.eq.s32.totalorder %s11, 2
      %p185 = por %p183, %p184
      %p186 = scmp.ne.s32.totalorder %s178, %s181
      %p187 = scmp.eq.s32.totalorder %s11, 0
      %p188 = por %p186, %p187
      %p189 = scmp.ne.s32.totalorder %s178, %s181
      %p190 = scmp.eq.s32.totalorder %s16, 2
      %p191 = por %p189, %p190
      %p192 = scmp.ne.s32.totalorder %s181, %s182
      %p193 = scmp.eq.s32.totalorder %s16, 0
      %p194 = por %p192, %p193
      %p195 = scmp.ne.s32.totalorder %s181, %s182
      %p196 = scmp.eq.s32.totalorder %s17, 2
      %p197 = por %p195, %p196
      %p199 = scmp.ne.s32.totalorder %s182, %s198
      %p200 = scmp.eq.s32.totalorder %s17, 0
      %p201 = por %p199, %p200
      %p202 = scmp.le.s32.totalorder 1, %s11
      %p203 = scmp.lt.s32.totalorder %s11, 4
      %p204 = pnand %p202, %p203
      %p205 = pneg %p204
      // Predicated region
      $region9: #{flexible_resnet_forward.21} parent=5 // pred_check
        _
      $region10: #{flexible_resnet_forward.21} parent=5 // pred_check_branch
        %207 = sbr.rel (%p204) target = $region12
      $region11: #{flexible_resnet_forward.21} parent=5 // pred_region
        %s208 = ssub.s32 %s11, 1
        // Predicated region
        $region13: #{flexible_resnet_forward.21} parent=11 // pred_check
          %p209 = pneg %p112
        $region14: #{flexible_resnet_forward.21} parent=11 // pred_check_branch
          %211 = sbr.rel (%p209) target = $region16
        $region15: #{flexible_resnet_forward.21} parent=11 // pred_region
          %p212 = scmp.lt.s32.totalorder %s22, 0
          %s213 = scalar_select %p212, %s22, 0
          %s214 = scalar_lea.vmem %s2, %s213
        $region16: #{flexible_resnet_forward.21} parent=11 // pred_fallthru
          _
        // Predicated region
        $region17: #{flexible_resnet_forward.21} parent=11 // pred_check
          %p215 = pneg %p138
        $region18: #{flexible_resnet_forward.21} parent=11 // pred_check_branch
          %217 = sbr.rel (%p215) target = $region20
        $region19: #{flexible_resnet_forward.21} parent=11 // pred_region
          %p218 = scmp.lt.s32.totalorder %s22, 0
          %s219 = scalar_select %p218, %s22, 0
          %s220 = scalar_lea.vmem %s3, %s219
        $region20: #{flexible_resnet_forward.21} parent=11 // pred_fallthru
          _
        // Predicated region
        $region21: #{flexible_resnet_forward.21} parent=11 // pred_check
          %p221 = pneg %p166
        $region22: #{flexible_resnet_forward.21} parent=11 // pred_check_branch
          %223 = sbr.rel (%p221) target = $region24
        $region23: #{flexible_resnet_forward.21} parent=11 // pred_region
          %s224 = smul.u32 2, %s21
          %p225 = scmp.lt.s32.totalorder %s224, 1
          %s226 = scalar_select %p225, %s224, 1
          %p227 = scmp.lt.s32.totalorder %s22, 0
          %s228 = scalar_select %p227, %s22, 0
          %s229 = sadd.s32 %s228, %s226
          %s230 = smul.addr %s229, 4
          %s231 = scalar_lea.vmem %s4, %s230
          %s232 = smul.u32 2, %s21
        $region24: #{flexible_resnet_forward.21} parent=11 // pred_fallthru
          _
      $region12: #{flexible_resnet_forward.21} parent=5 // pred_fallthru
        _
      %p233 = scmp.lt.s32.totalorder %s11, 3
      // Predicated region
      $region25: #{flexible_resnet_forward.21} parent=5 // pred_check
        %p234 = pneg %p233
      $region26: #{flexible_resnet_forward.21} parent=5 // pred_check_branch
        %236 = sbr.rel (%p234) target = $region28
      $region27: #{flexible_resnet_forward.21} parent=5 // pred_region
        // Predicated region
        $region29: #{flexible_resnet_forward.21} parent=27 // pred_check
          %p237 = pneg %p52
        $region30: #{flexible_resnet_forward.21} parent=27 // pred_check_branch
          %239 = sbr.rel (%p237) target = $region32
        $region31: #{flexible_resnet_forward.21} parent=27 // pred_region
          %s240 = sand.u32 %s42, 1
          %s241 = sand.u32 %s42, 1
          %s242 = smul.addr %s241, 24
          %s243 = scalar_lea.vmem [#allocation3], %s242
          %s244 = smul.u32 2, %s18
          %s245 = smul.u32 3, %s20
          %s246 = smul.addr %s244, 9
          %s247 = sadd.s32 %s245, %s246
          %s248 = smul.addr %s247, 4
          %s249 = scalar_lea.vmem %s0, %s248
          // Predicated region
          $region33: #{flexible_resnet_forward.21} parent=31 // pred_check
            _
          $region34: #{flexible_resnet_forward.21} parent=31 // pred_check_branch
            %251 = sbr.rel (0) target = $region36
          $region35: #{flexible_resnet_forward.21} parent=31 // pred_region
            // Predicated region
            $region37: #{flexible_resnet_forward.21} parent=35 // pred_check
              _
            $region38: #{flexible_resnet_forward.21} parent=35 // pred_check_branch
              %253 = sbr.rel (0) target = $region40
            $region39: #{flexible_resnet_forward.21} parent=35 // pred_region
              %s254 = scalar_lea.vmem %s249, 8
              %s255 = scalar_lea.vmem %s243, 8 [#allocation3]
              loop: start=0, step=1, limit=1
              $region41: #{flexible_resnet_forward.21} parent=39 // loop_pre_header
                _
              $region42: #{flexible_resnet_forward.21} parent=39 // loop_header
                %s257 = sphi 0, %s261
                %p258 = scmp.ge.s32.totalorder %s257, 1
                %s262 = sphi %s249, %s249
                %s263 = sphi %s243, %s243
              $region43: #{flexible_resnet_forward.21} parent=39 // loop_header_branch
                %260 = sbr.rel (%p258) target = $region47
              $region44: #{flexible_resnet_forward.21} parent=39 // loop_body
                %v264 = vld [vmem:[%s262] sm:$0xff]
                %265 = vst [vmem:[%s263] sm:$0xff] %v264
                %v266 = vld [vmem:[%s262 + $0x24] sm:$0xff]
                %267 = vst [vmem:[%s263 + $0xc] sm:$0xff] %v266
              $region45: #{flexible_resnet_forward.21} parent=39 // loop_footer
                %s261 = sadd.s32 1, %s257
              $region46: #{flexible_resnet_forward.21} parent=39 // loop_footer_branch
                %256 = sbr.rel target = $region42
              $region47: #{flexible_resnet_forward.21} parent=39 // loop_exit
                _
              loop: start=0, step=1, limit=1
              $region48: #{flexible_resnet_forward.21} parent=39 // loop_pre_header
                _
              $region49: #{flexible_resnet_forward.21} parent=39 // loop_header
                %s270 = sphi 0, %s274
                %p271 = scmp.ge.s32.totalorder %s270, 1
                %s275 = sphi %s254, %s254
                %s276 = sphi %s255, %s255
              $region50: #{flexible_resnet_forward.21} parent=39 // loop_header_branch
                %273 = sbr.rel (%p271) target = $region54
              $region51: #{flexible_resnet_forward.21} parent=39 // loop_body
                %v277 = vld [vmem:[%s275] sm:$0xf]
                %278 = vst [vmem:[%s276] sm:$0xf] %v277
                %v279 = vld [vmem:[%s275 + $0x24] sm:$0xf]
                %280 = vst [vmem:[%s276 + $0xc] sm:$0xf] %v279
              $region52: #{flexible_resnet_forward.21} parent=39 // loop_footer
                %s274 = sadd.s32 1, %s270
              $region53: #{flexible_resnet_forward.21} parent=39 // loop_footer_branch
                %269 = sbr.rel target = $region49
              $region54: #{flexible_resnet_forward.21} parent=39 // loop_exit
                _
            $region40: #{flexible_resnet_forward.21} parent=35 // pred_fallthru
              _
          $region36: #{flexible_resnet_forward.21} parent=31 // pred_fallthru
            _
          %281 = vnop
        $region32: #{flexible_resnet_forward.21} parent=27 // pred_fallthru
          _
        // Predicated region
        $region55: #{flexible_resnet_forward.21} parent=27 // pred_check
          %p282 = pneg %p80
        $region56: #{flexible_resnet_forward.21} parent=27 // pred_check_branch
          %284 = sbr.rel (%p282) target = $region58
        $region57: #{flexible_resnet_forward.21} parent=27 // pred_region
          %s285 = smul.u32 48, %s20
          %p286 = scmp.lt.s32.totalorder %s285, 143
          %s287 = scalar_select %p286, %s285, 143
          %p288 = scmp.lt.s32.totalorder %s19, 0
          %s289 = scalar_select %p288, %s19, 0
          %s290 = sadd.s32 %s289, %s287
          %s291 = smul.addr %s290, 4
          %s292 = scalar_lea.vmem %s1, %s291
          %s293 = smul.u32 48, %s20
        $region58: #{flexible_resnet_forward.21} parent=27 // pred_fallthru
          _
      $region28: #{flexible_resnet_forward.21} parent=5 // pred_fallthru
        _
      %p294 = scmp.le.s32.totalorder 1, %s11
      %p295 = scmp.lt.s32.totalorder %s11, 4
      %p296 = pnand %p294, %p295
      %p297 = pneg %p296
      // Predicated region
      $region59: #{flexible_resnet_forward.21} parent=5 // pred_check
        _
      $region60: #{flexible_resnet_forward.21} parent=5 // pred_check_branch
        %299 = sbr.rel (%p296) target = $region62
      $region61: #{flexible_resnet_forward.21} parent=5 // pred_region
        %s300 = ssub.s32 %s11, 1
        %s301 = sand.u32 %s45, 1
        %s302 = sand.u32 %s45, 1
        %s303 = smul.addr %s302, 24
        %s304 = scalar_lea.vmem [#allocation3], %s303
        // Predicated region
        $region63: #{flexible_resnet_forward.21} parent=61 // pred_check
          %p305 = pneg %p58
        $region64: #{flexible_resnet_forward.21} parent=61 // pred_check_branch
          %307 = sbr.rel (%p305) target = $region66
        $region65: #{flexible_resnet_forward.21} parent=61 // pred_region
          _
        $region66: #{flexible_resnet_forward.21} parent=61 // pred_fallthru
          _
        %s308 = sand.u32 %s45, 1
        %s309 = sand.u32 %s45, 1
        %s310 = smul.addr %s309, 24
        %s311 = scalar_lea.vmem [#allocation3], %s310
        %p312 = pneg %p58
        %p313 = pneg %p55
        %s314 = smul.u32 48, %s23
        %p315 = scmp.lt.s32.totalorder %s314, 143
        %s316 = scalar_select %p315, %s314, 143
        %p317 = scmp.lt.s32.totalorder %s22, 0
        %s318 = scalar_select %p317, %s22, 0
        %s319 = sadd.s32 %s318, %s316
        %s320 = smul.addr %s319, 4
        %s321 = scalar_lea.vmem %s1, %s320
        %p322 = pneg %p86
        %p323 = pneg %p83
        %p324 = scmp.lt.s32.totalorder %s22, 0
        %s325 = scalar_select %p324, %s22, 0
        %s326 = scalar_lea.vmem %s2, %s325
        %p327 = pneg %p112
        %p328 = pneg %p109
        %p329 = scmp.lt.s32.totalorder %s22, 0
        %s330 = scalar_select %p329, %s22, 0
        %s331 = scalar_lea.vmem %s3, %s330
        %p332 = pneg %p138
        %p333 = pneg %p135
        %s334 = smul.u32 2, %s21
        %p335 = scmp.lt.s32.totalorder %s334, 1
        %s336 = scalar_select %p335, %s334, 1
        %p337 = scmp.lt.s32.totalorder %s22, 0
        %s338 = scalar_select %p337, %s22, 0
        %s339 = sadd.s32 %s338, %s336
        %s340 = smul.addr %s339, 4
        %s341 = scalar_lea.vmem %s4, %s340
        %p342 = pneg %p166
        %p343 = pneg %p163
        %p344 = pneg %p194
        %p345 = pneg %p191
        %s346 = smul.u32 2, %s21
        %p347 = scmp.lt.s32.totalorder %s346, 1
        %s348 = scalar_select %p347, %s346, 1
        %p349 = scmp.lt.s32.totalorder %s22, 0
        %s350 = scalar_select %p349, %s22, 0
        %s351 = sadd.s32 %s350, %s348
        %s352 = smul.addr %s351, 4
        %s353 = scalar_lea.vmem %s5, %s352
        %s354 = smul.u32 2, %s21
        %s355 = smul.u32 3, %s23
        %s356 = smul.u32 48, %s23
        %p357 = scmp.lt.s32.totalorder %s356, 143
        %s358 = scalar_select %p357, %s356, 143
        %p359 = scmp.lt.s32.totalorder %s22, 0
        %s360 = scalar_select %p359, %s22, 0
        %s361 = sadd.s32 %s360, %s358
        %s362 = smul.addr %s361, 4
        %s363 = scalar_lea.vmem %s1, %s362
        %s364 = smul.u32 48, %s23
        %p365 = scmp.lt.s32.totalorder %s22, 0
        %s366 = scalar_select %p365, %s22, 0
        %s367 = scalar_lea.vmem %s2, %s366
        %p368 = scmp.lt.s32.totalorder %s22, 0
        %s369 = scalar_select %p368, %s22, 0
        %s370 = scalar_lea.vmem %s3, %s369
        %s371 = smul.u32 2, %s21
        %p372 = scmp.lt.s32.totalorder %s371, 1
        %s373 = scalar_select %p372, %s371, 1
        %p374 = scmp.lt.s32.totalorder %s22, 0
        %s375 = scalar_select %p374, %s22, 0
        %s376 = sadd.s32 %s375, %s373
        %s377 = smul.addr %s376, 4
        %s378 = scalar_lea.vmem %s4, %s377
        %s379 = smul.u32 2, %s21
        %s380 = smul.u32 2, %s21
        %p381 = scmp.lt.s32.totalorder %s380, 1
        %s382 = scalar_select %p381, %s380, 1
        %p383 = scmp.lt.s32.totalorder %s22, 0
        %s384 = scalar_select %p383, %s22, 0
        %s385 = sadd.s32 %s384, %s382
        %s386 = smul.addr %s385, 4
        %s387 = scalar_lea.vmem %s5, %s386
        %s388 = smul.u32 2, %s21
        %p390 = scmp.eq.s32.totalorder %s23, 0
        // Predicated region
        $region67: #{flexible_resnet_forward.21} parent=61 // pred_check
          %p391 = pneg %p390
        $region68: #{flexible_resnet_forward.21} parent=61 // pred_check_branch
          %393 = sbr.rel (%p391) target = $region70
        $region69: #{flexible_resnet_forward.21} parent=61 // pred_region
          %394 = vst [vmem:[#allocation2] sm:$0xff] 0.0
          %395 = vst [vmem:[#allocation2 + $0x8] sm:$0xff] 0.0
        $region70: #{flexible_resnet_forward.21} parent=61 // pred_fallthru
          _
        %v396 = vld [vmem:[#allocation2] sm:$0xff]
        %v397 = vld [vmem:[#allocation2 + $0x8] sm:$0xff]
        %v398 = vld [vmem:[%s304] sm:$0xff]
        %v399 = vld [vmem:[%s304 + $0x8] sm:$0xf]
        %v400 = vld [vmem:[%s304 + $0xc] sm:$0xff]
        %v401 = vld [vmem:[%s304 + $0x14] sm:$0xf]
        %v402 = vld [vmem:[%s363] sm:$0xf]
        %v403 = vld [vmem:[%s363 + $0x4] sm:$0xf]
        %v404 = vld [vmem:[%s363 + $0x8] sm:$0xf]
        %v405 = vld [vmem:[%s363 + $0xc] sm:$0xf]
        %v406 = vld [vmem:[%s363 + $0x10] sm:$0xf]
        %v407 = vld [vmem:[%s363 + $0x14] sm:$0xf]
        %v408 = vld [vmem:[%s363 + $0x18] sm:$0xf]
        %v409 = vld [vmem:[%s363 + $0x1c] sm:$0xf]
        %v410 = vld [vmem:[%s363 + $0x20] sm:$0xf]
        %v411 = vld [vmem:[%s363 + $0x24] sm:$0xf]
        %v412 = vld [vmem:[%s363 + $0x28] sm:$0xf]
        %v413 = vld [vmem:[%s363 + $0x2c] sm:$0xf]
        %v414 = vld [vmem:[%s363 + $0x30] sm:$0xf]
        %v415 = vld [vmem:[%s363 + $0x34] sm:$0xf]
        %v416 = vld [vmem:[%s363 + $0x38] sm:$0xf]
        %v417 = vld [vmem:[%s363 + $0x3c] sm:$0xf]
        %v418 = vld [vmem:[%s363 + $0x40] sm:$0xf]
        %v419 = vld [vmem:[%s363 + $0x44] sm:$0xf]
        %v420 = vld [vmem:[%s363 + $0x48] sm:$0xf]
        %v421 = vld [vmem:[%s363 + $0x4c] sm:$0xf]
        %v422 = vld [vmem:[%s363 + $0x50] sm:$0xf]
        %v423 = vld [vmem:[%s363 + $0x54] sm:$0xf]
        %v424 = vld [vmem:[%s363 + $0x58] sm:$0xf]
        %v425 = vld [vmem:[%s363 + $0x5c] sm:$0xf]
        %v426 = vld [vmem:[%s363 + $0x60] sm:$0xf]
        %v427 = vld [vmem:[%s363 + $0x64] sm:$0xf]
        %v428 = vld [vmem:[%s363 + $0x68] sm:$0xf]
        %v429 = vld [vmem:[%s363 + $0x6c] sm:$0xf]
        %v430 = vld [vmem:[%s363 + $0x70] sm:$0xf]
        %v431 = vld [vmem:[%s363 + $0x74] sm:$0xf]
        %v432 = vld [vmem:[%s363 + $0x78] sm:$0xf]
        %v433 = vld [vmem:[%s363 + $0x7c] sm:$0xf]
        %v434 = vld [vmem:[%s363 + $0x80] sm:$0xf]
        %v435 = vld [vmem:[%s363 + $0x84] sm:$0xf]
        %v436 = vld [vmem:[%s363 + $0x88] sm:$0xf]
        %v437 = vld [vmem:[%s363 + $0x8c] sm:$0xf]
        %v438 = vld [vmem:[%s363 + $0x90] sm:$0xf]
        %v439 = vld [vmem:[%s363 + $0x94] sm:$0xf]
        %v440 = vld [vmem:[%s363 + $0x98] sm:$0xf]
        %v441 = vld [vmem:[%s363 + $0x9c] sm:$0xf]
        %v442 = vld [vmem:[%s363 + $0xa0] sm:$0xf]
        %v443 = vld [vmem:[%s363 + $0xa4] sm:$0xf]
        %v444 = vld [vmem:[%s363 + $0xa8] sm:$0xf]
        %v445 = vld [vmem:[%s363 + $0xac] sm:$0xf]
        %v446 = vld [vmem:[%s363 + $0xb0] sm:$0xf]
        %v447 = vld [vmem:[%s363 + $0xb4] sm:$0xf]
        %v448 = vld [vmem:[%s363 + $0xb8] sm:$0xf]
        %v449 = vld [vmem:[%s363 + $0xbc] sm:$0xf]
        %v454 = vunpack.c.l.b16 %v398
        %v455 = vunpack.c.h.b16 %v398
        %v456 = vunpack.c.l.b16 %v399
        %v457 = vunpack.c.l.b16 %v400
        %v458 = vunpack.c.h.b16 %v400
        %v459 = vunpack.c.l.b16 %v401
        %v460 = vpack.c.b16 %v457, %v454
        %v461 = vpack.c.b16 %v458, %v455
        %v462 = vpack.c.b16 %v459, %v456
        %v514 = vunpack.c.l.b16 %v402
        %v515 = vunpack.c.l.b16 %v403
        %v516 = vunpack.c.l.b16 %v404
        %v517 = vunpack.c.l.b16 %v405
        %v518 = vunpack.c.l.b16 %v406
        %v519 = vunpack.c.l.b16 %v407
        %v520 = vunpack.c.l.b16 %v408
        %v521 = vunpack.c.l.b16 %v409
        %v522 = vunpack.c.l.b16 %v410
        %v523 = vunpack.c.l.b16 %v411
        %v524 = vunpack.c.l.b16 %v412
        %v525 = vunpack.c.l.b16 %v413
        %v526 = vunpack.c.l.b16 %v414
        %v527 = vunpack.c.l.b16 %v415
        %v528 = vunpack.c.l.b16 %v416
        %v529 = vunpack.c.l.b16 %v417
        %v530 = vunpack.c.l.b16 %v418
        %v531 = vunpack.c.l.b16 %v419
        %v532 = vunpack.c.l.b16 %v420
        %v533 = vunpack.c.l.b16 %v421
        %v534 = vunpack.c.l.b16 %v422
        %v535 = vunpack.c.l.b16 %v423
        %v536 = vunpack.c.l.b16 %v424
        %v537 = vunpack.c.l.b16 %v425
        %v538 = vunpack.c.l.b16 %v426
        %v539 = vunpack.c.l.b16 %v427
        %v540 = vunpack.c.l.b16 %v428
        %v541 = vunpack.c.l.b16 %v429
        %v542 = vunpack.c.l.b16 %v430
        %v543 = vunpack.c.l.b16 %v431
        %v544 = vunpack.c.l.b16 %v432
        %v545 = vunpack.c.l.b16 %v433
        %v546 = vunpack.c.l.b16 %v434
        %v547 = vunpack.c.l.b16 %v435
        %v548 = vunpack.c.l.b16 %v436
        %v549 = vunpack.c.l.b16 %v437
        %v550 = vunpack.c.l.b16 %v438
        %v551 = vunpack.c.l.b16 %v439
        %v552 = vunpack.c.l.b16 %v440
        %v553 = vunpack.c.l.b16 %v441
        %v554 = vunpack.c.l.b16 %v442
        %v555 = vunpack.c.l.b16 %v443
        %v556 = vunpack.c.l.b16 %v444
        %v557 = vunpack.c.l.b16 %v445
        %v558 = vunpack.c.l.b16 %v446
        %v559 = vunpack.c.l.b16 %v447
        %v560 = vunpack.c.l.b16 %v448
        %v561 = vunpack.c.l.b16 %v449
        %v562 = vpack.c.b16 %v515, %v514
        %v563 = vpack.c.b16 %v517, %v516
        %v564 = vpack.c.b16 %v519, %v518
        %v565 = vpack.c.b16 %v521, %v520
        %v566 = vpack.c.b16 %v523, %v522
        %v567 = vpack.c.b16 %v525, %v524
        %v568 = vpack.c.b16 %v527, %v526
        %v569 = vpack.c.b16 %v529, %v528
        %v570 = vpack.c.b16 %v531, %v530
        %v571 = vpack.c.b16 %v533, %v532
        %v572 = vpack.c.b16 %v535, %v534
        %v573 = vpack.c.b16 %v537, %v536
        %v574 = vpack.c.b16 %v539, %v538
        %v575 = vpack.c.b16 %v541, %v540
        %v576 = vpack.c.b16 %v543, %v542
        %v577 = vpack.c.b16 %v545, %v544
        %v578 = vpack.c.b16 %v547, %v546
        %v579 = vpack.c.b16 %v549, %v548
        %v580 = vpack.c.b16 %v551, %v550
        %v581 = vpack.c.b16 %v553, %v552
        %v582 = vpack.c.b16 %v555, %v554
        %v583 = vpack.c.b16 %v557, %v556
        %v584 = vpack.c.b16 %v559, %v558
        %v585 = vpack.c.b16 %v561, %v560
        %610 = vmatprep.subr.bf16.mxu0 0
        %611 = vmatpush1.bf16.msra.mxu0 %v562
        %612 = vmatprep.subr.bf16.mxu0 0
        %613 = vmatpush1.bf16.msra.mxu0 %v563
        %614 = vmatprep.subr.bf16.mxu0 0
        %615 = vmatpush1.bf16.msra.mxu0 %v564
        %616 = vmatprep.subr.bf16.mxu0 0
        %617 = vmatpush1.bf16.msra.mxu0 %v565
        %618 = vmatprep.subr.bf16.mxu0 0
        %619 = vmatpush1.bf16.msra.mxu0 %v566
        %620 = vmatprep.subr.bf16.mxu0 0
        %621 = vmatpush1.bf16.msra.mxu0 %v567
        %622 = vmatprep.subr.bf16.mxu0 0
        %623 = vmatpush1.bf16.msra.mxu0 %v568
        %624 = vmatprep.subr.bf16.mxu0 0
        %625 = vmatpush1.bf16.msra.mxu0 %v569
        %626 = vmatprep.subr.bf16.mxu0 0
        %627 = vmatpush1.bf16.msra.mxu0 %v570
        %628 = vmatprep.subr.bf16.mxu0 0
        %629 = vmatpush1.bf16.msra.mxu0 %v571
        %630 = vmatprep.subr.bf16.mxu0 0
        %631 = vmatpush1.bf16.msra.mxu0 %v572
        %632 = vmatprep.subr.bf16.mxu0 0
        %633 = vmatpush1.bf16.msra.mxu0 %v573
        %634 = vmatprep.subr.bf16.mxu0 0
        %635 = vmatpush1.bf16.msra.mxu0 %v574
        %636 = vmatprep.subr.bf16.mxu0 0
        %637 = vmatpush1.bf16.msra.mxu0 %v575
        %638 = vmatprep.subr.bf16.mxu0 0
        %639 = vmatpush1.bf16.msra.mxu0 %v576
        %640 = vmatprep.subr.bf16.mxu0 0
        %641 = vmatpush1.bf16.msra.mxu0 %v577
        %642 = vmatprep.mubr.bf16.mxu0 %v461
        %643 = vmatmul.mubr.bf16.gmra.mrb[0].mxu0 %v460
        %v644 = vpop.f32.mrb[0].mxu0
        %v645 = vadd.f32 0.0, %v644
        %v646 = vpop.f32.mrb[0].mxu0
        %v647 = vpop.f32.mrb[0].mxu0
        %v648 = vadd.f32 0.0, %v647
        %v649 = vpop.f32.mrb[0].mxu0
        %650 = vdwg.mxu0
        %651 = vmatprep.subr.bf16.mxu0 0
        %652 = vmatpush1.bf16.msra.mxu0 %v578
        %653 = vmatprep.subr.bf16.mxu0 0
        %654 = vmatpush1.bf16.msra.mxu0 %v579
        %655 = vmatprep.subr.bf16.mxu0 0
        %656 = vmatpush1.bf16.msra.mxu0 %v580
        %657 = vmatprep.subr.bf16.mxu0 0
        %658 = vmatpush1.bf16.msra.mxu0 %v581
        %659 = vmatprep.subr.bf16.mxu0 0
        %660 = vmatpush1.bf16.msra.mxu0 %v582
        %661 = vmatprep.subr.bf16.mxu0 0
        %662 = vmatpush1.bf16.msra.mxu0 %v583
        %663 = vmatprep.subr.bf16.mxu0 0
        %664 = vmatpush1.bf16.msra.mxu0 %v584
        %665 = vmatprep.subr.bf16.mxu0 0
        %666 = vmatpush1.bf16.msra.mxu0 %v585
        %667 = vmatprep.subr.bf16.mxu0 0
        %668 = vmatpush1.bf16.msra.mxu0 0
        %669 = vmatprep.subr.bf16.mxu0 0
        %670 = vmatpush1.bf16.msra.mxu0 0
        %671 = vmatprep.subr.bf16.mxu0 0
        %672 = vmatpush1.bf16.msra.mxu0 0
        %673 = vmatprep.subr.bf16.mxu0 0
        %674 = vmatpush1.bf16.msra.mxu0 0
        %675 = vmatprep.subr.bf16.mxu0 0
        %676 = vmatpush1.bf16.msra.mxu0 0
        %677 = vmatprep.subr.bf16.mxu0 0
        %678 = vmatpush1.bf16.msra.mxu0 0
        %679 = vmatprep.subr.bf16.mxu0 0
        %680 = vmatpush1.bf16.msra.mxu0 0
        %681 = vmatprep.subr.bf16.mxu0 0
        %682 = vmatpush1.bf16.msra.mxu0 0
        %683 = vmatprep.mubr.bf16.mxu0 0
        %684 = vmatmul.mubr.bf16.gmra.mrb[0].mxu0 %v462
        %v685 = vpop.f32.mrb[0].mxu0
        %v686 = vadd.f32 %v645, %v685
        %v687 = vpop.f32.mrb[0].mxu0
        %v688 = vpop.f32.mrb[0].mxu0
        %v689 = vadd.f32 %v648, %v688
        %v690 = vpop.f32.mrb[0].mxu0
        %691 = vdwg.mxu0
        %v692 = vadd.f32 %v396, %v686
        %v693 = vadd.f32 %v397, %v689
        %694 = vst [vmem:[#allocation2] sm:$0xff] %v692
        %695 = vst [vmem:[#allocation2 + $0x8] sm:$0xff] %v693
        %p696 = scmp.eq.s32.totalorder %s23, 2
        // Predicated region
        $region71: #{flexible_resnet_forward.21} parent=61 // pred_check
          %p697 = pneg %p696
        $region72: #{flexible_resnet_forward.21} parent=61 // pred_check_branch
          %699 = sbr.rel (%p697) target = $region74
        $region73: #{flexible_resnet_forward.21} parent=61 // pred_region
          %v700 = vld [vmem:[#allocation2] sm:$0xff]
          %v701 = vld [vmem:[#allocation2 + $0x8] sm:$0xff]
          %v702 = vld [vmem:[%s367] sm:$0x1]
          %v704 = vlaneseq
          %v705 = vshrl.u32 %v704, 7
          %v706 = vsub.s32 0, %v705
          %v707 = vrot.slane %v702, %v706
          %v709 = vmul.f32 %v700, %v707
          %v710 = vmul.f32 %v701, %v707
          %v711 = vld [vmem:[%s370] sm:$0x1]
          %v713 = vlaneseq
          %v714 = vshrl.u32 %v713, 7
          %v715 = vsub.s32 0, %v714
          %v716 = vrot.slane %v711, %v715
          %v718 = vadd.f32 %v709, %v716
          %v719 = vadd.f32 %v710, %v716
          %v720 = vld [vmem:[%s378] sm:$0xf]
          %v721 = vld [vmem:[%s378 + $0x4] sm:$0xf]
          %v722 = vunpack.c.l.bf16 %v720
          %v723 = vunpack.c.l.bf16 %v721
          %v724 = vadd.f32 %v718, %v722
          %v725 = vadd.f32 %v719, %v723
          %v726 = vmax.f32 %v724, 0.0
          %v727 = vmax.f32 %v725, 0.0
          %v728 = vpack.c.bf16 %v727, %v726
          %v730 = vunpack.c.l.b16 %v728
          %v731 = vunpack.c.h.b16 %v728
          %v732 = vpack.c.b16 %v730, %v730
          %v733 = vpack.c.b16 %v731, %v731
          %736 = vst [vmem:[%s387] sm:$0xf] %v732
          %737 = vst [vmem:[%s387 + $0x4] sm:$0xf] %v733
        $region74: #{flexible_resnet_forward.21} parent=61 // pred_fallthru
          _
        %s738 = smul.u32 2, %s21
        %p739 = scmp.lt.s32.totalorder %s738, 1
        %s740 = scalar_select %p739, %s738, 1
        %p741 = scmp.lt.s32.totalorder %s22, 0
        %s742 = scalar_select %p741, %s22, 0
        %s743 = sadd.s32 %s742, %s740
        %s744 = smul.addr %s743, 4
        %s745 = scalar_lea.vmem %s5, %s744
        // Predicated region
        $region75: #{flexible_resnet_forward.21} parent=61 // pred_check
          %p746 = pneg %p191
        $region76: #{flexible_resnet_forward.21} parent=61 // pred_check_branch
          %748 = sbr.rel (%p746) target = $region78
        $region77: #{flexible_resnet_forward.21} parent=61 // pred_region
          %s749 = smul.u32 2, %s21
        $region78: #{flexible_resnet_forward.21} parent=61 // pred_fallthru
          _
        // Predicated region
        $region79: #{flexible_resnet_forward.21} parent=61 // pred_check
          %p750 = pneg %p191
        $region80: #{flexible_resnet_forward.21} parent=61 // pred_check_branch
          %752 = sbr.rel (%p750) target = $region82
        $region81: #{flexible_resnet_forward.21} parent=61 // pred_region
          %s753 = smul.u32 2, %s21
          %p754 = scmp.lt.s32.totalorder %s753, 1
          %s755 = scalar_select %p754, %s753, 1
          %p756 = scmp.lt.s32.totalorder %s22, 0
          %s757 = scalar_select %p756, %s22, 0
          %s758 = sadd.s32 %s757, %s755
          %s759 = smul.addr %s758, 4
          %s760 = scalar_lea.vmem %s5, %s759
        $region82: #{flexible_resnet_forward.21} parent=61 // pred_fallthru
          _
      $region62: #{flexible_resnet_forward.21} parent=5 // pred_fallthru
        _
      %p761 = scmp.le.s32.totalorder 2, %s11
      // Predicated region
      $region83: #{flexible_resnet_forward.21} parent=5 // pred_check
        %p762 = pneg %p761
      $region84: #{flexible_resnet_forward.21} parent=5 // pred_check_branch
        %764 = sbr.rel (%p762) target = $region86
      $region85: #{flexible_resnet_forward.21} parent=5 // pred_region
        %s765 = ssub.s32 %s11, 2
      $region86: #{flexible_resnet_forward.21} parent=5 // pred_fallthru
        _
    $region6: #{flexible_resnet_forward.21} parent=1 // loop_footer
      %s15 = sadd.s32 1, %s11
    $region7: #{flexible_resnet_forward.21} parent=1 // loop_footer_branch
      %10 = sbr.rel target = $region3
    $region8: #{flexible_resnet_forward.21} parent=1 // loop_exit
      _

// kernel: flexible_resnet_forward.20
$region0: #{flexible_resnet_forward.20}
  #allocation0 [shape = 'u32[]', space=smem, size = 0x4, offset = 0x4, fixed_abs, tag = 'smem constant byte address 0x4 - core index']
  #allocation1 [shape = 'u32[144,128]{1,0:T(1,128)}', space=vmem, size = 0x12000, scoped, tag = 'internal scratch']
  #allocation2 [shape = 'f32[16,128]{1,0:T(8,128)}', space=vmem, size = 0x2000, scoped, tag = 'scratch operand']
  %s0 = inlined_call_operand.vmem [shape: bf16[16,128], index: 0, kind: input, shape index: {}]
  %s1 = inlined_call_operand.vmem [shape: bf16[128,128], index: 1, kind: input, shape index: {}]
  %s2 = inlined_call_operand.vmem [shape: f32[1,128], index: 2, kind: input, shape index: {}]
  %s3 = inlined_call_operand.vmem [shape: f32[1,128], index: 3, kind: input, shape index: {}]
  %s4 = inlined_call_operand.vmem [shape: bf16[16,128], index: 4, kind: output, shape index: {}]
  %s5 = sld [smem:[#allocation0]]
  $region34: #{flexible_resnet_forward.20} parent=0
    _
  %s7 = ssub.s32 1, %s5
  %s8 = scalar_select 0, %s7, %s5
  // Predicated region
  $region2: #{flexible_resnet_forward.20} parent=0 // pred_check
    _
  $region3: #{flexible_resnet_forward.20} parent=0 // pred_check_branch
    %10 = sbr.rel (0) target = $region5
  $region4: #{flexible_resnet_forward.20} parent=0 // pred_region
    _
  $region5: #{flexible_resnet_forward.20} parent=0 // pred_fallthru
    _
  // Predicated region
  $region6: #{flexible_resnet_forward.20} parent=0 // pred_check
    _
  $region7: #{flexible_resnet_forward.20} parent=0 // pred_check_branch
    %12 = sbr.rel (0) target = $region9
  $region8: #{flexible_resnet_forward.20} parent=0 // pred_region
    _
  $region9: #{flexible_resnet_forward.20} parent=0 // pred_fallthru
    _
  // Predicated region
  $region10: #{flexible_resnet_forward.20} parent=0 // pred_check
    _
  $region11: #{flexible_resnet_forward.20} parent=0 // pred_check_branch
    %14 = sbr.rel (0) target = $region13
  $region12: #{flexible_resnet_forward.20} parent=0 // pred_region
    _
  $region13: #{flexible_resnet_forward.20} parent=0 // pred_fallthru
    _
  // Predicated region
  $region14: #{flexible_resnet_forward.20} parent=0 // pred_check
    _
  $region15: #{flexible_resnet_forward.20} parent=0 // pred_check_branch
    %16 = sbr.rel (0) target = $region17
  $region16: #{flexible_resnet_forward.20} parent=0 // pred_region
    _
  $region17: #{flexible_resnet_forward.20} parent=0 // pred_fallthru
    _
  %p18 = scmp.eq.s32.totalorder 0, 0
  // Predicated region
  $region18: #{flexible_resnet_forward.20} parent=0 // pred_check
    %p19 = pneg %p18
  $region19: #{flexible_resnet_forward.20} parent=0 // pred_check_branch
    %21 = sbr.rel (%p19) target = $region21
  $region20: #{flexible_resnet_forward.20} parent=0 // pred_region
    %22 = vst [vmem:[#allocation2] sm:$0xff] 0.0
    %23 = vst [vmem:[#allocation2 + $0x8] sm:$0xff] 0.0
  $region21: #{flexible_resnet_forward.20} parent=0 // pred_fallthru
    _
  %v24 = vld [vmem:[#allocation2] sm:$0xff]
  %v25 = vld [vmem:[#allocation2 + $0x8] sm:$0xff]
  %v26 = vld [vmem:[%s0] sm:$0xf]
  %v27 = vld [vmem:[%s0 + $0x4] sm:$0xf]
  %v28 = vld [vmem:[%s1] sm:$0xf]
  %v29 = vld [vmem:[%s1 + $0x4] sm:$0xf]
  %v30 = vld [vmem:[%s1 + $0x8] sm:$0xf]
  %v31 = vld [vmem:[%s1 + $0xc] sm:$0xf]
  %v32 = vld [vmem:[%s1 + $0x10] sm:$0xf]
  %v33 = vld [vmem:[%s1 + $0x14] sm:$0xf]
  %v34 = vld [vmem:[%s1 + $0x18] sm:$0xf]
  %v35 = vld [vmem:[%s1 + $0x1c] sm:$0xf]
  %v36 = vld [vmem:[%s1 + $0x20] sm:$0xf]
  %v37 = vld [vmem:[%s1 + $0x24] sm:$0xf]
  %v38 = vld [vmem:[%s1 + $0x28] sm:$0xf]
  %v39 = vld [vmem:[%s1 + $0x2c] sm:$0xf]
  %v40 = vld [vmem:[%s1 + $0x30] sm:$0xf]
  %v41 = vld [vmem:[%s1 + $0x34] sm:$0xf]
  %v42 = vld [vmem:[%s1 + $0x38] sm:$0xf]
  %v43 = vld [vmem:[%s1 + $0x3c] sm:$0xf]
  %v46 = vunpack.c.l.b16 %v26
  %v47 = vunpack.c.l.b16 %v27
  %v48 = vpack.c.b16 %v47, %v46
  %v66 = vunpack.c.l.b16 %v28
  %v67 = vunpack.c.l.b16 %v29
  %v68 = vunpack.c.l.b16 %v30
  %v69 = vunpack.c.l.b16 %v31
  %v70 = vunpack.c.l.b16 %v32
  %v71 = vunpack.c.l.b16 %v33
  %v72 = vunpack.c.l.b16 %v34
  %v73 = vunpack.c.l.b16 %v35
  %v74 = vunpack.c.l.b16 %v36
  %v75 = vunpack.c.l.b16 %v37
  %v76 = vunpack.c.l.b16 %v38
  %v77 = vunpack.c.l.b16 %v39
  %v78 = vunpack.c.l.b16 %v40
  %v79 = vunpack.c.l.b16 %v41
  %v80 = vunpack.c.l.b16 %v42
  %v81 = vunpack.c.l.b16 %v43
  %v82 = vpack.c.b16 %v67, %v66
  %v83 = vpack.c.b16 %v69, %v68
  %v84 = vpack.c.b16 %v71, %v70
  %v85 = vpack.c.b16 %v73, %v72
  %v86 = vpack.c.b16 %v75, %v74
  %v87 = vpack.c.b16 %v77, %v76
  %v88 = vpack.c.b16 %v79, %v78
  %v89 = vpack.c.b16 %v81, %v80
  %98 = vmatprep.subr.bf16.mxu0 0
  %99 = vmatpush1.bf16.msra.mxu0 %v82
  %100 = vmatprep.subr.bf16.mxu0 0
  %101 = vmatpush1.bf16.msra.mxu0 %v83
  %102 = vmatprep.subr.bf16.mxu0 0
  %103 = vmatpush1.bf16.msra.mxu0 %v84
  %104 = vmatprep.subr.bf16.mxu0 0
  %105 = vmatpush1.bf16.msra.mxu0 %v85
  %106 = vmatprep.subr.bf16.mxu0 0
  %107 = vmatpush1.bf16.msra.mxu0 %v86
  %108 = vmatprep.subr.bf16.mxu0 0
  %109 = vmatpush1.bf16.msra.mxu0 %v87
  %110 = vmatprep.subr.bf16.mxu0 0
  %111 = vmatpush1.bf16.msra.mxu0 %v88
  %112 = vmatprep.subr.bf16.mxu0 0
  %113 = vmatpush1.bf16.msra.mxu0 %v89
  %114 = vmatprep.subr.bf16.mxu0 0
  %115 = vmatpush1.bf16.msra.mxu0 0
  %116 = vmatprep.subr.bf16.mxu0 0
  %117 = vmatpush1.bf16.msra.mxu0 0
  %118 = vmatprep.subr.bf16.mxu0 0
  %119 = vmatpush1.bf16.msra.mxu0 0
  %120 = vmatprep.subr.bf16.mxu0 0
  %121 = vmatpush1.bf16.msra.mxu0 0
  %122 = vmatprep.subr.bf16.mxu0 0
  %123 = vmatpush1.bf16.msra.mxu0 0
  %124 = vmatprep.subr.bf16.mxu0 0
  %125 = vmatpush1.bf16.msra.mxu0 0
  %126 = vmatprep.subr.bf16.mxu0 0
  %127 = vmatpush1.bf16.msra.mxu0 0
  %128 = vmatprep.subr.bf16.mxu0 0
  %129 = vmatpush1.bf16.msra.mxu0 0
  %130 = vmatprep.mubr.bf16.mxu0 0
  %131 = vmatmul.mubr.bf16.gmra.mrb[0].mxu0 %v48
  %v132 = vpop.f32.mrb[0].mxu0
  %v133 = vadd.f32 0.0, %v132
  %v134 = vpop.f32.mrb[0].mxu0
  %v135 = vpop.f32.mrb[0].mxu0
  %v136 = vadd.f32 0.0, %v135
  %v137 = vpop.f32.mrb[0].mxu0
  %138 = vdwg.mxu0
  %v139 = vadd.f32 %v24, %v133
  %v140 = vadd.f32 %v25, %v136
  %141 = vst [vmem:[#allocation2] sm:$0xff] %v139
  %142 = vst [vmem:[#allocation2 + $0x8] sm:$0xff] %v140
  // Predicated region
  $region22: #{flexible_resnet_forward.20} parent=0 // pred_check
    %p143 = pneg %p18
  $region23: #{flexible_resnet_forward.20} parent=0 // pred_check_branch
    %145 = sbr.rel (%p143) target = $region25
  $region24: #{flexible_resnet_forward.20} parent=0 // pred_region
    %v146 = vld [vmem:[#allocation2] sm:$0xff]
    %v147 = vld [vmem:[#allocation2 + $0x8] sm:$0xff]
    %v148 = vld [vmem:[%s2] sm:$0x1]
    %v150 = vlaneseq
    %v151 = vshrl.u32 %v150, 7
    %v152 = vsub.s32 0, %v151
    %v153 = vrot.slane %v148, %v152
    %v155 = vmul.f32 %v146, %v153
    %v156 = vmul.f32 %v147, %v153
    %v157 = vld [vmem:[%s3] sm:$0x1]
    %v159 = vlaneseq
    %v160 = vshrl.u32 %v159, 7
    %v161 = vsub.s32 0, %v160
    %v162 = vrot.slane %v157, %v161
    %v164 = vadd.f32 %v155, %v162
    %v165 = vadd.f32 %v156, %v162
    %v166 = vpack.c.bf16 %v165, %v164
    %v168 = vunpack.c.l.b16 %v166
    %v169 = vunpack.c.h.b16 %v166
    %v170 = vpack.c.b16 %v168, %v168
    %v171 = vpack.c.b16 %v169, %v169
    %174 = vst [vmem:[%s4] sm:$0xf] %v170
    %175 = vst [vmem:[%s4 + $0x4] sm:$0xf] %v171
  $region25: #{flexible_resnet_forward.20} parent=0 // pred_fallthru
    _
  // Predicated region
  $region26: #{flexible_resnet_forward.20} parent=0 // pred_check
    _
  $region27: #{flexible_resnet_forward.20} parent=0 // pred_check_branch
    %177 = sbr.rel (0) target = $region29
  $region28: #{flexible_resnet_forward.20} parent=0 // pred_region
    _
  $region29: #{flexible_resnet_forward.20} parent=0 // pred_fallthru
    _
  // Predicated region
  $region30: #{flexible_resnet_forward.20} parent=0 // pred_check
    _
  $region31: #{flexible_resnet_forward.20} parent=0 // pred_check_branch
    %179 = sbr.rel (0) target = $region33
  $region32: #{flexible_resnet_forward.20} parent=0 // pred_region
    _
  $region33: #{flexible_resnet_forward.20} parent=0 // pred_fallthru
    _

// kernel: flexible_resnet_forward.25
$region0: #{flexible_resnet_forward.25}
  #allocation0 [shape = 'u32[]', space=smem, size = 0x4, offset = 0x4, fixed_abs, tag = 'smem constant byte address 0x4 - core index']
  #allocation1 [shape = 'u32[144,128]{1,0:T(1,128)}', space=vmem, size = 0x12000, scoped, tag = 'internal scratch']
  %s0 = inlined_call_operand.vmem [shape: bf16[2,1,128], index: 0, kind: input, shape index: {}]
  %s1 = inlined_call_operand.vmem [shape: f32[128,128], index: 1, kind: input, shape index: {}]
  %s2 = inlined_call_operand.vmem [shape: f32[1,128], index: 2, kind: input, shape index: {}]
  %s3 = inlined_call_operand.hbm [shape: f32[2,128], index: 3, kind: output, shape index: {}]
  %s4 = sld [smem:[#allocation0]]
  $region22: #{flexible_resnet_forward.25} parent=0
    _
  %s6 = ssub.s32 1, %s4
  %s7 = scalar_select 0, %s6, %s4
  $region1: #{flexible_resnet_forward.25} parent=0
    #allocation2 [shape = 'u8[1024]{0}', space=vmem, size = 0x400, scoped, tag = 'output window, operand 0, single buffered']
    #allocation3 [shape = 's32[1]{0}', space=sflag, size = 0x4, scoped, tag = 'scoped memory for flexible_resnet_forward.25']
    %8 = vsyncpa [#allocation3], 0
    // Predicated region
    $region2: #{flexible_resnet_forward.25} parent=1 // pred_check
      _
    $region3: #{flexible_resnet_forward.25} parent=1 // pred_check_branch
      %10 = sbr.rel (0) target = $region5
    $region4: #{flexible_resnet_forward.25} parent=1 // pred_region
      _
    $region5: #{flexible_resnet_forward.25} parent=1 // pred_fallthru
      _
    // Predicated region
    $region6: #{flexible_resnet_forward.25} parent=1 // pred_check
      _
    $region7: #{flexible_resnet_forward.25} parent=1 // pred_check_branch
      %12 = sbr.rel (0) target = $region9
    $region8: #{flexible_resnet_forward.25} parent=1 // pred_region
      _
    $region9: #{flexible_resnet_forward.25} parent=1 // pred_fallthru
      _
    // Predicated region
    $region10: #{flexible_resnet_forward.25} parent=1 // pred_check
      _
    $region11: #{flexible_resnet_forward.25} parent=1 // pred_check_branch
      %14 = sbr.rel (0) target = $region13
    $region12: #{flexible_resnet_forward.25} parent=1 // pred_region
      _
    $region13: #{flexible_resnet_forward.25} parent=1 // pred_fallthru
      _
    %v15 = vld [vmem:[%s0] sm:$0x1]
    %v16 = vld [vmem:[%s0 + $0x1] sm:$0x1]
    %v17 = vunpack.c.l.bf16 %v15
    %v18 = vunpack.c.l.bf16 %v16
    %v19 = vadd.f32 %v17, 0.0
    %v20 = vadd.f32 %v18, 0.0
    %v21 = vld [vmem:[%s1] sm:$0xff]
    %v22 = vld [vmem:[%s1 + $0x8] sm:$0xff]
    %v23 = vld [vmem:[%s1 + $0x10] sm:$0xff]
    %v24 = vld [vmem:[%s1 + $0x18] sm:$0xff]
    %v25 = vld [vmem:[%s1 + $0x20] sm:$0xff]
    %v26 = vld [vmem:[%s1 + $0x28] sm:$0xff]
    %v27 = vld [vmem:[%s1 + $0x30] sm:$0xff]
    %v28 = vld [vmem:[%s1 + $0x38] sm:$0xff]
    %v29 = vld [vmem:[%s1 + $0x40] sm:$0xff]
    %v30 = vld [vmem:[%s1 + $0x48] sm:$0xff]
    %v31 = vld [vmem:[%s1 + $0x50] sm:$0xff]
    %v32 = vld [vmem:[%s1 + $0x58] sm:$0xff]
    %v33 = vld [vmem:[%s1 + $0x60] sm:$0xff]
    %v34 = vld [vmem:[%s1 + $0x68] sm:$0xff]
    %v35 = vld [vmem:[%s1 + $0x70] sm:$0xff]
    %v36 = vld [vmem:[%s1 + $0x78] sm:$0xff]
    %v37 = vld [vmem:[%s2] sm:$0x1]
    %v39 = vlaneseq
    %v40 = vshrl.u32 %v39, 7
    %v41 = vsub.s32 0, %v40
    %v42 = vrot.slane %v37, %v41
    %v46 = vlaneseq
    %v47 = vshrl.u32 %v46, 7
    %v48 = vsub.s32 0, %v47
    %v49 = vrot.slane %v19, %v48
    %v50 = vlaneseq
    %v51 = vshrl.u32 %v50, 7
    %v52 = vsub.s32 0, %v51
    %v53 = vrot.slane %v20, %v52
    %vm54 = vcmask 1041409
    %v55 = vsel %vm54, %v53, %v49
    %57 = vmatprep.subr.mxu0 0.0
    %58 = vmatpush1.msra.mxu0 %v21
    %59 = vmatprep.subr.mxu0 0.0
    %60 = vmatpush1.msra.mxu0 %v22
    %61 = vmatprep.subr.mxu0 0.0
    %62 = vmatpush1.msra.mxu0 %v23
    %63 = vmatprep.subr.mxu0 0.0
    %64 = vmatpush1.msra.mxu0 %v24
    %65 = vmatprep.subr.mxu0 0.0
    %66 = vmatpush1.msra.mxu0 %v25
    %67 = vmatprep.subr.mxu0 0.0
    %68 = vmatpush1.msra.mxu0 %v26
    %69 = vmatprep.subr.mxu0 0.0
    %70 = vmatpush1.msra.mxu0 %v27
    %71 = vmatprep.subr.mxu0 0.0
    %72 = vmatpush1.msra.mxu0 %v28
    %73 = vmatprep.subr.mxu0 0.0
    %74 = vmatpush1.msra.mxu0 %v29
    %75 = vmatprep.subr.mxu0 0.0
    %76 = vmatpush1.msra.mxu0 %v30
    %77 = vmatprep.subr.mxu0 0.0
    %78 = vmatpush1.msra.mxu0 %v31
    %79 = vmatprep.subr.mxu0 0.0
    %80 = vmatpush1.msra.mxu0 %v32
    %81 = vmatprep.subr.mxu0 0.0
    %82 = vmatpush1.msra.mxu0 %v33
    %83 = vmatprep.subr.mxu0 0.0
    %84 = vmatpush1.msra.mxu0 %v34
    %85 = vmatprep.subr.mxu0 0.0
    %86 = vmatpush1.msra.mxu0 %v35
    %87 = vmatprep.subr.mxu0 0.0
    %88 = vmatpush1.msra.mxu0 %v36
    %89 = vmatprep.subr.mxu0 0.0
    %90 = vmatpush1.msra.mxu0 0.0
    %91 = vmatprep.subr.mxu0 0.0
    %92 = vmatpush1.msra.mxu0 0.0
    %93 = vmatprep.subr.mxu0 0.0
    %94 = vmatpush1.msra.mxu0 0.0
    %95 = vmatprep.subr.mxu0 0.0
    %96 = vmatpush1.msra.mxu0 0.0
    %97 = vmatprep.subr.mxu0 0.0
    %98 = vmatpush1.msra.mxu0 0.0
    %99 = vmatprep.subr.mxu0 0.0
    %100 = vmatpush1.msra.mxu0 0.0
    %101 = vmatprep.subr.mxu0 0.0
    %102 = vmatpush1.msra.mxu0 0.0
    %103 = vmatprep.subr.mxu0 0.0
    %104 = vmatpush1.msra.mxu0 0.0
    %105 = vmatprep.subr.mxu0 0.0
    %106 = vmatpush1.msra.mxu0 0.0
    %107 = vmatprep.subr.mxu0 0.0
    %108 = vmatpush1.msra.mxu0 0.0
    %109 = vmatprep.subr.mxu0 0.0
    %110 = vmatpush1.msra.mxu0 0.0
    %111 = vmatprep.subr.mxu0 0.0
    %112 = vmatpush1.msra.mxu0 0.0
    %113 = vmatprep.subr.mxu0 0.0
    %114 = vmatpush1.msra.mxu0 0.0
    %115 = vmatprep.subr.mxu0 0.0
    %116 = vmatpush1.msra.mxu0 0.0
    %117 = vmatprep.subr.mxu0 0.0
    %118 = vmatpush1.msra.mxu0 0.0
    %119 = vmatprep.subr.mxu0 0.0
    %120 = vmatpush1.msra.mxu0 0.0
    %121 = vmatprep.mubr.f32.mxu0 0.0
    %122 = vmatmul.mubr.f32.gmra.mrb[0].mxu0 %v55
    %v123 = vpop.f32.mrb[0].mxu0
    %v124 = vadd.f32 %v42, %v123
    %v125 = vpop.f32.mrb[0].mxu0
    %126 = vdwg.mxu0
    %127 = vst [vmem:[#allocation2] sm:$0x3] %v124
    // Predicated region
    $region14: #{flexible_resnet_forward.25} parent=1 // pred_check
      _
    $region15: #{flexible_resnet_forward.25} parent=1 // pred_check_branch
      %129 = sbr.rel (0) target = $region17
    $region16: #{flexible_resnet_forward.25} parent=1 // pred_region
      %s131 = ssub.s32 32, 32
      %132 = vsyncadd [#allocation3], %s131
      %s134 = sshll.u32 [#allocation2], 4
      %s135 = int_to_ptr.vmem [resolvable:$true] %s134
      %137 = dma.vmem_to_hbm [thread:$0]  %s135, 32, %s3, [#allocation3]
    $region17: #{flexible_resnet_forward.25} parent=1 // pred_fallthru
      _
    // Predicated region
    $region18: #{flexible_resnet_forward.25} parent=1 // pred_check
      _
    $region19: #{flexible_resnet_forward.25} parent=1 // pred_check_branch
      %139 = sbr.rel (0) target = $region21
    $region20: #{flexible_resnet_forward.25} parent=1 // pred_region
      %140 = dma.done [#allocation3], 32
    $region21: #{flexible_resnet_forward.25} parent=1 // pred_fallthru
      _
    %141 = vsyncpa [#allocation3], 1

</llo_original>
